<compile_context>
chip_gen: v6e
topology: v6e:2x2x1
jax: 0.10.0
libtpu: 0.0.40
codegen_flags: <defaults>
</compile_context>

<pallas_src>
import math

import numpy as np
import jax
import jax.numpy as jnp
from jax.experimental import pallas as pl
from jax.experimental.pallas import tpu as pltpu

IN_FEATURES = 4
HIDDEN = 32
DEPTH = 3
NUM_HEADS = 4
HEAD_DIM = HIDDEN // NUM_HEADS
N_NODES = 16            # 2 graphs of 8 nodes each
LN_EPS = 1e-5

# Row indices inside the per-layer bias/LN slab, shape (DEPTH, NB_ROWS, 3*HIDDEN).
(_R_GINB, _R_LN0W, _R_LN0B, _R_BQKV, _R_BO,
 _R_LN1W, _R_LN1B, _R_F1B, _R_F2B) = range(9)
NB_ROWS = 9
# Slot indices inside the per-layer square-weight slab, shape (DEPTH, NW, H, H).
_W_GIN, _W_O, _W_F1, _W_F2 = range(4)
NW = 4


def _layernorm(x, w, b):
    mu = jnp.mean(x, axis=-1, keepdims=True)
    xc = x - mu
    var = jnp.mean(xc * xc, axis=-1, keepdims=True)
    return xc * jax.lax.rsqrt(var + LN_EPS) * w + b


def _silu(x):
    return x * jax.nn.sigmoid(x)


def encoder_kernel(eps_ref,                       # SMEM (DEPTH,) f32  (GIN eps)
                   h_ref, bias_ref, adj_ref,      # VMEM node feats / attn bias / adj
                   fcw0_ref, fcw1_ref, fcb_ref,   # fc_in weights, (2, H) biases
                   wsq_ref,                       # (D, NW, H, H)  gin/wo/f1/f2
                   wqkv_ref,                      # (D, H, 3H)     fused QKV weight
                   bslab_ref,                     # (D, NB_ROWS, 3H) biases + LN params
                   o_ref):
    f32 = jnp.float32
    H = HIDDEN
    h = h_ref[...]                                # (N, F_in)
    adj = adj_ref[...]                            # (N, N)
    attn_bias = bias_ref[...]                     # (N, N) additive (-1e9 / 0)

    # ---- fc_in: Linear -> tanh -> Linear ----
    h = jnp.tanh(jnp.dot(h, fcw0_ref[...], preferred_element_type=f32)
                 + fcb_ref[0:1, :])
    h = jnp.dot(h, fcw1_ref[...], preferred_element_type=f32) + fcb_ref[1:2, :]

    scale = jnp.float32(1.0 / math.sqrt(HEAD_DIM))
    n = h.shape[0]

    for l in range(DEPTH):                        # static unroll over depth
        # Hoist per-layer parameter slab reads once per iteration.
        wgin = wsq_ref[l, _W_GIN]                 # (H, H)
        wo = wsq_ref[l, _W_O]                     # (H, H)
        wf1 = wsq_ref[l, _W_F1]                   # (H, H)
        wf2 = wsq_ref[l, _W_F2]                   # (H, H)
        wqkv = wqkv_ref[l]                        # (H, 3H)
        bl = bslab_ref[l]                         # (NB_ROWS, 3H)
        gin_b = bl[_R_GINB:_R_GINB + 1, :H]
        ln0_w = bl[_R_LN0W:_R_LN0W + 1, :H]
        ln0_b = bl[_R_LN0B:_R_LN0B + 1, :H]
        bqkv = bl[_R_BQKV:_R_BQKV + 1, :]         # (1, 3H)
        bo = bl[_R_BO:_R_BO + 1, :H]
        ln1_w = bl[_R_LN1W:_R_LN1W + 1, :H]
        ln1_b = bl[_R_LN1B:_R_LN1B + 1, :H]
        f1_b = bl[_R_F1B:_R_F1B + 1, :H]
        f2_b = bl[_R_F2B:_R_F2B + 1, :H]

        h_outer = h

        # ---- GIN conv: apply_func((1 + eps) * h + sum_neighbors h) ----
        agg = jnp.dot(adj, h, preferred_element_type=f32)
        gin_in = (1.0 + eps_ref[l]) * h + agg
        h = jnp.dot(gin_in, wgin, preferred_element_type=f32) + gin_b

        # ---- Attention block: pre-LN MHA + residual, pre-LN FFN + residual ----
        # TODO(synk): the PyTorch reference computes power_to_head(stack of adj
        # powers), but its result is never used downstream in forward -> skipped.
        h_res = h
        x = _layernorm(h, ln0_w, ln0_b)
        qkv = jnp.dot(x, wqkv, preferred_element_type=f32) + bqkv   # (N, 3H)
        kT = qkv[:, H:2 * H].T                    # single (N,H)->(H,N) transpose/layer

        attn = jnp.zeros((n, H), f32)
        for hd in range(NUM_HEADS):               # static unroll over heads
            lo, hi = hd * HEAD_DIM, (hd + 1) * HEAD_DIM
            qh = qkv[:, lo:hi]                    # (N, d)
            kTh = kT[lo:hi, :]                    # sublane-row slice (d, N)
            vh = qkv[:, 2 * H + lo:2 * H + hi]    # (N, d)
            s = jnp.dot(qh, kTh, preferred_element_type=f32) * scale + attn_bias
            s = s - jnp.max(s, axis=-1, keepdims=True)
            p = jnp.exp(s)
            p = p * pl.reciprocal(jnp.sum(p, axis=-1, keepdims=True), approx=True)
            oh = jnp.dot(p, vh, preferred_element_type=f32)          # (N, d)
            # Fold the head concat into the output projection: accumulate
            # (p@v) @ wo[rows lo:hi] -- sublane slice of wo, no lane concat.
            attn = attn + jnp.dot(oh, wo[lo:hi, :], preferred_element_type=f32)
        h = attn + bo + h_res

        h_res = h
        x = _layernorm(h, ln1_w, ln1_b)
        x = _silu(jnp.dot(x, wf1, preferred_element_type=f32) + f1_b)
        x = jnp.dot(x, wf2, preferred_element_type=f32) + f2_b
        h = x + h_res                             # dropout is eval-mode identity

        if l < DEPTH - 1:
            h = _silu(h)                          # encoder activation_fn = SiLU
        h = h + h_outer

    o_ref[...] = jnp.tanh(h)


def encoder_forward(packed, h, adj, attn_bias):
    vmem = pl.BlockSpec(memory_space=pltpu.MemorySpace.VMEM)
    smem = pl.BlockSpec(memory_space=pltpu.MemorySpace.SMEM)
    inputs = (packed["gin_eps"], h, attn_bias, adj,
              packed["fc_w0"], packed["fc_w1"], packed["fc_b"],
              packed["w_sq"], packed["w_qkv"], packed["b_slab"])
    in_specs = [smem] + [vmem] * (len(inputs) - 1)
    return pl.pallas_call(
        encoder_kernel,
        out_shape=jax.ShapeDtypeStruct((h.shape[0], HIDDEN), jnp.float32),
        in_specs=in_specs,
        out_specs=vmem,
    )(*inputs)


def pack_params(p):
    """Pack per-layer params into a few stacked slabs for the kernel."""
    H = HIDDEN
    w_sq = jnp.stack([p["gin_w"], p["wo"], p["f1_w"], p["f2_w"]], axis=1)   # (D,4,H,H)
    w_qkv = jnp.concatenate([p["wq"], p["wk"], p["wv"]], axis=-1)           # (D,H,3H)

    def pad3h(x):                                                           # (D,1,H)->(D,1,3H)
        return jnp.pad(x, ((0, 0), (0, 0), (0, 2 * H)))

    b_slab = jnp.concatenate([
        pad3h(p["gin_b"]),
        pad3h(p["ln0_w"]), pad3h(p["ln0_b"]),
        jnp.concatenate([p["bq"], p["bk"], p["bv"]], axis=-1),              # (D,1,3H)
        pad3h(p["bo"]),
        pad3h(p["ln1_w"]), pad3h(p["ln1_b"]),
        pad3h(p["f1_b"]), pad3h(p["f2_b"]),
    ], axis=1)                                                              # (D,9,3H)
    fc_b = jnp.concatenate([p["fc_b0"], p["fc_b1"]], axis=0)                # (2,H)
    return {"gin_eps": p["gin_eps"], "fc_w0": p["fc_w0"], "fc_w1": p["fc_w1"],
            "fc_b": fc_b, "w_sq": w_sq, "w_qkv": w_qkv, "b_slab": b_slab}


def reference_forward(params, h, adj, attn_bias):
    """Pure-JAX mirror of the kernel for a correctness check."""
    h = jnp.tanh(h @ params["fc_w0"] + params["fc_b0"])
    h = h @ params["fc_w1"] + params["fc_b1"]
    scale = 1.0 / math.sqrt(HEAD_DIM)
    for l in range(DEPTH):
        h_outer = h
        gin_in = (1.0 + params["gin_eps"][l]) * h + adj @ h
        h = gin_in @ params["gin_w"][l] + params["gin_b"][l]
        h_res = h
        x = _layernorm(h, params["ln0_w"][l], params["ln0_b"][l])
        q = x @ params["wq"][l] + params["bq"][l]
        k = x @ params["wk"][l] + params["bk"][l]
        v = x @ params["wv"][l] + params["bv"][l]
        outs = []
        for hd in range(NUM_HEADS):
            sl = slice(hd * HEAD_DIM, (hd + 1) * HEAD_DIM)
            s = q[:, sl] @ k[:, sl].T * scale + attn_bias
            p = jax.nn.softmax(s, axis=-1)
            outs.append(p @ v[:, sl])
        attn = jnp.concatenate(outs, axis=-1) @ params["wo"][l] + params["bo"][l]
        h = attn + h_res
        h_res = h
        x = _layernorm(h, params["ln1_w"][l], params["ln1_b"][l])
        x = _silu(x @ params["f1_w"][l] + params["f1_b"][l])
        h = x @ params["f2_w"][l] + params["f2_b"][l] + h_res
        if l < DEPTH - 1:
            h = _silu(h)
        h = h + h_outer
    return jnp.tanh(h)


def init_params(key):
    """Deterministic synthetic weight init (shapes from the torch module)."""
    keys = jax.random.split(key, 40)
    it = iter(keys)

    def w(shape, fan_in):
        return jax.random.normal(next(it), shape, jnp.float32) / math.sqrt(fan_in)

    def b(shape):
        return 0.05 * jax.random.normal(next(it), shape, jnp.float32)

    D, H = DEPTH, HIDDEN
    params = {
        "fc_w0": w((IN_FEATURES, H), IN_FEATURES), "fc_b0": b((1, H)),
        "fc_w1": w((H, H), H),                     "fc_b1": b((1, H)),
        "gin_eps": jnp.zeros((D,), jnp.float32),   # dgl default init_eps=0
        "gin_w": w((D, H, H), H), "gin_b": b((D, 1, H)),
        "ln0_w": jnp.ones((D, 1, H), jnp.float32), "ln0_b": jnp.zeros((D, 1, H), jnp.float32),
        "wq": w((D, H, H), H), "bq": b((D, 1, H)),
        "wk": w((D, H, H), H), "bk": b((D, 1, H)),
        "wv": w((D, H, H), H), "bv": b((D, 1, H)),
        "wo": w((D, H, H), H), "bo": b((D, 1, H)),
        "ln1_w": jnp.ones((D, 1, H), jnp.float32), "ln1_b": jnp.zeros((D, 1, H), jnp.float32),
        "f1_w": w((D, H, H), H), "f1_b": b((D, 1, H)),
        "f2_w": w((D, H, H), H), "f2_b": b((D, 1, H)),
    }
    return params


def build_graph():
    """2 ring graphs of 8 nodes each; dense adjacency + additive attention bias."""
    sizes = [8, 8]
    n = sum(sizes)
    graph_idx = np.repeat(np.arange(len(sizes)), sizes)
    adj = np.zeros((n, n), np.float32)
    off = 0
    for s in sizes:
        for i in range(s):
            j = (i + 1) % s
            adj[off + i, off + j] = 1.0
            adj[off + j, off + i] = 1.0
        off += s
    # Additive attention bias: -1e9 across graphs, 0 within a graph.
    attn_bias = np.where(graph_idx[:, None] != graph_idx[None, :],
                         np.float32(-1e9), np.float32(0.0)).astype(np.float32)
    return jnp.asarray(adj), jnp.asarray(attn_bias)


if __name__ == "__main__":
    key = jax.random.PRNGKey(0)
    k_h, k_p = jax.random.split(key)
    adj, attn_bias = build_graph()
    h = jax.random.normal(k_h, (N_NODES, IN_FEATURES), jnp.float32)
    params = init_params(k_p)
    packed = pack_params(params)

    out = encoder_forward(packed, h, adj, attn_bias)
    out = jax.block_until_ready(out)

    ref = reference_forward(params, h, adj, attn_bias)
    assert out.shape == (N_NODES, HIDDEN)
    assert bool(jnp.all(jnp.isfinite(out)))
    assert bool(jnp.allclose(out, ref, atol=2e-2, rtol=2e-2)), "mismatch vs JAX reference"
    print("KERNEL_OK")
</pallas_src>

<mosaic_0001>
module attributes {stable_mosaic.version = 11 : i64} {
  func.func @encoder_kernel(%arg0: memref<3xf32, #tpu.memory_space<smem>>, %arg1: memref<16x4xf32, #tpu.memory_space<vmem>>, %arg2: memref<16x16xf32, #tpu.memory_space<vmem>>, %arg3: memref<16x16xf32, #tpu.memory_space<vmem>>, %arg4: memref<4x32xf32, #tpu.memory_space<vmem>>, %arg5: memref<32x32xf32, #tpu.memory_space<vmem>>, %arg6: memref<2x32xf32, #tpu.memory_space<vmem>>, %arg7: memref<3x4x32x32xf32, #tpu.memory_space<vmem>>, %arg8: memref<3x32x96xf32, #tpu.memory_space<vmem>>, %arg9: memref<3x9x96xf32, #tpu.memory_space<vmem>>, %arg10: memref<16x32xf32, #tpu.memory_space<vmem>>) attributes {dimension_semantics = [], scalar_prefetch = 0 : i64, scratch_operands = 0 : i64, tpu.core_type = #tpu.core_type<tc>} {
    %c0 = arith.constant 0 : index
    %c0_0 = arith.constant 0 : index
    %0 = vector.load %arg1[%c0, %c0_0] : memref<16x4xf32, #tpu.memory_space<vmem>>, vector<16x4xf32>
    %c0_1 = arith.constant 0 : index
    %c0_2 = arith.constant 0 : index
    %1 = vector.load %arg3[%c0_1, %c0_2] : memref<16x16xf32, #tpu.memory_space<vmem>>, vector<16x16xf32>
    %c0_3 = arith.constant 0 : index
    %c0_4 = arith.constant 0 : index
    %2 = vector.load %arg2[%c0_3, %c0_4] : memref<16x16xf32, #tpu.memory_space<vmem>>, vector<16x16xf32>
    %c0_5 = arith.constant 0 : index
    %c0_6 = arith.constant 0 : index
    %3 = vector.load %arg4[%c0_5, %c0_6] : memref<4x32xf32, #tpu.memory_space<vmem>>, vector<4x32xf32>
    %cst = arith.constant dense<0.000000e+00> : vector<16x32xf32>
    %4 = tpu.matmul %0, %3, %cst {dimension_numbers = #tpu.dot_dimension_numbers<[1], [0], [0], [1], [0, 0, 1, 1], [], []>} : vector<16x4xf32>, vector<4x32xf32>, vector<16x32xf32> -> vector<16x32xf32>
    %c0_7 = arith.constant 0 : index
    %c0_8 = arith.constant 0 : index
    %5 = vector.load %arg6[%c0_7, %c0_8] : memref<2x32xf32, #tpu.memory_space<vmem>>, vector<1x32xf32>
    %6 = vector.broadcast %5 : vector<1x32xf32> to vector<16x32xf32>
    %7 = arith.addf %4, %6 : vector<16x32xf32>
    %8 = math.tanh %7 : vector<16x32xf32>
    %c0_9 = arith.constant 0 : index
    %c0_10 = arith.constant 0 : index
    %9 = vector.load %arg5[%c0_9, %c0_10] : memref<32x32xf32, #tpu.memory_space<vmem>>, vector<32x32xf32>
    %cst_11 = arith.constant dense<0.000000e+00> : vector<16x32xf32>
    %10 = tpu.matmul %8, %9, %cst_11 {dimension_numbers = #tpu.dot_dimension_numbers<[1], [0], [0], [1], [0, 0, 1, 1], [], []>} : vector<16x32xf32>, vector<32x32xf32>, vector<16x32xf32> -> vector<16x32xf32>
    %c1 = arith.constant 1 : index
    %c0_12 = arith.constant 0 : index
    %11 = vector.load %arg6[%c1, %c0_12] : memref<2x32xf32, #tpu.memory_space<vmem>>, vector<1x32xf32>
    %12 = vector.broadcast %11 : vector<1x32xf32> to vector<16x32xf32>
    %13 = arith.addf %10, %12 : vector<16x32xf32>
    %c0_13 = arith.constant 0 : index
    %c0_14 = arith.constant 0 : index
    %c0_15 = arith.constant 0 : index
    %c0_16 = arith.constant 0 : index
    %14 = vector.load %arg7[%c0_13, %c0_14, %c0_15, %c0_16] : memref<3x4x32x32xf32, #tpu.memory_space<vmem>>, vector<1x1x32x32xf32>
    %15 = vector.shape_cast %14 : vector<1x1x32x32xf32> to vector<32x32xf32>
    %c0_17 = arith.constant 0 : index
    %c1_18 = arith.constant 1 : index
    %c0_19 = arith.constant 0 : index
    %c0_20 = arith.constant 0 : index
    %16 = vector.load %arg7[%c0_17, %c1_18, %c0_19, %c0_20] : memref<3x4x32x32xf32, #tpu.memory_space<vmem>>, vector<1x1x32x32xf32>
    %17 = vector.shape_cast %16 : vector<1x1x32x32xf32> to vector<32x32xf32>
    %c0_21 = arith.constant 0 : index
    %c2 = arith.constant 2 : index
    %c0_22 = arith.constant 0 : index
    %c0_23 = arith.constant 0 : index
    %18 = vector.load %arg7[%c0_21, %c2, %c0_22, %c0_23] : memref<3x4x32x32xf32, #tpu.memory_space<vmem>>, vector<1x1x32x32xf32>
    %19 = vector.shape_cast %18 : vector<1x1x32x32xf32> to vector<32x32xf32>
    %c0_24 = arith.constant 0 : index
    %c3 = arith.constant 3 : index
    %c0_25 = arith.constant 0 : index
    %c0_26 = arith.constant 0 : index
    %20 = vector.load %arg7[%c0_24, %c3, %c0_25, %c0_26] : memref<3x4x32x32xf32, #tpu.memory_space<vmem>>, vector<1x1x32x32xf32>
    %21 = vector.shape_cast %20 : vector<1x1x32x32xf32> to vector<32x32xf32>
    %c0_27 = arith.constant 0 : index
    %c0_28 = arith.constant 0 : index
    %c0_29 = arith.constant 0 : index
    %22 = vector.load %arg8[%c0_27, %c0_28, %c0_29] : memref<3x32x96xf32, #tpu.memory_space<vmem>>, vector<1x32x96xf32>
    %23 = vector.shape_cast %22 : vector<1x32x96xf32> to vector<32x96xf32>
    %c0_30 = arith.constant 0 : index
    %c0_31 = arith.constant 0 : index
    %c0_32 = arith.constant 0 : index
    %24 = vector.load %arg9[%c0_30, %c0_31, %c0_32] : memref<3x9x96xf32, #tpu.memory_space<vmem>>, vector<1x9x96xf32>
    %25 = vector.shape_cast %24 : vector<1x9x96xf32> to vector<9x96xf32>
    %26 = vector.extract_strided_slice %25 {offsets = [0, 0], sizes = [1, 32], strides = [1, 1]} : vector<9x96xf32> to vector<1x32xf32>
    %27 = vector.extract_strided_slice %25 {offsets = [1, 0], sizes = [1, 32], strides = [1, 1]} : vector<9x96xf32> to vector<1x32xf32>
    %28 = vector.extract_strided_slice %25 {offsets = [2, 0], sizes = [1, 32], strides = [1, 1]} : vector<9x96xf32> to vector<1x32xf32>
    %29 = vector.extract_strided_slice %25 {offsets = [3, 0], sizes = [1, 96], strides = [1, 1]} : vector<9x96xf32> to vector<1x96xf32>
    %30 = vector.extract_strided_slice %25 {offsets = [4, 0], sizes = [1, 32], strides = [1, 1]} : vector<9x96xf32> to vector<1x32xf32>
    %31 = vector.extract_strided_slice %25 {offsets = [5, 0], sizes = [1, 32], strides = [1, 1]} : vector<9x96xf32> to vector<1x32xf32>
    %32 = vector.extract_strided_slice %25 {offsets = [6, 0], sizes = [1, 32], strides = [1, 1]} : vector<9x96xf32> to vector<1x32xf32>
    %33 = vector.extract_strided_slice %25 {offsets = [7, 0], sizes = [1, 32], strides = [1, 1]} : vector<9x96xf32> to vector<1x32xf32>
    %34 = vector.extract_strided_slice %25 {offsets = [8, 0], sizes = [1, 32], strides = [1, 1]} : vector<9x96xf32> to vector<1x32xf32>
    %cst_33 = arith.constant dense<0.000000e+00> : vector<16x32xf32>
    %35 = tpu.matmul %1, %13, %cst_33 {dimension_numbers = #tpu.dot_dimension_numbers<[1], [0], [0], [1], [0, 0, 1, 1], [], []>} : vector<16x16xf32>, vector<16x32xf32>, vector<16x32xf32> -> vector<16x32xf32>
    %c0_34 = arith.constant 0 : index
    %36 = memref.load %arg0[%c0_34] : memref<3xf32, #tpu.memory_space<smem>>
    %cst_35 = arith.constant 1.000000e+00 : f32
    %37 = arith.addf %cst_35, %36 : f32
    %38 = vector.broadcast %37 : f32 to vector<16x32xf32>
    %39 = arith.mulf %38, %13 : vector<16x32xf32>
    %40 = arith.addf %39, %35 : vector<16x32xf32>
    %cst_36 = arith.constant dense<0.000000e+00> : vector<16x32xf32>
    %41 = tpu.matmul %40, %15, %cst_36 {dimension_numbers = #tpu.dot_dimension_numbers<[1], [0], [0], [1], [0, 0, 1, 1], [], []>} : vector<16x32xf32>, vector<32x32xf32>, vector<16x32xf32> -> vector<16x32xf32>
    %42 = vector.broadcast %26 : vector<1x32xf32> to vector<16x32xf32>
    %43 = arith.addf %41, %42 : vector<16x32xf32>
    %cst_37 = arith.constant dense<0.000000e+00> : vector<16xf32>
    %44 = vector.multi_reduction <add>, %43, %cst_37 [1] : vector<16x32xf32> to vector<16xf32>
    %45 = vector.shape_cast %44 : vector<16xf32> to vector<16x1xf32>
    %cst_38 = arith.constant 3.200000e+01 : f32
    %46 = vector.broadcast %cst_38 : f32 to vector<16x1xf32>
    %47 = arith.divf %45, %46 : vector<16x1xf32>
    %48 = vector.broadcast %47 : vector<16x1xf32> to vector<16x32xf32>
    %49 = arith.subf %43, %48 : vector<16x32xf32>
    %50 = arith.mulf %49, %49 : vector<16x32xf32>
    %cst_39 = arith.constant dense<0.000000e+00> : vector<16xf32>
    %51 = vector.multi_reduction <add>, %50, %cst_39 [1] : vector<16x32xf32> to vector<16xf32>
    %52 = vector.shape_cast %51 : vector<16xf32> to vector<16x1xf32>
    %cst_40 = arith.constant 3.200000e+01 : f32
    %53 = vector.broadcast %cst_40 : f32 to vector<16x1xf32>
    %54 = arith.divf %52, %53 : vector<16x1xf32>
    %cst_41 = arith.constant 9.99999974E-6 : f32
    %55 = vector.broadcast %cst_41 : f32 to vector<16x1xf32>
    %56 = arith.addf %54, %55 : vector<16x1xf32>
    %57 = math.rsqrt %56 : vector<16x1xf32>
    %58 = vector.broadcast %57 : vector<16x1xf32> to vector<16x32xf32>
    %59 = arith.mulf %49, %58 : vector<16x32xf32>
    %60 = vector.broadcast %27 : vector<1x32xf32> to vector<16x32xf32>
    %61 = arith.mulf %59, %60 : vector<16x32xf32>
    %62 = vector.broadcast %28 : vector<1x32xf32> to vector<16x32xf32>
    %63 = arith.addf %61, %62 : vector<16x32xf32>
    %cst_42 = arith.constant dense<0.000000e+00> : vector<16x96xf32>
    %64 = tpu.matmul %63, %23, %cst_42 {dimension_numbers = #tpu.dot_dimension_numbers<[1], [0], [0], [1], [0, 0, 1, 1], [], []>} : vector<16x32xf32>, vector<32x96xf32>, vector<16x96xf32> -> vector<16x96xf32>
    %65 = vector.broadcast %29 : vector<1x96xf32> to vector<16x96xf32>
    %66 = arith.addf %64, %65 : vector<16x96xf32>
    %67 = vector.extract_strided_slice %66 {offsets = [0, 32], sizes = [16, 32], strides = [1, 1]} : vector<16x96xf32> to vector<16x32xf32>
    %68 = tpu.transpose %67, [1, 0] : vector<16x32xf32> -> vector<32x16xf32>
    %cst_43 = arith.constant 0.000000e+00 : f32
    %69 = vector.broadcast %cst_43 : f32 to vector<16x32xf32>
    %70 = vector.extract_strided_slice %66 {offsets = [0, 0], sizes = [16, 8], strides = [1, 1]} : vector<16x96xf32> to vector<16x8xf32>
    %71 = vector.extract_strided_slice %68 {offsets = [0, 0], sizes = [8, 16], strides = [1, 1]} : vector<32x16xf32> to vector<8x16xf32>
    %72 = vector.extract_strided_slice %66 {offsets = [0, 64], sizes = [16, 8], strides = [1, 1]} : vector<16x96xf32> to vector<16x8xf32>
    %cst_44 = arith.constant dense<0.000000e+00> : vector<16x16xf32>
    %73 = tpu.matmul %70, %71, %cst_44 {dimension_numbers = #tpu.dot_dimension_numbers<[1], [0], [0], [1], [0, 0, 1, 1], [], []>} : vector<16x8xf32>, vector<8x16xf32>, vector<16x16xf32> -> vector<16x16xf32>
    %cst_45 = arith.constant 0.353553385 : f32
    %74 = vector.broadcast %cst_45 : f32 to vector<16x16xf32>
    %75 = arith.mulf %73, %74 : vector<16x16xf32>
    %76 = arith.addf %75, %2 : vector<16x16xf32>
    %cst_46 = arith.constant dense<0xFF800000> : vector<16xf32>
    %77 = vector.multi_reduction <maximumf>, %76, %cst_46 [1] : vector<16x16xf32> to vector<16xf32>
    %78 = vector.shape_cast %77 : vector<16xf32> to vector<16x1xf32>
    %79 = vector.broadcast %78 : vector<16x1xf32> to vector<16x16xf32>
    %80 = arith.subf %76, %79 : vector<16x16xf32>
    %81 = math.exp %80 : vector<16x16xf32>
    %cst_47 = arith.constant dense<0.000000e+00> : vector<16xf32>
    %82 = vector.multi_reduction <add>, %81, %cst_47 [1] : vector<16x16xf32> to vector<16xf32>
    %83 = vector.shape_cast %82 : vector<16xf32> to vector<16x1xf32>
    %84 = tpu.reciprocal %83 {approx = true} : vector<16x1xf32> -> vector<16x1xf32>
    %85 = vector.broadcast %84 : vector<16x1xf32> to vector<16x16xf32>
    %86 = arith.mulf %81, %85 : vector<16x16xf32>
    %cst_48 = arith.constant dense<0.000000e+00> : vector<16x8xf32>
    %87 = tpu.matmul %86, %72, %cst_48 {dimension_numbers = #tpu.dot_dimension_numbers<[1], [0], [0], [1], [0, 0, 1, 1], [], []>} : vector<16x16xf32>, vector<16x8xf32>, vector<16x8xf32> -> vector<16x8xf32>
    %88 = vector.extract_strided_slice %17 {offsets = [0, 0], sizes = [8, 32], strides = [1, 1]} : vector<32x32xf32> to vector<8x32xf32>
    %cst_49 = arith.constant dense<0.000000e+00> : vector<16x32xf32>
    %89 = tpu.matmul %87, %88, %cst_49 {dimension_numbers = #tpu.dot_dimension_numbers<[1], [0], [0], [1], [0, 0, 1, 1], [], []>} : vector<16x8xf32>, vector<8x32xf32>, vector<16x32xf32> -> vector<16x32xf32>
    %90 = arith.addf %69, %89 : vector<16x32xf32>
    %91 = vector.extract_strided_slice %66 {offsets = [0, 8], sizes = [16, 8], strides = [1, 1]} : vector<16x96xf32> to vector<16x8xf32>
    %92 = vector.extract_strided_slice %68 {offsets = [8, 0], sizes = [8, 16], strides = [1, 1]} : vector<32x16xf32> to vector<8x16xf32>
    %93 = vector.extract_strided_slice %66 {offsets = [0, 72], sizes = [16, 8], strides = [1, 1]} : vector<16x96xf32> to vector<16x8xf32>
    %cst_50 = arith.constant dense<0.000000e+00> : vector<16x16xf32>
    %94 = tpu.matmul %91, %92, %cst_50 {dimension_numbers = #tpu.dot_dimension_numbers<[1], [0], [0], [1], [0, 0, 1, 1], [], []>} : vector<16x8xf32>, vector<8x16xf32>, vector<16x16xf32> -> vector<16x16xf32>
    %cst_51 = arith.constant 0.353553385 : f32
    %95 = vector.broadcast %cst_51 : f32 to vector<16x16xf32>
    %96 = arith.mulf %94, %95 : vector<16x16xf32>
    %97 = arith.addf %96, %2 : vector<16x16xf32>
    %cst_52 = arith.constant dense<0xFF800000> : vector<16xf32>
    %98 = vector.multi_reduction <maximumf>, %97, %cst_52 [1] : vector<16x16xf32> to vector<16xf32>
    %99 = vector.shape_cast %98 : vector<16xf32> to vector<16x1xf32>
    %100 = vector.broadcast %99 : vector<16x1xf32> to vector<16x16xf32>
    %101 = arith.subf %97, %100 : vector<16x16xf32>
    %102 = math.exp %101 : vector<16x16xf32>
    %cst_53 = arith.constant dense<0.000000e+00> : vector<16xf32>
    %103 = vector.multi_reduction <add>, %102, %cst_53 [1] : vector<16x16xf32> to vector<16xf32>
    %104 = vector.shape_cast %103 : vector<16xf32> to vector<16x1xf32>
    %105 = tpu.reciprocal %104 {approx = true} : vector<16x1xf32> -> vector<16x1xf32>
    %106 = vector.broadcast %105 : vector<16x1xf32> to vector<16x16xf32>
    %107 = arith.mulf %102, %106 : vector<16x16xf32>
    %cst_54 = arith.constant dense<0.000000e+00> : vector<16x8xf32>
    %108 = tpu.matmul %107, %93, %cst_54 {dimension_numbers = #tpu.dot_dimension_numbers<[1], [0], [0], [1], [0, 0, 1, 1], [], []>} : vector<16x16xf32>, vector<16x8xf32>, vector<16x8xf32> -> vector<16x8xf32>
    %109 = vector.extract_strided_slice %17 {offsets = [8, 0], sizes = [8, 32], strides = [1, 1]} : vector<32x32xf32> to vector<8x32xf32>
    %cst_55 = arith.constant dense<0.000000e+00> : vector<16x32xf32>
    %110 = tpu.matmul %108, %109, %cst_55 {dimension_numbers = #tpu.dot_dimension_numbers<[1], [0], [0], [1], [0, 0, 1, 1], [], []>} : vector<16x8xf32>, vector<8x32xf32>, vector<16x32xf32> -> vector<16x32xf32>
    %111 = arith.addf %90, %110 : vector<16x32xf32>
    %112 = vector.extract_strided_slice %66 {offsets = [0, 16], sizes = [16, 8], strides = [1, 1]} : vector<16x96xf32> to vector<16x8xf32>
    %113 = vector.extract_strided_slice %68 {offsets = [16, 0], sizes = [8, 16], strides = [1, 1]} : vector<32x16xf32> to vector<8x16xf32>
    %114 = vector.extract_strided_slice %66 {offsets = [0, 80], sizes = [16, 8], strides = [1, 1]} : vector<16x96xf32> to vector<16x8xf32>
    %cst_56 = arith.constant dense<0.000000e+00> : vector<16x16xf32>
    %115 = tpu.matmul %112, %113, %cst_56 {dimension_numbers = #tpu.dot_dimension_numbers<[1], [0], [0], [1], [0, 0, 1, 1], [], []>} : vector<16x8xf32>, vector<8x16xf32>, vector<16x16xf32> -> vector<16x16xf32>
    %cst_57 = arith.constant 0.353553385 : f32
    %116 = vector.broadcast %cst_57 : f32 to vector<16x16xf32>
    %117 = arith.mulf %115, %116 : vector<16x16xf32>
    %118 = arith.addf %117, %2 : vector<16x16xf32>
    %cst_58 = arith.constant dense<0xFF800000> : vector<16xf32>
    %119 = vector.multi_reduction <maximumf>, %118, %cst_58 [1] : vector<16x16xf32> to vector<16xf32>
    %120 = vector.shape_cast %119 : vector<16xf32> to vector<16x1xf32>
    %121 = vector.broadcast %120 : vector<16x1xf32> to vector<16x16xf32>
    %122 = arith.subf %118, %121 : vector<16x16xf32>
    %123 = math.exp %122 : vector<16x16xf32>
    %cst_59 = arith.constant dense<0.000000e+00> : vector<16xf32>
    %124 = vector.multi_reduction <add>, %123, %cst_59 [1] : vector<16x16xf32> to vector<16xf32>
    %125 = vector.shape_cast %124 : vector<16xf32> to vector<16x1xf32>
    %126 = tpu.reciprocal %125 {approx = true} : vector<16x1xf32> -> vector<16x1xf32>
    %127 = vector.broadcast %126 : vector<16x1xf32> to vector<16x16xf32>
    %128 = arith.mulf %123, %127 : vector<16x16xf32>
    %cst_60 = arith.constant dense<0.000000e+00> : vector<16x8xf32>
    %129 = tpu.matmul %128, %114, %cst_60 {dimension_numbers = #tpu.dot_dimension_numbers<[1], [0], [0], [1], [0, 0, 1, 1], [], []>} : vector<16x16xf32>, vector<16x8xf32>, vector<16x8xf32> -> vector<16x8xf32>
    %130 = vector.extract_strided_slice %17 {offsets = [16, 0], sizes = [8, 32], strides = [1, 1]} : vector<32x32xf32> to vector<8x32xf32>
    %cst_61 = arith.constant dense<0.000000e+00> : vector<16x32xf32>
    %131 = tpu.matmul %129, %130, %cst_61 {dimension_numbers = #tpu.dot_dimension_numbers<[1], [0], [0], [1], [0, 0, 1, 1], [], []>} : vector<16x8xf32>, vector<8x32xf32>, vector<16x32xf32> -> vector<16x32xf32>
    %132 = arith.addf %111, %131 : vector<16x32xf32>
    %133 = vector.extract_strided_slice %66 {offsets = [0, 24], sizes = [16, 8], strides = [1, 1]} : vector<16x96xf32> to vector<16x8xf32>
    %134 = vector.extract_strided_slice %68 {offsets = [24, 0], sizes = [8, 16], strides = [1, 1]} : vector<32x16xf32> to vector<8x16xf32>
    %135 = vector.extract_strided_slice %66 {offsets = [0, 88], sizes = [16, 8], strides = [1, 1]} : vector<16x96xf32> to vector<16x8xf32>
    %cst_62 = arith.constant dense<0.000000e+00> : vector<16x16xf32>
    %136 = tpu.matmul %133, %134, %cst_62 {dimension_numbers = #tpu.dot_dimension_numbers<[1], [0], [0], [1], [0, 0, 1, 1], [], []>} : vector<16x8xf32>, vector<8x16xf32>, vector<16x16xf32> -> vector<16x16xf32>
    %cst_63 = arith.constant 0.353553385 : f32
    %137 = vector.broadcast %cst_63 : f32 to vector<16x16xf32>
    %138 = arith.mulf %136, %137 : vector<16x16xf32>
    %139 = arith.addf %138, %2 : vector<16x16xf32>
    %cst_64 = arith.constant dense<0xFF800000> : vector<16xf32>
    %140 = vector.multi_reduction <maximumf>, %139, %cst_64 [1] : vector<16x16xf32> to vector<16xf32>
    %141 = vector.shape_cast %140 : vector<16xf32> to vector<16x1xf32>
    %142 = vector.broadcast %141 : vector<16x1xf32> to vector<16x16xf32>
    %143 = arith.subf %139, %142 : vector<16x16xf32>
    %144 = math.exp %143 : vector<16x16xf32>
    %cst_65 = arith.constant dense<0.000000e+00> : vector<16xf32>
    %145 = vector.multi_reduction <add>, %144, %cst_65 [1] : vector<16x16xf32> to vector<16xf32>
    %146 = vector.shape_cast %145 : vector<16xf32> to vector<16x1xf32>
    %147 = tpu.reciprocal %146 {approx = true} : vector<16x1xf32> -> vector<16x1xf32>
    %148 = vector.broadcast %147 : vector<16x1xf32> to vector<16x16xf32>
    %149 = arith.mulf %144, %148 : vector<16x16xf32>
    %cst_66 = arith.constant dense<0.000000e+00> : vector<16x8xf32>
    %150 = tpu.matmul %149, %135, %cst_66 {dimension_numbers = #tpu.dot_dimension_numbers<[1], [0], [0], [1], [0, 0, 1, 1], [], []>} : vector<16x16xf32>, vector<16x8xf32>, vector<16x8xf32> -> vector<16x8xf32>
    %151 = vector.extract_strided_slice %17 {offsets = [24, 0], sizes = [8, 32], strides = [1, 1]} : vector<32x32xf32> to vector<8x32xf32>
    %cst_67 = arith.constant dense<0.000000e+00> : vector<16x32xf32>
    %152 = tpu.matmul %150, %151, %cst_67 {dimension_numbers = #tpu.dot_dimension_numbers<[1], [0], [0], [1], [0, 0, 1, 1], [], []>} : vector<16x8xf32>, vector<8x32xf32>, vector<16x32xf32> -> vector<16x32xf32>
    %153 = arith.addf %132, %152 : vector<16x32xf32>
    %154 = vector.broadcast %30 : vector<1x32xf32> to vector<16x32xf32>
    %155 = arith.addf %153, %154 : vector<16x32xf32>
    %156 = arith.addf %155, %43 : vector<16x32xf32>
    %cst_68 = arith.constant dense<0.000000e+00> : vector<16xf32>
    %157 = vector.multi_reduction <add>, %156, %cst_68 [1] : vector<16x32xf32> to vector<16xf32>
    %158 = vector.shape_cast %157 : vector<16xf32> to vector<16x1xf32>
    %cst_69 = arith.constant 3.200000e+01 : f32
    %159 = vector.broadcast %cst_69 : f32 to vector<16x1xf32>
    %160 = arith.divf %158, %159 : vector<16x1xf32>
    %161 = vector.broadcast %160 : vector<16x1xf32> to vector<16x32xf32>
    %162 = arith.subf %156, %161 : vector<16x32xf32>
    %163 = arith.mulf %162, %162 : vector<16x32xf32>
    %cst_70 = arith.constant dense<0.000000e+00> : vector<16xf32>
    %164 = vector.multi_reduction <add>, %163, %cst_70 [1] : vector<16x32xf32> to vector<16xf32>
    %165 = vector.shape_cast %164 : vector<16xf32> to vector<16x1xf32>
    %cst_71 = arith.constant 3.200000e+01 : f32
    %166 = vector.broadcast %cst_71 : f32 to vector<16x1xf32>
    %167 = arith.divf %165, %166 : vector<16x1xf32>
    %cst_72 = arith.constant 9.99999974E-6 : f32
    %168 = vector.broadcast %cst_72 : f32 to vector<16x1xf32>
    %169 = arith.addf %167, %168 : vector<16x1xf32>
    %170 = math.rsqrt %169 : vector<16x1xf32>
    %171 = vector.broadcast %170 : vector<16x1xf32> to vector<16x32xf32>
    %172 = arith.mulf %162, %171 : vector<16x32xf32>
    %173 = vector.broadcast %31 : vector<1x32xf32> to vector<16x32xf32>
    %174 = arith.mulf %172, %173 : vector<16x32xf32>
    %175 = vector.broadcast %32 : vector<1x32xf32> to vector<16x32xf32>
    %176 = arith.addf %174, %175 : vector<16x32xf32>
    %cst_73 = arith.constant dense<0.000000e+00> : vector<16x32xf32>
    %177 = tpu.matmul %176, %19, %cst_73 {dimension_numbers = #tpu.dot_dimension_numbers<[1], [0], [0], [1], [0, 0, 1, 1], [], []>} : vector<16x32xf32>, vector<32x32xf32>, vector<16x32xf32> -> vector<16x32xf32>
    %178 = vector.broadcast %33 : vector<1x32xf32> to vector<16x32xf32>
    %179 = arith.addf %177, %178 : vector<16x32xf32>
    %180 = arith.negf %179 : vector<16x32xf32>
    %181 = math.exp %180 : vector<16x32xf32>
    %cst_74 = arith.constant 1.000000e+00 : f32
    %182 = vector.broadcast %cst_74 : f32 to vector<16x32xf32>
    %183 = arith.addf %182, %181 : vector<16x32xf32>
    %184 = arith.divf %182, %183 : vector<16x32xf32>
    %185 = arith.mulf %179, %184 : vector<16x32xf32>
    %cst_75 = arith.constant dense<0.000000e+00> : vector<16x32xf32>
    %186 = tpu.matmul %185, %21, %cst_75 {dimension_numbers = #tpu.dot_dimension_numbers<[1], [0], [0], [1], [0, 0, 1, 1], [], []>} : vector<16x32xf32>, vector<32x32xf32>, vector<16x32xf32> -> vector<16x32xf32>
    %187 = vector.broadcast %34 : vector<1x32xf32> to vector<16x32xf32>
    %188 = arith.addf %186, %187 : vector<16x32xf32>
    %189 = arith.addf %188, %156 : vector<16x32xf32>
    %190 = arith.negf %189 : vector<16x32xf32>
    %191 = math.exp %190 : vector<16x32xf32>
    %cst_76 = arith.constant 1.000000e+00 : f32
    %192 = vector.broadcast %cst_76 : f32 to vector<16x32xf32>
    %193 = arith.addf %192, %191 : vector<16x32xf32>
    %194 = arith.divf %192, %193 : vector<16x32xf32>
    %195 = arith.mulf %189, %194 : vector<16x32xf32>
    %196 = arith.addf %195, %13 : vector<16x32xf32>
    %c1_77 = arith.constant 1 : index
    %c0_78 = arith.constant 0 : index
    %c0_79 = arith.constant 0 : index
    %c0_80 = arith.constant 0 : index
    %197 = vector.load %arg7[%c1_77, %c0_78, %c0_79, %c0_80] : memref<3x4x32x32xf32, #tpu.memory_space<vmem>>, vector<1x1x32x32xf32>
    %198 = vector.shape_cast %197 : vector<1x1x32x32xf32> to vector<32x32xf32>
    %c1_81 = arith.constant 1 : index
    %c1_82 = arith.constant 1 : index
    %c0_83 = arith.constant 0 : index
    %c0_84 = arith.constant 0 : index
    %199 = vector.load %arg7[%c1_81, %c1_82, %c0_83, %c0_84] : memref<3x4x32x32xf32, #tpu.memory_space<vmem>>, vector<1x1x32x32xf32>
    %200 = vector.shape_cast %199 : vector<1x1x32x32xf32> to vector<32x32xf32>
    %c1_85 = arith.constant 1 : index
    %c2_86 = arith.constant 2 : index
    %c0_87 = arith.constant 0 : index
    %c0_88 = arith.constant 0 : index
    %201 = vector.load %arg7[%c1_85, %c2_86, %c0_87, %c0_88] : memref<3x4x32x32xf32, #tpu.memory_space<vmem>>, vector<1x1x32x32xf32>
    %202 = vector.shape_cast %201 : vector<1x1x32x32xf32> to vector<32x32xf32>
    %c1_89 = arith.constant 1 : index
    %c3_90 = arith.constant 3 : index
    %c0_91 = arith.constant 0 : index
    %c0_92 = arith.constant 0 : index
    %203 = vector.load %arg7[%c1_89, %c3_90, %c0_91, %c0_92] : memref<3x4x32x32xf32, #tpu.memory_space<vmem>>, vector<1x1x32x32xf32>
    %204 = vector.shape_cast %203 : vector<1x1x32x32xf32> to vector<32x32xf32>
    %c1_93 = arith.constant 1 : index
    %c0_94 = arith.constant 0 : index
    %c0_95 = arith.constant 0 : index
    %205 = vector.load %arg8[%c1_93, %c0_94, %c0_95] : memref<3x32x96xf32, #tpu.memory_space<vmem>>, vector<1x32x96xf32>
    %206 = vector.shape_cast %205 : vector<1x32x96xf32> to vector<32x96xf32>
    %c1_96 = arith.constant 1 : index
    %c0_97 = arith.constant 0 : index
    %c0_98 = arith.constant 0 : index
    %207 = vector.load %arg9[%c1_96, %c0_97, %c0_98] : memref<3x9x96xf32, #tpu.memory_space<vmem>>, vector<1x9x96xf32>
    %208 = vector.shape_cast %207 : vector<1x9x96xf32> to vector<9x96xf32>
    %209 = vector.extract_strided_slice %208 {offsets = [0, 0], sizes = [1, 32], strides = [1, 1]} : vector<9x96xf32> to vector<1x32xf32>
    %210 = vector.extract_strided_slice %208 {offsets = [1, 0], sizes = [1, 32], strides = [1, 1]} : vector<9x96xf32> to vector<1x32xf32>
    %211 = vector.extract_strided_slice %208 {offsets = [2, 0], sizes = [1, 32], strides = [1, 1]} : vector<9x96xf32> to vector<1x32xf32>
    %212 = vector.extract_strided_slice %208 {offsets = [3, 0], sizes = [1, 96], strides = [1, 1]} : vector<9x96xf32> to vector<1x96xf32>
    %213 = vector.extract_strided_slice %208 {offsets = [4, 0], sizes = [1, 32], strides = [1, 1]} : vector<9x96xf32> to vector<1x32xf32>
    %214 = vector.extract_strided_slice %208 {offsets = [5, 0], sizes = [1, 32], strides = [1, 1]} : vector<9x96xf32> to vector<1x32xf32>
    %215 = vector.extract_strided_slice %208 {offsets = [6, 0], sizes = [1, 32], strides = [1, 1]} : vector<9x96xf32> to vector<1x32xf32>
    %216 = vector.extract_strided_slice %208 {offsets = [7, 0], sizes = [1, 32], strides = [1, 1]} : vector<9x96xf32> to vector<1x32xf32>
    %217 = vector.extract_strided_slice %208 {offsets = [8, 0], sizes = [1, 32], strides = [1, 1]} : vector<9x96xf32> to vector<1x32xf32>
    %cst_99 = arith.constant dense<0.000000e+00> : vector<16x32xf32>
    %218 = tpu.matmul %1, %196, %cst_99 {dimension_numbers = #tpu.dot_dimension_numbers<[1], [0], [0], [1], [0, 0, 1, 1], [], []>} : vector<16x16xf32>, vector<16x32xf32>, vector<16x32xf32> -> vector<16x32xf32>
    %c1_100 = arith.constant 1 : index
    %219 = memref.load %arg0[%c1_100] : memref<3xf32, #tpu.memory_space<smem>>
    %cst_101 = arith.constant 1.000000e+00 : f32
    %220 = arith.addf %cst_101, %219 : f32
    %221 = vector.broadcast %220 : f32 to vector<16x32xf32>
    %222 = arith.mulf %221, %196 : vector<16x32xf32>
    %223 = arith.addf %222, %218 : vector<16x32xf32>
    %cst_102 = arith.constant dense<0.000000e+00> : vector<16x32xf32>
    %224 = tpu.matmul %223, %198, %cst_102 {dimension_numbers = #tpu.dot_dimension_numbers<[1], [0], [0], [1], [0, 0, 1, 1], [], []>} : vector<16x32xf32>, vector<32x32xf32>, vector<16x32xf32> -> vector<16x32xf32>
    %225 = vector.broadcast %209 : vector<1x32xf32> to vector<16x32xf32>
    %226 = arith.addf %224, %225 : vector<16x32xf32>
    %cst_103 = arith.constant dense<0.000000e+00> : vector<16xf32>
    %227 = vector.multi_reduction <add>, %226, %cst_103 [1] : vector<16x32xf32> to vector<16xf32>
    %228 = vector.shape_cast %227 : vector<16xf32> to vector<16x1xf32>
    %cst_104 = arith.constant 3.200000e+01 : f32
    %229 = vector.broadcast %cst_104 : f32 to vector<16x1xf32>
    %230 = arith.divf %228, %229 : vector<16x1xf32>
    %231 = vector.broadcast %230 : vector<16x1xf32> to vector<16x32xf32>
    %232 = arith.subf %226, %231 : vector<16x32xf32>
    %233 = arith.mulf %232, %232 : vector<16x32xf32>
    %cst_105 = arith.constant dense<0.000000e+00> : vector<16xf32>
    %234 = vector.multi_reduction <add>, %233, %cst_105 [1] : vector<16x32xf32> to vector<16xf32>
    %235 = vector.shape_cast %234 : vector<16xf32> to vector<16x1xf32>
    %cst_106 = arith.constant 3.200000e+01 : f32
    %236 = vector.broadcast %cst_106 : f32 to vector<16x1xf32>
    %237 = arith.divf %235, %236 : vector<16x1xf32>
    %cst_107 = arith.constant 9.99999974E-6 : f32
    %238 = vector.broadcast %cst_107 : f32 to vector<16x1xf32>
    %239 = arith.addf %237, %238 : vector<16x1xf32>
    %240 = math.rsqrt %239 : vector<16x1xf32>
    %241 = vector.broadcast %240 : vector<16x1xf32> to vector<16x32xf32>
    %242 = arith.mulf %232, %241 : vector<16x32xf32>
    %243 = vector.broadcast %210 : vector<1x32xf32> to vector<16x32xf32>
    %244 = arith.mulf %242, %243 : vector<16x32xf32>
    %245 = vector.broadcast %211 : vector<1x32xf32> to vector<16x32xf32>
    %246 = arith.addf %244, %245 : vector<16x32xf32>
    %cst_108 = arith.constant dense<0.000000e+00> : vector<16x96xf32>
    %247 = tpu.matmul %246, %206, %cst_108 {dimension_numbers = #tpu.dot_dimension_numbers<[1], [0], [0], [1], [0, 0, 1, 1], [], []>} : vector<16x32xf32>, vector<32x96xf32>, vector<16x96xf32> -> vector<16x96xf32>
    %248 = vector.broadcast %212 : vector<1x96xf32> to vector<16x96xf32>
    %249 = arith.addf %247, %248 : vector<16x96xf32>
    %250 = vector.extract_strided_slice %249 {offsets = [0, 32], sizes = [16, 32], strides = [1, 1]} : vector<16x96xf32> to vector<16x32xf32>
    %251 = tpu.transpose %250, [1, 0] : vector<16x32xf32> -> vector<32x16xf32>
    %cst_109 = arith.constant 0.000000e+00 : f32
    %252 = vector.broadcast %cst_109 : f32 to vector<16x32xf32>
    %253 = vector.extract_strided_slice %249 {offsets = [0, 0], sizes = [16, 8], strides = [1, 1]} : vector<16x96xf32> to vector<16x8xf32>
    %254 = vector.extract_strided_slice %251 {offsets = [0, 0], sizes = [8, 16], strides = [1, 1]} : vector<32x16xf32> to vector<8x16xf32>
    %255 = vector.extract_strided_slice %249 {offsets = [0, 64], sizes = [16, 8], strides = [1, 1]} : vector<16x96xf32> to vector<16x8xf32>
    %cst_110 = arith.constant dense<0.000000e+00> : vector<16x16xf32>
    %256 = tpu.matmul %253, %254, %cst_110 {dimension_numbers = #tpu.dot_dimension_numbers<[1], [0], [0], [1], [0, 0, 1, 1], [], []>} : vector<16x8xf32>, vector<8x16xf32>, vector<16x16xf32> -> vector<16x16xf32>
    %cst_111 = arith.constant 0.353553385 : f32
    %257 = vector.broadcast %cst_111 : f32 to vector<16x16xf32>
    %258 = arith.mulf %256, %257 : vector<16x16xf32>
    %259 = arith.addf %258, %2 : vector<16x16xf32>
    %cst_112 = arith.constant dense<0xFF800000> : vector<16xf32>
    %260 = vector.multi_reduction <maximumf>, %259, %cst_112 [1] : vector<16x16xf32> to vector<16xf32>
    %261 = vector.shape_cast %260 : vector<16xf32> to vector<16x1xf32>
    %262 = vector.broadcast %261 : vector<16x1xf32> to vector<16x16xf32>
    %263 = arith.subf %259, %262 : vector<16x16xf32>
    %264 = math.exp %263 : vector<16x16xf32>
    %cst_113 = arith.constant dense<0.000000e+00> : vector<16xf32>
    %265 = vector.multi_reduction <add>, %264, %cst_113 [1] : vector<16x16xf32> to vector<16xf32>
    %266 = vector.shape_cast %265 : vector<16xf32> to vector<16x1xf32>
    %267 = tpu.reciprocal %266 {approx = true} : vector<16x1xf32> -> vector<16x1xf32>
    %268 = vector.broadcast %267 : vector<16x1xf32> to vector<16x16xf32>
    %269 = arith.mulf %264, %268 : vector<16x16xf32>
    %cst_114 = arith.constant dense<0.000000e+00> : vector<16x8xf32>
    %270 = tpu.matmul %269, %255, %cst_114 {dimension_numbers = #tpu.dot_dimension_numbers<[1], [0], [0], [1], [0, 0, 1, 1], [], []>} : vector<16x16xf32>, vector<16x8xf32>, vector<16x8xf32> -> vector<16x8xf32>
    %271 = vector.extract_strided_slice %200 {offsets = [0, 0], sizes = [8, 32], strides = [1, 1]} : vector<32x32xf32> to vector<8x32xf32>
    %cst_115 = arith.constant dense<0.000000e+00> : vector<16x32xf32>
    %272 = tpu.matmul %270, %271, %cst_115 {dimension_numbers = #tpu.dot_dimension_numbers<[1], [0], [0], [1], [0, 0, 1, 1], [], []>} : vector<16x8xf32>, vector<8x32xf32>, vector<16x32xf32> -> vector<16x32xf32>
    %273 = arith.addf %252, %272 : vector<16x32xf32>
    %274 = vector.extract_strided_slice %249 {offsets = [0, 8], sizes = [16, 8], strides = [1, 1]} : vector<16x96xf32> to vector<16x8xf32>
    %275 = vector.extract_strided_slice %251 {offsets = [8, 0], sizes = [8, 16], strides = [1, 1]} : vector<32x16xf32> to vector<8x16xf32>
    %276 = vector.extract_strided_slice %249 {offsets = [0, 72], sizes = [16, 8], strides = [1, 1]} : vector<16x96xf32> to vector<16x8xf32>
    %cst_116 = arith.constant dense<0.000000e+00> : vector<16x16xf32>
    %277 = tpu.matmul %274, %275, %cst_116 {dimension_numbers = #tpu.dot_dimension_numbers<[1], [0], [0], [1], [0, 0, 1, 1], [], []>} : vector<16x8xf32>, vector<8x16xf32>, vector<16x16xf32> -> vector<16x16xf32>
    %cst_117 = arith.constant 0.353553385 : f32
    %278 = vector.broadcast %cst_117 : f32 to vector<16x16xf32>
    %279 = arith.mulf %277, %278 : vector<16x16xf32>
    %280 = arith.addf %279, %2 : vector<16x16xf32>
    %cst_118 = arith.constant dense<0xFF800000> : vector<16xf32>
    %281 = vector.multi_reduction <maximumf>, %280, %cst_118 [1] : vector<16x16xf32> to vector<16xf32>
    %282 = vector.shape_cast %281 : vector<16xf32> to vector<16x1xf32>
    %283 = vector.broadcast %282 : vector<16x1xf32> to vector<16x16xf32>
    %284 = arith.subf %280, %283 : vector<16x16xf32>
    %285 = math.exp %284 : vector<16x16xf32>
    %cst_119 = arith.constant dense<0.000000e+00> : vector<16xf32>
    %286 = vector.multi_reduction <add>, %285, %cst_119 [1] : vector<16x16xf32> to vector<16xf32>
    %287 = vector.shape_cast %286 : vector<16xf32> to vector<16x1xf32>
    %288 = tpu.reciprocal %287 {approx = true} : vector<16x1xf32> -> vector<16x1xf32>
    %289 = vector.broadcast %288 : vector<16x1xf32> to vector<16x16xf32>
    %290 = arith.mulf %285, %289 : vector<16x16xf32>
    %cst_120 = arith.constant dense<0.000000e+00> : vector<16x8xf32>
    %291 = tpu.matmul %290, %276, %cst_120 {dimension_numbers = #tpu.dot_dimension_numbers<[1], [0], [0], [1], [0, 0, 1, 1], [], []>} : vector<16x16xf32>, vector<16x8xf32>, vector<16x8xf32> -> vector<16x8xf32>
    %292 = vector.extract_strided_slice %200 {offsets = [8, 0], sizes = [8, 32], strides = [1, 1]} : vector<32x32xf32> to vector<8x32xf32>
    %cst_121 = arith.constant dense<0.000000e+00> : vector<16x32xf32>
    %293 = tpu.matmul %291, %292, %cst_121 {dimension_numbers = #tpu.dot_dimension_numbers<[1], [0], [0], [1], [0, 0, 1, 1], [], []>} : vector<16x8xf32>, vector<8x32xf32>, vector<16x32xf32> -> vector<16x32xf32>
    %294 = arith.addf %273, %293 : vector<16x32xf32>
    %295 = vector.extract_strided_slice %249 {offsets = [0, 16], sizes = [16, 8], strides = [1, 1]} : vector<16x96xf32> to vector<16x8xf32>
    %296 = vector.extract_strided_slice %251 {offsets = [16, 0], sizes = [8, 16], strides = [1, 1]} : vector<32x16xf32> to vector<8x16xf32>
    %297 = vector.extract_strided_slice %249 {offsets = [0, 80], sizes = [16, 8], strides = [1, 1]} : vector<16x96xf32> to vector<16x8xf32>
    %cst_122 = arith.constant dense<0.000000e+00> : vector<16x16xf32>
    %298 = tpu.matmul %295, %296, %cst_122 {dimension_numbers = #tpu.dot_dimension_numbers<[1], [0], [0], [1], [0, 0, 1, 1], [], []>} : vector<16x8xf32>, vector<8x16xf32>, vector<16x16xf32> -> vector<16x16xf32>
    %cst_123 = arith.constant 0.353553385 : f32
    %299 = vector.broadcast %cst_123 : f32 to vector<16x16xf32>
    %300 = arith.mulf %298, %299 : vector<16x16xf32>
    %301 = arith.addf %300, %2 : vector<16x16xf32>
    %cst_124 = arith.constant dense<0xFF800000> : vector<16xf32>
    %302 = vector.multi_reduction <maximumf>, %301, %cst_124 [1] : vector<16x16xf32> to vector<16xf32>
    %303 = vector.shape_cast %302 : vector<16xf32> to vector<16x1xf32>
    %304 = vector.broadcast %303 : vector<16x1xf32> to vector<16x16xf32>
    %305 = arith.subf %301, %304 : vector<16x16xf32>
    %306 = math.exp %305 : vector<16x16xf32>
    %cst_125 = arith.constant dense<0.000000e+00> : vector<16xf32>
    %307 = vector.multi_reduction <add>, %306, %cst_125 [1] : vector<16x16xf32> to vector<16xf32>
    %308 = vector.shape_cast %307 : vector<16xf32> to vector<16x1xf32>
    %309 = tpu.reciprocal %308 {approx = true} : vector<16x1xf32> -> vector<16x1xf32>
    %310 = vector.broadcast %309 : vector<16x1xf32> to vector<16x16xf32>
    %311 = arith.mulf %306, %310 : vector<16x16xf32>
    %cst_126 = arith.constant dense<0.000000e+00> : vector<16x8xf32>
    %312 = tpu.matmul %311, %297, %cst_126 {dimension_numbers = #tpu.dot_dimension_numbers<[1], [0], [0], [1], [0, 0, 1, 1], [], []>} : vector<16x16xf32>, vector<16x8xf32>, vector<16x8xf32> -> vector<16x8xf32>
    %313 = vector.extract_strided_slice %200 {offsets = [16, 0], sizes = [8, 32], strides = [1, 1]} : vector<32x32xf32> to vector<8x32xf32>
    %cst_127 = arith.constant dense<0.000000e+00> : vector<16x32xf32>
    %314 = tpu.matmul %312, %313, %cst_127 {dimension_numbers = #tpu.dot_dimension_numbers<[1], [0], [0], [1], [0, 0, 1, 1], [], []>} : vector<16x8xf32>, vector<8x32xf32>, vector<16x32xf32> -> vector<16x32xf32>
    %315 = arith.addf %294, %314 : vector<16x32xf32>
    %316 = vector.extract_strided_slice %249 {offsets = [0, 24], sizes = [16, 8], strides = [1, 1]} : vector<16x96xf32> to vector<16x8xf32>
    %317 = vector.extract_strided_slice %251 {offsets = [24, 0], sizes = [8, 16], strides = [1, 1]} : vector<32x16xf32> to vector<8x16xf32>
    %318 = vector.extract_strided_slice %249 {offsets = [0, 88], sizes = [16, 8], strides = [1, 1]} : vector<16x96xf32> to vector<16x8xf32>
    %cst_128 = arith.constant dense<0.000000e+00> : vector<16x16xf32>
    %319 = tpu.matmul %316, %317, %cst_128 {dimension_numbers = #tpu.dot_dimension_numbers<[1], [0], [0], [1], [0, 0, 1, 1], [], []>} : vector<16x8xf32>, vector<8x16xf32>, vector<16x16xf32> -> vector<16x16xf32>
    %cst_129 = arith.constant 0.353553385 : f32
    %320 = vector.broadcast %cst_129 : f32 to vector<16x16xf32>
    %321 = arith.mulf %319, %320 : vector<16x16xf32>
    %322 = arith.addf %321, %2 : vector<16x16xf32>
    %cst_130 = arith.constant dense<0xFF800000> : vector<16xf32>
    %323 = vector.multi_reduction <maximumf>, %322, %cst_130 [1] : vector<16x16xf32> to vector<16xf32>
    %324 = vector.shape_cast %323 : vector<16xf32> to vector<16x1xf32>
    %325 = vector.broadcast %324 : vector<16x1xf32> to vector<16x16xf32>
    %326 = arith.subf %322, %325 : vector<16x16xf32>
    %327 = math.exp %326 : vector<16x16xf32>
    %cst_131 = arith.constant dense<0.000000e+00> : vector<16xf32>
    %328 = vector.multi_reduction <add>, %327, %cst_131 [1] : vector<16x16xf32> to vector<16xf32>
    %329 = vector.shape_cast %328 : vector<16xf32> to vector<16x1xf32>
    %330 = tpu.reciprocal %329 {approx = true} : vector<16x1xf32> -> vector<16x1xf32>
    %331 = vector.broadcast %330 : vector<16x1xf32> to vector<16x16xf32>
    %332 = arith.mulf %327, %331 : vector<16x16xf32>
    %cst_132 = arith.constant dense<0.000000e+00> : vector<16x8xf32>
    %333 = tpu.matmul %332, %318, %cst_132 {dimension_numbers = #tpu.dot_dimension_numbers<[1], [0], [0], [1], [0, 0, 1, 1], [], []>} : vector<16x16xf32>, vector<16x8xf32>, vector<16x8xf32> -> vector<16x8xf32>
    %334 = vector.extract_strided_slice %200 {offsets = [24, 0], sizes = [8, 32], strides = [1, 1]} : vector<32x32xf32> to vector<8x32xf32>
    %cst_133 = arith.constant dense<0.000000e+00> : vector<16x32xf32>
    %335 = tpu.matmul %333, %334, %cst_133 {dimension_numbers = #tpu.dot_dimension_numbers<[1], [0], [0], [1], [0, 0, 1, 1], [], []>} : vector<16x8xf32>, vector<8x32xf32>, vector<16x32xf32> -> vector<16x32xf32>
    %336 = arith.addf %315, %335 : vector<16x32xf32>
    %337 = vector.broadcast %213 : vector<1x32xf32> to vector<16x32xf32>
    %338 = arith.addf %336, %337 : vector<16x32xf32>
    %339 = arith.addf %338, %226 : vector<16x32xf32>
    %cst_134 = arith.constant dense<0.000000e+00> : vector<16xf32>
    %340 = vector.multi_reduction <add>, %339, %cst_134 [1] : vector<16x32xf32> to vector<16xf32>
    %341 = vector.shape_cast %340 : vector<16xf32> to vector<16x1xf32>
    %cst_135 = arith.constant 3.200000e+01 : f32
    %342 = vector.broadcast %cst_135 : f32 to vector<16x1xf32>
    %343 = arith.divf %341, %342 : vector<16x1xf32>
    %344 = vector.broadcast %343 : vector<16x1xf32> to vector<16x32xf32>
    %345 = arith.subf %339, %344 : vector<16x32xf32>
    %346 = arith.mulf %345, %345 : vector<16x32xf32>
    %cst_136 = arith.constant dense<0.000000e+00> : vector<16xf32>
    %347 = vector.multi_reduction <add>, %346, %cst_136 [1] : vector<16x32xf32> to vector<16xf32>
    %348 = vector.shape_cast %347 : vector<16xf32> to vector<16x1xf32>
    %cst_137 = arith.constant 3.200000e+01 : f32
    %349 = vector.broadcast %cst_137 : f32 to vector<16x1xf32>
    %350 = arith.divf %348, %349 : vector<16x1xf32>
    %cst_138 = arith.constant 9.99999974E-6 : f32
    %351 = vector.broadcast %cst_138 : f32 to vector<16x1xf32>
    %352 = arith.addf %350, %351 : vector<16x1xf32>
    %353 = math.rsqrt %352 : vector<16x1xf32>
    %354 = vector.broadcast %353 : vector<16x1xf32> to vector<16x32xf32>
    %355 = arith.mulf %345, %354 : vector<16x32xf32>
    %356 = vector.broadcast %214 : vector<1x32xf32> to vector<16x32xf32>
    %357 = arith.mulf %355, %356 : vector<16x32xf32>
    %358 = vector.broadcast %215 : vector<1x32xf32> to vector<16x32xf32>
    %359 = arith.addf %357, %358 : vector<16x32xf32>
    %cst_139 = arith.constant dense<0.000000e+00> : vector<16x32xf32>
    %360 = tpu.matmul %359, %202, %cst_139 {dimension_numbers = #tpu.dot_dimension_numbers<[1], [0], [0], [1], [0, 0, 1, 1], [], []>} : vector<16x32xf32>, vector<32x32xf32>, vector<16x32xf32> -> vector<16x32xf32>
    %361 = vector.broadcast %216 : vector<1x32xf32> to vector<16x32xf32>
    %362 = arith.addf %360, %361 : vector<16x32xf32>
    %363 = arith.negf %362 : vector<16x32xf32>
    %364 = math.exp %363 : vector<16x32xf32>
    %cst_140 = arith.constant 1.000000e+00 : f32
    %365 = vector.broadcast %cst_140 : f32 to vector<16x32xf32>
    %366 = arith.addf %365, %364 : vector<16x32xf32>
    %367 = arith.divf %365, %366 : vector<16x32xf32>
    %368 = arith.mulf %362, %367 : vector<16x32xf32>
    %cst_141 = arith.constant dense<0.000000e+00> : vector<16x32xf32>
    %369 = tpu.matmul %368, %204, %cst_141 {dimension_numbers = #tpu.dot_dimension_numbers<[1], [0], [0], [1], [0, 0, 1, 1], [], []>} : vector<16x32xf32>, vector<32x32xf32>, vector<16x32xf32> -> vector<16x32xf32>
    %370 = vector.broadcast %217 : vector<1x32xf32> to vector<16x32xf32>
    %371 = arith.addf %369, %370 : vector<16x32xf32>
    %372 = arith.addf %371, %339 : vector<16x32xf32>
    %373 = arith.negf %372 : vector<16x32xf32>
    %374 = math.exp %373 : vector<16x32xf32>
    %cst_142 = arith.constant 1.000000e+00 : f32
    %375 = vector.broadcast %cst_142 : f32 to vector<16x32xf32>
    %376 = arith.addf %375, %374 : vector<16x32xf32>
    %377 = arith.divf %375, %376 : vector<16x32xf32>
    %378 = arith.mulf %372, %377 : vector<16x32xf32>
    %379 = arith.addf %378, %196 : vector<16x32xf32>
    %c2_143 = arith.constant 2 : index
    %c0_144 = arith.constant 0 : index
    %c0_145 = arith.constant 0 : index
    %c0_146 = arith.constant 0 : index
    %380 = vector.load %arg7[%c2_143, %c0_144, %c0_145, %c0_146] : memref<3x4x32x32xf32, #tpu.memory_space<vmem>>, vector<1x1x32x32xf32>
    %381 = vector.shape_cast %380 : vector<1x1x32x32xf32> to vector<32x32xf32>
    %c2_147 = arith.constant 2 : index
    %c1_148 = arith.constant 1 : index
    %c0_149 = arith.constant 0 : index
    %c0_150 = arith.constant 0 : index
    %382 = vector.load %arg7[%c2_147, %c1_148, %c0_149, %c0_150] : memref<3x4x32x32xf32, #tpu.memory_space<vmem>>, vector<1x1x32x32xf32>
    %383 = vector.shape_cast %382 : vector<1x1x32x32xf32> to vector<32x32xf32>
    %c2_151 = arith.constant 2 : index
    %c2_152 = arith.constant 2 : index
    %c0_153 = arith.constant 0 : index
    %c0_154 = arith.constant 0 : index
    %384 = vector.load %arg7[%c2_151, %c2_152, %c0_153, %c0_154] : memref<3x4x32x32xf32, #tpu.memory_space<vmem>>, vector<1x1x32x32xf32>
    %385 = vector.shape_cast %384 : vector<1x1x32x32xf32> to vector<32x32xf32>
    %c2_155 = arith.constant 2 : index
    %c3_156 = arith.constant 3 : index
    %c0_157 = arith.constant 0 : index
    %c0_158 = arith.constant 0 : index
    %386 = vector.load %arg7[%c2_155, %c3_156, %c0_157, %c0_158] : memref<3x4x32x32xf32, #tpu.memory_space<vmem>>, vector<1x1x32x32xf32>
    %387 = vector.shape_cast %386 : vector<1x1x32x32xf32> to vector<32x32xf32>
    %c2_159 = arith.constant 2 : index
    %c0_160 = arith.constant 0 : index
    %c0_161 = arith.constant 0 : index
    %388 = vector.load %arg8[%c2_159, %c0_160, %c0_161] : memref<3x32x96xf32, #tpu.memory_space<vmem>>, vector<1x32x96xf32>
    %389 = vector.shape_cast %388 : vector<1x32x96xf32> to vector<32x96xf32>
    %c2_162 = arith.constant 2 : index
    %c0_163 = arith.constant 0 : index
    %c0_164 = arith.constant 0 : index
    %390 = vector.load %arg9[%c2_162, %c0_163, %c0_164] : memref<3x9x96xf32, #tpu.memory_space<vmem>>, vector<1x9x96xf32>
    %391 = vector.shape_cast %390 : vector<1x9x96xf32> to vector<9x96xf32>
    %392 = vector.extract_strided_slice %391 {offsets = [0, 0], sizes = [1, 32], strides = [1, 1]} : vector<9x96xf32> to vector<1x32xf32>
    %393 = vector.extract_strided_slice %391 {offsets = [1, 0], sizes = [1, 32], strides = [1, 1]} : vector<9x96xf32> to vector<1x32xf32>
    %394 = vector.extract_strided_slice %391 {offsets = [2, 0], sizes = [1, 32], strides = [1, 1]} : vector<9x96xf32> to vector<1x32xf32>
    %395 = vector.extract_strided_slice %391 {offsets = [3, 0], sizes = [1, 96], strides = [1, 1]} : vector<9x96xf32> to vector<1x96xf32>
    %396 = vector.extract_strided_slice %391 {offsets = [4, 0], sizes = [1, 32], strides = [1, 1]} : vector<9x96xf32> to vector<1x32xf32>
    %397 = vector.extract_strided_slice %391 {offsets = [5, 0], sizes = [1, 32], strides = [1, 1]} : vector<9x96xf32> to vector<1x32xf32>
    %398 = vector.extract_strided_slice %391 {offsets = [6, 0], sizes = [1, 32], strides = [1, 1]} : vector<9x96xf32> to vector<1x32xf32>
    %399 = vector.extract_strided_slice %391 {offsets = [7, 0], sizes = [1, 32], strides = [1, 1]} : vector<9x96xf32> to vector<1x32xf32>
    %400 = vector.extract_strided_slice %391 {offsets = [8, 0], sizes = [1, 32], strides = [1, 1]} : vector<9x96xf32> to vector<1x32xf32>
    %cst_165 = arith.constant dense<0.000000e+00> : vector<16x32xf32>
    %401 = tpu.matmul %1, %379, %cst_165 {dimension_numbers = #tpu.dot_dimension_numbers<[1], [0], [0], [1], [0, 0, 1, 1], [], []>} : vector<16x16xf32>, vector<16x32xf32>, vector<16x32xf32> -> vector<16x32xf32>
    %c2_166 = arith.constant 2 : index
    %402 = memref.load %arg0[%c2_166] : memref<3xf32, #tpu.memory_space<smem>>
    %cst_167 = arith.constant 1.000000e+00 : f32
    %403 = arith.addf %cst_167, %402 : f32
    %404 = vector.broadcast %403 : f32 to vector<16x32xf32>
    %405 = arith.mulf %404, %379 : vector<16x32xf32>
    %406 = arith.addf %405, %401 : vector<16x32xf32>
    %cst_168 = arith.constant dense<0.000000e+00> : vector<16x32xf32>
    %407 = tpu.matmul %406, %381, %cst_168 {dimension_numbers = #tpu.dot_dimension_numbers<[1], [0], [0], [1], [0, 0, 1, 1], [], []>} : vector<16x32xf32>, vector<32x32xf32>, vector<16x32xf32> -> vector<16x32xf32>
    %408 = vector.broadcast %392 : vector<1x32xf32> to vector<16x32xf32>
    %409 = arith.addf %407, %408 : vector<16x32xf32>
    %cst_169 = arith.constant dense<0.000000e+00> : vector<16xf32>
    %410 = vector.multi_reduction <add>, %409, %cst_169 [1] : vector<16x32xf32> to vector<16xf32>
    %411 = vector.shape_cast %410 : vector<16xf32> to vector<16x1xf32>
    %cst_170 = arith.constant 3.200000e+01 : f32
    %412 = vector.broadcast %cst_170 : f32 to vector<16x1xf32>
    %413 = arith.divf %411, %412 : vector<16x1xf32>
    %414 = vector.broadcast %413 : vector<16x1xf32> to vector<16x32xf32>
    %415 = arith.subf %409, %414 : vector<16x32xf32>
    %416 = arith.mulf %415, %415 : vector<16x32xf32>
    %cst_171 = arith.constant dense<0.000000e+00> : vector<16xf32>
    %417 = vector.multi_reduction <add>, %416, %cst_171 [1] : vector<16x32xf32> to vector<16xf32>
    %418 = vector.shape_cast %417 : vector<16xf32> to vector<16x1xf32>
    %cst_172 = arith.constant 3.200000e+01 : f32
    %419 = vector.broadcast %cst_172 : f32 to vector<16x1xf32>
    %420 = arith.divf %418, %419 : vector<16x1xf32>
    %cst_173 = arith.constant 9.99999974E-6 : f32
    %421 = vector.broadcast %cst_173 : f32 to vector<16x1xf32>
    %422 = arith.addf %420, %421 : vector<16x1xf32>
    %423 = math.rsqrt %422 : vector<16x1xf32>
    %424 = vector.broadcast %423 : vector<16x1xf32> to vector<16x32xf32>
    %425 = arith.mulf %415, %424 : vector<16x32xf32>
    %426 = vector.broadcast %393 : vector<1x32xf32> to vector<16x32xf32>
    %427 = arith.mulf %425, %426 : vector<16x32xf32>
    %428 = vector.broadcast %394 : vector<1x32xf32> to vector<16x32xf32>
    %429 = arith.addf %427, %428 : vector<16x32xf32>
    %cst_174 = arith.constant dense<0.000000e+00> : vector<16x96xf32>
    %430 = tpu.matmul %429, %389, %cst_174 {dimension_numbers = #tpu.dot_dimension_numbers<[1], [0], [0], [1], [0, 0, 1, 1], [], []>} : vector<16x32xf32>, vector<32x96xf32>, vector<16x96xf32> -> vector<16x96xf32>
    %431 = vector.broadcast %395 : vector<1x96xf32> to vector<16x96xf32>
    %432 = arith.addf %430, %431 : vector<16x96xf32>
    %433 = vector.extract_strided_slice %432 {offsets = [0, 32], sizes = [16, 32], strides = [1, 1]} : vector<16x96xf32> to vector<16x32xf32>
    %434 = tpu.transpose %433, [1, 0] : vector<16x32xf32> -> vector<32x16xf32>
    %cst_175 = arith.constant 0.000000e+00 : f32
    %435 = vector.broadcast %cst_175 : f32 to vector<16x32xf32>
    %436 = vector.extract_strided_slice %432 {offsets = [0, 0], sizes = [16, 8], strides = [1, 1]} : vector<16x96xf32> to vector<16x8xf32>
    %437 = vector.extract_strided_slice %434 {offsets = [0, 0], sizes = [8, 16], strides = [1, 1]} : vector<32x16xf32> to vector<8x16xf32>
    %438 = vector.extract_strided_slice %432 {offsets = [0, 64], sizes = [16, 8], strides = [1, 1]} : vector<16x96xf32> to vector<16x8xf32>
    %cst_176 = arith.constant dense<0.000000e+00> : vector<16x16xf32>
    %439 = tpu.matmul %436, %437, %cst_176 {dimension_numbers = #tpu.dot_dimension_numbers<[1], [0], [0], [1], [0, 0, 1, 1], [], []>} : vector<16x8xf32>, vector<8x16xf32>, vector<16x16xf32> -> vector<16x16xf32>
    %cst_177 = arith.constant 0.353553385 : f32
    %440 = vector.broadcast %cst_177 : f32 to vector<16x16xf32>
    %441 = arith.mulf %439, %440 : vector<16x16xf32>
    %442 = arith.addf %441, %2 : vector<16x16xf32>
    %cst_178 = arith.constant dense<0xFF800000> : vector<16xf32>
    %443 = vector.multi_reduction <maximumf>, %442, %cst_178 [1] : vector<16x16xf32> to vector<16xf32>
    %444 = vector.shape_cast %443 : vector<16xf32> to vector<16x1xf32>
    %445 = vector.broadcast %444 : vector<16x1xf32> to vector<16x16xf32>
    %446 = arith.subf %442, %445 : vector<16x16xf32>
    %447 = math.exp %446 : vector<16x16xf32>
    %cst_179 = arith.constant dense<0.000000e+00> : vector<16xf32>
    %448 = vector.multi_reduction <add>, %447, %cst_179 [1] : vector<16x16xf32> to vector<16xf32>
    %449 = vector.shape_cast %448 : vector<16xf32> to vector<16x1xf32>
    %450 = tpu.reciprocal %449 {approx = true} : vector<16x1xf32> -> vector<16x1xf32>
    %451 = vector.broadcast %450 : vector<16x1xf32> to vector<16x16xf32>
    %452 = arith.mulf %447, %451 : vector<16x16xf32>
    %cst_180 = arith.constant dense<0.000000e+00> : vector<16x8xf32>
    %453 = tpu.matmul %452, %438, %cst_180 {dimension_numbers = #tpu.dot_dimension_numbers<[1], [0], [0], [1], [0, 0, 1, 1], [], []>} : vector<16x16xf32>, vector<16x8xf32>, vector<16x8xf32> -> vector<16x8xf32>
    %454 = vector.extract_strided_slice %383 {offsets = [0, 0], sizes = [8, 32], strides = [1, 1]} : vector<32x32xf32> to vector<8x32xf32>
    %cst_181 = arith.constant dense<0.000000e+00> : vector<16x32xf32>
    %455 = tpu.matmul %453, %454, %cst_181 {dimension_numbers = #tpu.dot_dimension_numbers<[1], [0], [0], [1], [0, 0, 1, 1], [], []>} : vector<16x8xf32>, vector<8x32xf32>, vector<16x32xf32> -> vector<16x32xf32>
    %456 = arith.addf %435, %455 : vector<16x32xf32>
    %457 = vector.extract_strided_slice %432 {offsets = [0, 8], sizes = [16, 8], strides = [1, 1]} : vector<16x96xf32> to vector<16x8xf32>
    %458 = vector.extract_strided_slice %434 {offsets = [8, 0], sizes = [8, 16], strides = [1, 1]} : vector<32x16xf32> to vector<8x16xf32>
    %459 = vector.extract_strided_slice %432 {offsets = [0, 72], sizes = [16, 8], strides = [1, 1]} : vector<16x96xf32> to vector<16x8xf32>
    %cst_182 = arith.constant dense<0.000000e+00> : vector<16x16xf32>
    %460 = tpu.matmul %457, %458, %cst_182 {dimension_numbers = #tpu.dot_dimension_numbers<[1], [0], [0], [1], [0, 0, 1, 1], [], []>} : vector<16x8xf32>, vector<8x16xf32>, vector<16x16xf32> -> vector<16x16xf32>
    %cst_183 = arith.constant 0.353553385 : f32
    %461 = vector.broadcast %cst_183 : f32 to vector<16x16xf32>
    %462 = arith.mulf %460, %461 : vector<16x16xf32>
    %463 = arith.addf %462, %2 : vector<16x16xf32>
    %cst_184 = arith.constant dense<0xFF800000> : vector<16xf32>
    %464 = vector.multi_reduction <maximumf>, %463, %cst_184 [1] : vector<16x16xf32> to vector<16xf32>
    %465 = vector.shape_cast %464 : vector<16xf32> to vector<16x1xf32>
    %466 = vector.broadcast %465 : vector<16x1xf32> to vector<16x16xf32>
    %467 = arith.subf %463, %466 : vector<16x16xf32>
    %468 = math.exp %467 : vector<16x16xf32>
    %cst_185 = arith.constant dense<0.000000e+00> : vector<16xf32>
    %469 = vector.multi_reduction <add>, %468, %cst_185 [1] : vector<16x16xf32> to vector<16xf32>
    %470 = vector.shape_cast %469 : vector<16xf32> to vector<16x1xf32>
    %471 = tpu.reciprocal %470 {approx = true} : vector<16x1xf32> -> vector<16x1xf32>
    %472 = vector.broadcast %471 : vector<16x1xf32> to vector<16x16xf32>
    %473 = arith.mulf %468, %472 : vector<16x16xf32>
    %cst_186 = arith.constant dense<0.000000e+00> : vector<16x8xf32>
    %474 = tpu.matmul %473, %459, %cst_186 {dimension_numbers = #tpu.dot_dimension_numbers<[1], [0], [0], [1], [0, 0, 1, 1], [], []>} : vector<16x16xf32>, vector<16x8xf32>, vector<16x8xf32> -> vector<16x8xf32>
    %475 = vector.extract_strided_slice %383 {offsets = [8, 0], sizes = [8, 32], strides = [1, 1]} : vector<32x32xf32> to vector<8x32xf32>
    %cst_187 = arith.constant dense<0.000000e+00> : vector<16x32xf32>
    %476 = tpu.matmul %474, %475, %cst_187 {dimension_numbers = #tpu.dot_dimension_numbers<[1], [0], [0], [1], [0, 0, 1, 1], [], []>} : vector<16x8xf32>, vector<8x32xf32>, vector<16x32xf32> -> vector<16x32xf32>
    %477 = arith.addf %456, %476 : vector<16x32xf32>
    %478 = vector.extract_strided_slice %432 {offsets = [0, 16], sizes = [16, 8], strides = [1, 1]} : vector<16x96xf32> to vector<16x8xf32>
    %479 = vector.extract_strided_slice %434 {offsets = [16, 0], sizes = [8, 16], strides = [1, 1]} : vector<32x16xf32> to vector<8x16xf32>
    %480 = vector.extract_strided_slice %432 {offsets = [0, 80], sizes = [16, 8], strides = [1, 1]} : vector<16x96xf32> to vector<16x8xf32>
    %cst_188 = arith.constant dense<0.000000e+00> : vector<16x16xf32>
    %481 = tpu.matmul %478, %479, %cst_188 {dimension_numbers = #tpu.dot_dimension_numbers<[1], [0], [0], [1], [0, 0, 1, 1], [], []>} : vector<16x8xf32>, vector<8x16xf32>, vector<16x16xf32> -> vector<16x16xf32>
    %cst_189 = arith.constant 0.353553385 : f32
    %482 = vector.broadcast %cst_189 : f32 to vector<16x16xf32>
    %483 = arith.mulf %481, %482 : vector<16x16xf32>
    %484 = arith.addf %483, %2 : vector<16x16xf32>
    %cst_190 = arith.constant dense<0xFF800000> : vector<16xf32>
    %485 = vector.multi_reduction <maximumf>, %484, %cst_190 [1] : vector<16x16xf32> to vector<16xf32>
    %486 = vector.shape_cast %485 : vector<16xf32> to vector<16x1xf32>
    %487 = vector.broadcast %486 : vector<16x1xf32> to vector<16x16xf32>
    %488 = arith.subf %484, %487 : vector<16x16xf32>
    %489 = math.exp %488 : vector<16x16xf32>
    %cst_191 = arith.constant dense<0.000000e+00> : vector<16xf32>
    %490 = vector.multi_reduction <add>, %489, %cst_191 [1] : vector<16x16xf32> to vector<16xf32>
    %491 = vector.shape_cast %490 : vector<16xf32> to vector<16x1xf32>
    %492 = tpu.reciprocal %491 {approx = true} : vector<16x1xf32> -> vector<16x1xf32>
    %493 = vector.broadcast %492 : vector<16x1xf32> to vector<16x16xf32>
    %494 = arith.mulf %489, %493 : vector<16x16xf32>
    %cst_192 = arith.constant dense<0.000000e+00> : vector<16x8xf32>
    %495 = tpu.matmul %494, %480, %cst_192 {dimension_numbers = #tpu.dot_dimension_numbers<[1], [0], [0], [1], [0, 0, 1, 1], [], []>} : vector<16x16xf32>, vector<16x8xf32>, vector<16x8xf32> -> vector<16x8xf32>
    %496 = vector.extract_strided_slice %383 {offsets = [16, 0], sizes = [8, 32], strides = [1, 1]} : vector<32x32xf32> to vector<8x32xf32>
    %cst_193 = arith.constant dense<0.000000e+00> : vector<16x32xf32>
    %497 = tpu.matmul %495, %496, %cst_193 {dimension_numbers = #tpu.dot_dimension_numbers<[1], [0], [0], [1], [0, 0, 1, 1], [], []>} : vector<16x8xf32>, vector<8x32xf32>, vector<16x32xf32> -> vector<16x32xf32>
    %498 = arith.addf %477, %497 : vector<16x32xf32>
    %499 = vector.extract_strided_slice %432 {offsets = [0, 24], sizes = [16, 8], strides = [1, 1]} : vector<16x96xf32> to vector<16x8xf32>
    %500 = vector.extract_strided_slice %434 {offsets = [24, 0], sizes = [8, 16], strides = [1, 1]} : vector<32x16xf32> to vector<8x16xf32>
    %501 = vector.extract_strided_slice %432 {offsets = [0, 88], sizes = [16, 8], strides = [1, 1]} : vector<16x96xf32> to vector<16x8xf32>
    %cst_194 = arith.constant dense<0.000000e+00> : vector<16x16xf32>
    %502 = tpu.matmul %499, %500, %cst_194 {dimension_numbers = #tpu.dot_dimension_numbers<[1], [0], [0], [1], [0, 0, 1, 1], [], []>} : vector<16x8xf32>, vector<8x16xf32>, vector<16x16xf32> -> vector<16x16xf32>
    %cst_195 = arith.constant 0.353553385 : f32
    %503 = vector.broadcast %cst_195 : f32 to vector<16x16xf32>
    %504 = arith.mulf %502, %503 : vector<16x16xf32>
    %505 = arith.addf %504, %2 : vector<16x16xf32>
    %cst_196 = arith.constant dense<0xFF800000> : vector<16xf32>
    %506 = vector.multi_reduction <maximumf>, %505, %cst_196 [1] : vector<16x16xf32> to vector<16xf32>
    %507 = vector.shape_cast %506 : vector<16xf32> to vector<16x1xf32>
    %508 = vector.broadcast %507 : vector<16x1xf32> to vector<16x16xf32>
    %509 = arith.subf %505, %508 : vector<16x16xf32>
    %510 = math.exp %509 : vector<16x16xf32>
    %cst_197 = arith.constant dense<0.000000e+00> : vector<16xf32>
    %511 = vector.multi_reduction <add>, %510, %cst_197 [1] : vector<16x16xf32> to vector<16xf32>
    %512 = vector.shape_cast %511 : vector<16xf32> to vector<16x1xf32>
    %513 = tpu.reciprocal %512 {approx = true} : vector<16x1xf32> -> vector<16x1xf32>
    %514 = vector.broadcast %513 : vector<16x1xf32> to vector<16x16xf32>
    %515 = arith.mulf %510, %514 : vector<16x16xf32>
    %cst_198 = arith.constant dense<0.000000e+00> : vector<16x8xf32>
    %516 = tpu.matmul %515, %501, %cst_198 {dimension_numbers = #tpu.dot_dimension_numbers<[1], [0], [0], [1], [0, 0, 1, 1], [], []>} : vector<16x16xf32>, vector<16x8xf32>, vector<16x8xf32> -> vector<16x8xf32>
    %517 = vector.extract_strided_slice %383 {offsets = [24, 0], sizes = [8, 32], strides = [1, 1]} : vector<32x32xf32> to vector<8x32xf32>
    %cst_199 = arith.constant dense<0.000000e+00> : vector<16x32xf32>
    %518 = tpu.matmul %516, %517, %cst_199 {dimension_numbers = #tpu.dot_dimension_numbers<[1], [0], [0], [1], [0, 0, 1, 1], [], []>} : vector<16x8xf32>, vector<8x32xf32>, vector<16x32xf32> -> vector<16x32xf32>
    %519 = arith.addf %498, %518 : vector<16x32xf32>
    %520 = vector.broadcast %396 : vector<1x32xf32> to vector<16x32xf32>
    %521 = arith.addf %519, %520 : vector<16x32xf32>
    %522 = arith.addf %521, %409 : vector<16x32xf32>
    %cst_200 = arith.constant dense<0.000000e+00> : vector<16xf32>
    %523 = vector.multi_reduction <add>, %522, %cst_200 [1] : vector<16x32xf32> to vector<16xf32>
    %524 = vector.shape_cast %523 : vector<16xf32> to vector<16x1xf32>
    %cst_201 = arith.constant 3.200000e+01 : f32
    %525 = vector.broadcast %cst_201 : f32 to vector<16x1xf32>
    %526 = arith.divf %524, %525 : vector<16x1xf32>
    %527 = vector.broadcast %526 : vector<16x1xf32> to vector<16x32xf32>
    %528 = arith.subf %522, %527 : vector<16x32xf32>
    %529 = arith.mulf %528, %528 : vector<16x32xf32>
    %cst_202 = arith.constant dense<0.000000e+00> : vector<16xf32>
    %530 = vector.multi_reduction <add>, %529, %cst_202 [1] : vector<16x32xf32> to vector<16xf32>
    %531 = vector.shape_cast %530 : vector<16xf32> to vector<16x1xf32>
    %cst_203 = arith.constant 3.200000e+01 : f32
    %532 = vector.broadcast %cst_203 : f32 to vector<16x1xf32>
    %533 = arith.divf %531, %532 : vector<16x1xf32>
    %cst_204 = arith.constant 9.99999974E-6 : f32
    %534 = vector.broadcast %cst_204 : f32 to vector<16x1xf32>
    %535 = arith.addf %533, %534 : vector<16x1xf32>
    %536 = math.rsqrt %535 : vector<16x1xf32>
    %537 = vector.broadcast %536 : vector<16x1xf32> to vector<16x32xf32>
    %538 = arith.mulf %528, %537 : vector<16x32xf32>
    %539 = vector.broadcast %397 : vector<1x32xf32> to vector<16x32xf32>
    %540 = arith.mulf %538, %539 : vector<16x32xf32>
    %541 = vector.broadcast %398 : vector<1x32xf32> to vector<16x32xf32>
    %542 = arith.addf %540, %541 : vector<16x32xf32>
    %cst_205 = arith.constant dense<0.000000e+00> : vector<16x32xf32>
    %543 = tpu.matmul %542, %385, %cst_205 {dimension_numbers = #tpu.dot_dimension_numbers<[1], [0], [0], [1], [0, 0, 1, 1], [], []>} : vector<16x32xf32>, vector<32x32xf32>, vector<16x32xf32> -> vector<16x32xf32>
    %544 = vector.broadcast %399 : vector<1x32xf32> to vector<16x32xf32>
    %545 = arith.addf %543, %544 : vector<16x32xf32>
    %546 = arith.negf %545 : vector<16x32xf32>
    %547 = math.exp %546 : vector<16x32xf32>
    %cst_206 = arith.constant 1.000000e+00 : f32
    %548 = vector.broadcast %cst_206 : f32 to vector<16x32xf32>
    %549 = arith.addf %548, %547 : vector<16x32xf32>
    %550 = arith.divf %548, %549 : vector<16x32xf32>
    %551 = arith.mulf %545, %550 : vector<16x32xf32>
    %cst_207 = arith.constant dense<0.000000e+00> : vector<16x32xf32>
    %552 = tpu.matmul %551, %387, %cst_207 {dimension_numbers = #tpu.dot_dimension_numbers<[1], [0], [0], [1], [0, 0, 1, 1], [], []>} : vector<16x32xf32>, vector<32x32xf32>, vector<16x32xf32> -> vector<16x32xf32>
    %553 = vector.broadcast %400 : vector<1x32xf32> to vector<16x32xf32>
    %554 = arith.addf %552, %553 : vector<16x32xf32>
    %555 = arith.addf %554, %522 : vector<16x32xf32>
    %556 = arith.addf %555, %379 : vector<16x32xf32>
    %557 = math.tanh %556 : vector<16x32xf32>
    %c0_208 = arith.constant 0 : index
    %c0_209 = arith.constant 0 : index
    %558 = vector.load %arg10[%c0_208, %c0_209] : memref<16x32xf32, #tpu.memory_space<vmem>>, vector<16x32xf32>
    tpu.vector_store %arg10[%c0_208, %c0_209], %557 {strides = array<i32>} : memref<16x32xf32, #tpu.memory_space<vmem>>, vector<16x32xf32>,
    return
  }
}

</mosaic_0001>

<llo_original>
// kernel: tpu_custom_call.1
$region0: #{tpu_custom_call.1}
  #allocation0 [shape = 'u32[]', space=smem, size = 0x4, offset = 0x4, fixed_abs, tag = 'smem constant byte address 0x4 - core index']
  #allocation1 [shape = 'u32[144,128]{1,0:T(1,128)}', space=vmem, size = 0x12000, scoped, tag = 'internal scratch']
  %s0 = inlined_call_operand.hbm [shape: f32[3], index: 0, kind: input, shape index: {}]
  %s1 = inlined_call_operand.vmem [shape: f32[16,4], index: 1, kind: input, shape index: {}]
  %s2 = inlined_call_operand.vmem [shape: f32[16,16], index: 2, kind: input, shape index: {}]
  %s3 = inlined_call_operand.hbm [shape: f32[16,16], index: 3, kind: input, shape index: {}]
  %s4 = inlined_call_operand.vmem [shape: f32[4,32], index: 4, kind: input, shape index: {}]
  %s5 = inlined_call_operand.hbm [shape: f32[32,32], index: 5, kind: input, shape index: {}]
  %s6 = inlined_call_operand.vmem [shape: f32[2,32], index: 6, kind: input, shape index: {}]
  %s7 = inlined_call_operand.hbm [shape: f32[3,4,32,32], index: 7, kind: input, shape index: {}]
  %s8 = inlined_call_operand.vmem [shape: f32[3,32,96], index: 8, kind: input, shape index: {}]
  %s9 = inlined_call_operand.vmem [shape: f32[3,9,96], index: 9, kind: input, shape index: {}]
  %s10 = inlined_call_operand.hbm [shape: f32[16,32], index: 10, kind: output, shape index: {}]
  %s11 = sld [smem:[#allocation0]]
  $region66: #{tpu_custom_call.1} parent=0
    _
  %s13 = ssub.s32 1, %s11
  %s14 = scalar_select 0, %s13, %s11
  $region1: #{tpu_custom_call.1} parent=0
    #allocation2 [shape = 'u8[512]{0}', space=smem, size = 0x200, scoped, tag = 'input window, operand 0, single buffered']
    #allocation3 [shape = 's32[1]{0}', space=sflag, size = 0x4, scoped, tag = 'scoped memory for tpu_custom_call.1']
    #allocation4 [shape = 's32[1]{0}', space=sflag, size = 0x4, scoped, tag = 'scoped memory for tpu_custom_call.1']
    #allocation5 [shape = 's32[1]{0}', space=sflag, size = 0x4, scoped, tag = 'scoped memory for tpu_custom_call.1']
    #allocation6 [shape = 'u8[8192]{0}', space=vmem, size = 0x2000, scoped, tag = 'input window, operand 3, single buffered']
    #allocation7 [shape = 'u8[16384]{0}', space=vmem, size = 0x4000, scoped, tag = 'input window, operand 5, single buffered']
    #allocation8 [shape = 's32[1]{0}', space=sflag, size = 0x4, scoped, tag = 'scoped memory for tpu_custom_call.1']
    #allocation9 [shape = 'u8[196608]{0}', space=vmem, size = 0x30000, scoped, tag = 'input window, operand 7, single buffered']
    #allocation10 [shape = 'u8[8192]{0}', space=vmem, size = 0x2000, scoped, tag = 'output window, operand 0, single buffered']
    %15 = vsyncpa [#allocation5], 0
    %16 = vsyncpa [#allocation3], 0
    %17 = vsyncpa [#allocation8], 0
    %18 = vsyncpa [#allocation4], 0
    // Predicated region
    $region2: #{tpu_custom_call.1} parent=1 // pred_check
      _
    $region3: #{tpu_custom_call.1} parent=1 // pred_check_branch
      %20 = sbr.rel (0) target = $region5
    $region4: #{tpu_custom_call.1} parent=1 // pred_region
      %s22 = ssub.s32 16, 16
      %23 = vsyncadd [#allocation5], %s22
      %26 = dma.hbm_to_smem %s0, 16, [#allocation2], [#allocation5]
    $region5: #{tpu_custom_call.1} parent=1 // pred_fallthru
      _
    // Predicated region
    $region6: #{tpu_custom_call.1} parent=1 // pred_check
      _
    $region7: #{tpu_custom_call.1} parent=1 // pred_check_branch
      %28 = sbr.rel (0) target = $region9
    $region8: #{tpu_custom_call.1} parent=1 // pred_region
      _
    $region9: #{tpu_custom_call.1} parent=1 // pred_fallthru
      _
    // Predicated region
    $region10: #{tpu_custom_call.1} parent=1 // pred_check
      _
    $region11: #{tpu_custom_call.1} parent=1 // pred_check_branch
      %30 = sbr.rel (0) target = $region13
    $region12: #{tpu_custom_call.1} parent=1 // pred_region
      _
    $region13: #{tpu_custom_call.1} parent=1 // pred_fallthru
      _
    // Predicated region
    $region14: #{tpu_custom_call.1} parent=1 // pred_check
      _
    $region15: #{tpu_custom_call.1} parent=1 // pred_check_branch
      %32 = sbr.rel (0) target = $region17
    $region16: #{tpu_custom_call.1} parent=1 // pred_region
      %s34 = ssub.s32 256, 256
      %35 = vsyncadd [#allocation3], %s34
      %s36 = sshll.u32 [#allocation6], 4
      %s37 = int_to_ptr.vmem [resolvable:$true] %s36
      %42 = dma.hbm_to_vmem [thread:$0]  %s3, 256, %s37, [#allocation3], 128, 128, 8
    $region17: #{tpu_custom_call.1} parent=1 // pred_fallthru
      _
    // Predicated region
    $region18: #{tpu_custom_call.1} parent=1 // pred_check
      _
    $region19: #{tpu_custom_call.1} parent=1 // pred_check_branch
      %44 = sbr.rel (0) target = $region21
    $region20: #{tpu_custom_call.1} parent=1 // pred_region
      _
    $region21: #{tpu_custom_call.1} parent=1 // pred_fallthru
      _
    // Predicated region
    $region22: #{tpu_custom_call.1} parent=1 // pred_check
      _
    $region23: #{tpu_custom_call.1} parent=1 // pred_check_branch
      %46 = sbr.rel (0) target = $region25
    $region24: #{tpu_custom_call.1} parent=1 // pred_region
      %s48 = ssub.s32 512, 512
      %49 = vsyncadd [#allocation8], %s48
      %s50 = sshll.u32 [#allocation7], 4
      %s51 = int_to_ptr.vmem [resolvable:$true] %s50
      %56 = dma.hbm_to_vmem [thread:$0]  %s5, 512, %s51, [#allocation8], 128, 128, 8
    $region25: #{tpu_custom_call.1} parent=1 // pred_fallthru
      _
    // Predicated region
    $region26: #{tpu_custom_call.1} parent=1 // pred_check
      _
    $region27: #{tpu_custom_call.1} parent=1 // pred_check_branch
      %58 = sbr.rel (0) target = $region29
    $region28: #{tpu_custom_call.1} parent=1 // pred_region
      _
    $region29: #{tpu_custom_call.1} parent=1 // pred_fallthru
      _
    // Predicated region
    $region30: #{tpu_custom_call.1} parent=1 // pred_check
      _
    $region31: #{tpu_custom_call.1} parent=1 // pred_check_branch
      %60 = sbr.rel (0) target = $region33
    $region32: #{tpu_custom_call.1} parent=1 // pred_region
      %s62 = ssub.s32 6144, 6144
      %63 = vsyncadd [#allocation8], %s62
      %s64 = sshll.u32 [#allocation9], 4
      %s65 = int_to_ptr.vmem [resolvable:$true] %s64
      %70 = dma.hbm_to_vmem [thread:$0]  %s7, 6144, %s65, [#allocation8], 128, 128, 8
    $region33: #{tpu_custom_call.1} parent=1 // pred_fallthru
      _
    // Predicated region
    $region34: #{tpu_custom_call.1} parent=1 // pred_check
      _
    $region35: #{tpu_custom_call.1} parent=1 // pred_check_branch
      %72 = sbr.rel (0) target = $region37
    $region36: #{tpu_custom_call.1} parent=1 // pred_region
      _
    $region37: #{tpu_custom_call.1} parent=1 // pred_fallthru
      _
    // Predicated region
    $region38: #{tpu_custom_call.1} parent=1 // pred_check
      _
    $region39: #{tpu_custom_call.1} parent=1 // pred_check_branch
      %74 = sbr.rel (0) target = $region41
    $region40: #{tpu_custom_call.1} parent=1 // pred_region
      _
    $region41: #{tpu_custom_call.1} parent=1 // pred_fallthru
      _
    // Predicated region
    $region42: #{tpu_custom_call.1} parent=1 // pred_check
      _
    $region43: #{tpu_custom_call.1} parent=1 // pred_check_branch
      %76 = sbr.rel (0) target = $region45
    $region44: #{tpu_custom_call.1} parent=1 // pred_region
      %77 = dma.done [#allocation5], 16
    $region45: #{tpu_custom_call.1} parent=1 // pred_fallthru
      _
    // Predicated region
    $region46: #{tpu_custom_call.1} parent=1 // pred_check
      _
    $region47: #{tpu_custom_call.1} parent=1 // pred_check_branch
      %79 = sbr.rel (0) target = $region49
    $region48: #{tpu_custom_call.1} parent=1 // pred_region
      %80 = dma.done [#allocation3], 256
    $region49: #{tpu_custom_call.1} parent=1 // pred_fallthru
      _
    // Predicated region
    $region50: #{tpu_custom_call.1} parent=1 // pred_check
      _
    $region51: #{tpu_custom_call.1} parent=1 // pred_check_branch
      %82 = sbr.rel (0) target = $region53
    $region52: #{tpu_custom_call.1} parent=1 // pred_region
      %83 = dma.done [#allocation8], 512
    $region53: #{tpu_custom_call.1} parent=1 // pred_fallthru
      _
    // Predicated region
    $region54: #{tpu_custom_call.1} parent=1 // pred_check
      _
    $region55: #{tpu_custom_call.1} parent=1 // pred_check_branch
      %85 = sbr.rel (0) target = $region57
    $region56: #{tpu_custom_call.1} parent=1 // pred_region
      %86 = dma.done [#allocation8], 6144
    $region57: #{tpu_custom_call.1} parent=1 // pred_fallthru
      _
    %87 = sfence
    %v88 = vld [vmem:[%s1] sm:$0xff]
    %v89 = vld [vmem:[%s1 + $0x8] sm:$0xff]
    %v90 = vld [vmem:[#allocation6] sm:$0xff]
    %v91 = vld [vmem:[#allocation6 + $0x8] sm:$0xff]
    %v92 = vld [vmem:[%s2] sm:$0xff]
    %v93 = vld [vmem:[%s2 + $0x8] sm:$0xff]
    %v94 = vld [vmem:[%s4] sm:$0xf]
    %v95 = vld [vmem:[%s6] sm:$0x1]
    %v96 = vlaneseq
    %v97 = vshrl.u32 %v96, 7
    %v98 = vsub.s32 0, %v97
    %v99 = vrot.slane %v95, %v98
    %vm100 = vcmask 31744
    %v102 = vsel %vm100, %v88, 0
    %v105 = vsel %vm100, %v89, 0
    %vm107 = vcmask 1043456
    %v109 = vsel %vm107, %v94, 0
    %111 = vmatprep.subr.mxu0 0.0
    %112 = vmatpush1.msra.mxu0 0.0
    %113 = vmatprep.subr.mxu0 0.0
    %114 = vmatpush1.msra.mxu0 0.0
    %115 = vmatprep.subr.mxu0 0.0
    %116 = vmatpush1.msra.mxu0 0.0
    %117 = vmatprep.subr.mxu0 0.0
    %118 = vmatpush1.msra.mxu0 0.0
    %119 = vmatprep.subr.mxu0 0.0
    %120 = vmatpush1.msra.mxu0 0.0
    %121 = vmatprep.subr.mxu0 0.0
    %122 = vmatpush1.msra.mxu0 0.0
    %123 = vmatprep.subr.mxu0 0.0
    %124 = vmatpush1.msra.mxu0 0.0
    %125 = vmatprep.subr.mxu0 0.0
    %126 = vmatpush1.msra.mxu0 0.0
    %127 = vmatprep.subr.mxu0 0.0
    %128 = vmatpush1.msra.mxu0 0.0
    %129 = vmatprep.subr.mxu0 0.0
    %130 = vmatpush1.msra.mxu0 0.0
    %131 = vmatprep.subr.mxu0 0.0
    %132 = vmatpush1.msra.mxu0 0.0
    %133 = vmatprep.subr.mxu0 0.0
    %134 = vmatpush1.msra.mxu0 0.0
    %135 = vmatprep.subr.mxu0 0.0
    %136 = vmatpush1.msra.mxu0 0.0
    %137 = vmatprep.subr.mxu0 0.0
    %138 = vmatpush1.msra.mxu0 0.0
    %139 = vmatprep.subr.mxu0 0.0
    %140 = vmatpush1.msra.mxu0 0.0
    %141 = vmatprep.subr.mxu0 0.0
    %142 = vmatpush1.msra.mxu0 %v109
    %143 = vmatprep.subr.mxu0 0.0
    %144 = vmatpush2.msra.mxu0 0.0
    %145 = vmatprep.subr.mxu0 0.0
    %146 = vmatpush2.msra.mxu0 0.0
    %147 = vmatprep.subr.mxu0 0.0
    %148 = vmatpush2.msra.mxu0 0.0
    %149 = vmatprep.subr.mxu0 0.0
    %150 = vmatpush2.msra.mxu0 0.0
    %151 = vmatprep.subr.mxu0 0.0
    %152 = vmatpush2.msra.mxu0 0.0
    %153 = vmatprep.subr.mxu0 0.0
    %154 = vmatpush2.msra.mxu0 0.0
    %155 = vmatprep.subr.mxu0 0.0
    %156 = vmatpush2.msra.mxu0 0.0
    %157 = vmatprep.subr.mxu0 0.0
    %158 = vmatpush2.msra.mxu0 0.0
    %159 = vmatprep.subr.mxu0 0.0
    %160 = vmatpush2.msra.mxu0 0.0
    %161 = vmatprep.subr.mxu0 0.0
    %162 = vmatpush2.msra.mxu0 0.0
    %163 = vmatprep.subr.mxu0 0.0
    %164 = vmatpush2.msra.mxu0 0.0
    %165 = vmatprep.subr.mxu0 0.0
    %166 = vmatpush2.msra.mxu0 0.0
    %167 = vmatprep.subr.mxu0 0.0
    %168 = vmatpush2.msra.mxu0 0.0
    %169 = vmatprep.subr.mxu0 0.0
    %170 = vmatpush2.msra.mxu0 0.0
    %171 = vmatprep.subr.mxu0 0.0
    %172 = vmatpush2.msra.mxu0 0.0
    %173 = vmatprep.subr.mxu0 0.0
    %174 = vmatpush2.msra.mxu0 0.0
    %175 = vmatprep.mubr.f32.mxu0 0.0
    %176 = vmatmul.mubr.f32.gmra.mxu0 %v102
    %v177 = vpop.f32.mrf.mxu0
    %v178 = vadd.f32 %v99, %v177
    %v179 = vpop.f32.mrf.mxu0
    %180 = vmatprep.mubr.f32.mxu0 0.0
    %181 = vmatmul.mubr.f32.gmra.mxu0 %v105
    %v182 = vpop.f32.mrf.mxu0
    %v183 = vadd.f32 %v99, %v182
    %v184 = vpop.f32.mrf.mxu0
    %185 = vdwg.mxu0
    %v186 = vtanh.pop %v178
    %v187 = vtanh.pop %v183
    %v188 = vld [vmem:[#allocation7] sm:$0xff]
    %v189 = vld [vmem:[#allocation7 + $0x8] sm:$0xff]
    %v190 = vld [vmem:[#allocation7 + $0x10] sm:$0xff]
    %v191 = vld [vmem:[#allocation7 + $0x18] sm:$0xff]
    %v192 = vld [vmem:[%s6 + $0x1] sm:$0x1]
    %v193 = vlaneseq
    %v194 = vshrl.u32 %v193, 7
    %v195 = vsub.s32 0, %v194
    %v196 = vrot.slane %v192, %v195
    %vm197 = vcmask 261120
    %v199 = vsel %vm197, %v186, 0
    %v202 = vsel %vm197, %v187, 0
    %204 = vmatprep.subr.mxu0 0.0
    %205 = vmatpush1.msra.mxu0 0.0
    %206 = vmatprep.subr.mxu0 0.0
    %207 = vmatpush1.msra.mxu0 0.0
    %208 = vmatprep.subr.mxu0 0.0
    %209 = vmatpush1.msra.mxu0 0.0
    %210 = vmatprep.subr.mxu0 0.0
    %211 = vmatpush1.msra.mxu0 0.0
    %212 = vmatprep.subr.mxu0 0.0
    %213 = vmatpush1.msra.mxu0 0.0
    %214 = vmatprep.subr.mxu0 0.0
    %215 = vmatpush1.msra.mxu0 0.0
    %216 = vmatprep.subr.mxu0 0.0
    %217 = vmatpush1.msra.mxu0 0.0
    %218 = vmatprep.subr.mxu0 0.0
    %219 = vmatpush1.msra.mxu0 0.0
    %220 = vmatprep.subr.mxu0 0.0
    %221 = vmatpush1.msra.mxu0 0.0
    %222 = vmatprep.subr.mxu0 0.0
    %223 = vmatpush1.msra.mxu0 0.0
    %224 = vmatprep.subr.mxu0 0.0
    %225 = vmatpush1.msra.mxu0 0.0
    %226 = vmatprep.subr.mxu0 0.0
    %227 = vmatpush1.msra.mxu0 0.0
    %228 = vmatprep.subr.mxu0 0.0
    %229 = vmatpush1.msra.mxu0 %v191
    %230 = vmatprep.subr.mxu0 0.0
    %231 = vmatpush1.msra.mxu0 %v190
    %232 = vmatprep.subr.mxu0 0.0
    %233 = vmatpush1.msra.mxu0 %v189
    %234 = vmatprep.subr.mxu0 0.0
    %235 = vmatpush1.msra.mxu0 %v188
    %236 = vmatprep.subr.mxu0 0.0
    %237 = vmatpush2.msra.mxu0 0.0
    %238 = vmatprep.subr.mxu0 0.0
    %239 = vmatpush2.msra.mxu0 0.0
    %240 = vmatprep.subr.mxu0 0.0
    %241 = vmatpush2.msra.mxu0 0.0
    %242 = vmatprep.subr.mxu0 0.0
    %243 = vmatpush2.msra.mxu0 0.0
    %244 = vmatprep.subr.mxu0 0.0
    %245 = vmatpush2.msra.mxu0 0.0
    %246 = vmatprep.subr.mxu0 0.0
    %247 = vmatpush2.msra.mxu0 0.0
    %248 = vmatprep.subr.mxu0 0.0
    %249 = vmatpush2.msra.mxu0 0.0
    %250 = vmatprep.subr.mxu0 0.0
    %251 = vmatpush2.msra.mxu0 0.0
    %252 = vmatprep.subr.mxu0 0.0
    %253 = vmatpush2.msra.mxu0 0.0
    %254 = vmatprep.subr.mxu0 0.0
    %255 = vmatpush2.msra.mxu0 0.0
    %256 = vmatprep.subr.mxu0 0.0
    %257 = vmatpush2.msra.mxu0 0.0
    %258 = vmatprep.subr.mxu0 0.0
    %259 = vmatpush2.msra.mxu0 0.0
    %260 = vmatprep.subr.mxu0 0.0
    %261 = vmatpush2.msra.mxu0 0.0
    %262 = vmatprep.subr.mxu0 0.0
    %263 = vmatpush2.msra.mxu0 0.0
    %264 = vmatprep.subr.mxu0 0.0
    %265 = vmatpush2.msra.mxu0 0.0
    %266 = vmatprep.subr.mxu0 0.0
    %267 = vmatpush2.msra.mxu0 0.0
    %268 = vmatprep.mubr.f32.mxu0 0.0
    %269 = vmatmul.mubr.f32.gmra.mxu0 %v199
    %v270 = vpop.f32.mrf.mxu0
    %v271 = vadd.f32 %v196, %v270
    %v272 = vpop.f32.mrf.mxu0
    %273 = vmatprep.mubr.f32.mxu0 0.0
    %274 = vmatmul.mubr.f32.gmra.mxu0 %v202
    %v275 = vpop.f32.mrf.mxu0
    %v276 = vadd.f32 %v196, %v275
    %v277 = vpop.f32.mrf.mxu0
    %278 = vdwg.mxu0
    %v279 = vld [vmem:[#allocation9] sm:$0xff]
    %v280 = vld [vmem:[#allocation9 + $0x8] sm:$0xff]
    %v281 = vld [vmem:[#allocation9 + $0x10] sm:$0xff]
    %v282 = vld [vmem:[#allocation9 + $0x18] sm:$0xff]
    %s283 = scalar_lea.vmem [#allocation9], 32
    %v284 = vld [vmem:[%s283] sm:$0xff]
    %v285 = vld [vmem:[%s283 + $0x8] sm:$0xff]
    %v286 = vld [vmem:[%s283 + $0x10] sm:$0xff]
    %v287 = vld [vmem:[%s283 + $0x18] sm:$0xff]
    %s288 = scalar_lea.vmem [#allocation9], 64
    %v289 = vld [vmem:[%s288] sm:$0xff]
    %v290 = vld [vmem:[%s288 + $0x8] sm:$0xff]
    %v291 = vld [vmem:[%s288 + $0x10] sm:$0xff]
    %v292 = vld [vmem:[%s288 + $0x18] sm:$0xff]
    %s293 = scalar_lea.vmem [#allocation9], 96
    %v294 = vld [vmem:[%s293] sm:$0xff]
    %v295 = vld [vmem:[%s293 + $0x8] sm:$0xff]
    %v296 = vld [vmem:[%s293 + $0x10] sm:$0xff]
    %v297 = vld [vmem:[%s293 + $0x18] sm:$0xff]
    %v298 = vld [vmem:[%s8] sm:$0xff]
    %v299 = vld [vmem:[%s8 + $0x8] sm:$0xff]
    %v300 = vld [vmem:[%s8 + $0x10] sm:$0xff]
    %v301 = vld [vmem:[%s8 + $0x18] sm:$0xff]
    %v302 = vld [vmem:[%s9] sm:$0xff]
    %v303 = vld [vmem:[%s9 + $0x8] sm:$0x1]
    %vm304 = vcmask 130048
    %v306 = vsel %vm304, %v90, 0
    %v309 = vsel %vm304, %v91, 0
    %311 = vmatprep.subr.mxu0 0.0
    %312 = vmatpush1.msra.mxu0 0.0
    %313 = vmatprep.subr.mxu0 0.0
    %314 = vmatpush1.msra.mxu0 0.0
    %315 = vmatprep.subr.mxu0 0.0
    %316 = vmatpush1.msra.mxu0 0.0
    %317 = vmatprep.subr.mxu0 0.0
    %318 = vmatpush1.msra.mxu0 0.0
    %319 = vmatprep.subr.mxu0 0.0
    %320 = vmatpush1.msra.mxu0 0.0
    %321 = vmatprep.subr.mxu0 0.0
    %322 = vmatpush1.msra.mxu0 0.0
    %323 = vmatprep.subr.mxu0 0.0
    %324 = vmatpush1.msra.mxu0 0.0
    %325 = vmatprep.subr.mxu0 0.0
    %326 = vmatpush1.msra.mxu0 0.0
    %327 = vmatprep.subr.mxu0 0.0
    %328 = vmatpush1.msra.mxu0 0.0
    %329 = vmatprep.subr.mxu0 0.0
    %330 = vmatpush1.msra.mxu0 0.0
    %331 = vmatprep.subr.mxu0 0.0
    %332 = vmatpush1.msra.mxu0 0.0
    %333 = vmatprep.subr.mxu0 0.0
    %334 = vmatpush1.msra.mxu0 0.0
    %335 = vmatprep.subr.mxu0 0.0
    %336 = vmatpush1.msra.mxu0 0.0
    %337 = vmatprep.subr.mxu0 0.0
    %338 = vmatpush1.msra.mxu0 0.0
    %339 = vmatprep.subr.mxu0 0.0
    %340 = vmatpush1.msra.mxu0 %v276
    %341 = vmatprep.subr.mxu0 0.0
    %342 = vmatpush1.msra.mxu0 %v271
    %343 = vmatprep.subr.mxu0 0.0
    %344 = vmatpush2.msra.mxu0 0.0
    %345 = vmatprep.subr.mxu0 0.0
    %346 = vmatpush2.msra.mxu0 0.0
    %347 = vmatprep.subr.mxu0 0.0
    %348 = vmatpush2.msra.mxu0 0.0
    %349 = vmatprep.subr.mxu0 0.0
    %350 = vmatpush2.msra.mxu0 0.0
    %351 = vmatprep.subr.mxu0 0.0
    %352 = vmatpush2.msra.mxu0 0.0
    %353 = vmatprep.subr.mxu0 0.0
    %354 = vmatpush2.msra.mxu0 0.0
    %355 = vmatprep.subr.mxu0 0.0
    %356 = vmatpush2.msra.mxu0 0.0
    %357 = vmatprep.subr.mxu0 0.0
    %358 = vmatpush2.msra.mxu0 0.0
    %359 = vmatprep.subr.mxu0 0.0
    %360 = vmatpush2.msra.mxu0 0.0
    %361 = vmatprep.subr.mxu0 0.0
    %362 = vmatpush2.msra.mxu0 0.0
    %363 = vmatprep.subr.mxu0 0.0
    %364 = vmatpush2.msra.mxu0 0.0
    %365 = vmatprep.subr.mxu0 0.0
    %366 = vmatpush2.msra.mxu0 0.0
    %367 = vmatprep.subr.mxu0 0.0
    %368 = vmatpush2.msra.mxu0 0.0
    %369 = vmatprep.subr.mxu0 0.0
    %370 = vmatpush2.msra.mxu0 0.0
    %371 = vmatprep.subr.mxu0 0.0
    %372 = vmatpush2.msra.mxu0 0.0
    %373 = vmatprep.subr.mxu0 0.0
    %374 = vmatpush2.msra.mxu0 0.0
    %375 = vmatprep.mubr.f32.mxu0 0.0
    %376 = vmatmul.mubr.f32.gmra.mxu0 %v306
    %v377 = vpop.f32.mrf.mxu0
    %v378 = vadd.f32 0.0, %v377
    %v379 = vpop.f32.mrf.mxu0
    %380 = vmatprep.mubr.f32.mxu0 0.0
    %381 = vmatmul.mubr.f32.gmra.mxu0 %v309
    %v382 = vpop.f32.mrf.mxu0
    %v383 = vadd.f32 0.0, %v382
    %v384 = vpop.f32.mrf.mxu0
    %385 = vdwg.mxu0
    %s386 = sld [smem:[#allocation2]]
    %s387 = sadd.f32 %s386, 1.0
    %v388 = vstv %s387
    %v389 = vmul.f32 %v388, %v271
    %v390 = vmul.f32 %v388, %v276
    %v391 = vadd.f32 %v389, %v378
    %v392 = vadd.f32 %v390, %v383
    %v393 = vlaneseq
    %v394 = vshrl.u32 %v393, 7
    %v395 = vsub.s32 0, %v394
    %v396 = vrot.slane %v302, %v395
    %v398 = vsel %vm197, %v391, 0
    %v401 = vsel %vm197, %v392, 0
    %403 = vmatprep.subr.mxu0 0.0
    %404 = vmatpush1.msra.mxu0 0.0
    %405 = vmatprep.subr.mxu0 0.0
    %406 = vmatpush1.msra.mxu0 0.0
    %407 = vmatprep.subr.mxu0 0.0
    %408 = vmatpush1.msra.mxu0 0.0
    %409 = vmatprep.subr.mxu0 0.0
    %410 = vmatpush1.msra.mxu0 0.0
    %411 = vmatprep.subr.mxu0 0.0
    %412 = vmatpush1.msra.mxu0 0.0
    %413 = vmatprep.subr.mxu0 0.0
    %414 = vmatpush1.msra.mxu0 0.0
    %415 = vmatprep.subr.mxu0 0.0
    %416 = vmatpush1.msra.mxu0 0.0
    %417 = vmatprep.subr.mxu0 0.0
    %418 = vmatpush1.msra.mxu0 0.0
    %419 = vmatprep.subr.mxu0 0.0
    %420 = vmatpush1.msra.mxu0 0.0
    %421 = vmatprep.subr.mxu0 0.0
    %422 = vmatpush1.msra.mxu0 0.0
    %423 = vmatprep.subr.mxu0 0.0
    %424 = vmatpush1.msra.mxu0 0.0
    %425 = vmatprep.subr.mxu0 0.0
    %426 = vmatpush1.msra.mxu0 0.0
    %427 = vmatprep.subr.mxu0 0.0
    %428 = vmatpush1.msra.mxu0 %v282
    %429 = vmatprep.subr.mxu0 0.0
    %430 = vmatpush1.msra.mxu0 %v281
    %431 = vmatprep.subr.mxu0 0.0
    %432 = vmatpush1.msra.mxu0 %v280
    %433 = vmatprep.subr.mxu0 0.0
    %434 = vmatpush1.msra.mxu0 %v279
    %435 = vmatprep.subr.mxu0 0.0
    %436 = vmatpush2.msra.mxu0 0.0
    %437 = vmatprep.subr.mxu0 0.0
    %438 = vmatpush2.msra.mxu0 0.0
    %439 = vmatprep.subr.mxu0 0.0
    %440 = vmatpush2.msra.mxu0 0.0
    %441 = vmatprep.subr.mxu0 0.0
    %442 = vmatpush2.msra.mxu0 0.0
    %443 = vmatprep.subr.mxu0 0.0
    %444 = vmatpush2.msra.mxu0 0.0
    %445 = vmatprep.subr.mxu0 0.0
    %446 = vmatpush2.msra.mxu0 0.0
    %447 = vmatprep.subr.mxu0 0.0
    %448 = vmatpush2.msra.mxu0 0.0
    %449 = vmatprep.subr.mxu0 0.0
    %450 = vmatpush2.msra.mxu0 0.0
    %451 = vmatprep.subr.mxu0 0.0
    %452 = vmatpush2.msra.mxu0 0.0
    %453 = vmatprep.subr.mxu0 0.0
    %454 = vmatpush2.msra.mxu0 0.0
    %455 = vmatprep.subr.mxu0 0.0
    %456 = vmatpush2.msra.mxu0 0.0
    %457 = vmatprep.subr.mxu0 0.0
    %458 = vmatpush2.msra.mxu0 0.0
    %459 = vmatprep.subr.mxu0 0.0
    %460 = vmatpush2.msra.mxu0 0.0
    %461 = vmatprep.subr.mxu0 0.0
    %462 = vmatpush2.msra.mxu0 0.0
    %463 = vmatprep.subr.mxu0 0.0
    %464 = vmatpush2.msra.mxu0 0.0
    %465 = vmatprep.subr.mxu0 0.0
    %466 = vmatpush2.msra.mxu0 0.0
    %467 = vmatprep.mubr.f32.mxu0 0.0
    %468 = vmatmul.mubr.f32.gmra.mxu0 %v398
    %v469 = vpop.f32.mrf.mxu0
    %v470 = vadd.f32 %v396, %v469
    %v471 = vpop.f32.mrf.mxu0
    %472 = vmatprep.mubr.f32.mxu0 0.0
    %473 = vmatmul.mubr.f32.gmra.mxu0 %v401
    %v474 = vpop.f32.mrf.mxu0
    %v475 = vadd.f32 %v396, %v474
    %v476 = vpop.f32.mrf.mxu0
    %477 = vdwg.mxu0
    %v478 = vsel %vm197, %v470, 0.0
    %479 = vadd.xlane.f32.xlu0 %v478
    %v480 = vpop.xlane.xlu0 %479
    %v481 = vsel %vm197, %v475, 0.0
    %482 = vadd.xlane.f32.xlu0 %v481
    %v483 = vpop.xlane.xlu0 %482
    %v484 = vrcp.pop 32.0
    %v485 = vmul.f32 %v480, %v484
    %v486 = vmul.f32 %v483, %v484
    %v487 = vsub.f32 %v470, %v485
    %v488 = vsub.f32 %v475, %v486
    %v489 = vmul.f32 %v487, %v487
    %v490 = vmul.f32 %v488, %v488
    %v491 = vsel %vm197, %v489, 0.0
    %492 = vadd.xlane.f32.xlu0 %v491
    %v493 = vpop.xlane.xlu0 %492
    %v494 = vsel %vm197, %v490, 0.0
    %495 = vadd.xlane.f32.xlu0 %v494
    %v496 = vpop.xlane.xlu0 %495
    %v497 = vmul.f32 %v493, %v484
    %v498 = vmul.f32 %v496, %v484
    %v499 = vadd.f32 %v497, 1e-05
    %v500 = vadd.f32 %v498, 1e-05
    %v501 = vrsqrt.pop %v499
    %v502 = vrsqrt.pop %v500
    %v503 = vmul.f32 %v487, %v501
    %v504 = vmul.f32 %v488, %v502
    %v505 = vlaneseq
    %v506 = vshrl.u32 %v505, 7
    %v507 = vsub.s32 1, %v506
    %v508 = vrot.slane %v302, %v507
    %v509 = vmul.f32 %v503, %v508
    %v510 = vmul.f32 %v504, %v508
    %v511 = vlaneseq
    %v512 = vshrl.u32 %v511, 7
    %v513 = vsub.s32 2, %v512
    %v514 = vrot.slane %v302, %v513
    %v515 = vadd.f32 %v509, %v514
    %v516 = vadd.f32 %v510, %v514
    %v517 = vlaneseq
    %v518 = vshrl.u32 %v517, 7
    %v519 = vsub.s32 3, %v518
    %v520 = vrot.slane %v302, %v519
    %v522 = vsel %vm197, %v515, 0
    %v525 = vsel %vm197, %v516, 0
    %527 = vmatprep.subr.mxu0 0.0
    %528 = vmatpush1.msra.mxu0 0.0
    %529 = vmatprep.subr.mxu0 0.0
    %530 = vmatpush1.msra.mxu0 0.0
    %531 = vmatprep.subr.mxu0 0.0
    %532 = vmatpush1.msra.mxu0 0.0
    %533 = vmatprep.subr.mxu0 0.0
    %534 = vmatpush1.msra.mxu0 0.0
    %535 = vmatprep.subr.mxu0 0.0
    %536 = vmatpush1.msra.mxu0 0.0
    %537 = vmatprep.subr.mxu0 0.0
    %538 = vmatpush1.msra.mxu0 0.0
    %539 = vmatprep.subr.mxu0 0.0
    %540 = vmatpush1.msra.mxu0 0.0
    %541 = vmatprep.subr.mxu0 0.0
    %542 = vmatpush1.msra.mxu0 0.0
    %543 = vmatprep.subr.mxu0 0.0
    %544 = vmatpush1.msra.mxu0 0.0
    %545 = vmatprep.subr.mxu0 0.0
    %546 = vmatpush1.msra.mxu0 0.0
    %547 = vmatprep.subr.mxu0 0.0
    %548 = vmatpush1.msra.mxu0 0.0
    %549 = vmatprep.subr.mxu0 0.0
    %550 = vmatpush1.msra.mxu0 0.0
    %551 = vmatprep.subr.mxu0 0.0
    %552 = vmatpush1.msra.mxu0 %v301
    %553 = vmatprep.subr.mxu0 0.0
    %554 = vmatpush1.msra.mxu0 %v300
    %555 = vmatprep.subr.mxu0 0.0
    %556 = vmatpush1.msra.mxu0 %v299
    %557 = vmatprep.subr.mxu0 0.0
    %558 = vmatpush1.msra.mxu0 %v298
    %559 = vmatprep.subr.mxu0 0.0
    %560 = vmatpush2.msra.mxu0 0.0
    %561 = vmatprep.subr.mxu0 0.0
    %562 = vmatpush2.msra.mxu0 0.0
    %563 = vmatprep.subr.mxu0 0.0
    %564 = vmatpush2.msra.mxu0 0.0
    %565 = vmatprep.subr.mxu0 0.0
    %566 = vmatpush2.msra.mxu0 0.0
    %567 = vmatprep.subr.mxu0 0.0
    %568 = vmatpush2.msra.mxu0 0.0
    %569 = vmatprep.subr.mxu0 0.0
    %570 = vmatpush2.msra.mxu0 0.0
    %571 = vmatprep.subr.mxu0 0.0
    %572 = vmatpush2.msra.mxu0 0.0
    %573 = vmatprep.subr.mxu0 0.0
    %574 = vmatpush2.msra.mxu0 0.0
    %575 = vmatprep.subr.mxu0 0.0
    %576 = vmatpush2.msra.mxu0 0.0
    %577 = vmatprep.subr.mxu0 0.0
    %578 = vmatpush2.msra.mxu0 0.0
    %579 = vmatprep.subr.mxu0 0.0
    %580 = vmatpush2.msra.mxu0 0.0
    %581 = vmatprep.subr.mxu0 0.0
    %582 = vmatpush2.msra.mxu0 0.0
    %583 = vmatprep.subr.mxu0 0.0
    %584 = vmatpush2.msra.mxu0 0.0
    %585 = vmatprep.subr.mxu0 0.0
    %586 = vmatpush2.msra.mxu0 0.0
    %587 = vmatprep.subr.mxu0 0.0
    %588 = vmatpush2.msra.mxu0 0.0
    %589 = vmatprep.subr.mxu0 0.0
    %590 = vmatpush2.msra.mxu0 0.0
    %591 = vmatprep.mubr.f32.mxu0 0.0
    %592 = vmatmul.mubr.f32.gmra.mxu0 %v522
    %v593 = vpop.f32.mrf.mxu0
    %v594 = vadd.f32 %v520, %v593
    %v595 = vpop.f32.mrf.mxu0
    %596 = vmatprep.mubr.f32.mxu0 0.0
    %597 = vmatmul.mubr.f32.gmra.mxu0 %v525
    %v598 = vpop.f32.mrf.mxu0
    %v599 = vadd.f32 %v520, %v598
    %v600 = vpop.f32.mrf.mxu0
    %601 = vdwg.mxu0
    %604 = vrot.lane.b32.xlu0 %v594, 96
    %v605 = vpop.permute.xlu0 %604
    %606 = vrot.lane.b32.xlu0 %v599, 96
    %v607 = vpop.permute.xlu0 %606
    %vm608 = vcmask 64512
    %v609 = vsel %vm608, %v594, 0
    %v611 = vsel %vm608, %v599, 0
    %v613 = vsel %vm608, %v605, 0
    %v615 = vsel %vm608, %v607, 0
    %617 = vmatprep.subr.mxu0 0.0
    %618 = vmatpush1.xpose.msra.mxu0 0.0
    %619 = vmatprep.subr.mxu0 0.0
    %620 = vmatpush1.xpose.msra.mxu0 0.0
    %621 = vmatprep.subr.mxu0 0.0
    %622 = vmatpush1.xpose.msra.mxu0 0.0
    %623 = vmatprep.subr.mxu0 0.0
    %624 = vmatpush1.xpose.msra.mxu0 0.0
    %625 = vmatprep.subr.mxu0 0.0
    %626 = vmatpush1.xpose.msra.mxu0 0.0
    %627 = vmatprep.subr.mxu0 0.0
    %628 = vmatpush1.xpose.msra.mxu0 0.0
    %629 = vmatprep.subr.mxu0 0.0
    %630 = vmatpush1.xpose.msra.mxu0 0.0
    %631 = vmatprep.subr.mxu0 0.0
    %632 = vmatpush1.xpose.msra.mxu0 0.0
    %633 = vmatprep.subr.mxu0 0.0
    %634 = vmatpush1.xpose.msra.mxu0 0.0
    %635 = vmatprep.subr.mxu0 0.0
    %636 = vmatpush1.xpose.msra.mxu0 0.0
    %637 = vmatprep.subr.mxu0 0.0
    %638 = vmatpush1.xpose.msra.mxu0 0.0
    %639 = vmatprep.subr.mxu0 0.0
    %640 = vmatpush1.xpose.msra.mxu0 0.0
    %641 = vmatprep.subr.mxu0 0.0
    %642 = vmatpush1.xpose.msra.mxu0 0.0
    %643 = vmatprep.subr.mxu0 0.0
    %644 = vmatpush1.xpose.msra.mxu0 0.0
    %645 = vmatprep.subr.mxu0 0.0
    %646 = vmatpush1.xpose.msra.mxu0 %v615
    %647 = vmatprep.subr.mxu0 0.0
    %648 = vmatpush1.xpose.msra.mxu0 %v613
    %649 = vmatprep.subr.mxu0 0.0
    %650 = vmatpush2.xpose.msra.mxu0 0.0
    %651 = vmatprep.subr.mxu0 0.0
    %652 = vmatpush2.xpose.msra.mxu0 0.0
    %653 = vmatprep.subr.mxu0 0.0
    %654 = vmatpush2.xpose.msra.mxu0 0.0
    %655 = vmatprep.subr.mxu0 0.0
    %656 = vmatpush2.xpose.msra.mxu0 0.0
    %657 = vmatprep.subr.mxu0 0.0
    %658 = vmatpush2.xpose.msra.mxu0 0.0
    %659 = vmatprep.subr.mxu0 0.0
    %660 = vmatpush2.xpose.msra.mxu0 0.0
    %661 = vmatprep.subr.mxu0 0.0
    %662 = vmatpush2.xpose.msra.mxu0 0.0
    %663 = vmatprep.subr.mxu0 0.0
    %664 = vmatpush2.xpose.msra.mxu0 0.0
    %665 = vmatprep.subr.mxu0 0.0
    %666 = vmatpush2.xpose.msra.mxu0 0.0
    %667 = vmatprep.subr.mxu0 0.0
    %668 = vmatpush2.xpose.msra.mxu0 0.0
    %669 = vmatprep.subr.mxu0 0.0
    %670 = vmatpush2.xpose.msra.mxu0 0.0
    %671 = vmatprep.subr.mxu0 0.0
    %672 = vmatpush2.xpose.msra.mxu0 0.0
    %673 = vmatprep.subr.mxu0 0.0
    %674 = vmatpush2.xpose.msra.mxu0 0.0
    %675 = vmatprep.subr.mxu0 0.0
    %676 = vmatpush2.xpose.msra.mxu0 0.0
    %677 = vmatprep.subr.mxu0 0.0
    %678 = vmatpush2.xpose.msra.mxu0 0.0
    %679 = vmatprep.subr.mxu0 0.0
    %680 = vmatpush2.xpose.msra.mxu0 0.0
    %681 = vmatprep.mubr.f32.mxu0 0.0
    %682 = vmatmul.mubr.f32.gmra.mxu0 %v609
    %v683 = vpop.f32.mrf.mxu0
    %v684 = vadd.f32 0.0, %v683
    %v685 = vpop.f32.mrf.mxu0
    %686 = vmatprep.mubr.f32.mxu0 0.0
    %687 = vmatmul.mubr.f32.gmra.mxu0 %v611
    %v688 = vpop.f32.mrf.mxu0
    %v689 = vadd.f32 0.0, %v688
    %v690 = vpop.f32.mrf.mxu0
    %691 = vdwg.mxu0
    %v692 = vmul.f32 %v684, 0.35355338
    %v693 = vmul.f32 %v689, 0.35355338
    %v694 = vadd.f32 %v692, %v92
    %v695 = vadd.f32 %v693, %v93
    %v696 = vsel %vm304, %v694, -inf
    %697 = vmax.xlane.f32.xlu0 %v696
    %v698 = vpop.xlane.xlu0 %697
    %v699 = vsel %vm304, %v695, -inf
    %700 = vmax.xlane.f32.xlu0 %v699
    %v701 = vpop.xlane.xlu0 %700
    %v702 = vsub.f32 %v694, %v698
    %v703 = vsub.f32 %v695, %v701
    %v704 = vmul.f32 %v702, 1.442695
    %v705 = vpow.pop %v704
    %v706 = vmul.f32 %v703, 1.442695
    %v707 = vpow.pop %v706
    %v708 = vsel %vm304, %v705, 0.0
    %709 = vadd.xlane.f32.xlu0 %v708
    %v710 = vpop.xlane.xlu0 %709
    %v711 = vsel %vm304, %v707, 0.0
    %712 = vadd.xlane.f32.xlu0 %v711
    %v713 = vpop.xlane.xlu0 %712
    %v714 = vrcp.pop %v710
    %v715 = vrcp.pop %v713
    %v716 = vmul.f32 %v705, %v714
    %v717 = vmul.f32 %v707, %v715
    %718 = vrot.lane.b32.xlu0 %v594, 64
    %v719 = vpop.permute.xlu0 %718
    %720 = vrot.lane.b32.xlu0 %v599, 64
    %v721 = vpop.permute.xlu0 %720
    %v725 = vsel %vm304, %v716, 0
    %v728 = vsel %vm304, %v717, 0
    %730 = vmatprep.subr.mxu0 0.0
    %731 = vmatpush1.msra.mxu0 0.0
    %732 = vmatprep.subr.mxu0 0.0
    %733 = vmatpush1.msra.mxu0 0.0
    %734 = vmatprep.subr.mxu0 0.0
    %735 = vmatpush1.msra.mxu0 0.0
    %736 = vmatprep.subr.mxu0 0.0
    %737 = vmatpush1.msra.mxu0 0.0
    %738 = vmatprep.subr.mxu0 0.0
    %739 = vmatpush1.msra.mxu0 0.0
    %740 = vmatprep.subr.mxu0 0.0
    %741 = vmatpush1.msra.mxu0 0.0
    %742 = vmatprep.subr.mxu0 0.0
    %743 = vmatpush1.msra.mxu0 0.0
    %744 = vmatprep.subr.mxu0 0.0
    %745 = vmatpush1.msra.mxu0 0.0
    %746 = vmatprep.subr.mxu0 0.0
    %747 = vmatpush1.msra.mxu0 0.0
    %748 = vmatprep.subr.mxu0 0.0
    %749 = vmatpush1.msra.mxu0 0.0
    %750 = vmatprep.subr.mxu0 0.0
    %751 = vmatpush1.msra.mxu0 0.0
    %752 = vmatprep.subr.mxu0 0.0
    %753 = vmatpush1.msra.mxu0 0.0
    %754 = vmatprep.subr.mxu0 0.0
    %755 = vmatpush1.msra.mxu0 0.0
    %756 = vmatprep.subr.mxu0 0.0
    %757 = vmatpush1.msra.mxu0 0.0
    %758 = vmatprep.subr.mxu0 0.0
    %759 = vmatpush1.msra.mxu0 %v721
    %760 = vmatprep.subr.mxu0 0.0
    %761 = vmatpush1.msra.mxu0 %v719
    %762 = vmatprep.subr.mxu0 0.0
    %763 = vmatpush2.msra.mxu0 0.0
    %764 = vmatprep.subr.mxu0 0.0
    %765 = vmatpush2.msra.mxu0 0.0
    %766 = vmatprep.subr.mxu0 0.0
    %767 = vmatpush2.msra.mxu0 0.0
    %768 = vmatprep.subr.mxu0 0.0
    %769 = vmatpush2.msra.mxu0 0.0
    %770 = vmatprep.subr.mxu0 0.0
    %771 = vmatpush2.msra.mxu0 0.0
    %772 = vmatprep.subr.mxu0 0.0
    %773 = vmatpush2.msra.mxu0 0.0
    %774 = vmatprep.subr.mxu0 0.0
    %775 = vmatpush2.msra.mxu0 0.0
    %776 = vmatprep.subr.mxu0 0.0
    %777 = vmatpush2.msra.mxu0 0.0
    %778 = vmatprep.subr.mxu0 0.0
    %779 = vmatpush2.msra.mxu0 0.0
    %780 = vmatprep.subr.mxu0 0.0
    %781 = vmatpush2.msra.mxu0 0.0
    %782 = vmatprep.subr.mxu0 0.0
    %783 = vmatpush2.msra.mxu0 0.0
    %784 = vmatprep.subr.mxu0 0.0
    %785 = vmatpush2.msra.mxu0 0.0
    %786 = vmatprep.subr.mxu0 0.0
    %787 = vmatpush2.msra.mxu0 0.0
    %788 = vmatprep.subr.mxu0 0.0
    %789 = vmatpush2.msra.mxu0 0.0
    %790 = vmatprep.subr.mxu0 0.0
    %791 = vmatpush2.msra.mxu0 0.0
    %792 = vmatprep.subr.mxu0 0.0
    %793 = vmatpush2.msra.mxu0 0.0
    %794 = vmatprep.mubr.f32.mxu0 0.0
    %795 = vmatmul.mubr.f32.gmra.mxu0 %v725
    %v796 = vpop.f32.mrf.mxu0
    %v797 = vadd.f32 0.0, %v796
    %v798 = vpop.f32.mrf.mxu0
    %799 = vmatprep.mubr.f32.mxu0 0.0
    %800 = vmatmul.mubr.f32.gmra.mxu0 %v728
    %v801 = vpop.f32.mrf.mxu0
    %v802 = vadd.f32 0.0, %v801
    %v803 = vpop.f32.mrf.mxu0
    %804 = vdwg.mxu0
    %805 = vrot.lane.b32.xlu0 %v594, 120
    %v806 = vpop.permute.xlu0 %805
    %807 = vrot.lane.b32.xlu0 %v599, 120
    %v808 = vpop.permute.xlu0 %807
    %809 = vrot.lane.b32.xlu0 %v594, 88
    %v810 = vpop.permute.xlu0 %809
    %811 = vrot.lane.b32.xlu0 %v599, 88
    %v812 = vpop.permute.xlu0 %811
    %v813 = vsel %vm608, %v806, 0
    %v815 = vsel %vm608, %v808, 0
    %v817 = vsel %vm608, %v810, 0
    %v819 = vsel %vm608, %v812, 0
    %821 = vmatprep.subr.mxu0 0.0
    %822 = vmatpush1.xpose.msra.mxu0 0.0
    %823 = vmatprep.subr.mxu0 0.0
    %824 = vmatpush1.xpose.msra.mxu0 0.0
    %825 = vmatprep.subr.mxu0 0.0
    %826 = vmatpush1.xpose.msra.mxu0 0.0
    %827 = vmatprep.subr.mxu0 0.0
    %828 = vmatpush1.xpose.msra.mxu0 0.0
    %829 = vmatprep.subr.mxu0 0.0
    %830 = vmatpush1.xpose.msra.mxu0 0.0
    %831 = vmatprep.subr.mxu0 0.0
    %832 = vmatpush1.xpose.msra.mxu0 0.0
    %833 = vmatprep.subr.mxu0 0.0
    %834 = vmatpush1.xpose.msra.mxu0 0.0
    %835 = vmatprep.subr.mxu0 0.0
    %836 = vmatpush1.xpose.msra.mxu0 0.0
    %837 = vmatprep.subr.mxu0 0.0
    %838 = vmatpush1.xpose.msra.mxu0 0.0
    %839 = vmatprep.subr.mxu0 0.0
    %840 = vmatpush1.xpose.msra.mxu0 0.0
    %841 = vmatprep.subr.mxu0 0.0
    %842 = vmatpush1.xpose.msra.mxu0 0.0
    %843 = vmatprep.subr.mxu0 0.0
    %844 = vmatpush1.xpose.msra.mxu0 0.0
    %845 = vmatprep.subr.mxu0 0.0
    %846 = vmatpush1.xpose.msra.mxu0 0.0
    %847 = vmatprep.subr.mxu0 0.0
    %848 = vmatpush1.xpose.msra.mxu0 0.0
    %849 = vmatprep.subr.mxu0 0.0
    %850 = vmatpush1.xpose.msra.mxu0 %v819
    %851 = vmatprep.subr.mxu0 0.0
    %852 = vmatpush1.xpose.msra.mxu0 %v817
    %853 = vmatprep.subr.mxu0 0.0
    %854 = vmatpush2.xpose.msra.mxu0 0.0
    %855 = vmatprep.subr.mxu0 0.0
    %856 = vmatpush2.xpose.msra.mxu0 0.0
    %857 = vmatprep.subr.mxu0 0.0
    %858 = vmatpush2.xpose.msra.mxu0 0.0
    %859 = vmatprep.subr.mxu0 0.0
    %860 = vmatpush2.xpose.msra.mxu0 0.0
    %861 = vmatprep.subr.mxu0 0.0
    %862 = vmatpush2.xpose.msra.mxu0 0.0
    %863 = vmatprep.subr.mxu0 0.0
    %864 = vmatpush2.xpose.msra.mxu0 0.0
    %865 = vmatprep.subr.mxu0 0.0
    %866 = vmatpush2.xpose.msra.mxu0 0.0
    %867 = vmatprep.subr.mxu0 0.0
    %868 = vmatpush2.xpose.msra.mxu0 0.0
    %869 = vmatprep.subr.mxu0 0.0
    %870 = vmatpush2.xpose.msra.mxu0 0.0
    %871 = vmatprep.subr.mxu0 0.0
    %872 = vmatpush2.xpose.msra.mxu0 0.0
    %873 = vmatprep.subr.mxu0 0.0
    %874 = vmatpush2.xpose.msra.mxu0 0.0
    %875 = vmatprep.subr.mxu0 0.0
    %876 = vmatpush2.xpose.msra.mxu0 0.0
    %877 = vmatprep.subr.mxu0 0.0
    %878 = vmatpush2.xpose.msra.mxu0 0.0
    %879 = vmatprep.subr.mxu0 0.0
    %880 = vmatpush2.xpose.msra.mxu0 0.0
    %881 = vmatprep.subr.mxu0 0.0
    %882 = vmatpush2.xpose.msra.mxu0 0.0
    %883 = vmatprep.subr.mxu0 0.0
    %884 = vmatpush2.xpose.msra.mxu0 0.0
    %885 = vmatprep.mubr.f32.mxu0 0.0
    %886 = vmatmul.mubr.f32.gmra.mxu0 %v813
    %v887 = vpop.f32.mrf.mxu0
    %v888 = vadd.f32 0.0, %v887
    %v889 = vpop.f32.mrf.mxu0
    %890 = vmatprep.mubr.f32.mxu0 0.0
    %891 = vmatmul.mubr.f32.gmra.mxu0 %v815
    %v892 = vpop.f32.mrf.mxu0
    %v893 = vadd.f32 0.0, %v892
    %v894 = vpop.f32.mrf.mxu0
    %895 = vdwg.mxu0
    %v896 = vmul.f32 %v888, 0.35355338
    %v897 = vmul.f32 %v893, 0.35355338
    %v898 = vadd.f32 %v896, %v92
    %v899 = vadd.f32 %v897, %v93
    %v900 = vsel %vm304, %v898, -inf
    %901 = vmax.xlane.f32.xlu0 %v900
    %v902 = vpop.xlane.xlu0 %901
    %v903 = vsel %vm304, %v899, -inf
    %904 = vmax.xlane.f32.xlu0 %v903
    %v905 = vpop.xlane.xlu0 %904
    %v906 = vsub.f32 %v898, %v902
    %v907 = vsub.f32 %v899, %v905
    %v908 = vmul.f32 %v906, 1.442695
    %v909 = vpow.pop %v908
    %v910 = vmul.f32 %v907, 1.442695
    %v911 = vpow.pop %v910
    %v912 = vsel %vm304, %v909, 0.0
    %913 = vadd.xlane.f32.xlu0 %v912
    %v914 = vpop.xlane.xlu0 %913
    %v915 = vsel %vm304, %v911, 0.0
    %916 = vadd.xlane.f32.xlu0 %v915
    %v917 = vpop.xlane.xlu0 %916
    %v918 = vrcp.pop %v914
    %v919 = vrcp.pop %v917
    %v920 = vmul.f32 %v909, %v918
    %v921 = vmul.f32 %v911, %v919
    %922 = vrot.lane.b32.xlu0 %v594, 56
    %v923 = vpop.permute.xlu0 %922
    %924 = vrot.lane.b32.xlu0 %v599, 56
    %v925 = vpop.permute.xlu0 %924
    %v929 = vsel %vm304, %v920, 0
    %v932 = vsel %vm304, %v921, 0
    %934 = vmatprep.subr.mxu0 0.0
    %935 = vmatpush1.msra.mxu0 0.0
    %936 = vmatprep.subr.mxu0 0.0
    %937 = vmatpush1.msra.mxu0 0.0
    %938 = vmatprep.subr.mxu0 0.0
    %939 = vmatpush1.msra.mxu0 0.0
    %940 = vmatprep.subr.mxu0 0.0
    %941 = vmatpush1.msra.mxu0 0.0
    %942 = vmatprep.subr.mxu0 0.0
    %943 = vmatpush1.msra.mxu0 0.0
    %944 = vmatprep.subr.mxu0 0.0
    %945 = vmatpush1.msra.mxu0 0.0
    %946 = vmatprep.subr.mxu0 0.0
    %947 = vmatpush1.msra.mxu0 0.0
    %948 = vmatprep.subr.mxu0 0.0
    %949 = vmatpush1.msra.mxu0 0.0
    %950 = vmatprep.subr.mxu0 0.0
    %951 = vmatpush1.msra.mxu0 0.0
    %952 = vmatprep.subr.mxu0 0.0
    %953 = vmatpush1.msra.mxu0 0.0
    %954 = vmatprep.subr.mxu0 0.0
    %955 = vmatpush1.msra.mxu0 0.0
    %956 = vmatprep.subr.mxu0 0.0
    %957 = vmatpush1.msra.mxu0 0.0
    %958 = vmatprep.subr.mxu0 0.0
    %959 = vmatpush1.msra.mxu0 0.0
    %960 = vmatprep.subr.mxu0 0.0
    %961 = vmatpush1.msra.mxu0 0.0
    %962 = vmatprep.subr.mxu0 0.0
    %963 = vmatpush1.msra.mxu0 %v925
    %964 = vmatprep.subr.mxu0 0.0
    %965 = vmatpush1.msra.mxu0 %v923
    %966 = vmatprep.subr.mxu0 0.0
    %967 = vmatpush2.msra.mxu0 0.0
    %968 = vmatprep.subr.mxu0 0.0
    %969 = vmatpush2.msra.mxu0 0.0
    %970 = vmatprep.subr.mxu0 0.0
    %971 = vmatpush2.msra.mxu0 0.0
    %972 = vmatprep.subr.mxu0 0.0
    %973 = vmatpush2.msra.mxu0 0.0
    %974 = vmatprep.subr.mxu0 0.0
    %975 = vmatpush2.msra.mxu0 0.0
    %976 = vmatprep.subr.mxu0 0.0
    %977 = vmatpush2.msra.mxu0 0.0
    %978 = vmatprep.subr.mxu0 0.0
    %979 = vmatpush2.msra.mxu0 0.0
    %980 = vmatprep.subr.mxu0 0.0
    %981 = vmatpush2.msra.mxu0 0.0
    %982 = vmatprep.subr.mxu0 0.0
    %983 = vmatpush2.msra.mxu0 0.0
    %984 = vmatprep.subr.mxu0 0.0
    %985 = vmatpush2.msra.mxu0 0.0
    %986 = vmatprep.subr.mxu0 0.0
    %987 = vmatpush2.msra.mxu0 0.0
    %988 = vmatprep.subr.mxu0 0.0
    %989 = vmatpush2.msra.mxu0 0.0
    %990 = vmatprep.subr.mxu0 0.0
    %991 = vmatpush2.msra.mxu0 0.0
    %992 = vmatprep.subr.mxu0 0.0
    %993 = vmatpush2.msra.mxu0 0.0
    %994 = vmatprep.subr.mxu0 0.0
    %995 = vmatpush2.msra.mxu0 0.0
    %996 = vmatprep.subr.mxu0 0.0
    %997 = vmatpush2.msra.mxu0 0.0
    %998 = vmatprep.mubr.f32.mxu0 0.0
    %999 = vmatmul.mubr.f32.gmra.mxu0 %v929
    %v1000 = vpop.f32.mrf.mxu0
    %v1001 = vadd.f32 0.0, %v1000
    %v1002 = vpop.f32.mrf.mxu0
    %1003 = vmatprep.mubr.f32.mxu0 0.0
    %1004 = vmatmul.mubr.f32.gmra.mxu0 %v932
    %v1005 = vpop.f32.mrf.mxu0
    %v1006 = vadd.f32 0.0, %v1005
    %v1007 = vpop.f32.mrf.mxu0
    %1008 = vdwg.mxu0
    %v1010 = vsel %vm608, %v1001, 0
    %v1013 = vsel %vm608, %v1006, 0
    %1015 = vmatprep.subr.mxu0 0.0
    %1016 = vmatpush1.msra.mxu0 0.0
    %1017 = vmatprep.subr.mxu0 0.0
    %1018 = vmatpush1.msra.mxu0 0.0
    %1019 = vmatprep.subr.mxu0 0.0
    %1020 = vmatpush1.msra.mxu0 0.0
    %1021 = vmatprep.subr.mxu0 0.0
    %1022 = vmatpush1.msra.mxu0 0.0
    %1023 = vmatprep.subr.mxu0 0.0
    %1024 = vmatpush1.msra.mxu0 0.0
    %1025 = vmatprep.subr.mxu0 0.0
    %1026 = vmatpush1.msra.mxu0 0.0
    %1027 = vmatprep.subr.mxu0 0.0
    %1028 = vmatpush1.msra.mxu0 0.0
    %1029 = vmatprep.subr.mxu0 0.0
    %1030 = vmatpush1.msra.mxu0 0.0
    %1031 = vmatprep.subr.mxu0 0.0
    %1032 = vmatpush1.msra.mxu0 0.0
    %1033 = vmatprep.subr.mxu0 0.0
    %1034 = vmatpush1.msra.mxu0 0.0
    %1035 = vmatprep.subr.mxu0 0.0
    %1036 = vmatpush1.msra.mxu0 0.0
    %1037 = vmatprep.subr.mxu0 0.0
    %1038 = vmatpush1.msra.mxu0 0.0
    %1039 = vmatprep.subr.mxu0 0.0
    %1040 = vmatpush1.msra.mxu0 0.0
    %1041 = vmatprep.subr.mxu0 0.0
    %1042 = vmatpush1.msra.mxu0 0.0
    %1043 = vmatprep.subr.mxu0 0.0
    %1044 = vmatpush1.msra.mxu0 0.0
    %1045 = vmatprep.subr.mxu0 0.0
    %1046 = vmatpush1.msra.mxu0 %v285
    %1047 = vmatprep.subr.mxu0 0.0
    %1048 = vmatpush2.msra.mxu0 0.0
    %1049 = vmatprep.subr.mxu0 0.0
    %1050 = vmatpush2.msra.mxu0 0.0
    %1051 = vmatprep.subr.mxu0 0.0
    %1052 = vmatpush2.msra.mxu0 0.0
    %1053 = vmatprep.subr.mxu0 0.0
    %1054 = vmatpush2.msra.mxu0 0.0
    %1055 = vmatprep.subr.mxu0 0.0
    %1056 = vmatpush2.msra.mxu0 0.0
    %1057 = vmatprep.subr.mxu0 0.0
    %1058 = vmatpush2.msra.mxu0 0.0
    %1059 = vmatprep.subr.mxu0 0.0
    %1060 = vmatpush2.msra.mxu0 0.0
    %1061 = vmatprep.subr.mxu0 0.0
    %1062 = vmatpush2.msra.mxu0 0.0
    %1063 = vmatprep.subr.mxu0 0.0
    %1064 = vmatpush2.msra.mxu0 0.0
    %1065 = vmatprep.subr.mxu0 0.0
    %1066 = vmatpush2.msra.mxu0 0.0
    %1067 = vmatprep.subr.mxu0 0.0
    %1068 = vmatpush2.msra.mxu0 0.0
    %1069 = vmatprep.subr.mxu0 0.0
    %1070 = vmatpush2.msra.mxu0 0.0
    %1071 = vmatprep.subr.mxu0 0.0
    %1072 = vmatpush2.msra.mxu0 0.0
    %1073 = vmatprep.subr.mxu0 0.0
    %1074 = vmatpush2.msra.mxu0 0.0
    %1075 = vmatprep.subr.mxu0 0.0
    %1076 = vmatpush2.msra.mxu0 0.0
    %1077 = vmatprep.subr.mxu0 0.0
    %1078 = vmatpush2.msra.mxu0 0.0
    %1079 = vmatprep.mubr.f32.mxu0 0.0
    %1080 = vmatmul.mubr.f32.gmra.mxu0 %v1010
    %v1081 = vpop.f32.mrf.mxu0
    %v1082 = vadd.f32 0.0, %v1081
    %v1083 = vpop.f32.mrf.mxu0
    %1084 = vmatprep.mubr.f32.mxu0 0.0
    %1085 = vmatmul.mubr.f32.gmra.mxu0 %v1013
    %v1086 = vpop.f32.mrf.mxu0
    %v1087 = vadd.f32 0.0, %v1086
    %v1088 = vpop.f32.mrf.mxu0
    %1089 = vdwg.mxu0
    %v1091 = vsel %vm608, %v797, 0
    %v1094 = vsel %vm608, %v802, 0
    %1096 = vmatprep.subr.mxu0 0.0
    %1097 = vmatpush1.msra.mxu0 0.0
    %1098 = vmatprep.subr.mxu0 0.0
    %1099 = vmatpush1.msra.mxu0 0.0
    %1100 = vmatprep.subr.mxu0 0.0
    %1101 = vmatpush1.msra.mxu0 0.0
    %1102 = vmatprep.subr.mxu0 0.0
    %1103 = vmatpush1.msra.mxu0 0.0
    %1104 = vmatprep.subr.mxu0 0.0
    %1105 = vmatpush1.msra.mxu0 0.0
    %1106 = vmatprep.subr.mxu0 0.0
    %1107 = vmatpush1.msra.mxu0 0.0
    %1108 = vmatprep.subr.mxu0 0.0
    %1109 = vmatpush1.msra.mxu0 0.0
    %1110 = vmatprep.subr.mxu0 0.0
    %1111 = vmatpush1.msra.mxu0 0.0
    %1112 = vmatprep.subr.mxu0 0.0
    %1113 = vmatpush1.msra.mxu0 0.0
    %1114 = vmatprep.subr.mxu0 0.0
    %1115 = vmatpush1.msra.mxu0 0.0
    %1116 = vmatprep.subr.mxu0 0.0
    %1117 = vmatpush1.msra.mxu0 0.0
    %1118 = vmatprep.subr.mxu0 0.0
    %1119 = vmatpush1.msra.mxu0 0.0
    %1120 = vmatprep.subr.mxu0 0.0
    %1121 = vmatpush1.msra.mxu0 0.0
    %1122 = vmatprep.subr.mxu0 0.0
    %1123 = vmatpush1.msra.mxu0 0.0
    %1124 = vmatprep.subr.mxu0 0.0
    %1125 = vmatpush1.msra.mxu0 0.0
    %1126 = vmatprep.subr.mxu0 0.0
    %1127 = vmatpush1.msra.mxu0 %v284
    %1128 = vmatprep.subr.mxu0 0.0
    %1129 = vmatpush2.msra.mxu0 0.0
    %1130 = vmatprep.subr.mxu0 0.0
    %1131 = vmatpush2.msra.mxu0 0.0
    %1132 = vmatprep.subr.mxu0 0.0
    %1133 = vmatpush2.msra.mxu0 0.0
    %1134 = vmatprep.subr.mxu0 0.0
    %1135 = vmatpush2.msra.mxu0 0.0
    %1136 = vmatprep.subr.mxu0 0.0
    %1137 = vmatpush2.msra.mxu0 0.0
    %1138 = vmatprep.subr.mxu0 0.0
    %1139 = vmatpush2.msra.mxu0 0.0
    %1140 = vmatprep.subr.mxu0 0.0
    %1141 = vmatpush2.msra.mxu0 0.0
    %1142 = vmatprep.subr.mxu0 0.0
    %1143 = vmatpush2.msra.mxu0 0.0
    %1144 = vmatprep.subr.mxu0 0.0
    %1145 = vmatpush2.msra.mxu0 0.0
    %1146 = vmatprep.subr.mxu0 0.0
    %1147 = vmatpush2.msra.mxu0 0.0
    %1148 = vmatprep.subr.mxu0 0.0
    %1149 = vmatpush2.msra.mxu0 0.0
    %1150 = vmatprep.subr.mxu0 0.0
    %1151 = vmatpush2.msra.mxu0 0.0
    %1152 = vmatprep.subr.mxu0 0.0
    %1153 = vmatpush2.msra.mxu0 0.0
    %1154 = vmatprep.subr.mxu0 0.0
    %1155 = vmatpush2.msra.mxu0 0.0
    %1156 = vmatprep.subr.mxu0 0.0
    %1157 = vmatpush2.msra.mxu0 0.0
    %1158 = vmatprep.subr.mxu0 0.0
    %1159 = vmatpush2.msra.mxu0 0.0
    %1160 = vmatprep.mubr.f32.mxu0 0.0
    %1161 = vmatmul.mubr.f32.gmra.mxu0 %v1091
    %v1162 = vpop.f32.mrf.mxu0
    %v1163 = vadd.f32 %v1082, %v1162
    %v1164 = vpop.f32.mrf.mxu0
    %1165 = vmatprep.mubr.f32.mxu0 0.0
    %1166 = vmatmul.mubr.f32.gmra.mxu0 %v1094
    %v1167 = vpop.f32.mrf.mxu0
    %v1168 = vadd.f32 %v1087, %v1167
    %v1169 = vpop.f32.mrf.mxu0
    %1170 = vdwg.mxu0
    %1171 = vrot.lane.b32.xlu0 %v594, 112
    %v1172 = vpop.permute.xlu0 %1171
    %1173 = vrot.lane.b32.xlu0 %v599, 112
    %v1174 = vpop.permute.xlu0 %1173
    %1175 = vrot.lane.b32.xlu0 %v594, 80
    %v1176 = vpop.permute.xlu0 %1175
    %1177 = vrot.lane.b32.xlu0 %v599, 80
    %v1178 = vpop.permute.xlu0 %1177
    %v1179 = vsel %vm608, %v1172, 0
    %v1181 = vsel %vm608, %v1174, 0
    %v1183 = vsel %vm608, %v1176, 0
    %v1185 = vsel %vm608, %v1178, 0
    %1187 = vmatprep.subr.mxu0 0.0
    %1188 = vmatpush1.xpose.msra.mxu0 0.0
    %1189 = vmatprep.subr.mxu0 0.0
    %1190 = vmatpush1.xpose.msra.mxu0 0.0
    %1191 = vmatprep.subr.mxu0 0.0
    %1192 = vmatpush1.xpose.msra.mxu0 0.0
    %1193 = vmatprep.subr.mxu0 0.0
    %1194 = vmatpush1.xpose.msra.mxu0 0.0
    %1195 = vmatprep.subr.mxu0 0.0
    %1196 = vmatpush1.xpose.msra.mxu0 0.0
    %1197 = vmatprep.subr.mxu0 0.0
    %1198 = vmatpush1.xpose.msra.mxu0 0.0
    %1199 = vmatprep.subr.mxu0 0.0
    %1200 = vmatpush1.xpose.msra.mxu0 0.0
    %1201 = vmatprep.subr.mxu0 0.0
    %1202 = vmatpush1.xpose.msra.mxu0 0.0
    %1203 = vmatprep.subr.mxu0 0.0
    %1204 = vmatpush1.xpose.msra.mxu0 0.0
    %1205 = vmatprep.subr.mxu0 0.0
    %1206 = vmatpush1.xpose.msra.mxu0 0.0
    %1207 = vmatprep.subr.mxu0 0.0
    %1208 = vmatpush1.xpose.msra.mxu0 0.0
    %1209 = vmatprep.subr.mxu0 0.0
    %1210 = vmatpush1.xpose.msra.mxu0 0.0
    %1211 = vmatprep.subr.mxu0 0.0
    %1212 = vmatpush1.xpose.msra.mxu0 0.0
    %1213 = vmatprep.subr.mxu0 0.0
    %1214 = vmatpush1.xpose.msra.mxu0 0.0
    %1215 = vmatprep.subr.mxu0 0.0
    %1216 = vmatpush1.xpose.msra.mxu0 %v1185
    %1217 = vmatprep.subr.mxu0 0.0
    %1218 = vmatpush1.xpose.msra.mxu0 %v1183
    %1219 = vmatprep.subr.mxu0 0.0
    %1220 = vmatpush2.xpose.msra.mxu0 0.0
    %1221 = vmatprep.subr.mxu0 0.0
    %1222 = vmatpush2.xpose.msra.mxu0 0.0
    %1223 = vmatprep.subr.mxu0 0.0
    %1224 = vmatpush2.xpose.msra.mxu0 0.0
    %1225 = vmatprep.subr.mxu0 0.0
    %1226 = vmatpush2.xpose.msra.mxu0 0.0
    %1227 = vmatprep.subr.mxu0 0.0
    %1228 = vmatpush2.xpose.msra.mxu0 0.0
    %1229 = vmatprep.subr.mxu0 0.0
    %1230 = vmatpush2.xpose.msra.mxu0 0.0
    %1231 = vmatprep.subr.mxu0 0.0
    %1232 = vmatpush2.xpose.msra.mxu0 0.0
    %1233 = vmatprep.subr.mxu0 0.0
    %1234 = vmatpush2.xpose.msra.mxu0 0.0
    %1235 = vmatprep.subr.mxu0 0.0
    %1236 = vmatpush2.xpose.msra.mxu0 0.0
    %1237 = vmatprep.subr.mxu0 0.0
    %1238 = vmatpush2.xpose.msra.mxu0 0.0
    %1239 = vmatprep.subr.mxu0 0.0
    %1240 = vmatpush2.xpose.msra.mxu0 0.0
    %1241 = vmatprep.subr.mxu0 0.0
    %1242 = vmatpush2.xpose.msra.mxu0 0.0
    %1243 = vmatprep.subr.mxu0 0.0
    %1244 = vmatpush2.xpose.msra.mxu0 0.0
    %1245 = vmatprep.subr.mxu0 0.0
    %1246 = vmatpush2.xpose.msra.mxu0 0.0
    %1247 = vmatprep.subr.mxu0 0.0
    %1248 = vmatpush2.xpose.msra.mxu0 0.0
    %1249 = vmatprep.subr.mxu0 0.0
    %1250 = vmatpush2.xpose.msra.mxu0 0.0
    %1251 = vmatprep.mubr.f32.mxu0 0.0
    %1252 = vmatmul.mubr.f32.gmra.mxu0 %v1179
    %v1253 = vpop.f32.mrf.mxu0
    %v1254 = vadd.f32 0.0, %v1253
    %v1255 = vpop.f32.mrf.mxu0
    %1256 = vmatprep.mubr.f32.mxu0 0.0
    %1257 = vmatmul.mubr.f32.gmra.mxu0 %v1181
    %v1258 = vpop.f32.mrf.mxu0
    %v1259 = vadd.f32 0.0, %v1258
    %v1260 = vpop.f32.mrf.mxu0
    %1261 = vdwg.mxu0
    %v1262 = vmul.f32 %v1254, 0.35355338
    %v1263 = vmul.f32 %v1259, 0.35355338
    %v1264 = vadd.f32 %v1262, %v92
    %v1265 = vadd.f32 %v1263, %v93
    %v1266 = vsel %vm304, %v1264, -inf
    %1267 = vmax.xlane.f32.xlu0 %v1266
    %v1268 = vpop.xlane.xlu0 %1267
    %v1269 = vsel %vm304, %v1265, -inf
    %1270 = vmax.xlane.f32.xlu0 %v1269
    %v1271 = vpop.xlane.xlu0 %1270
    %v1272 = vsub.f32 %v1264, %v1268
    %v1273 = vsub.f32 %v1265, %v1271
    %v1274 = vmul.f32 %v1272, 1.442695
    %v1275 = vpow.pop %v1274
    %v1276 = vmul.f32 %v1273, 1.442695
    %v1277 = vpow.pop %v1276
    %v1278 = vsel %vm304, %v1275, 0.0
    %1279 = vadd.xlane.f32.xlu0 %v1278
    %v1280 = vpop.xlane.xlu0 %1279
    %v1281 = vsel %vm304, %v1277, 0.0
    %1282 = vadd.xlane.f32.xlu0 %v1281
    %v1283 = vpop.xlane.xlu0 %1282
    %v1284 = vrcp.pop %v1280
    %v1285 = vrcp.pop %v1283
    %v1286 = vmul.f32 %v1275, %v1284
    %v1287 = vmul.f32 %v1277, %v1285
    %1288 = vrot.lane.b32.xlu0 %v594, 48
    %v1289 = vpop.permute.xlu0 %1288
    %1290 = vrot.lane.b32.xlu0 %v599, 48
    %v1291 = vpop.permute.xlu0 %1290
    %v1295 = vsel %vm304, %v1286, 0
    %v1298 = vsel %vm304, %v1287, 0
    %1300 = vmatprep.subr.mxu0 0.0
    %1301 = vmatpush1.msra.mxu0 0.0
    %1302 = vmatprep.subr.mxu0 0.0
    %1303 = vmatpush1.msra.mxu0 0.0
    %1304 = vmatprep.subr.mxu0 0.0
    %1305 = vmatpush1.msra.mxu0 0.0
    %1306 = vmatprep.subr.mxu0 0.0
    %1307 = vmatpush1.msra.mxu0 0.0
    %1308 = vmatprep.subr.mxu0 0.0
    %1309 = vmatpush1.msra.mxu0 0.0
    %1310 = vmatprep.subr.mxu0 0.0
    %1311 = vmatpush1.msra.mxu0 0.0
    %1312 = vmatprep.subr.mxu0 0.0
    %1313 = vmatpush1.msra.mxu0 0.0
    %1314 = vmatprep.subr.mxu0 0.0
    %1315 = vmatpush1.msra.mxu0 0.0
    %1316 = vmatprep.subr.mxu0 0.0
    %1317 = vmatpush1.msra.mxu0 0.0
    %1318 = vmatprep.subr.mxu0 0.0
    %1319 = vmatpush1.msra.mxu0 0.0
    %1320 = vmatprep.subr.mxu0 0.0
    %1321 = vmatpush1.msra.mxu0 0.0
    %1322 = vmatprep.subr.mxu0 0.0
    %1323 = vmatpush1.msra.mxu0 0.0
    %1324 = vmatprep.subr.mxu0 0.0
    %1325 = vmatpush1.msra.mxu0 0.0
    %1326 = vmatprep.subr.mxu0 0.0
    %1327 = vmatpush1.msra.mxu0 0.0
    %1328 = vmatprep.subr.mxu0 0.0
    %1329 = vmatpush1.msra.mxu0 %v1291
    %1330 = vmatprep.subr.mxu0 0.0
    %1331 = vmatpush1.msra.mxu0 %v1289
    %1332 = vmatprep.subr.mxu0 0.0
    %1333 = vmatpush2.msra.mxu0 0.0
    %1334 = vmatprep.subr.mxu0 0.0
    %1335 = vmatpush2.msra.mxu0 0.0
    %1336 = vmatprep.subr.mxu0 0.0
    %1337 = vmatpush2.msra.mxu0 0.0
    %1338 = vmatprep.subr.mxu0 0.0
    %1339 = vmatpush2.msra.mxu0 0.0
    %1340 = vmatprep.subr.mxu0 0.0
    %1341 = vmatpush2.msra.mxu0 0.0
    %1342 = vmatprep.subr.mxu0 0.0
    %1343 = vmatpush2.msra.mxu0 0.0
    %1344 = vmatprep.subr.mxu0 0.0
    %1345 = vmatpush2.msra.mxu0 0.0
    %1346 = vmatprep.subr.mxu0 0.0
    %1347 = vmatpush2.msra.mxu0 0.0
    %1348 = vmatprep.subr.mxu0 0.0
    %1349 = vmatpush2.msra.mxu0 0.0
    %1350 = vmatprep.subr.mxu0 0.0
    %1351 = vmatpush2.msra.mxu0 0.0
    %1352 = vmatprep.subr.mxu0 0.0
    %1353 = vmatpush2.msra.mxu0 0.0
    %1354 = vmatprep.subr.mxu0 0.0
    %1355 = vmatpush2.msra.mxu0 0.0
    %1356 = vmatprep.subr.mxu0 0.0
    %1357 = vmatpush2.msra.mxu0 0.0
    %1358 = vmatprep.subr.mxu0 0.0
    %1359 = vmatpush2.msra.mxu0 0.0
    %1360 = vmatprep.subr.mxu0 0.0
    %1361 = vmatpush2.msra.mxu0 0.0
    %1362 = vmatprep.subr.mxu0 0.0
    %1363 = vmatpush2.msra.mxu0 0.0
    %1364 = vmatprep.mubr.f32.mxu0 0.0
    %1365 = vmatmul.mubr.f32.gmra.mxu0 %v1295
    %v1366 = vpop.f32.mrf.mxu0
    %v1367 = vadd.f32 0.0, %v1366
    %v1368 = vpop.f32.mrf.mxu0
    %1369 = vmatprep.mubr.f32.mxu0 0.0
    %1370 = vmatmul.mubr.f32.gmra.mxu0 %v1298
    %v1371 = vpop.f32.mrf.mxu0
    %v1372 = vadd.f32 0.0, %v1371
    %v1373 = vpop.f32.mrf.mxu0
    %1374 = vdwg.mxu0
    %v1376 = vsel %vm608, %v1367, 0
    %v1379 = vsel %vm608, %v1372, 0
    %1381 = vmatprep.subr.mxu0 0.0
    %1382 = vmatpush1.msra.mxu0 0.0
    %1383 = vmatprep.subr.mxu0 0.0
    %1384 = vmatpush1.msra.mxu0 0.0
    %1385 = vmatprep.subr.mxu0 0.0
    %1386 = vmatpush1.msra.mxu0 0.0
    %1387 = vmatprep.subr.mxu0 0.0
    %1388 = vmatpush1.msra.mxu0 0.0
    %1389 = vmatprep.subr.mxu0 0.0
    %1390 = vmatpush1.msra.mxu0 0.0
    %1391 = vmatprep.subr.mxu0 0.0
    %1392 = vmatpush1.msra.mxu0 0.0
    %1393 = vmatprep.subr.mxu0 0.0
    %1394 = vmatpush1.msra.mxu0 0.0
    %1395 = vmatprep.subr.mxu0 0.0
    %1396 = vmatpush1.msra.mxu0 0.0
    %1397 = vmatprep.subr.mxu0 0.0
    %1398 = vmatpush1.msra.mxu0 0.0
    %1399 = vmatprep.subr.mxu0 0.0
    %1400 = vmatpush1.msra.mxu0 0.0
    %1401 = vmatprep.subr.mxu0 0.0
    %1402 = vmatpush1.msra.mxu0 0.0
    %1403 = vmatprep.subr.mxu0 0.0
    %1404 = vmatpush1.msra.mxu0 0.0
    %1405 = vmatprep.subr.mxu0 0.0
    %1406 = vmatpush1.msra.mxu0 0.0
    %1407 = vmatprep.subr.mxu0 0.0
    %1408 = vmatpush1.msra.mxu0 0.0
    %1409 = vmatprep.subr.mxu0 0.0
    %1410 = vmatpush1.msra.mxu0 0.0
    %1411 = vmatprep.subr.mxu0 0.0
    %1412 = vmatpush1.msra.mxu0 %v286
    %1413 = vmatprep.subr.mxu0 0.0
    %1414 = vmatpush2.msra.mxu0 0.0
    %1415 = vmatprep.subr.mxu0 0.0
    %1416 = vmatpush2.msra.mxu0 0.0
    %1417 = vmatprep.subr.mxu0 0.0
    %1418 = vmatpush2.msra.mxu0 0.0
    %1419 = vmatprep.subr.mxu0 0.0
    %1420 = vmatpush2.msra.mxu0 0.0
    %1421 = vmatprep.subr.mxu0 0.0
    %1422 = vmatpush2.msra.mxu0 0.0
    %1423 = vmatprep.subr.mxu0 0.0
    %1424 = vmatpush2.msra.mxu0 0.0
    %1425 = vmatprep.subr.mxu0 0.0
    %1426 = vmatpush2.msra.mxu0 0.0
    %1427 = vmatprep.subr.mxu0 0.0
    %1428 = vmatpush2.msra.mxu0 0.0
    %1429 = vmatprep.subr.mxu0 0.0
    %1430 = vmatpush2.msra.mxu0 0.0
    %1431 = vmatprep.subr.mxu0 0.0
    %1432 = vmatpush2.msra.mxu0 0.0
    %1433 = vmatprep.subr.mxu0 0.0
    %1434 = vmatpush2.msra.mxu0 0.0
    %1435 = vmatprep.subr.mxu0 0.0
    %1436 = vmatpush2.msra.mxu0 0.0
    %1437 = vmatprep.subr.mxu0 0.0
    %1438 = vmatpush2.msra.mxu0 0.0
    %1439 = vmatprep.subr.mxu0 0.0
    %1440 = vmatpush2.msra.mxu0 0.0
    %1441 = vmatprep.subr.mxu0 0.0
    %1442 = vmatpush2.msra.mxu0 0.0
    %1443 = vmatprep.subr.mxu0 0.0
    %1444 = vmatpush2.msra.mxu0 0.0
    %1445 = vmatprep.mubr.f32.mxu0 0.0
    %1446 = vmatmul.mubr.f32.gmra.mxu0 %v1376
    %v1447 = vpop.f32.mrf.mxu0
    %v1448 = vadd.f32 0.0, %v1447
    %v1449 = vpop.f32.mrf.mxu0
    %1450 = vmatprep.mubr.f32.mxu0 0.0
    %1451 = vmatmul.mubr.f32.gmra.mxu0 %v1379
    %v1452 = vpop.f32.mrf.mxu0
    %v1453 = vadd.f32 0.0, %v1452
    %v1454 = vpop.f32.mrf.mxu0
    %1455 = vdwg.mxu0
    %v1456 = vadd.f32 %v1163, %v1448
    %v1457 = vadd.f32 %v1168, %v1453
    %1458 = vrot.lane.b32.xlu0 %v594, 104
    %v1459 = vpop.permute.xlu0 %1458
    %1460 = vrot.lane.b32.xlu0 %v599, 104
    %v1461 = vpop.permute.xlu0 %1460
    %1462 = vrot.lane.b32.xlu0 %v594, 72
    %v1463 = vpop.permute.xlu0 %1462
    %1464 = vrot.lane.b32.xlu0 %v599, 72
    %v1465 = vpop.permute.xlu0 %1464
    %v1466 = vsel %vm608, %v1459, 0
    %v1468 = vsel %vm608, %v1461, 0
    %v1470 = vsel %vm608, %v1463, 0
    %v1472 = vsel %vm608, %v1465, 0
    %1474 = vmatprep.subr.mxu0 0.0
    %1475 = vmatpush1.xpose.msra.mxu0 0.0
    %1476 = vmatprep.subr.mxu0 0.0
    %1477 = vmatpush1.xpose.msra.mxu0 0.0
    %1478 = vmatprep.subr.mxu0 0.0
    %1479 = vmatpush1.xpose.msra.mxu0 0.0
    %1480 = vmatprep.subr.mxu0 0.0
    %1481 = vmatpush1.xpose.msra.mxu0 0.0
    %1482 = vmatprep.subr.mxu0 0.0
    %1483 = vmatpush1.xpose.msra.mxu0 0.0
    %1484 = vmatprep.subr.mxu0 0.0
    %1485 = vmatpush1.xpose.msra.mxu0 0.0
    %1486 = vmatprep.subr.mxu0 0.0
    %1487 = vmatpush1.xpose.msra.mxu0 0.0
    %1488 = vmatprep.subr.mxu0 0.0
    %1489 = vmatpush1.xpose.msra.mxu0 0.0
    %1490 = vmatprep.subr.mxu0 0.0
    %1491 = vmatpush1.xpose.msra.mxu0 0.0
    %1492 = vmatprep.subr.mxu0 0.0
    %1493 = vmatpush1.xpose.msra.mxu0 0.0
    %1494 = vmatprep.subr.mxu0 0.0
    %1495 = vmatpush1.xpose.msra.mxu0 0.0
    %1496 = vmatprep.subr.mxu0 0.0
    %1497 = vmatpush1.xpose.msra.mxu0 0.0
    %1498 = vmatprep.subr.mxu0 0.0
    %1499 = vmatpush1.xpose.msra.mxu0 0.0
    %1500 = vmatprep.subr.mxu0 0.0
    %1501 = vmatpush1.xpose.msra.mxu0 0.0
    %1502 = vmatprep.subr.mxu0 0.0
    %1503 = vmatpush1.xpose.msra.mxu0 %v1472
    %1504 = vmatprep.subr.mxu0 0.0
    %1505 = vmatpush1.xpose.msra.mxu0 %v1470
    %1506 = vmatprep.subr.mxu0 0.0
    %1507 = vmatpush2.xpose.msra.mxu0 0.0
    %1508 = vmatprep.subr.mxu0 0.0
    %1509 = vmatpush2.xpose.msra.mxu0 0.0
    %1510 = vmatprep.subr.mxu0 0.0
    %1511 = vmatpush2.xpose.msra.mxu0 0.0
    %1512 = vmatprep.subr.mxu0 0.0
    %1513 = vmatpush2.xpose.msra.mxu0 0.0
    %1514 = vmatprep.subr.mxu0 0.0
    %1515 = vmatpush2.xpose.msra.mxu0 0.0
    %1516 = vmatprep.subr.mxu0 0.0
    %1517 = vmatpush2.xpose.msra.mxu0 0.0
    %1518 = vmatprep.subr.mxu0 0.0
    %1519 = vmatpush2.xpose.msra.mxu0 0.0
    %1520 = vmatprep.subr.mxu0 0.0
    %1521 = vmatpush2.xpose.msra.mxu0 0.0
    %1522 = vmatprep.subr.mxu0 0.0
    %1523 = vmatpush2.xpose.msra.mxu0 0.0
    %1524 = vmatprep.subr.mxu0 0.0
    %1525 = vmatpush2.xpose.msra.mxu0 0.0
    %1526 = vmatprep.subr.mxu0 0.0
    %1527 = vmatpush2.xpose.msra.mxu0 0.0
    %1528 = vmatprep.subr.mxu0 0.0
    %1529 = vmatpush2.xpose.msra.mxu0 0.0
    %1530 = vmatprep.subr.mxu0 0.0
    %1531 = vmatpush2.xpose.msra.mxu0 0.0
    %1532 = vmatprep.subr.mxu0 0.0
    %1533 = vmatpush2.xpose.msra.mxu0 0.0
    %1534 = vmatprep.subr.mxu0 0.0
    %1535 = vmatpush2.xpose.msra.mxu0 0.0
    %1536 = vmatprep.subr.mxu0 0.0
    %1537 = vmatpush2.xpose.msra.mxu0 0.0
    %1538 = vmatprep.mubr.f32.mxu0 0.0
    %1539 = vmatmul.mubr.f32.gmra.mxu0 %v1466
    %v1540 = vpop.f32.mrf.mxu0
    %v1541 = vadd.f32 0.0, %v1540
    %v1542 = vpop.f32.mrf.mxu0
    %1543 = vmatprep.mubr.f32.mxu0 0.0
    %1544 = vmatmul.mubr.f32.gmra.mxu0 %v1468
    %v1545 = vpop.f32.mrf.mxu0
    %v1546 = vadd.f32 0.0, %v1545
    %v1547 = vpop.f32.mrf.mxu0
    %1548 = vdwg.mxu0
    %v1549 = vmul.f32 %v1541, 0.35355338
    %v1550 = vmul.f32 %v1546, 0.35355338
    %v1551 = vadd.f32 %v1549, %v92
    %v1552 = vadd.f32 %v1550, %v93
    %v1553 = vsel %vm304, %v1551, -inf
    %1554 = vmax.xlane.f32.xlu0 %v1553
    %v1555 = vpop.xlane.xlu0 %1554
    %v1556 = vsel %vm304, %v1552, -inf
    %1557 = vmax.xlane.f32.xlu0 %v1556
    %v1558 = vpop.xlane.xlu0 %1557
    %v1559 = vsub.f32 %v1551, %v1555
    %v1560 = vsub.f32 %v1552, %v1558
    %v1561 = vmul.f32 %v1559, 1.442695
    %v1562 = vpow.pop %v1561
    %v1563 = vmul.f32 %v1560, 1.442695
    %v1564 = vpow.pop %v1563
    %v1565 = vsel %vm304, %v1562, 0.0
    %1566 = vadd.xlane.f32.xlu0 %v1565
    %v1567 = vpop.xlane.xlu0 %1566
    %v1568 = vsel %vm304, %v1564, 0.0
    %1569 = vadd.xlane.f32.xlu0 %v1568
    %v1570 = vpop.xlane.xlu0 %1569
    %v1571 = vrcp.pop %v1567
    %v1572 = vrcp.pop %v1570
    %v1573 = vmul.f32 %v1562, %v1571
    %v1574 = vmul.f32 %v1564, %v1572
    %1575 = vrot.lane.b32.xlu0 %v594, 40
    %v1576 = vpop.permute.xlu0 %1575
    %1577 = vrot.lane.b32.xlu0 %v599, 40
    %v1578 = vpop.permute.xlu0 %1577
    %v1582 = vsel %vm304, %v1573, 0
    %v1585 = vsel %vm304, %v1574, 0
    %1587 = vmatprep.subr.mxu0 0.0
    %1588 = vmatpush1.msra.mxu0 0.0
    %1589 = vmatprep.subr.mxu0 0.0
    %1590 = vmatpush1.msra.mxu0 0.0
    %1591 = vmatprep.subr.mxu0 0.0
    %1592 = vmatpush1.msra.mxu0 0.0
    %1593 = vmatprep.subr.mxu0 0.0
    %1594 = vmatpush1.msra.mxu0 0.0
    %1595 = vmatprep.subr.mxu0 0.0
    %1596 = vmatpush1.msra.mxu0 0.0
    %1597 = vmatprep.subr.mxu0 0.0
    %1598 = vmatpush1.msra.mxu0 0.0
    %1599 = vmatprep.subr.mxu0 0.0
    %1600 = vmatpush1.msra.mxu0 0.0
    %1601 = vmatprep.subr.mxu0 0.0
    %1602 = vmatpush1.msra.mxu0 0.0
    %1603 = vmatprep.subr.mxu0 0.0
    %1604 = vmatpush1.msra.mxu0 0.0
    %1605 = vmatprep.subr.mxu0 0.0
    %1606 = vmatpush1.msra.mxu0 0.0
    %1607 = vmatprep.subr.mxu0 0.0
    %1608 = vmatpush1.msra.mxu0 0.0
    %1609 = vmatprep.subr.mxu0 0.0
    %1610 = vmatpush1.msra.mxu0 0.0
    %1611 = vmatprep.subr.mxu0 0.0
    %1612 = vmatpush1.msra.mxu0 0.0
    %1613 = vmatprep.subr.mxu0 0.0
    %1614 = vmatpush1.msra.mxu0 0.0
    %1615 = vmatprep.subr.mxu0 0.0
    %1616 = vmatpush1.msra.mxu0 %v1578
    %1617 = vmatprep.subr.mxu0 0.0
    %1618 = vmatpush1.msra.mxu0 %v1576
    %1619 = vmatprep.subr.mxu0 0.0
    %1620 = vmatpush2.msra.mxu0 0.0
    %1621 = vmatprep.subr.mxu0 0.0
    %1622 = vmatpush2.msra.mxu0 0.0
    %1623 = vmatprep.subr.mxu0 0.0
    %1624 = vmatpush2.msra.mxu0 0.0
    %1625 = vmatprep.subr.mxu0 0.0
    %1626 = vmatpush2.msra.mxu0 0.0
    %1627 = vmatprep.subr.mxu0 0.0
    %1628 = vmatpush2.msra.mxu0 0.0
    %1629 = vmatprep.subr.mxu0 0.0
    %1630 = vmatpush2.msra.mxu0 0.0
    %1631 = vmatprep.subr.mxu0 0.0
    %1632 = vmatpush2.msra.mxu0 0.0
    %1633 = vmatprep.subr.mxu0 0.0
    %1634 = vmatpush2.msra.mxu0 0.0
    %1635 = vmatprep.subr.mxu0 0.0
    %1636 = vmatpush2.msra.mxu0 0.0
    %1637 = vmatprep.subr.mxu0 0.0
    %1638 = vmatpush2.msra.mxu0 0.0
    %1639 = vmatprep.subr.mxu0 0.0
    %1640 = vmatpush2.msra.mxu0 0.0
    %1641 = vmatprep.subr.mxu0 0.0
    %1642 = vmatpush2.msra.mxu0 0.0
    %1643 = vmatprep.subr.mxu0 0.0
    %1644 = vmatpush2.msra.mxu0 0.0
    %1645 = vmatprep.subr.mxu0 0.0
    %1646 = vmatpush2.msra.mxu0 0.0
    %1647 = vmatprep.subr.mxu0 0.0
    %1648 = vmatpush2.msra.mxu0 0.0
    %1649 = vmatprep.subr.mxu0 0.0
    %1650 = vmatpush2.msra.mxu0 0.0
    %1651 = vmatprep.mubr.f32.mxu0 0.0
    %1652 = vmatmul.mubr.f32.gmra.mxu0 %v1582
    %v1653 = vpop.f32.mrf.mxu0
    %v1654 = vadd.f32 0.0, %v1653
    %v1655 = vpop.f32.mrf.mxu0
    %1656 = vmatprep.mubr.f32.mxu0 0.0
    %1657 = vmatmul.mubr.f32.gmra.mxu0 %v1585
    %v1658 = vpop.f32.mrf.mxu0
    %v1659 = vadd.f32 0.0, %v1658
    %v1660 = vpop.f32.mrf.mxu0
    %1661 = vdwg.mxu0
    %v1663 = vsel %vm608, %v1654, 0
    %v1666 = vsel %vm608, %v1659, 0
    %1668 = vmatprep.subr.mxu0 0.0
    %1669 = vmatpush1.msra.mxu0 0.0
    %1670 = vmatprep.subr.mxu0 0.0
    %1671 = vmatpush1.msra.mxu0 0.0
    %1672 = vmatprep.subr.mxu0 0.0
    %1673 = vmatpush1.msra.mxu0 0.0
    %1674 = vmatprep.subr.mxu0 0.0
    %1675 = vmatpush1.msra.mxu0 0.0
    %1676 = vmatprep.subr.mxu0 0.0
    %1677 = vmatpush1.msra.mxu0 0.0
    %1678 = vmatprep.subr.mxu0 0.0
    %1679 = vmatpush1.msra.mxu0 0.0
    %1680 = vmatprep.subr.mxu0 0.0
    %1681 = vmatpush1.msra.mxu0 0.0
    %1682 = vmatprep.subr.mxu0 0.0
    %1683 = vmatpush1.msra.mxu0 0.0
    %1684 = vmatprep.subr.mxu0 0.0
    %1685 = vmatpush1.msra.mxu0 0.0
    %1686 = vmatprep.subr.mxu0 0.0
    %1687 = vmatpush1.msra.mxu0 0.0
    %1688 = vmatprep.subr.mxu0 0.0
    %1689 = vmatpush1.msra.mxu0 0.0
    %1690 = vmatprep.subr.mxu0 0.0
    %1691 = vmatpush1.msra.mxu0 0.0
    %1692 = vmatprep.subr.mxu0 0.0
    %1693 = vmatpush1.msra.mxu0 0.0
    %1694 = vmatprep.subr.mxu0 0.0
    %1695 = vmatpush1.msra.mxu0 0.0
    %1696 = vmatprep.subr.mxu0 0.0
    %1697 = vmatpush1.msra.mxu0 0.0
    %1698 = vmatprep.subr.mxu0 0.0
    %1699 = vmatpush1.msra.mxu0 %v287
    %1700 = vmatprep.subr.mxu0 0.0
    %1701 = vmatpush2.msra.mxu0 0.0
    %1702 = vmatprep.subr.mxu0 0.0
    %1703 = vmatpush2.msra.mxu0 0.0
    %1704 = vmatprep.subr.mxu0 0.0
    %1705 = vmatpush2.msra.mxu0 0.0
    %1706 = vmatprep.subr.mxu0 0.0
    %1707 = vmatpush2.msra.mxu0 0.0
    %1708 = vmatprep.subr.mxu0 0.0
    %1709 = vmatpush2.msra.mxu0 0.0
    %1710 = vmatprep.subr.mxu0 0.0
    %1711 = vmatpush2.msra.mxu0 0.0
    %1712 = vmatprep.subr.mxu0 0.0
    %1713 = vmatpush2.msra.mxu0 0.0
    %1714 = vmatprep.subr.mxu0 0.0
    %1715 = vmatpush2.msra.mxu0 0.0
    %1716 = vmatprep.subr.mxu0 0.0
    %1717 = vmatpush2.msra.mxu0 0.0
    %1718 = vmatprep.subr.mxu0 0.0
    %1719 = vmatpush2.msra.mxu0 0.0
    %1720 = vmatprep.subr.mxu0 0.0
    %1721 = vmatpush2.msra.mxu0 0.0
    %1722 = vmatprep.subr.mxu0 0.0
    %1723 = vmatpush2.msra.mxu0 0.0
    %1724 = vmatprep.subr.mxu0 0.0
    %1725 = vmatpush2.msra.mxu0 0.0
    %1726 = vmatprep.subr.mxu0 0.0
    %1727 = vmatpush2.msra.mxu0 0.0
    %1728 = vmatprep.subr.mxu0 0.0
    %1729 = vmatpush2.msra.mxu0 0.0
    %1730 = vmatprep.subr.mxu0 0.0
    %1731 = vmatpush2.msra.mxu0 0.0
    %1732 = vmatprep.mubr.f32.mxu0 0.0
    %1733 = vmatmul.mubr.f32.gmra.mxu0 %v1663
    %v1734 = vpop.f32.mrf.mxu0
    %v1735 = vadd.f32 0.0, %v1734
    %v1736 = vpop.f32.mrf.mxu0
    %1737 = vmatprep.mubr.f32.mxu0 0.0
    %1738 = vmatmul.mubr.f32.gmra.mxu0 %v1666
    %v1739 = vpop.f32.mrf.mxu0
    %v1740 = vadd.f32 0.0, %v1739
    %v1741 = vpop.f32.mrf.mxu0
    %1742 = vdwg.mxu0
    %v1743 = vadd.f32 %v1456, %v1735
    %v1744 = vadd.f32 %v1457, %v1740
    %v1745 = vlaneseq
    %v1746 = vshrl.u32 %v1745, 7
    %v1747 = vsub.s32 4, %v1746
    %v1748 = vrot.slane %v302, %v1747
    %v1749 = vadd.f32 %v1743, %v1748
    %v1750 = vadd.f32 %v1744, %v1748
    %v1751 = vadd.f32 %v1749, %v470
    %v1752 = vadd.f32 %v1750, %v475
    %v1753 = vsel %vm197, %v1751, 0.0
    %1754 = vadd.xlane.f32.xlu0 %v1753
    %v1755 = vpop.xlane.xlu0 %1754
    %v1756 = vsel %vm197, %v1752, 0.0
    %1757 = vadd.xlane.f32.xlu0 %v1756
    %v1758 = vpop.xlane.xlu0 %1757
    %v1759 = vmul.f32 %v1755, %v484
    %v1760 = vmul.f32 %v1758, %v484
    %v1761 = vsub.f32 %v1751, %v1759
    %v1762 = vsub.f32 %v1752, %v1760
    %v1763 = vmul.f32 %v1761, %v1761
    %v1764 = vmul.f32 %v1762, %v1762
    %v1765 = vsel %vm197, %v1763, 0.0
    %1766 = vadd.xlane.f32.xlu0 %v1765
    %v1767 = vpop.xlane.xlu0 %1766
    %v1768 = vsel %vm197, %v1764, 0.0
    %1769 = vadd.xlane.f32.xlu0 %v1768
    %v1770 = vpop.xlane.xlu0 %1769
    %v1771 = vmul.f32 %v1767, %v484
    %v1772 = vmul.f32 %v1770, %v484
    %v1773 = vadd.f32 %v1771, 1e-05
    %v1774 = vadd.f32 %v1772, 1e-05
    %v1775 = vrsqrt.pop %v1773
    %v1776 = vrsqrt.pop %v1774
    %v1777 = vmul.f32 %v1761, %v1775
    %v1778 = vmul.f32 %v1762, %v1776
    %v1779 = vlaneseq
    %v1780 = vshrl.u32 %v1779, 7
    %v1781 = vsub.s32 5, %v1780
    %v1782 = vrot.slane %v302, %v1781
    %v1783 = vmul.f32 %v1777, %v1782
    %v1784 = vmul.f32 %v1778, %v1782
    %v1785 = vlaneseq
    %v1786 = vshrl.u32 %v1785, 7
    %v1787 = vsub.s32 6, %v1786
    %v1788 = vrot.slane %v302, %v1787
    %v1789 = vadd.f32 %v1783, %v1788
    %v1790 = vadd.f32 %v1784, %v1788
    %v1791 = vlaneseq
    %v1792 = vshrl.u32 %v1791, 7
    %v1793 = vsub.s32 7, %v1792
    %v1794 = vrot.slane %v302, %v1793
    %v1796 = vsel %vm197, %v1789, 0
    %v1799 = vsel %vm197, %v1790, 0
    %1801 = vmatprep.subr.mxu0 0.0
    %1802 = vmatpush1.msra.mxu0 0.0
    %1803 = vmatprep.subr.mxu0 0.0
    %1804 = vmatpush1.msra.mxu0 0.0
    %1805 = vmatprep.subr.mxu0 0.0
    %1806 = vmatpush1.msra.mxu0 0.0
    %1807 = vmatprep.subr.mxu0 0.0
    %1808 = vmatpush1.msra.mxu0 0.0
    %1809 = vmatprep.subr.mxu0 0.0
    %1810 = vmatpush1.msra.mxu0 0.0
    %1811 = vmatprep.subr.mxu0 0.0
    %1812 = vmatpush1.msra.mxu0 0.0
    %1813 = vmatprep.subr.mxu0 0.0
    %1814 = vmatpush1.msra.mxu0 0.0
    %1815 = vmatprep.subr.mxu0 0.0
    %1816 = vmatpush1.msra.mxu0 0.0
    %1817 = vmatprep.subr.mxu0 0.0
    %1818 = vmatpush1.msra.mxu0 0.0
    %1819 = vmatprep.subr.mxu0 0.0
    %1820 = vmatpush1.msra.mxu0 0.0
    %1821 = vmatprep.subr.mxu0 0.0
    %1822 = vmatpush1.msra.mxu0 0.0
    %1823 = vmatprep.subr.mxu0 0.0
    %1824 = vmatpush1.msra.mxu0 0.0
    %1825 = vmatprep.subr.mxu0 0.0
    %1826 = vmatpush1.msra.mxu0 %v292
    %1827 = vmatprep.subr.mxu0 0.0
    %1828 = vmatpush1.msra.mxu0 %v291
    %1829 = vmatprep.subr.mxu0 0.0
    %1830 = vmatpush1.msra.mxu0 %v290
    %1831 = vmatprep.subr.mxu0 0.0
    %1832 = vmatpush1.msra.mxu0 %v289
    %1833 = vmatprep.subr.mxu0 0.0
    %1834 = vmatpush2.msra.mxu0 0.0
    %1835 = vmatprep.subr.mxu0 0.0
    %1836 = vmatpush2.msra.mxu0 0.0
    %1837 = vmatprep.subr.mxu0 0.0
    %1838 = vmatpush2.msra.mxu0 0.0
    %1839 = vmatprep.subr.mxu0 0.0
    %1840 = vmatpush2.msra.mxu0 0.0
    %1841 = vmatprep.subr.mxu0 0.0
    %1842 = vmatpush2.msra.mxu0 0.0
    %1843 = vmatprep.subr.mxu0 0.0
    %1844 = vmatpush2.msra.mxu0 0.0
    %1845 = vmatprep.subr.mxu0 0.0
    %1846 = vmatpush2.msra.mxu0 0.0
    %1847 = vmatprep.subr.mxu0 0.0
    %1848 = vmatpush2.msra.mxu0 0.0
    %1849 = vmatprep.subr.mxu0 0.0
    %1850 = vmatpush2.msra.mxu0 0.0
    %1851 = vmatprep.subr.mxu0 0.0
    %1852 = vmatpush2.msra.mxu0 0.0
    %1853 = vmatprep.subr.mxu0 0.0
    %1854 = vmatpush2.msra.mxu0 0.0
    %1855 = vmatprep.subr.mxu0 0.0
    %1856 = vmatpush2.msra.mxu0 0.0
    %1857 = vmatprep.subr.mxu0 0.0
    %1858 = vmatpush2.msra.mxu0 0.0
    %1859 = vmatprep.subr.mxu0 0.0
    %1860 = vmatpush2.msra.mxu0 0.0
    %1861 = vmatprep.subr.mxu0 0.0
    %1862 = vmatpush2.msra.mxu0 0.0
    %1863 = vmatprep.subr.mxu0 0.0
    %1864 = vmatpush2.msra.mxu0 0.0
    %1865 = vmatprep.mubr.f32.mxu0 0.0
    %1866 = vmatmul.mubr.f32.gmra.mxu0 %v1796
    %v1867 = vpop.f32.mrf.mxu0
    %v1868 = vadd.f32 %v1794, %v1867
    %v1869 = vpop.f32.mrf.mxu0
    %1870 = vmatprep.mubr.f32.mxu0 0.0
    %1871 = vmatmul.mubr.f32.gmra.mxu0 %v1799
    %v1872 = vpop.f32.mrf.mxu0
    %v1873 = vadd.f32 %v1794, %v1872
    %v1874 = vpop.f32.mrf.mxu0
    %1875 = vdwg.mxu0
    %v1876 = vxor.u32 %v1868, 2147483648
    %v1877 = vxor.u32 %v1873, 2147483648
    %v1878 = vmul.f32 %v1876, 1.442695
    %v1879 = vpow.pop %v1878
    %v1880 = vmul.f32 %v1877, 1.442695
    %v1881 = vpow.pop %v1880
    %v1882 = vadd.f32 %v1879, 1.0
    %v1883 = vadd.f32 %v1881, 1.0
    %v1884 = vrcp.pop %v1882
    %v1885 = vmul.f32 1.0, %v1884
    %v1886 = vrcp.pop %v1883
    %v1887 = vmul.f32 1.0, %v1886
    %v1888 = vmul.f32 %v1868, %v1885
    %v1889 = vmul.f32 %v1873, %v1887
    %v1890 = vlaneseq
    %v1891 = vshrl.u32 %v1890, 7
    %v1892 = vsub.s32 0, %v1891
    %v1893 = vrot.slane %v303, %v1892
    %v1895 = vsel %vm197, %v1888, 0
    %v1898 = vsel %vm197, %v1889, 0
    %1900 = vmatprep.subr.mxu0 0.0
    %1901 = vmatpush1.msra.mxu0 0.0
    %1902 = vmatprep.subr.mxu0 0.0
    %1903 = vmatpush1.msra.mxu0 0.0
    %1904 = vmatprep.subr.mxu0 0.0
    %1905 = vmatpush1.msra.mxu0 0.0
    %1906 = vmatprep.subr.mxu0 0.0
    %1907 = vmatpush1.msra.mxu0 0.0
    %1908 = vmatprep.subr.mxu0 0.0
    %1909 = vmatpush1.msra.mxu0 0.0
    %1910 = vmatprep.subr.mxu0 0.0
    %1911 = vmatpush1.msra.mxu0 0.0
    %1912 = vmatprep.subr.mxu0 0.0
    %1913 = vmatpush1.msra.mxu0 0.0
    %1914 = vmatprep.subr.mxu0 0.0
    %1915 = vmatpush1.msra.mxu0 0.0
    %1916 = vmatprep.subr.mxu0 0.0
    %1917 = vmatpush1.msra.mxu0 0.0
    %1918 = vmatprep.subr.mxu0 0.0
    %1919 = vmatpush1.msra.mxu0 0.0
    %1920 = vmatprep.subr.mxu0 0.0
    %1921 = vmatpush1.msra.mxu0 0.0
    %1922 = vmatprep.subr.mxu0 0.0
    %1923 = vmatpush1.msra.mxu0 0.0
    %1924 = vmatprep.subr.mxu0 0.0
    %1925 = vmatpush1.msra.mxu0 %v297
    %1926 = vmatprep.subr.mxu0 0.0
    %1927 = vmatpush1.msra.mxu0 %v296
    %1928 = vmatprep.subr.mxu0 0.0
    %1929 = vmatpush1.msra.mxu0 %v295
    %1930 = vmatprep.subr.mxu0 0.0
    %1931 = vmatpush1.msra.mxu0 %v294
    %1932 = vmatprep.subr.mxu0 0.0
    %1933 = vmatpush2.msra.mxu0 0.0
    %1934 = vmatprep.subr.mxu0 0.0
    %1935 = vmatpush2.msra.mxu0 0.0
    %1936 = vmatprep.subr.mxu0 0.0
    %1937 = vmatpush2.msra.mxu0 0.0
    %1938 = vmatprep.subr.mxu0 0.0
    %1939 = vmatpush2.msra.mxu0 0.0
    %1940 = vmatprep.subr.mxu0 0.0
    %1941 = vmatpush2.msra.mxu0 0.0
    %1942 = vmatprep.subr.mxu0 0.0
    %1943 = vmatpush2.msra.mxu0 0.0
    %1944 = vmatprep.subr.mxu0 0.0
    %1945 = vmatpush2.msra.mxu0 0.0
    %1946 = vmatprep.subr.mxu0 0.0
    %1947 = vmatpush2.msra.mxu0 0.0
    %1948 = vmatprep.subr.mxu0 0.0
    %1949 = vmatpush2.msra.mxu0 0.0
    %1950 = vmatprep.subr.mxu0 0.0
    %1951 = vmatpush2.msra.mxu0 0.0
    %1952 = vmatprep.subr.mxu0 0.0
    %1953 = vmatpush2.msra.mxu0 0.0
    %1954 = vmatprep.subr.mxu0 0.0
    %1955 = vmatpush2.msra.mxu0 0.0
    %1956 = vmatprep.subr.mxu0 0.0
    %1957 = vmatpush2.msra.mxu0 0.0
    %1958 = vmatprep.subr.mxu0 0.0
    %1959 = vmatpush2.msra.mxu0 0.0
    %1960 = vmatprep.subr.mxu0 0.0
    %1961 = vmatpush2.msra.mxu0 0.0
    %1962 = vmatprep.subr.mxu0 0.0
    %1963 = vmatpush2.msra.mxu0 0.0
    %1964 = vmatprep.mubr.f32.mxu0 0.0
    %1965 = vmatmul.mubr.f32.gmra.mxu0 %v1895
    %v1966 = vpop.f32.mrf.mxu0
    %v1967 = vadd.f32 %v1893, %v1966
    %v1968 = vpop.f32.mrf.mxu0
    %1969 = vmatprep.mubr.f32.mxu0 0.0
    %1970 = vmatmul.mubr.f32.gmra.mxu0 %v1898
    %v1971 = vpop.f32.mrf.mxu0
    %v1972 = vadd.f32 %v1893, %v1971
    %v1973 = vpop.f32.mrf.mxu0
    %1974 = vdwg.mxu0
    %v1975 = vadd.f32 %v1967, %v1751
    %v1976 = vadd.f32 %v1972, %v1752
    %v1977 = vxor.u32 %v1975, 2147483648
    %v1978 = vxor.u32 %v1976, 2147483648
    %v1979 = vmul.f32 %v1977, 1.442695
    %v1980 = vpow.pop %v1979
    %v1981 = vmul.f32 %v1978, 1.442695
    %v1982 = vpow.pop %v1981
    %v1983 = vadd.f32 %v1980, 1.0
    %v1984 = vadd.f32 %v1982, 1.0
    %v1985 = vrcp.pop %v1983
    %v1986 = vmul.f32 1.0, %v1985
    %v1987 = vrcp.pop %v1984
    %v1988 = vmul.f32 1.0, %v1987
    %v1989 = vmul.f32 %v1975, %v1986
    %v1990 = vmul.f32 %v1976, %v1988
    %v1991 = vadd.f32 %v1989, %v271
    %v1992 = vadd.f32 %v1990, %v276
    %s1993 = scalar_lea.vmem [#allocation9], 128
    %v1994 = vld [vmem:[%s1993] sm:$0xff]
    %v1995 = vld [vmem:[%s1993 + $0x8] sm:$0xff]
    %v1996 = vld [vmem:[%s1993 + $0x10] sm:$0xff]
    %v1997 = vld [vmem:[%s1993 + $0x18] sm:$0xff]
    %s1998 = scalar_lea.vmem [#allocation9], 160
    %v1999 = vld [vmem:[%s1998] sm:$0xff]
    %v2000 = vld [vmem:[%s1998 + $0x8] sm:$0xff]
    %v2001 = vld [vmem:[%s1998 + $0x10] sm:$0xff]
    %v2002 = vld [vmem:[%s1998 + $0x18] sm:$0xff]
    %s2003 = scalar_lea.vmem [#allocation9], 192
    %v2004 = vld [vmem:[%s2003] sm:$0xff]
    %v2005 = vld [vmem:[%s2003 + $0x8] sm:$0xff]
    %v2006 = vld [vmem:[%s2003 + $0x10] sm:$0xff]
    %v2007 = vld [vmem:[%s2003 + $0x18] sm:$0xff]
    %s2008 = scalar_lea.vmem [#allocation9], 224
    %v2009 = vld [vmem:[%s2008] sm:$0xff]
    %v2010 = vld [vmem:[%s2008 + $0x8] sm:$0xff]
    %v2011 = vld [vmem:[%s2008 + $0x10] sm:$0xff]
    %v2012 = vld [vmem:[%s2008 + $0x18] sm:$0xff]
    %s2013 = scalar_lea.vmem %s8, 32
    %v2014 = vld [vmem:[%s2013] sm:$0xff]
    %v2015 = vld [vmem:[%s2013 + $0x8] sm:$0xff]
    %v2016 = vld [vmem:[%s2013 + $0x10] sm:$0xff]
    %v2017 = vld [vmem:[%s2013 + $0x18] sm:$0xff]
    %s2018 = scalar_lea.vmem %s9, 16
    %v2019 = vld [vmem:[%s2018] sm:$0xff]
    %v2020 = vld [vmem:[%s2018 + $0x8] sm:$0x1]
    %2021 = vmatprep.subr.mxu0 0.0
    %2022 = vmatpush1.msra.mxu0 0.0
    %2023 = vmatprep.subr.mxu0 0.0
    %2024 = vmatpush1.msra.mxu0 0.0
    %2025 = vmatprep.subr.mxu0 0.0
    %2026 = vmatpush1.msra.mxu0 0.0
    %2027 = vmatprep.subr.mxu0 0.0
    %2028 = vmatpush1.msra.mxu0 0.0
    %2029 = vmatprep.subr.mxu0 0.0
    %2030 = vmatpush1.msra.mxu0 0.0
    %2031 = vmatprep.subr.mxu0 0.0
    %2032 = vmatpush1.msra.mxu0 0.0
    %2033 = vmatprep.subr.mxu0 0.0
    %2034 = vmatpush1.msra.mxu0 0.0
    %2035 = vmatprep.subr.mxu0 0.0
    %2036 = vmatpush1.msra.mxu0 0.0
    %2037 = vmatprep.subr.mxu0 0.0
    %2038 = vmatpush1.msra.mxu0 0.0
    %2039 = vmatprep.subr.mxu0 0.0
    %2040 = vmatpush1.msra.mxu0 0.0
    %2041 = vmatprep.subr.mxu0 0.0
    %2042 = vmatpush1.msra.mxu0 0.0
    %2043 = vmatprep.subr.mxu0 0.0
    %2044 = vmatpush1.msra.mxu0 0.0
    %2045 = vmatprep.subr.mxu0 0.0
    %2046 = vmatpush1.msra.mxu0 0.0
    %2047 = vmatprep.subr.mxu0 0.0
    %2048 = vmatpush1.msra.mxu0 0.0
    %2049 = vmatprep.subr.mxu0 0.0
    %2050 = vmatpush1.msra.mxu0 %v1992
    %2051 = vmatprep.subr.mxu0 0.0
    %2052 = vmatpush1.msra.mxu0 %v1991
    %2053 = vmatprep.subr.mxu0 0.0
    %2054 = vmatpush2.msra.mxu0 0.0
    %2055 = vmatprep.subr.mxu0 0.0
    %2056 = vmatpush2.msra.mxu0 0.0
    %2057 = vmatprep.subr.mxu0 0.0
    %2058 = vmatpush2.msra.mxu0 0.0
    %2059 = vmatprep.subr.mxu0 0.0
    %2060 = vmatpush2.msra.mxu0 0.0
    %2061 = vmatprep.subr.mxu0 0.0
    %2062 = vmatpush2.msra.mxu0 0.0
    %2063 = vmatprep.subr.mxu0 0.0
    %2064 = vmatpush2.msra.mxu0 0.0
    %2065 = vmatprep.subr.mxu0 0.0
    %2066 = vmatpush2.msra.mxu0 0.0
    %2067 = vmatprep.subr.mxu0 0.0
    %2068 = vmatpush2.msra.mxu0 0.0
    %2069 = vmatprep.subr.mxu0 0.0
    %2070 = vmatpush2.msra.mxu0 0.0
    %2071 = vmatprep.subr.mxu0 0.0
    %2072 = vmatpush2.msra.mxu0 0.0
    %2073 = vmatprep.subr.mxu0 0.0
    %2074 = vmatpush2.msra.mxu0 0.0
    %2075 = vmatprep.subr.mxu0 0.0
    %2076 = vmatpush2.msra.mxu0 0.0
    %2077 = vmatprep.subr.mxu0 0.0
    %2078 = vmatpush2.msra.mxu0 0.0
    %2079 = vmatprep.subr.mxu0 0.0
    %2080 = vmatpush2.msra.mxu0 0.0
    %2081 = vmatprep.subr.mxu0 0.0
    %2082 = vmatpush2.msra.mxu0 0.0
    %2083 = vmatprep.subr.mxu0 0.0
    %2084 = vmatpush2.msra.mxu0 0.0
    %2085 = vmatprep.mubr.f32.mxu0 0.0
    %2086 = vmatmul.mubr.f32.gmra.mxu0 %v306
    %v2087 = vpop.f32.mrf.mxu0
    %v2088 = vadd.f32 0.0, %v2087
    %v2089 = vpop.f32.mrf.mxu0
    %2090 = vmatprep.mubr.f32.mxu0 0.0
    %2091 = vmatmul.mubr.f32.gmra.mxu0 %v309
    %v2092 = vpop.f32.mrf.mxu0
    %v2093 = vadd.f32 0.0, %v2092
    %v2094 = vpop.f32.mrf.mxu0
    %2095 = vdwg.mxu0
    %s2096 = sld [smem:[#allocation2 + $0x1]]
    %s2097 = sadd.f32 %s2096, 1.0
    %v2098 = vstv %s2097
    %v2099 = vmul.f32 %v2098, %v1991
    %v2100 = vmul.f32 %v2098, %v1992
    %v2101 = vadd.f32 %v2099, %v2088
    %v2102 = vadd.f32 %v2100, %v2093
    %v2103 = vlaneseq
    %v2104 = vshrl.u32 %v2103, 7
    %v2105 = vsub.s32 0, %v2104
    %v2106 = vrot.slane %v2019, %v2105
    %v2108 = vsel %vm197, %v2101, 0
    %v2111 = vsel %vm197, %v2102, 0
    %2113 = vmatprep.subr.mxu0 0.0
    %2114 = vmatpush1.msra.mxu0 0.0
    %2115 = vmatprep.subr.mxu0 0.0
    %2116 = vmatpush1.msra.mxu0 0.0
    %2117 = vmatprep.subr.mxu0 0.0
    %2118 = vmatpush1.msra.mxu0 0.0
    %2119 = vmatprep.subr.mxu0 0.0
    %2120 = vmatpush1.msra.mxu0 0.0
    %2121 = vmatprep.subr.mxu0 0.0
    %2122 = vmatpush1.msra.mxu0 0.0
    %2123 = vmatprep.subr.mxu0 0.0
    %2124 = vmatpush1.msra.mxu0 0.0
    %2125 = vmatprep.subr.mxu0 0.0
    %2126 = vmatpush1.msra.mxu0 0.0
    %2127 = vmatprep.subr.mxu0 0.0
    %2128 = vmatpush1.msra.mxu0 0.0
    %2129 = vmatprep.subr.mxu0 0.0
    %2130 = vmatpush1.msra.mxu0 0.0
    %2131 = vmatprep.subr.mxu0 0.0
    %2132 = vmatpush1.msra.mxu0 0.0
    %2133 = vmatprep.subr.mxu0 0.0
    %2134 = vmatpush1.msra.mxu0 0.0
    %2135 = vmatprep.subr.mxu0 0.0
    %2136 = vmatpush1.msra.mxu0 0.0
    %2137 = vmatprep.subr.mxu0 0.0
    %2138 = vmatpush1.msra.mxu0 %v1997
    %2139 = vmatprep.subr.mxu0 0.0
    %2140 = vmatpush1.msra.mxu0 %v1996
    %2141 = vmatprep.subr.mxu0 0.0
    %2142 = vmatpush1.msra.mxu0 %v1995
    %2143 = vmatprep.subr.mxu0 0.0
    %2144 = vmatpush1.msra.mxu0 %v1994
    %2145 = vmatprep.subr.mxu0 0.0
    %2146 = vmatpush2.msra.mxu0 0.0
    %2147 = vmatprep.subr.mxu0 0.0
    %2148 = vmatpush2.msra.mxu0 0.0
    %2149 = vmatprep.subr.mxu0 0.0
    %2150 = vmatpush2.msra.mxu0 0.0
    %2151 = vmatprep.subr.mxu0 0.0
    %2152 = vmatpush2.msra.mxu0 0.0
    %2153 = vmatprep.subr.mxu0 0.0
    %2154 = vmatpush2.msra.mxu0 0.0
    %2155 = vmatprep.subr.mxu0 0.0
    %2156 = vmatpush2.msra.mxu0 0.0
    %2157 = vmatprep.subr.mxu0 0.0
    %2158 = vmatpush2.msra.mxu0 0.0
    %2159 = vmatprep.subr.mxu0 0.0
    %2160 = vmatpush2.msra.mxu0 0.0
    %2161 = vmatprep.subr.mxu0 0.0
    %2162 = vmatpush2.msra.mxu0 0.0
    %2163 = vmatprep.subr.mxu0 0.0
    %2164 = vmatpush2.msra.mxu0 0.0
    %2165 = vmatprep.subr.mxu0 0.0
    %2166 = vmatpush2.msra.mxu0 0.0
    %2167 = vmatprep.subr.mxu0 0.0
    %2168 = vmatpush2.msra.mxu0 0.0
    %2169 = vmatprep.subr.mxu0 0.0
    %2170 = vmatpush2.msra.mxu0 0.0
    %2171 = vmatprep.subr.mxu0 0.0
    %2172 = vmatpush2.msra.mxu0 0.0
    %2173 = vmatprep.subr.mxu0 0.0
    %2174 = vmatpush2.msra.mxu0 0.0
    %2175 = vmatprep.subr.mxu0 0.0
    %2176 = vmatpush2.msra.mxu0 0.0
    %2177 = vmatprep.mubr.f32.mxu0 0.0
    %2178 = vmatmul.mubr.f32.gmra.mxu0 %v2108
    %v2179 = vpop.f32.mrf.mxu0
    %v2180 = vadd.f32 %v2106, %v2179
    %v2181 = vpop.f32.mrf.mxu0
    %2182 = vmatprep.mubr.f32.mxu0 0.0
    %2183 = vmatmul.mubr.f32.gmra.mxu0 %v2111
    %v2184 = vpop.f32.mrf.mxu0
    %v2185 = vadd.f32 %v2106, %v2184
    %v2186 = vpop.f32.mrf.mxu0
    %2187 = vdwg.mxu0
    %v2188 = vsel %vm197, %v2180, 0.0
    %2189 = vadd.xlane.f32.xlu0 %v2188
    %v2190 = vpop.xlane.xlu0 %2189
    %v2191 = vsel %vm197, %v2185, 0.0
    %2192 = vadd.xlane.f32.xlu0 %v2191
    %v2193 = vpop.xlane.xlu0 %2192
    %v2194 = vmul.f32 %v2190, %v484
    %v2195 = vmul.f32 %v2193, %v484
    %v2196 = vsub.f32 %v2180, %v2194
    %v2197 = vsub.f32 %v2185, %v2195
    %v2198 = vmul.f32 %v2196, %v2196
    %v2199 = vmul.f32 %v2197, %v2197
    %v2200 = vsel %vm197, %v2198, 0.0
    %2201 = vadd.xlane.f32.xlu0 %v2200
    %v2202 = vpop.xlane.xlu0 %2201
    %v2203 = vsel %vm197, %v2199, 0.0
    %2204 = vadd.xlane.f32.xlu0 %v2203
    %v2205 = vpop.xlane.xlu0 %2204
    %v2206 = vmul.f32 %v2202, %v484
    %v2207 = vmul.f32 %v2205, %v484
    %v2208 = vadd.f32 %v2206, 1e-05
    %v2209 = vadd.f32 %v2207, 1e-05
    %v2210 = vrsqrt.pop %v2208
    %v2211 = vrsqrt.pop %v2209
    %v2212 = vmul.f32 %v2196, %v2210
    %v2213 = vmul.f32 %v2197, %v2211
    %v2214 = vlaneseq
    %v2215 = vshrl.u32 %v2214, 7
    %v2216 = vsub.s32 1, %v2215
    %v2217 = vrot.slane %v2019, %v2216
    %v2218 = vmul.f32 %v2212, %v2217
    %v2219 = vmul.f32 %v2213, %v2217
    %v2220 = vlaneseq
    %v2221 = vshrl.u32 %v2220, 7
    %v2222 = vsub.s32 2, %v2221
    %v2223 = vrot.slane %v2019, %v2222
    %v2224 = vadd.f32 %v2218, %v2223
    %v2225 = vadd.f32 %v2219, %v2223
    %v2226 = vlaneseq
    %v2227 = vshrl.u32 %v2226, 7
    %v2228 = vsub.s32 3, %v2227
    %v2229 = vrot.slane %v2019, %v2228
    %v2231 = vsel %vm197, %v2224, 0
    %v2234 = vsel %vm197, %v2225, 0
    %2236 = vmatprep.subr.mxu0 0.0
    %2237 = vmatpush1.msra.mxu0 0.0
    %2238 = vmatprep.subr.mxu0 0.0
    %2239 = vmatpush1.msra.mxu0 0.0
    %2240 = vmatprep.subr.mxu0 0.0
    %2241 = vmatpush1.msra.mxu0 0.0
    %2242 = vmatprep.subr.mxu0 0.0
    %2243 = vmatpush1.msra.mxu0 0.0
    %2244 = vmatprep.subr.mxu0 0.0
    %2245 = vmatpush1.msra.mxu0 0.0
    %2246 = vmatprep.subr.mxu0 0.0
    %2247 = vmatpush1.msra.mxu0 0.0
    %2248 = vmatprep.subr.mxu0 0.0
    %2249 = vmatpush1.msra.mxu0 0.0
    %2250 = vmatprep.subr.mxu0 0.0
    %2251 = vmatpush1.msra.mxu0 0.0
    %2252 = vmatprep.subr.mxu0 0.0
    %2253 = vmatpush1.msra.mxu0 0.0
    %2254 = vmatprep.subr.mxu0 0.0
    %2255 = vmatpush1.msra.mxu0 0.0
    %2256 = vmatprep.subr.mxu0 0.0
    %2257 = vmatpush1.msra.mxu0 0.0
    %2258 = vmatprep.subr.mxu0 0.0
    %2259 = vmatpush1.msra.mxu0 0.0
    %2260 = vmatprep.subr.mxu0 0.0
    %2261 = vmatpush1.msra.mxu0 %v2017
    %2262 = vmatprep.subr.mxu0 0.0
    %2263 = vmatpush1.msra.mxu0 %v2016
    %2264 = vmatprep.subr.mxu0 0.0
    %2265 = vmatpush1.msra.mxu0 %v2015
    %2266 = vmatprep.subr.mxu0 0.0
    %2267 = vmatpush1.msra.mxu0 %v2014
    %2268 = vmatprep.subr.mxu0 0.0
    %2269 = vmatpush2.msra.mxu0 0.0
    %2270 = vmatprep.subr.mxu0 0.0
    %2271 = vmatpush2.msra.mxu0 0.0
    %2272 = vmatprep.subr.mxu0 0.0
    %2273 = vmatpush2.msra.mxu0 0.0
    %2274 = vmatprep.subr.mxu0 0.0
    %2275 = vmatpush2.msra.mxu0 0.0
    %2276 = vmatprep.subr.mxu0 0.0
    %2277 = vmatpush2.msra.mxu0 0.0
    %2278 = vmatprep.subr.mxu0 0.0
    %2279 = vmatpush2.msra.mxu0 0.0
    %2280 = vmatprep.subr.mxu0 0.0
    %2281 = vmatpush2.msra.mxu0 0.0
    %2282 = vmatprep.subr.mxu0 0.0
    %2283 = vmatpush2.msra.mxu0 0.0
    %2284 = vmatprep.subr.mxu0 0.0
    %2285 = vmatpush2.msra.mxu0 0.0
    %2286 = vmatprep.subr.mxu0 0.0
    %2287 = vmatpush2.msra.mxu0 0.0
    %2288 = vmatprep.subr.mxu0 0.0
    %2289 = vmatpush2.msra.mxu0 0.0
    %2290 = vmatprep.subr.mxu0 0.0
    %2291 = vmatpush2.msra.mxu0 0.0
    %2292 = vmatprep.subr.mxu0 0.0
    %2293 = vmatpush2.msra.mxu0 0.0
    %2294 = vmatprep.subr.mxu0 0.0
    %2295 = vmatpush2.msra.mxu0 0.0
    %2296 = vmatprep.subr.mxu0 0.0
    %2297 = vmatpush2.msra.mxu0 0.0
    %2298 = vmatprep.subr.mxu0 0.0
    %2299 = vmatpush2.msra.mxu0 0.0
    %2300 = vmatprep.mubr.f32.mxu0 0.0
    %2301 = vmatmul.mubr.f32.gmra.mxu0 %v2231
    %v2302 = vpop.f32.mrf.mxu0
    %v2303 = vadd.f32 %v2229, %v2302
    %v2304 = vpop.f32.mrf.mxu0
    %2305 = vmatprep.mubr.f32.mxu0 0.0
    %2306 = vmatmul.mubr.f32.gmra.mxu0 %v2234
    %v2307 = vpop.f32.mrf.mxu0
    %v2308 = vadd.f32 %v2229, %v2307
    %v2309 = vpop.f32.mrf.mxu0
    %2310 = vdwg.mxu0
    %2313 = vrot.lane.b32.xlu0 %v2303, 96
    %v2314 = vpop.permute.xlu0 %2313
    %2315 = vrot.lane.b32.xlu0 %v2308, 96
    %v2316 = vpop.permute.xlu0 %2315
    %v2317 = vsel %vm608, %v2303, 0
    %v2319 = vsel %vm608, %v2308, 0
    %v2321 = vsel %vm608, %v2314, 0
    %v2323 = vsel %vm608, %v2316, 0
    %2325 = vmatprep.subr.mxu0 0.0
    %2326 = vmatpush1.xpose.msra.mxu0 0.0
    %2327 = vmatprep.subr.mxu0 0.0
    %2328 = vmatpush1.xpose.msra.mxu0 0.0
    %2329 = vmatprep.subr.mxu0 0.0
    %2330 = vmatpush1.xpose.msra.mxu0 0.0
    %2331 = vmatprep.subr.mxu0 0.0
    %2332 = vmatpush1.xpose.msra.mxu0 0.0
    %2333 = vmatprep.subr.mxu0 0.0
    %2334 = vmatpush1.xpose.msra.mxu0 0.0
    %2335 = vmatprep.subr.mxu0 0.0
    %2336 = vmatpush1.xpose.msra.mxu0 0.0
    %2337 = vmatprep.subr.mxu0 0.0
    %2338 = vmatpush1.xpose.msra.mxu0 0.0
    %2339 = vmatprep.subr.mxu0 0.0
    %2340 = vmatpush1.xpose.msra.mxu0 0.0
    %2341 = vmatprep.subr.mxu0 0.0
    %2342 = vmatpush1.xpose.msra.mxu0 0.0
    %2343 = vmatprep.subr.mxu0 0.0
    %2344 = vmatpush1.xpose.msra.mxu0 0.0
    %2345 = vmatprep.subr.mxu0 0.0
    %2346 = vmatpush1.xpose.msra.mxu0 0.0
    %2347 = vmatprep.subr.mxu0 0.0
    %2348 = vmatpush1.xpose.msra.mxu0 0.0
    %2349 = vmatprep.subr.mxu0 0.0
    %2350 = vmatpush1.xpose.msra.mxu0 0.0
    %2351 = vmatprep.subr.mxu0 0.0
    %2352 = vmatpush1.xpose.msra.mxu0 0.0
    %2353 = vmatprep.subr.mxu0 0.0
    %2354 = vmatpush1.xpose.msra.mxu0 %v2323
    %2355 = vmatprep.subr.mxu0 0.0
    %2356 = vmatpush1.xpose.msra.mxu0 %v2321
    %2357 = vmatprep.subr.mxu0 0.0
    %2358 = vmatpush2.xpose.msra.mxu0 0.0
    %2359 = vmatprep.subr.mxu0 0.0
    %2360 = vmatpush2.xpose.msra.mxu0 0.0
    %2361 = vmatprep.subr.mxu0 0.0
    %2362 = vmatpush2.xpose.msra.mxu0 0.0
    %2363 = vmatprep.subr.mxu0 0.0
    %2364 = vmatpush2.xpose.msra.mxu0 0.0
    %2365 = vmatprep.subr.mxu0 0.0
    %2366 = vmatpush2.xpose.msra.mxu0 0.0
    %2367 = vmatprep.subr.mxu0 0.0
    %2368 = vmatpush2.xpose.msra.mxu0 0.0
    %2369 = vmatprep.subr.mxu0 0.0
    %2370 = vmatpush2.xpose.msra.mxu0 0.0
    %2371 = vmatprep.subr.mxu0 0.0
    %2372 = vmatpush2.xpose.msra.mxu0 0.0
    %2373 = vmatprep.subr.mxu0 0.0
    %2374 = vmatpush2.xpose.msra.mxu0 0.0
    %2375 = vmatprep.subr.mxu0 0.0
    %2376 = vmatpush2.xpose.msra.mxu0 0.0
    %2377 = vmatprep.subr.mxu0 0.0
    %2378 = vmatpush2.xpose.msra.mxu0 0.0
    %2379 = vmatprep.subr.mxu0 0.0
    %2380 = vmatpush2.xpose.msra.mxu0 0.0
    %2381 = vmatprep.subr.mxu0 0.0
    %2382 = vmatpush2.xpose.msra.mxu0 0.0
    %2383 = vmatprep.subr.mxu0 0.0
    %2384 = vmatpush2.xpose.msra.mxu0 0.0
    %2385 = vmatprep.subr.mxu0 0.0
    %2386 = vmatpush2.xpose.msra.mxu0 0.0
    %2387 = vmatprep.subr.mxu0 0.0
    %2388 = vmatpush2.xpose.msra.mxu0 0.0
    %2389 = vmatprep.mubr.f32.mxu0 0.0
    %2390 = vmatmul.mubr.f32.gmra.mxu0 %v2317
    %v2391 = vpop.f32.mrf.mxu0
    %v2392 = vadd.f32 0.0, %v2391
    %v2393 = vpop.f32.mrf.mxu0
    %2394 = vmatprep.mubr.f32.mxu0 0.0
    %2395 = vmatmul.mubr.f32.gmra.mxu0 %v2319
    %v2396 = vpop.f32.mrf.mxu0
    %v2397 = vadd.f32 0.0, %v2396
    %v2398 = vpop.f32.mrf.mxu0
    %2399 = vdwg.mxu0
    %v2400 = vmul.f32 %v2392, 0.35355338
    %v2401 = vmul.f32 %v2397, 0.35355338
    %v2402 = vadd.f32 %v2400, %v92
    %v2403 = vadd.f32 %v2401, %v93
    %v2404 = vsel %vm304, %v2402, -inf
    %2405 = vmax.xlane.f32.xlu0 %v2404
    %v2406 = vpop.xlane.xlu0 %2405
    %v2407 = vsel %vm304, %v2403, -inf
    %2408 = vmax.xlane.f32.xlu0 %v2407
    %v2409 = vpop.xlane.xlu0 %2408
    %v2410 = vsub.f32 %v2402, %v2406
    %v2411 = vsub.f32 %v2403, %v2409
    %v2412 = vmul.f32 %v2410, 1.442695
    %v2413 = vpow.pop %v2412
    %v2414 = vmul.f32 %v2411, 1.442695
    %v2415 = vpow.pop %v2414
    %v2416 = vsel %vm304, %v2413, 0.0
    %2417 = vadd.xlane.f32.xlu0 %v2416
    %v2418 = vpop.xlane.xlu0 %2417
    %v2419 = vsel %vm304, %v2415, 0.0
    %2420 = vadd.xlane.f32.xlu0 %v2419
    %v2421 = vpop.xlane.xlu0 %2420
    %v2422 = vrcp.pop %v2418
    %v2423 = vrcp.pop %v2421
    %v2424 = vmul.f32 %v2413, %v2422
    %v2425 = vmul.f32 %v2415, %v2423
    %2426 = vrot.lane.b32.xlu0 %v2303, 64
    %v2427 = vpop.permute.xlu0 %2426
    %2428 = vrot.lane.b32.xlu0 %v2308, 64
    %v2429 = vpop.permute.xlu0 %2428
    %v2433 = vsel %vm304, %v2424, 0
    %v2436 = vsel %vm304, %v2425, 0
    %2438 = vmatprep.subr.mxu0 0.0
    %2439 = vmatpush1.msra.mxu0 0.0
    %2440 = vmatprep.subr.mxu0 0.0
    %2441 = vmatpush1.msra.mxu0 0.0
    %2442 = vmatprep.subr.mxu0 0.0
    %2443 = vmatpush1.msra.mxu0 0.0
    %2444 = vmatprep.subr.mxu0 0.0
    %2445 = vmatpush1.msra.mxu0 0.0
    %2446 = vmatprep.subr.mxu0 0.0
    %2447 = vmatpush1.msra.mxu0 0.0
    %2448 = vmatprep.subr.mxu0 0.0
    %2449 = vmatpush1.msra.mxu0 0.0
    %2450 = vmatprep.subr.mxu0 0.0
    %2451 = vmatpush1.msra.mxu0 0.0
    %2452 = vmatprep.subr.mxu0 0.0
    %2453 = vmatpush1.msra.mxu0 0.0
    %2454 = vmatprep.subr.mxu0 0.0
    %2455 = vmatpush1.msra.mxu0 0.0
    %2456 = vmatprep.subr.mxu0 0.0
    %2457 = vmatpush1.msra.mxu0 0.0
    %2458 = vmatprep.subr.mxu0 0.0
    %2459 = vmatpush1.msra.mxu0 0.0
    %2460 = vmatprep.subr.mxu0 0.0
    %2461 = vmatpush1.msra.mxu0 0.0
    %2462 = vmatprep.subr.mxu0 0.0
    %2463 = vmatpush1.msra.mxu0 0.0
    %2464 = vmatprep.subr.mxu0 0.0
    %2465 = vmatpush1.msra.mxu0 0.0
    %2466 = vmatprep.subr.mxu0 0.0
    %2467 = vmatpush1.msra.mxu0 %v2429
    %2468 = vmatprep.subr.mxu0 0.0
    %2469 = vmatpush1.msra.mxu0 %v2427
    %2470 = vmatprep.subr.mxu0 0.0
    %2471 = vmatpush2.msra.mxu0 0.0
    %2472 = vmatprep.subr.mxu0 0.0
    %2473 = vmatpush2.msra.mxu0 0.0
    %2474 = vmatprep.subr.mxu0 0.0
    %2475 = vmatpush2.msra.mxu0 0.0
    %2476 = vmatprep.subr.mxu0 0.0
    %2477 = vmatpush2.msra.mxu0 0.0
    %2478 = vmatprep.subr.mxu0 0.0
    %2479 = vmatpush2.msra.mxu0 0.0
    %2480 = vmatprep.subr.mxu0 0.0
    %2481 = vmatpush2.msra.mxu0 0.0
    %2482 = vmatprep.subr.mxu0 0.0
    %2483 = vmatpush2.msra.mxu0 0.0
    %2484 = vmatprep.subr.mxu0 0.0
    %2485 = vmatpush2.msra.mxu0 0.0
    %2486 = vmatprep.subr.mxu0 0.0
    %2487 = vmatpush2.msra.mxu0 0.0
    %2488 = vmatprep.subr.mxu0 0.0
    %2489 = vmatpush2.msra.mxu0 0.0
    %2490 = vmatprep.subr.mxu0 0.0
    %2491 = vmatpush2.msra.mxu0 0.0
    %2492 = vmatprep.subr.mxu0 0.0
    %2493 = vmatpush2.msra.mxu0 0.0
    %2494 = vmatprep.subr.mxu0 0.0
    %2495 = vmatpush2.msra.mxu0 0.0
    %2496 = vmatprep.subr.mxu0 0.0
    %2497 = vmatpush2.msra.mxu0 0.0
    %2498 = vmatprep.subr.mxu0 0.0
    %2499 = vmatpush2.msra.mxu0 0.0
    %2500 = vmatprep.subr.mxu0 0.0
    %2501 = vmatpush2.msra.mxu0 0.0
    %2502 = vmatprep.mubr.f32.mxu0 0.0
    %2503 = vmatmul.mubr.f32.gmra.mxu0 %v2433
    %v2504 = vpop.f32.mrf.mxu0
    %v2505 = vadd.f32 0.0, %v2504
    %v2506 = vpop.f32.mrf.mxu0
    %2507 = vmatprep.mubr.f32.mxu0 0.0
    %2508 = vmatmul.mubr.f32.gmra.mxu0 %v2436
    %v2509 = vpop.f32.mrf.mxu0
    %v2510 = vadd.f32 0.0, %v2509
    %v2511 = vpop.f32.mrf.mxu0
    %2512 = vdwg.mxu0
    %2513 = vrot.lane.b32.xlu0 %v2303, 120
    %v2514 = vpop.permute.xlu0 %2513
    %2515 = vrot.lane.b32.xlu0 %v2308, 120
    %v2516 = vpop.permute.xlu0 %2515
    %2517 = vrot.lane.b32.xlu0 %v2303, 88
    %v2518 = vpop.permute.xlu0 %2517
    %2519 = vrot.lane.b32.xlu0 %v2308, 88
    %v2520 = vpop.permute.xlu0 %2519
    %v2521 = vsel %vm608, %v2514, 0
    %v2523 = vsel %vm608, %v2516, 0
    %v2525 = vsel %vm608, %v2518, 0
    %v2527 = vsel %vm608, %v2520, 0
    %2529 = vmatprep.subr.mxu0 0.0
    %2530 = vmatpush1.xpose.msra.mxu0 0.0
    %2531 = vmatprep.subr.mxu0 0.0
    %2532 = vmatpush1.xpose.msra.mxu0 0.0
    %2533 = vmatprep.subr.mxu0 0.0
    %2534 = vmatpush1.xpose.msra.mxu0 0.0
    %2535 = vmatprep.subr.mxu0 0.0
    %2536 = vmatpush1.xpose.msra.mxu0 0.0
    %2537 = vmatprep.subr.mxu0 0.0
    %2538 = vmatpush1.xpose.msra.mxu0 0.0
    %2539 = vmatprep.subr.mxu0 0.0
    %2540 = vmatpush1.xpose.msra.mxu0 0.0
    %2541 = vmatprep.subr.mxu0 0.0
    %2542 = vmatpush1.xpose.msra.mxu0 0.0
    %2543 = vmatprep.subr.mxu0 0.0
    %2544 = vmatpush1.xpose.msra.mxu0 0.0
    %2545 = vmatprep.subr.mxu0 0.0
    %2546 = vmatpush1.xpose.msra.mxu0 0.0
    %2547 = vmatprep.subr.mxu0 0.0
    %2548 = vmatpush1.xpose.msra.mxu0 0.0
    %2549 = vmatprep.subr.mxu0 0.0
    %2550 = vmatpush1.xpose.msra.mxu0 0.0
    %2551 = vmatprep.subr.mxu0 0.0
    %2552 = vmatpush1.xpose.msra.mxu0 0.0
    %2553 = vmatprep.subr.mxu0 0.0
    %2554 = vmatpush1.xpose.msra.mxu0 0.0
    %2555 = vmatprep.subr.mxu0 0.0
    %2556 = vmatpush1.xpose.msra.mxu0 0.0
    %2557 = vmatprep.subr.mxu0 0.0
    %2558 = vmatpush1.xpose.msra.mxu0 %v2527
    %2559 = vmatprep.subr.mxu0 0.0
    %2560 = vmatpush1.xpose.msra.mxu0 %v2525
    %2561 = vmatprep.subr.mxu0 0.0
    %2562 = vmatpush2.xpose.msra.mxu0 0.0
    %2563 = vmatprep.subr.mxu0 0.0
    %2564 = vmatpush2.xpose.msra.mxu0 0.0
    %2565 = vmatprep.subr.mxu0 0.0
    %2566 = vmatpush2.xpose.msra.mxu0 0.0
    %2567 = vmatprep.subr.mxu0 0.0
    %2568 = vmatpush2.xpose.msra.mxu0 0.0
    %2569 = vmatprep.subr.mxu0 0.0
    %2570 = vmatpush2.xpose.msra.mxu0 0.0
    %2571 = vmatprep.subr.mxu0 0.0
    %2572 = vmatpush2.xpose.msra.mxu0 0.0
    %2573 = vmatprep.subr.mxu0 0.0
    %2574 = vmatpush2.xpose.msra.mxu0 0.0
    %2575 = vmatprep.subr.mxu0 0.0
    %2576 = vmatpush2.xpose.msra.mxu0 0.0
    %2577 = vmatprep.subr.mxu0 0.0
    %2578 = vmatpush2.xpose.msra.mxu0 0.0
    %2579 = vmatprep.subr.mxu0 0.0
    %2580 = vmatpush2.xpose.msra.mxu0 0.0
    %2581 = vmatprep.subr.mxu0 0.0
    %2582 = vmatpush2.xpose.msra.mxu0 0.0
    %2583 = vmatprep.subr.mxu0 0.0
    %2584 = vmatpush2.xpose.msra.mxu0 0.0
    %2585 = vmatprep.subr.mxu0 0.0
    %2586 = vmatpush2.xpose.msra.mxu0 0.0
    %2587 = vmatprep.subr.mxu0 0.0
    %2588 = vmatpush2.xpose.msra.mxu0 0.0
    %2589 = vmatprep.subr.mxu0 0.0
    %2590 = vmatpush2.xpose.msra.mxu0 0.0
    %2591 = vmatprep.subr.mxu0 0.0
    %2592 = vmatpush2.xpose.msra.mxu0 0.0
    %2593 = vmatprep.mubr.f32.mxu0 0.0
    %2594 = vmatmul.mubr.f32.gmra.mxu0 %v2521
    %v2595 = vpop.f32.mrf.mxu0
    %v2596 = vadd.f32 0.0, %v2595
    %v2597 = vpop.f32.mrf.mxu0
    %2598 = vmatprep.mubr.f32.mxu0 0.0
    %2599 = vmatmul.mubr.f32.gmra.mxu0 %v2523
    %v2600 = vpop.f32.mrf.mxu0
    %v2601 = vadd.f32 0.0, %v2600
    %v2602 = vpop.f32.mrf.mxu0
    %2603 = vdwg.mxu0
    %v2604 = vmul.f32 %v2596, 0.35355338
    %v2605 = vmul.f32 %v2601, 0.35355338
    %v2606 = vadd.f32 %v2604, %v92
    %v2607 = vadd.f32 %v2605, %v93
    %v2608 = vsel %vm304, %v2606, -inf
    %2609 = vmax.xlane.f32.xlu0 %v2608
    %v2610 = vpop.xlane.xlu0 %2609
    %v2611 = vsel %vm304, %v2607, -inf
    %2612 = vmax.xlane.f32.xlu0 %v2611
    %v2613 = vpop.xlane.xlu0 %2612
    %v2614 = vsub.f32 %v2606, %v2610
    %v2615 = vsub.f32 %v2607, %v2613
    %v2616 = vmul.f32 %v2614, 1.442695
    %v2617 = vpow.pop %v2616
    %v2618 = vmul.f32 %v2615, 1.442695
    %v2619 = vpow.pop %v2618
    %v2620 = vsel %vm304, %v2617, 0.0
    %2621 = vadd.xlane.f32.xlu0 %v2620
    %v2622 = vpop.xlane.xlu0 %2621
    %v2623 = vsel %vm304, %v2619, 0.0
    %2624 = vadd.xlane.f32.xlu0 %v2623
    %v2625 = vpop.xlane.xlu0 %2624
    %v2626 = vrcp.pop %v2622
    %v2627 = vrcp.pop %v2625
    %v2628 = vmul.f32 %v2617, %v2626
    %v2629 = vmul.f32 %v2619, %v2627
    %2630 = vrot.lane.b32.xlu0 %v2303, 56
    %v2631 = vpop.permute.xlu0 %2630
    %2632 = vrot.lane.b32.xlu0 %v2308, 56
    %v2633 = vpop.permute.xlu0 %2632
    %v2637 = vsel %vm304, %v2628, 0
    %v2640 = vsel %vm304, %v2629, 0
    %2642 = vmatprep.subr.mxu0 0.0
    %2643 = vmatpush1.msra.mxu0 0.0
    %2644 = vmatprep.subr.mxu0 0.0
    %2645 = vmatpush1.msra.mxu0 0.0
    %2646 = vmatprep.subr.mxu0 0.0
    %2647 = vmatpush1.msra.mxu0 0.0
    %2648 = vmatprep.subr.mxu0 0.0
    %2649 = vmatpush1.msra.mxu0 0.0
    %2650 = vmatprep.subr.mxu0 0.0
    %2651 = vmatpush1.msra.mxu0 0.0
    %2652 = vmatprep.subr.mxu0 0.0
    %2653 = vmatpush1.msra.mxu0 0.0
    %2654 = vmatprep.subr.mxu0 0.0
    %2655 = vmatpush1.msra.mxu0 0.0
    %2656 = vmatprep.subr.mxu0 0.0
    %2657 = vmatpush1.msra.mxu0 0.0
    %2658 = vmatprep.subr.mxu0 0.0
    %2659 = vmatpush1.msra.mxu0 0.0
    %2660 = vmatprep.subr.mxu0 0.0
    %2661 = vmatpush1.msra.mxu0 0.0
    %2662 = vmatprep.subr.mxu0 0.0
    %2663 = vmatpush1.msra.mxu0 0.0
    %2664 = vmatprep.subr.mxu0 0.0
    %2665 = vmatpush1.msra.mxu0 0.0
    %2666 = vmatprep.subr.mxu0 0.0
    %2667 = vmatpush1.msra.mxu0 0.0
    %2668 = vmatprep.subr.mxu0 0.0
    %2669 = vmatpush1.msra.mxu0 0.0
    %2670 = vmatprep.subr.mxu0 0.0
    %2671 = vmatpush1.msra.mxu0 %v2633
    %2672 = vmatprep.subr.mxu0 0.0
    %2673 = vmatpush1.msra.mxu0 %v2631
    %2674 = vmatprep.subr.mxu0 0.0
    %2675 = vmatpush2.msra.mxu0 0.0
    %2676 = vmatprep.subr.mxu0 0.0
    %2677 = vmatpush2.msra.mxu0 0.0
    %2678 = vmatprep.subr.mxu0 0.0
    %2679 = vmatpush2.msra.mxu0 0.0
    %2680 = vmatprep.subr.mxu0 0.0
    %2681 = vmatpush2.msra.mxu0 0.0
    %2682 = vmatprep.subr.mxu0 0.0
    %2683 = vmatpush2.msra.mxu0 0.0
    %2684 = vmatprep.subr.mxu0 0.0
    %2685 = vmatpush2.msra.mxu0 0.0
    %2686 = vmatprep.subr.mxu0 0.0
    %2687 = vmatpush2.msra.mxu0 0.0
    %2688 = vmatprep.subr.mxu0 0.0
    %2689 = vmatpush2.msra.mxu0 0.0
    %2690 = vmatprep.subr.mxu0 0.0
    %2691 = vmatpush2.msra.mxu0 0.0
    %2692 = vmatprep.subr.mxu0 0.0
    %2693 = vmatpush2.msra.mxu0 0.0
    %2694 = vmatprep.subr.mxu0 0.0
    %2695 = vmatpush2.msra.mxu0 0.0
    %2696 = vmatprep.subr.mxu0 0.0
    %2697 = vmatpush2.msra.mxu0 0.0
    %2698 = vmatprep.subr.mxu0 0.0
    %2699 = vmatpush2.msra.mxu0 0.0
    %2700 = vmatprep.subr.mxu0 0.0
    %2701 = vmatpush2.msra.mxu0 0.0
    %2702 = vmatprep.subr.mxu0 0.0
    %2703 = vmatpush2.msra.mxu0 0.0
    %2704 = vmatprep.subr.mxu0 0.0
    %2705 = vmatpush2.msra.mxu0 0.0
    %2706 = vmatprep.mubr.f32.mxu0 0.0
    %2707 = vmatmul.mubr.f32.gmra.mxu0 %v2637
    %v2708 = vpop.f32.mrf.mxu0
    %v2709 = vadd.f32 0.0, %v2708
    %v2710 = vpop.f32.mrf.mxu0
    %2711 = vmatprep.mubr.f32.mxu0 0.0
    %2712 = vmatmul.mubr.f32.gmra.mxu0 %v2640
    %v2713 = vpop.f32.mrf.mxu0
    %v2714 = vadd.f32 0.0, %v2713
    %v2715 = vpop.f32.mrf.mxu0
    %2716 = vdwg.mxu0
    %v2718 = vsel %vm608, %v2709, 0
    %v2721 = vsel %vm608, %v2714, 0
    %2723 = vmatprep.subr.mxu0 0.0
    %2724 = vmatpush1.msra.mxu0 0.0
    %2725 = vmatprep.subr.mxu0 0.0
    %2726 = vmatpush1.msra.mxu0 0.0
    %2727 = vmatprep.subr.mxu0 0.0
    %2728 = vmatpush1.msra.mxu0 0.0
    %2729 = vmatprep.subr.mxu0 0.0
    %2730 = vmatpush1.msra.mxu0 0.0
    %2731 = vmatprep.subr.mxu0 0.0
    %2732 = vmatpush1.msra.mxu0 0.0
    %2733 = vmatprep.subr.mxu0 0.0
    %2734 = vmatpush1.msra.mxu0 0.0
    %2735 = vmatprep.subr.mxu0 0.0
    %2736 = vmatpush1.msra.mxu0 0.0
    %2737 = vmatprep.subr.mxu0 0.0
    %2738 = vmatpush1.msra.mxu0 0.0
    %2739 = vmatprep.subr.mxu0 0.0
    %2740 = vmatpush1.msra.mxu0 0.0
    %2741 = vmatprep.subr.mxu0 0.0
    %2742 = vmatpush1.msra.mxu0 0.0
    %2743 = vmatprep.subr.mxu0 0.0
    %2744 = vmatpush1.msra.mxu0 0.0
    %2745 = vmatprep.subr.mxu0 0.0
    %2746 = vmatpush1.msra.mxu0 0.0
    %2747 = vmatprep.subr.mxu0 0.0
    %2748 = vmatpush1.msra.mxu0 0.0
    %2749 = vmatprep.subr.mxu0 0.0
    %2750 = vmatpush1.msra.mxu0 0.0
    %2751 = vmatprep.subr.mxu0 0.0
    %2752 = vmatpush1.msra.mxu0 0.0
    %2753 = vmatprep.subr.mxu0 0.0
    %2754 = vmatpush1.msra.mxu0 %v2000
    %2755 = vmatprep.subr.mxu0 0.0
    %2756 = vmatpush2.msra.mxu0 0.0
    %2757 = vmatprep.subr.mxu0 0.0
    %2758 = vmatpush2.msra.mxu0 0.0
    %2759 = vmatprep.subr.mxu0 0.0
    %2760 = vmatpush2.msra.mxu0 0.0
    %2761 = vmatprep.subr.mxu0 0.0
    %2762 = vmatpush2.msra.mxu0 0.0
    %2763 = vmatprep.subr.mxu0 0.0
    %2764 = vmatpush2.msra.mxu0 0.0
    %2765 = vmatprep.subr.mxu0 0.0
    %2766 = vmatpush2.msra.mxu0 0.0
    %2767 = vmatprep.subr.mxu0 0.0
    %2768 = vmatpush2.msra.mxu0 0.0
    %2769 = vmatprep.subr.mxu0 0.0
    %2770 = vmatpush2.msra.mxu0 0.0
    %2771 = vmatprep.subr.mxu0 0.0
    %2772 = vmatpush2.msra.mxu0 0.0
    %2773 = vmatprep.subr.mxu0 0.0
    %2774 = vmatpush2.msra.mxu0 0.0
    %2775 = vmatprep.subr.mxu0 0.0
    %2776 = vmatpush2.msra.mxu0 0.0
    %2777 = vmatprep.subr.mxu0 0.0
    %2778 = vmatpush2.msra.mxu0 0.0
    %2779 = vmatprep.subr.mxu0 0.0
    %2780 = vmatpush2.msra.mxu0 0.0
    %2781 = vmatprep.subr.mxu0 0.0
    %2782 = vmatpush2.msra.mxu0 0.0
    %2783 = vmatprep.subr.mxu0 0.0
    %2784 = vmatpush2.msra.mxu0 0.0
    %2785 = vmatprep.subr.mxu0 0.0
    %2786 = vmatpush2.msra.mxu0 0.0
    %2787 = vmatprep.mubr.f32.mxu0 0.0
    %2788 = vmatmul.mubr.f32.gmra.mxu0 %v2718
    %v2789 = vpop.f32.mrf.mxu0
    %v2790 = vadd.f32 0.0, %v2789
    %v2791 = vpop.f32.mrf.mxu0
    %2792 = vmatprep.mubr.f32.mxu0 0.0
    %2793 = vmatmul.mubr.f32.gmra.mxu0 %v2721
    %v2794 = vpop.f32.mrf.mxu0
    %v2795 = vadd.f32 0.0, %v2794
    %v2796 = vpop.f32.mrf.mxu0
    %2797 = vdwg.mxu0
    %v2799 = vsel %vm608, %v2505, 0
    %v2802 = vsel %vm608, %v2510, 0
    %2804 = vmatprep.subr.mxu0 0.0
    %2805 = vmatpush1.msra.mxu0 0.0
    %2806 = vmatprep.subr.mxu0 0.0
    %2807 = vmatpush1.msra.mxu0 0.0
    %2808 = vmatprep.subr.mxu0 0.0
    %2809 = vmatpush1.msra.mxu0 0.0
    %2810 = vmatprep.subr.mxu0 0.0
    %2811 = vmatpush1.msra.mxu0 0.0
    %2812 = vmatprep.subr.mxu0 0.0
    %2813 = vmatpush1.msra.mxu0 0.0
    %2814 = vmatprep.subr.mxu0 0.0
    %2815 = vmatpush1.msra.mxu0 0.0
    %2816 = vmatprep.subr.mxu0 0.0
    %2817 = vmatpush1.msra.mxu0 0.0
    %2818 = vmatprep.subr.mxu0 0.0
    %2819 = vmatpush1.msra.mxu0 0.0
    %2820 = vmatprep.subr.mxu0 0.0
    %2821 = vmatpush1.msra.mxu0 0.0
    %2822 = vmatprep.subr.mxu0 0.0
    %2823 = vmatpush1.msra.mxu0 0.0
    %2824 = vmatprep.subr.mxu0 0.0
    %2825 = vmatpush1.msra.mxu0 0.0
    %2826 = vmatprep.subr.mxu0 0.0
    %2827 = vmatpush1.msra.mxu0 0.0
    %2828 = vmatprep.subr.mxu0 0.0
    %2829 = vmatpush1.msra.mxu0 0.0
    %2830 = vmatprep.subr.mxu0 0.0
    %2831 = vmatpush1.msra.mxu0 0.0
    %2832 = vmatprep.subr.mxu0 0.0
    %2833 = vmatpush1.msra.mxu0 0.0
    %2834 = vmatprep.subr.mxu0 0.0
    %2835 = vmatpush1.msra.mxu0 %v1999
    %2836 = vmatprep.subr.mxu0 0.0
    %2837 = vmatpush2.msra.mxu0 0.0
    %2838 = vmatprep.subr.mxu0 0.0
    %2839 = vmatpush2.msra.mxu0 0.0
    %2840 = vmatprep.subr.mxu0 0.0
    %2841 = vmatpush2.msra.mxu0 0.0
    %2842 = vmatprep.subr.mxu0 0.0
    %2843 = vmatpush2.msra.mxu0 0.0
    %2844 = vmatprep.subr.mxu0 0.0
    %2845 = vmatpush2.msra.mxu0 0.0
    %2846 = vmatprep.subr.mxu0 0.0
    %2847 = vmatpush2.msra.mxu0 0.0
    %2848 = vmatprep.subr.mxu0 0.0
    %2849 = vmatpush2.msra.mxu0 0.0
    %2850 = vmatprep.subr.mxu0 0.0
    %2851 = vmatpush2.msra.mxu0 0.0
    %2852 = vmatprep.subr.mxu0 0.0
    %2853 = vmatpush2.msra.mxu0 0.0
    %2854 = vmatprep.subr.mxu0 0.0
    %2855 = vmatpush2.msra.mxu0 0.0
    %2856 = vmatprep.subr.mxu0 0.0
    %2857 = vmatpush2.msra.mxu0 0.0
    %2858 = vmatprep.subr.mxu0 0.0
    %2859 = vmatpush2.msra.mxu0 0.0
    %2860 = vmatprep.subr.mxu0 0.0
    %2861 = vmatpush2.msra.mxu0 0.0
    %2862 = vmatprep.subr.mxu0 0.0
    %2863 = vmatpush2.msra.mxu0 0.0
    %2864 = vmatprep.subr.mxu0 0.0
    %2865 = vmatpush2.msra.mxu0 0.0
    %2866 = vmatprep.subr.mxu0 0.0
    %2867 = vmatpush2.msra.mxu0 0.0
    %2868 = vmatprep.mubr.f32.mxu0 0.0
    %2869 = vmatmul.mubr.f32.gmra.mxu0 %v2799
    %v2870 = vpop.f32.mrf.mxu0
    %v2871 = vadd.f32 %v2790, %v2870
    %v2872 = vpop.f32.mrf.mxu0
    %2873 = vmatprep.mubr.f32.mxu0 0.0
    %2874 = vmatmul.mubr.f32.gmra.mxu0 %v2802
    %v2875 = vpop.f32.mrf.mxu0
    %v2876 = vadd.f32 %v2795, %v2875
    %v2877 = vpop.f32.mrf.mxu0
    %2878 = vdwg.mxu0
    %2879 = vrot.lane.b32.xlu0 %v2303, 112
    %v2880 = vpop.permute.xlu0 %2879
    %2881 = vrot.lane.b32.xlu0 %v2308, 112
    %v2882 = vpop.permute.xlu0 %2881
    %2883 = vrot.lane.b32.xlu0 %v2303, 80
    %v2884 = vpop.permute.xlu0 %2883
    %2885 = vrot.lane.b32.xlu0 %v2308, 80
    %v2886 = vpop.permute.xlu0 %2885
    %v2887 = vsel %vm608, %v2880, 0
    %v2889 = vsel %vm608, %v2882, 0
    %v2891 = vsel %vm608, %v2884, 0
    %v2893 = vsel %vm608, %v2886, 0
    %2895 = vmatprep.subr.mxu0 0.0
    %2896 = vmatpush1.xpose.msra.mxu0 0.0
    %2897 = vmatprep.subr.mxu0 0.0
    %2898 = vmatpush1.xpose.msra.mxu0 0.0
    %2899 = vmatprep.subr.mxu0 0.0
    %2900 = vmatpush1.xpose.msra.mxu0 0.0
    %2901 = vmatprep.subr.mxu0 0.0
    %2902 = vmatpush1.xpose.msra.mxu0 0.0
    %2903 = vmatprep.subr.mxu0 0.0
    %2904 = vmatpush1.xpose.msra.mxu0 0.0
    %2905 = vmatprep.subr.mxu0 0.0
    %2906 = vmatpush1.xpose.msra.mxu0 0.0
    %2907 = vmatprep.subr.mxu0 0.0
    %2908 = vmatpush1.xpose.msra.mxu0 0.0
    %2909 = vmatprep.subr.mxu0 0.0
    %2910 = vmatpush1.xpose.msra.mxu0 0.0
    %2911 = vmatprep.subr.mxu0 0.0
    %2912 = vmatpush1.xpose.msra.mxu0 0.0
    %2913 = vmatprep.subr.mxu0 0.0
    %2914 = vmatpush1.xpose.msra.mxu0 0.0
    %2915 = vmatprep.subr.mxu0 0.0
    %2916 = vmatpush1.xpose.msra.mxu0 0.0
    %2917 = vmatprep.subr.mxu0 0.0
    %2918 = vmatpush1.xpose.msra.mxu0 0.0
    %2919 = vmatprep.subr.mxu0 0.0
    %2920 = vmatpush1.xpose.msra.mxu0 0.0
    %2921 = vmatprep.subr.mxu0 0.0
    %2922 = vmatpush1.xpose.msra.mxu0 0.0
    %2923 = vmatprep.subr.mxu0 0.0
    %2924 = vmatpush1.xpose.msra.mxu0 %v2893
    %2925 = vmatprep.subr.mxu0 0.0
    %2926 = vmatpush1.xpose.msra.mxu0 %v2891
    %2927 = vmatprep.subr.mxu0 0.0
    %2928 = vmatpush2.xpose.msra.mxu0 0.0
    %2929 = vmatprep.subr.mxu0 0.0
    %2930 = vmatpush2.xpose.msra.mxu0 0.0
    %2931 = vmatprep.subr.mxu0 0.0
    %2932 = vmatpush2.xpose.msra.mxu0 0.0
    %2933 = vmatprep.subr.mxu0 0.0
    %2934 = vmatpush2.xpose.msra.mxu0 0.0
    %2935 = vmatprep.subr.mxu0 0.0
    %2936 = vmatpush2.xpose.msra.mxu0 0.0
    %2937 = vmatprep.subr.mxu0 0.0
    %2938 = vmatpush2.xpose.msra.mxu0 0.0
    %2939 = vmatprep.subr.mxu0 0.0
    %2940 = vmatpush2.xpose.msra.mxu0 0.0
    %2941 = vmatprep.subr.mxu0 0.0
    %2942 = vmatpush2.xpose.msra.mxu0 0.0
    %2943 = vmatprep.subr.mxu0 0.0
    %2944 = vmatpush2.xpose.msra.mxu0 0.0
    %2945 = vmatprep.subr.mxu0 0.0
    %2946 = vmatpush2.xpose.msra.mxu0 0.0
    %2947 = vmatprep.subr.mxu0 0.0
    %2948 = vmatpush2.xpose.msra.mxu0 0.0
    %2949 = vmatprep.subr.mxu0 0.0
    %2950 = vmatpush2.xpose.msra.mxu0 0.0
    %2951 = vmatprep.subr.mxu0 0.0
    %2952 = vmatpush2.xpose.msra.mxu0 0.0
    %2953 = vmatprep.subr.mxu0 0.0
    %2954 = vmatpush2.xpose.msra.mxu0 0.0
    %2955 = vmatprep.subr.mxu0 0.0
    %2956 = vmatpush2.xpose.msra.mxu0 0.0
    %2957 = vmatprep.subr.mxu0 0.0
    %2958 = vmatpush2.xpose.msra.mxu0 0.0
    %2959 = vmatprep.mubr.f32.mxu0 0.0
    %2960 = vmatmul.mubr.f32.gmra.mxu0 %v2887
    %v2961 = vpop.f32.mrf.mxu0
    %v2962 = vadd.f32 0.0, %v2961
    %v2963 = vpop.f32.mrf.mxu0
    %2964 = vmatprep.mubr.f32.mxu0 0.0
    %2965 = vmatmul.mubr.f32.gmra.mxu0 %v2889
    %v2966 = vpop.f32.mrf.mxu0
    %v2967 = vadd.f32 0.0, %v2966
    %v2968 = vpop.f32.mrf.mxu0
    %2969 = vdwg.mxu0
    %v2970 = vmul.f32 %v2962, 0.35355338
    %v2971 = vmul.f32 %v2967, 0.35355338
    %v2972 = vadd.f32 %v2970, %v92
    %v2973 = vadd.f32 %v2971, %v93
    %v2974 = vsel %vm304, %v2972, -inf
    %2975 = vmax.xlane.f32.xlu0 %v2974
    %v2976 = vpop.xlane.xlu0 %2975
    %v2977 = vsel %vm304, %v2973, -inf
    %2978 = vmax.xlane.f32.xlu0 %v2977
    %v2979 = vpop.xlane.xlu0 %2978
    %v2980 = vsub.f32 %v2972, %v2976
    %v2981 = vsub.f32 %v2973, %v2979
    %v2982 = vmul.f32 %v2980, 1.442695
    %v2983 = vpow.pop %v2982
    %v2984 = vmul.f32 %v2981, 1.442695
    %v2985 = vpow.pop %v2984
    %v2986 = vsel %vm304, %v2983, 0.0
    %2987 = vadd.xlane.f32.xlu0 %v2986
    %v2988 = vpop.xlane.xlu0 %2987
    %v2989 = vsel %vm304, %v2985, 0.0
    %2990 = vadd.xlane.f32.xlu0 %v2989
    %v2991 = vpop.xlane.xlu0 %2990
    %v2992 = vrcp.pop %v2988
    %v2993 = vrcp.pop %v2991
    %v2994 = vmul.f32 %v2983, %v2992
    %v2995 = vmul.f32 %v2985, %v2993
    %2996 = vrot.lane.b32.xlu0 %v2303, 48
    %v2997 = vpop.permute.xlu0 %2996
    %2998 = vrot.lane.b32.xlu0 %v2308, 48
    %v2999 = vpop.permute.xlu0 %2998
    %v3003 = vsel %vm304, %v2994, 0
    %v3006 = vsel %vm304, %v2995, 0
    %3008 = vmatprep.subr.mxu0 0.0
    %3009 = vmatpush1.msra.mxu0 0.0
    %3010 = vmatprep.subr.mxu0 0.0
    %3011 = vmatpush1.msra.mxu0 0.0
    %3012 = vmatprep.subr.mxu0 0.0
    %3013 = vmatpush1.msra.mxu0 0.0
    %3014 = vmatprep.subr.mxu0 0.0
    %3015 = vmatpush1.msra.mxu0 0.0
    %3016 = vmatprep.subr.mxu0 0.0
    %3017 = vmatpush1.msra.mxu0 0.0
    %3018 = vmatprep.subr.mxu0 0.0
    %3019 = vmatpush1.msra.mxu0 0.0
    %3020 = vmatprep.subr.mxu0 0.0
    %3021 = vmatpush1.msra.mxu0 0.0
    %3022 = vmatprep.subr.mxu0 0.0
    %3023 = vmatpush1.msra.mxu0 0.0
    %3024 = vmatprep.subr.mxu0 0.0
    %3025 = vmatpush1.msra.mxu0 0.0
    %3026 = vmatprep.subr.mxu0 0.0
    %3027 = vmatpush1.msra.mxu0 0.0
    %3028 = vmatprep.subr.mxu0 0.0
    %3029 = vmatpush1.msra.mxu0 0.0
    %3030 = vmatprep.subr.mxu0 0.0
    %3031 = vmatpush1.msra.mxu0 0.0
    %3032 = vmatprep.subr.mxu0 0.0
    %3033 = vmatpush1.msra.mxu0 0.0
    %3034 = vmatprep.subr.mxu0 0.0
    %3035 = vmatpush1.msra.mxu0 0.0
    %3036 = vmatprep.subr.mxu0 0.0
    %3037 = vmatpush1.msra.mxu0 %v2999
    %3038 = vmatprep.subr.mxu0 0.0
    %3039 = vmatpush1.msra.mxu0 %v2997
    %3040 = vmatprep.subr.mxu0 0.0
    %3041 = vmatpush2.msra.mxu0 0.0
    %3042 = vmatprep.subr.mxu0 0.0
    %3043 = vmatpush2.msra.mxu0 0.0
    %3044 = vmatprep.subr.mxu0 0.0
    %3045 = vmatpush2.msra.mxu0 0.0
    %3046 = vmatprep.subr.mxu0 0.0
    %3047 = vmatpush2.msra.mxu0 0.0
    %3048 = vmatprep.subr.mxu0 0.0
    %3049 = vmatpush2.msra.mxu0 0.0
    %3050 = vmatprep.subr.mxu0 0.0
    %3051 = vmatpush2.msra.mxu0 0.0
    %3052 = vmatprep.subr.mxu0 0.0
    %3053 = vmatpush2.msra.mxu0 0.0
    %3054 = vmatprep.subr.mxu0 0.0
    %3055 = vmatpush2.msra.mxu0 0.0
    %3056 = vmatprep.subr.mxu0 0.0
    %3057 = vmatpush2.msra.mxu0 0.0
    %3058 = vmatprep.subr.mxu0 0.0
    %3059 = vmatpush2.msra.mxu0 0.0
    %3060 = vmatprep.subr.mxu0 0.0
    %3061 = vmatpush2.msra.mxu0 0.0
    %3062 = vmatprep.subr.mxu0 0.0
    %3063 = vmatpush2.msra.mxu0 0.0
    %3064 = vmatprep.subr.mxu0 0.0
    %3065 = vmatpush2.msra.mxu0 0.0
    %3066 = vmatprep.subr.mxu0 0.0
    %3067 = vmatpush2.msra.mxu0 0.0
    %3068 = vmatprep.subr.mxu0 0.0
    %3069 = vmatpush2.msra.mxu0 0.0
    %3070 = vmatprep.subr.mxu0 0.0
    %3071 = vmatpush2.msra.mxu0 0.0
    %3072 = vmatprep.mubr.f32.mxu0 0.0
    %3073 = vmatmul.mubr.f32.gmra.mxu0 %v3003
    %v3074 = vpop.f32.mrf.mxu0
    %v3075 = vadd.f32 0.0, %v3074
    %v3076 = vpop.f32.mrf.mxu0
    %3077 = vmatprep.mubr.f32.mxu0 0.0
    %3078 = vmatmul.mubr.f32.gmra.mxu0 %v3006
    %v3079 = vpop.f32.mrf.mxu0
    %v3080 = vadd.f32 0.0, %v3079
    %v3081 = vpop.f32.mrf.mxu0
    %3082 = vdwg.mxu0
    %v3084 = vsel %vm608, %v3075, 0
    %v3087 = vsel %vm608, %v3080, 0
    %3089 = vmatprep.subr.mxu0 0.0
    %3090 = vmatpush1.msra.mxu0 0.0
    %3091 = vmatprep.subr.mxu0 0.0
    %3092 = vmatpush1.msra.mxu0 0.0
    %3093 = vmatprep.subr.mxu0 0.0
    %3094 = vmatpush1.msra.mxu0 0.0
    %3095 = vmatprep.subr.mxu0 0.0
    %3096 = vmatpush1.msra.mxu0 0.0
    %3097 = vmatprep.subr.mxu0 0.0
    %3098 = vmatpush1.msra.mxu0 0.0
    %3099 = vmatprep.subr.mxu0 0.0
    %3100 = vmatpush1.msra.mxu0 0.0
    %3101 = vmatprep.subr.mxu0 0.0
    %3102 = vmatpush1.msra.mxu0 0.0
    %3103 = vmatprep.subr.mxu0 0.0
    %3104 = vmatpush1.msra.mxu0 0.0
    %3105 = vmatprep.subr.mxu0 0.0
    %3106 = vmatpush1.msra.mxu0 0.0
    %3107 = vmatprep.subr.mxu0 0.0
    %3108 = vmatpush1.msra.mxu0 0.0
    %3109 = vmatprep.subr.mxu0 0.0
    %3110 = vmatpush1.msra.mxu0 0.0
    %3111 = vmatprep.subr.mxu0 0.0
    %3112 = vmatpush1.msra.mxu0 0.0
    %3113 = vmatprep.subr.mxu0 0.0
    %3114 = vmatpush1.msra.mxu0 0.0
    %3115 = vmatprep.subr.mxu0 0.0
    %3116 = vmatpush1.msra.mxu0 0.0
    %3117 = vmatprep.subr.mxu0 0.0
    %3118 = vmatpush1.msra.mxu0 0.0
    %3119 = vmatprep.subr.mxu0 0.0
    %3120 = vmatpush1.msra.mxu0 %v2001
    %3121 = vmatprep.subr.mxu0 0.0
    %3122 = vmatpush2.msra.mxu0 0.0
    %3123 = vmatprep.subr.mxu0 0.0
    %3124 = vmatpush2.msra.mxu0 0.0
    %3125 = vmatprep.subr.mxu0 0.0
    %3126 = vmatpush2.msra.mxu0 0.0
    %3127 = vmatprep.subr.mxu0 0.0
    %3128 = vmatpush2.msra.mxu0 0.0
    %3129 = vmatprep.subr.mxu0 0.0
    %3130 = vmatpush2.msra.mxu0 0.0
    %3131 = vmatprep.subr.mxu0 0.0
    %3132 = vmatpush2.msra.mxu0 0.0
    %3133 = vmatprep.subr.mxu0 0.0
    %3134 = vmatpush2.msra.mxu0 0.0
    %3135 = vmatprep.subr.mxu0 0.0
    %3136 = vmatpush2.msra.mxu0 0.0
    %3137 = vmatprep.subr.mxu0 0.0
    %3138 = vmatpush2.msra.mxu0 0.0
    %3139 = vmatprep.subr.mxu0 0.0
    %3140 = vmatpush2.msra.mxu0 0.0
    %3141 = vmatprep.subr.mxu0 0.0
    %3142 = vmatpush2.msra.mxu0 0.0
    %3143 = vmatprep.subr.mxu0 0.0
    %3144 = vmatpush2.msra.mxu0 0.0
    %3145 = vmatprep.subr.mxu0 0.0
    %3146 = vmatpush2.msra.mxu0 0.0
    %3147 = vmatprep.subr.mxu0 0.0
    %3148 = vmatpush2.msra.mxu0 0.0
    %3149 = vmatprep.subr.mxu0 0.0
    %3150 = vmatpush2.msra.mxu0 0.0
    %3151 = vmatprep.subr.mxu0 0.0
    %3152 = vmatpush2.msra.mxu0 0.0
    %3153 = vmatprep.mubr.f32.mxu0 0.0
    %3154 = vmatmul.mubr.f32.gmra.mxu0 %v3084
    %v3155 = vpop.f32.mrf.mxu0
    %v3156 = vadd.f32 0.0, %v3155
    %v3157 = vpop.f32.mrf.mxu0
    %3158 = vmatprep.mubr.f32.mxu0 0.0
    %3159 = vmatmul.mubr.f32.gmra.mxu0 %v3087
    %v3160 = vpop.f32.mrf.mxu0
    %v3161 = vadd.f32 0.0, %v3160
    %v3162 = vpop.f32.mrf.mxu0
    %3163 = vdwg.mxu0
    %v3164 = vadd.f32 %v2871, %v3156
    %v3165 = vadd.f32 %v2876, %v3161
    %3166 = vrot.lane.b32.xlu0 %v2303, 104
    %v3167 = vpop.permute.xlu0 %3166
    %3168 = vrot.lane.b32.xlu0 %v2308, 104
    %v3169 = vpop.permute.xlu0 %3168
    %3170 = vrot.lane.b32.xlu0 %v2303, 72
    %v3171 = vpop.permute.xlu0 %3170
    %3172 = vrot.lane.b32.xlu0 %v2308, 72
    %v3173 = vpop.permute.xlu0 %3172
    %v3174 = vsel %vm608, %v3167, 0
    %v3176 = vsel %vm608, %v3169, 0
    %v3178 = vsel %vm608, %v3171, 0
    %v3180 = vsel %vm608, %v3173, 0
    %3182 = vmatprep.subr.mxu0 0.0
    %3183 = vmatpush1.xpose.msra.mxu0 0.0
    %3184 = vmatprep.subr.mxu0 0.0
    %3185 = vmatpush1.xpose.msra.mxu0 0.0
    %3186 = vmatprep.subr.mxu0 0.0
    %3187 = vmatpush1.xpose.msra.mxu0 0.0
    %3188 = vmatprep.subr.mxu0 0.0
    %3189 = vmatpush1.xpose.msra.mxu0 0.0
    %3190 = vmatprep.subr.mxu0 0.0
    %3191 = vmatpush1.xpose.msra.mxu0 0.0
    %3192 = vmatprep.subr.mxu0 0.0
    %3193 = vmatpush1.xpose.msra.mxu0 0.0
    %3194 = vmatprep.subr.mxu0 0.0
    %3195 = vmatpush1.xpose.msra.mxu0 0.0
    %3196 = vmatprep.subr.mxu0 0.0
    %3197 = vmatpush1.xpose.msra.mxu0 0.0
    %3198 = vmatprep.subr.mxu0 0.0
    %3199 = vmatpush1.xpose.msra.mxu0 0.0
    %3200 = vmatprep.subr.mxu0 0.0
    %3201 = vmatpush1.xpose.msra.mxu0 0.0
    %3202 = vmatprep.subr.mxu0 0.0
    %3203 = vmatpush1.xpose.msra.mxu0 0.0
    %3204 = vmatprep.subr.mxu0 0.0
    %3205 = vmatpush1.xpose.msra.mxu0 0.0
    %3206 = vmatprep.subr.mxu0 0.0
    %3207 = vmatpush1.xpose.msra.mxu0 0.0
    %3208 = vmatprep.subr.mxu0 0.0
    %3209 = vmatpush1.xpose.msra.mxu0 0.0
    %3210 = vmatprep.subr.mxu0 0.0
    %3211 = vmatpush1.xpose.msra.mxu0 %v3180
    %3212 = vmatprep.subr.mxu0 0.0
    %3213 = vmatpush1.xpose.msra.mxu0 %v3178
    %3214 = vmatprep.subr.mxu0 0.0
    %3215 = vmatpush2.xpose.msra.mxu0 0.0
    %3216 = vmatprep.subr.mxu0 0.0
    %3217 = vmatpush2.xpose.msra.mxu0 0.0
    %3218 = vmatprep.subr.mxu0 0.0
    %3219 = vmatpush2.xpose.msra.mxu0 0.0
    %3220 = vmatprep.subr.mxu0 0.0
    %3221 = vmatpush2.xpose.msra.mxu0 0.0
    %3222 = vmatprep.subr.mxu0 0.0
    %3223 = vmatpush2.xpose.msra.mxu0 0.0
    %3224 = vmatprep.subr.mxu0 0.0
    %3225 = vmatpush2.xpose.msra.mxu0 0.0
    %3226 = vmatprep.subr.mxu0 0.0
    %3227 = vmatpush2.xpose.msra.mxu0 0.0
    %3228 = vmatprep.subr.mxu0 0.0
    %3229 = vmatpush2.xpose.msra.mxu0 0.0
    %3230 = vmatprep.subr.mxu0 0.0
    %3231 = vmatpush2.xpose.msra.mxu0 0.0
    %3232 = vmatprep.subr.mxu0 0.0
    %3233 = vmatpush2.xpose.msra.mxu0 0.0
    %3234 = vmatprep.subr.mxu0 0.0
    %3235 = vmatpush2.xpose.msra.mxu0 0.0
    %3236 = vmatprep.subr.mxu0 0.0
    %3237 = vmatpush2.xpose.msra.mxu0 0.0
    %3238 = vmatprep.subr.mxu0 0.0
    %3239 = vmatpush2.xpose.msra.mxu0 0.0
    %3240 = vmatprep.subr.mxu0 0.0
    %3241 = vmatpush2.xpose.msra.mxu0 0.0
    %3242 = vmatprep.subr.mxu0 0.0
    %3243 = vmatpush2.xpose.msra.mxu0 0.0
    %3244 = vmatprep.subr.mxu0 0.0
    %3245 = vmatpush2.xpose.msra.mxu0 0.0
    %3246 = vmatprep.mubr.f32.mxu0 0.0
    %3247 = vmatmul.mubr.f32.gmra.mxu0 %v3174
    %v3248 = vpop.f32.mrf.mxu0
    %v3249 = vadd.f32 0.0, %v3248
    %v3250 = vpop.f32.mrf.mxu0
    %3251 = vmatprep.mubr.f32.mxu0 0.0
    %3252 = vmatmul.mubr.f32.gmra.mxu0 %v3176
    %v3253 = vpop.f32.mrf.mxu0
    %v3254 = vadd.f32 0.0, %v3253
    %v3255 = vpop.f32.mrf.mxu0
    %3256 = vdwg.mxu0
    %v3257 = vmul.f32 %v3249, 0.35355338
    %v3258 = vmul.f32 %v3254, 0.35355338
    %v3259 = vadd.f32 %v3257, %v92
    %v3260 = vadd.f32 %v3258, %v93
    %v3261 = vsel %vm304, %v3259, -inf
    %3262 = vmax.xlane.f32.xlu0 %v3261
    %v3263 = vpop.xlane.xlu0 %3262
    %v3264 = vsel %vm304, %v3260, -inf
    %3265 = vmax.xlane.f32.xlu0 %v3264
    %v3266 = vpop.xlane.xlu0 %3265
    %v3267 = vsub.f32 %v3259, %v3263
    %v3268 = vsub.f32 %v3260, %v3266
    %v3269 = vmul.f32 %v3267, 1.442695
    %v3270 = vpow.pop %v3269
    %v3271 = vmul.f32 %v3268, 1.442695
    %v3272 = vpow.pop %v3271
    %v3273 = vsel %vm304, %v3270, 0.0
    %3274 = vadd.xlane.f32.xlu0 %v3273
    %v3275 = vpop.xlane.xlu0 %3274
    %v3276 = vsel %vm304, %v3272, 0.0
    %3277 = vadd.xlane.f32.xlu0 %v3276
    %v3278 = vpop.xlane.xlu0 %3277
    %v3279 = vrcp.pop %v3275
    %v3280 = vrcp.pop %v3278
    %v3281 = vmul.f32 %v3270, %v3279
    %v3282 = vmul.f32 %v3272, %v3280
    %3283 = vrot.lane.b32.xlu0 %v2303, 40
    %v3284 = vpop.permute.xlu0 %3283
    %3285 = vrot.lane.b32.xlu0 %v2308, 40
    %v3286 = vpop.permute.xlu0 %3285
    %v3290 = vsel %vm304, %v3281, 0
    %v3293 = vsel %vm304, %v3282, 0
    %3295 = vmatprep.subr.mxu0 0.0
    %3296 = vmatpush1.msra.mxu0 0.0
    %3297 = vmatprep.subr.mxu0 0.0
    %3298 = vmatpush1.msra.mxu0 0.0
    %3299 = vmatprep.subr.mxu0 0.0
    %3300 = vmatpush1.msra.mxu0 0.0
    %3301 = vmatprep.subr.mxu0 0.0
    %3302 = vmatpush1.msra.mxu0 0.0
    %3303 = vmatprep.subr.mxu0 0.0
    %3304 = vmatpush1.msra.mxu0 0.0
    %3305 = vmatprep.subr.mxu0 0.0
    %3306 = vmatpush1.msra.mxu0 0.0
    %3307 = vmatprep.subr.mxu0 0.0
    %3308 = vmatpush1.msra.mxu0 0.0
    %3309 = vmatprep.subr.mxu0 0.0
    %3310 = vmatpush1.msra.mxu0 0.0
    %3311 = vmatprep.subr.mxu0 0.0
    %3312 = vmatpush1.msra.mxu0 0.0
    %3313 = vmatprep.subr.mxu0 0.0
    %3314 = vmatpush1.msra.mxu0 0.0
    %3315 = vmatprep.subr.mxu0 0.0
    %3316 = vmatpush1.msra.mxu0 0.0
    %3317 = vmatprep.subr.mxu0 0.0
    %3318 = vmatpush1.msra.mxu0 0.0
    %3319 = vmatprep.subr.mxu0 0.0
    %3320 = vmatpush1.msra.mxu0 0.0
    %3321 = vmatprep.subr.mxu0 0.0
    %3322 = vmatpush1.msra.mxu0 0.0
    %3323 = vmatprep.subr.mxu0 0.0
    %3324 = vmatpush1.msra.mxu0 %v3286
    %3325 = vmatprep.subr.mxu0 0.0
    %3326 = vmatpush1.msra.mxu0 %v3284
    %3327 = vmatprep.subr.mxu0 0.0
    %3328 = vmatpush2.msra.mxu0 0.0
    %3329 = vmatprep.subr.mxu0 0.0
    %3330 = vmatpush2.msra.mxu0 0.0
    %3331 = vmatprep.subr.mxu0 0.0
    %3332 = vmatpush2.msra.mxu0 0.0
    %3333 = vmatprep.subr.mxu0 0.0
    %3334 = vmatpush2.msra.mxu0 0.0
    %3335 = vmatprep.subr.mxu0 0.0
    %3336 = vmatpush2.msra.mxu0 0.0
    %3337 = vmatprep.subr.mxu0 0.0
    %3338 = vmatpush2.msra.mxu0 0.0
    %3339 = vmatprep.subr.mxu0 0.0
    %3340 = vmatpush2.msra.mxu0 0.0
    %3341 = vmatprep.subr.mxu0 0.0
    %3342 = vmatpush2.msra.mxu0 0.0
    %3343 = vmatprep.subr.mxu0 0.0
    %3344 = vmatpush2.msra.mxu0 0.0
    %3345 = vmatprep.subr.mxu0 0.0
    %3346 = vmatpush2.msra.mxu0 0.0
    %3347 = vmatprep.subr.mxu0 0.0
    %3348 = vmatpush2.msra.mxu0 0.0
    %3349 = vmatprep.subr.mxu0 0.0
    %3350 = vmatpush2.msra.mxu0 0.0
    %3351 = vmatprep.subr.mxu0 0.0
    %3352 = vmatpush2.msra.mxu0 0.0
    %3353 = vmatprep.subr.mxu0 0.0
    %3354 = vmatpush2.msra.mxu0 0.0
    %3355 = vmatprep.subr.mxu0 0.0
    %3356 = vmatpush2.msra.mxu0 0.0
    %3357 = vmatprep.subr.mxu0 0.0
    %3358 = vmatpush2.msra.mxu0 0.0
    %3359 = vmatprep.mubr.f32.mxu0 0.0
    %3360 = vmatmul.mubr.f32.gmra.mxu0 %v3290
    %v3361 = vpop.f32.mrf.mxu0
    %v3362 = vadd.f32 0.0, %v3361
    %v3363 = vpop.f32.mrf.mxu0
    %3364 = vmatprep.mubr.f32.mxu0 0.0
    %3365 = vmatmul.mubr.f32.gmra.mxu0 %v3293
    %v3366 = vpop.f32.mrf.mxu0
    %v3367 = vadd.f32 0.0, %v3366
    %v3368 = vpop.f32.mrf.mxu0
    %3369 = vdwg.mxu0
    %v3371 = vsel %vm608, %v3362, 0
    %v3374 = vsel %vm608, %v3367, 0
    %3376 = vmatprep.subr.mxu0 0.0
    %3377 = vmatpush1.msra.mxu0 0.0
    %3378 = vmatprep.subr.mxu0 0.0
    %3379 = vmatpush1.msra.mxu0 0.0
    %3380 = vmatprep.subr.mxu0 0.0
    %3381 = vmatpush1.msra.mxu0 0.0
    %3382 = vmatprep.subr.mxu0 0.0
    %3383 = vmatpush1.msra.mxu0 0.0
    %3384 = vmatprep.subr.mxu0 0.0
    %3385 = vmatpush1.msra.mxu0 0.0
    %3386 = vmatprep.subr.mxu0 0.0
    %3387 = vmatpush1.msra.mxu0 0.0
    %3388 = vmatprep.subr.mxu0 0.0
    %3389 = vmatpush1.msra.mxu0 0.0
    %3390 = vmatprep.subr.mxu0 0.0
    %3391 = vmatpush1.msra.mxu0 0.0
    %3392 = vmatprep.subr.mxu0 0.0
    %3393 = vmatpush1.msra.mxu0 0.0
    %3394 = vmatprep.subr.mxu0 0.0
    %3395 = vmatpush1.msra.mxu0 0.0
    %3396 = vmatprep.subr.mxu0 0.0
    %3397 = vmatpush1.msra.mxu0 0.0
    %3398 = vmatprep.subr.mxu0 0.0
    %3399 = vmatpush1.msra.mxu0 0.0
    %3400 = vmatprep.subr.mxu0 0.0
    %3401 = vmatpush1.msra.mxu0 0.0
    %3402 = vmatprep.subr.mxu0 0.0
    %3403 = vmatpush1.msra.mxu0 0.0
    %3404 = vmatprep.subr.mxu0 0.0
    %3405 = vmatpush1.msra.mxu0 0.0
    %3406 = vmatprep.subr.mxu0 0.0
    %3407 = vmatpush1.msra.mxu0 %v2002
    %3408 = vmatprep.subr.mxu0 0.0
    %3409 = vmatpush2.msra.mxu0 0.0
    %3410 = vmatprep.subr.mxu0 0.0
    %3411 = vmatpush2.msra.mxu0 0.0
    %3412 = vmatprep.subr.mxu0 0.0
    %3413 = vmatpush2.msra.mxu0 0.0
    %3414 = vmatprep.subr.mxu0 0.0
    %3415 = vmatpush2.msra.mxu0 0.0
    %3416 = vmatprep.subr.mxu0 0.0
    %3417 = vmatpush2.msra.mxu0 0.0
    %3418 = vmatprep.subr.mxu0 0.0
    %3419 = vmatpush2.msra.mxu0 0.0
    %3420 = vmatprep.subr.mxu0 0.0
    %3421 = vmatpush2.msra.mxu0 0.0
    %3422 = vmatprep.subr.mxu0 0.0
    %3423 = vmatpush2.msra.mxu0 0.0
    %3424 = vmatprep.subr.mxu0 0.0
    %3425 = vmatpush2.msra.mxu0 0.0
    %3426 = vmatprep.subr.mxu0 0.0
    %3427 = vmatpush2.msra.mxu0 0.0
    %3428 = vmatprep.subr.mxu0 0.0
    %3429 = vmatpush2.msra.mxu0 0.0
    %3430 = vmatprep.subr.mxu0 0.0
    %3431 = vmatpush2.msra.mxu0 0.0
    %3432 = vmatprep.subr.mxu0 0.0
    %3433 = vmatpush2.msra.mxu0 0.0
    %3434 = vmatprep.subr.mxu0 0.0
    %3435 = vmatpush2.msra.mxu0 0.0
    %3436 = vmatprep.subr.mxu0 0.0
    %3437 = vmatpush2.msra.mxu0 0.0
    %3438 = vmatprep.subr.mxu0 0.0
    %3439 = vmatpush2.msra.mxu0 0.0
    %3440 = vmatprep.mubr.f32.mxu0 0.0
    %3441 = vmatmul.mubr.f32.gmra.mxu0 %v3371
    %v3442 = vpop.f32.mrf.mxu0
    %v3443 = vadd.f32 0.0, %v3442
    %v3444 = vpop.f32.mrf.mxu0
    %3445 = vmatprep.mubr.f32.mxu0 0.0
    %3446 = vmatmul.mubr.f32.gmra.mxu0 %v3374
    %v3447 = vpop.f32.mrf.mxu0
    %v3448 = vadd.f32 0.0, %v3447
    %v3449 = vpop.f32.mrf.mxu0
    %3450 = vdwg.mxu0
    %v3451 = vadd.f32 %v3164, %v3443
    %v3452 = vadd.f32 %v3165, %v3448
    %v3453 = vlaneseq
    %v3454 = vshrl.u32 %v3453, 7
    %v3455 = vsub.s32 4, %v3454
    %v3456 = vrot.slane %v2019, %v3455
    %v3457 = vadd.f32 %v3451, %v3456
    %v3458 = vadd.f32 %v3452, %v3456
    %v3459 = vadd.f32 %v3457, %v2180
    %v3460 = vadd.f32 %v3458, %v2185
    %v3461 = vsel %vm197, %v3459, 0.0
    %3462 = vadd.xlane.f32.xlu0 %v3461
    %v3463 = vpop.xlane.xlu0 %3462
    %v3464 = vsel %vm197, %v3460, 0.0
    %3465 = vadd.xlane.f32.xlu0 %v3464
    %v3466 = vpop.xlane.xlu0 %3465
    %v3467 = vmul.f32 %v3463, %v484
    %v3468 = vmul.f32 %v3466, %v484
    %v3469 = vsub.f32 %v3459, %v3467
    %v3470 = vsub.f32 %v3460, %v3468
    %v3471 = vmul.f32 %v3469, %v3469
    %v3472 = vmul.f32 %v3470, %v3470
    %v3473 = vsel %vm197, %v3471, 0.0
    %3474 = vadd.xlane.f32.xlu0 %v3473
    %v3475 = vpop.xlane.xlu0 %3474
    %v3476 = vsel %vm197, %v3472, 0.0
    %3477 = vadd.xlane.f32.xlu0 %v3476
    %v3478 = vpop.xlane.xlu0 %3477
    %v3479 = vmul.f32 %v3475, %v484
    %v3480 = vmul.f32 %v3478, %v484
    %v3481 = vadd.f32 %v3479, 1e-05
    %v3482 = vadd.f32 %v3480, 1e-05
    %v3483 = vrsqrt.pop %v3481
    %v3484 = vrsqrt.pop %v3482
    %v3485 = vmul.f32 %v3469, %v3483
    %v3486 = vmul.f32 %v3470, %v3484
    %v3487 = vlaneseq
    %v3488 = vshrl.u32 %v3487, 7
    %v3489 = vsub.s32 5, %v3488
    %v3490 = vrot.slane %v2019, %v3489
    %v3491 = vmul.f32 %v3485, %v3490
    %v3492 = vmul.f32 %v3486, %v3490
    %v3493 = vlaneseq
    %v3494 = vshrl.u32 %v3493, 7
    %v3495 = vsub.s32 6, %v3494
    %v3496 = vrot.slane %v2019, %v3495
    %v3497 = vadd.f32 %v3491, %v3496
    %v3498 = vadd.f32 %v3492, %v3496
    %v3499 = vlaneseq
    %v3500 = vshrl.u32 %v3499, 7
    %v3501 = vsub.s32 7, %v3500
    %v3502 = vrot.slane %v2019, %v3501
    %v3504 = vsel %vm197, %v3497, 0
    %v3507 = vsel %vm197, %v3498, 0
    %3509 = vmatprep.subr.mxu0 0.0
    %3510 = vmatpush1.msra.mxu0 0.0
    %3511 = vmatprep.subr.mxu0 0.0
    %3512 = vmatpush1.msra.mxu0 0.0
    %3513 = vmatprep.subr.mxu0 0.0
    %3514 = vmatpush1.msra.mxu0 0.0
    %3515 = vmatprep.subr.mxu0 0.0
    %3516 = vmatpush1.msra.mxu0 0.0
    %3517 = vmatprep.subr.mxu0 0.0
    %3518 = vmatpush1.msra.mxu0 0.0
    %3519 = vmatprep.subr.mxu0 0.0
    %3520 = vmatpush1.msra.mxu0 0.0
    %3521 = vmatprep.subr.mxu0 0.0
    %3522 = vmatpush1.msra.mxu0 0.0
    %3523 = vmatprep.subr.mxu0 0.0
    %3524 = vmatpush1.msra.mxu0 0.0
    %3525 = vmatprep.subr.mxu0 0.0
    %3526 = vmatpush1.msra.mxu0 0.0
    %3527 = vmatprep.subr.mxu0 0.0
    %3528 = vmatpush1.msra.mxu0 0.0
    %3529 = vmatprep.subr.mxu0 0.0
    %3530 = vmatpush1.msra.mxu0 0.0
    %3531 = vmatprep.subr.mxu0 0.0
    %3532 = vmatpush1.msra.mxu0 0.0
    %3533 = vmatprep.subr.mxu0 0.0
    %3534 = vmatpush1.msra.mxu0 %v2007
    %3535 = vmatprep.subr.mxu0 0.0
    %3536 = vmatpush1.msra.mxu0 %v2006
    %3537 = vmatprep.subr.mxu0 0.0
    %3538 = vmatpush1.msra.mxu0 %v2005
    %3539 = vmatprep.subr.mxu0 0.0
    %3540 = vmatpush1.msra.mxu0 %v2004
    %3541 = vmatprep.subr.mxu0 0.0
    %3542 = vmatpush2.msra.mxu0 0.0
    %3543 = vmatprep.subr.mxu0 0.0
    %3544 = vmatpush2.msra.mxu0 0.0
    %3545 = vmatprep.subr.mxu0 0.0
    %3546 = vmatpush2.msra.mxu0 0.0
    %3547 = vmatprep.subr.mxu0 0.0
    %3548 = vmatpush2.msra.mxu0 0.0
    %3549 = vmatprep.subr.mxu0 0.0
    %3550 = vmatpush2.msra.mxu0 0.0
    %3551 = vmatprep.subr.mxu0 0.0
    %3552 = vmatpush2.msra.mxu0 0.0
    %3553 = vmatprep.subr.mxu0 0.0
    %3554 = vmatpush2.msra.mxu0 0.0
    %3555 = vmatprep.subr.mxu0 0.0
    %3556 = vmatpush2.msra.mxu0 0.0
    %3557 = vmatprep.subr.mxu0 0.0
    %3558 = vmatpush2.msra.mxu0 0.0
    %3559 = vmatprep.subr.mxu0 0.0
    %3560 = vmatpush2.msra.mxu0 0.0
    %3561 = vmatprep.subr.mxu0 0.0
    %3562 = vmatpush2.msra.mxu0 0.0
    %3563 = vmatprep.subr.mxu0 0.0
    %3564 = vmatpush2.msra.mxu0 0.0
    %3565 = vmatprep.subr.mxu0 0.0
    %3566 = vmatpush2.msra.mxu0 0.0
    %3567 = vmatprep.subr.mxu0 0.0
    %3568 = vmatpush2.msra.mxu0 0.0
    %3569 = vmatprep.subr.mxu0 0.0
    %3570 = vmatpush2.msra.mxu0 0.0
    %3571 = vmatprep.subr.mxu0 0.0
    %3572 = vmatpush2.msra.mxu0 0.0
    %3573 = vmatprep.mubr.f32.mxu0 0.0
    %3574 = vmatmul.mubr.f32.gmra.mxu0 %v3504
    %v3575 = vpop.f32.mrf.mxu0
    %v3576 = vadd.f32 %v3502, %v3575
    %v3577 = vpop.f32.mrf.mxu0
    %3578 = vmatprep.mubr.f32.mxu0 0.0
    %3579 = vmatmul.mubr.f32.gmra.mxu0 %v3507
    %v3580 = vpop.f32.mrf.mxu0
    %v3581 = vadd.f32 %v3502, %v3580
    %v3582 = vpop.f32.mrf.mxu0
    %3583 = vdwg.mxu0
    %v3584 = vxor.u32 %v3576, 2147483648
    %v3585 = vxor.u32 %v3581, 2147483648
    %v3586 = vmul.f32 %v3584, 1.442695
    %v3587 = vpow.pop %v3586
    %v3588 = vmul.f32 %v3585, 1.442695
    %v3589 = vpow.pop %v3588
    %v3590 = vadd.f32 %v3587, 1.0
    %v3591 = vadd.f32 %v3589, 1.0
    %v3592 = vrcp.pop %v3590
    %v3593 = vmul.f32 1.0, %v3592
    %v3594 = vrcp.pop %v3591
    %v3595 = vmul.f32 1.0, %v3594
    %v3596 = vmul.f32 %v3576, %v3593
    %v3597 = vmul.f32 %v3581, %v3595
    %v3598 = vlaneseq
    %v3599 = vshrl.u32 %v3598, 7
    %v3600 = vsub.s32 0, %v3599
    %v3601 = vrot.slane %v2020, %v3600
    %v3603 = vsel %vm197, %v3596, 0
    %v3606 = vsel %vm197, %v3597, 0
    %3608 = vmatprep.subr.mxu0 0.0
    %3609 = vmatpush1.msra.mxu0 0.0
    %3610 = vmatprep.subr.mxu0 0.0
    %3611 = vmatpush1.msra.mxu0 0.0
    %3612 = vmatprep.subr.mxu0 0.0
    %3613 = vmatpush1.msra.mxu0 0.0
    %3614 = vmatprep.subr.mxu0 0.0
    %3615 = vmatpush1.msra.mxu0 0.0
    %3616 = vmatprep.subr.mxu0 0.0
    %3617 = vmatpush1.msra.mxu0 0.0
    %3618 = vmatprep.subr.mxu0 0.0
    %3619 = vmatpush1.msra.mxu0 0.0
    %3620 = vmatprep.subr.mxu0 0.0
    %3621 = vmatpush1.msra.mxu0 0.0
    %3622 = vmatprep.subr.mxu0 0.0
    %3623 = vmatpush1.msra.mxu0 0.0
    %3624 = vmatprep.subr.mxu0 0.0
    %3625 = vmatpush1.msra.mxu0 0.0
    %3626 = vmatprep.subr.mxu0 0.0
    %3627 = vmatpush1.msra.mxu0 0.0
    %3628 = vmatprep.subr.mxu0 0.0
    %3629 = vmatpush1.msra.mxu0 0.0
    %3630 = vmatprep.subr.mxu0 0.0
    %3631 = vmatpush1.msra.mxu0 0.0
    %3632 = vmatprep.subr.mxu0 0.0
    %3633 = vmatpush1.msra.mxu0 %v2012
    %3634 = vmatprep.subr.mxu0 0.0
    %3635 = vmatpush1.msra.mxu0 %v2011
    %3636 = vmatprep.subr.mxu0 0.0
    %3637 = vmatpush1.msra.mxu0 %v2010
    %3638 = vmatprep.subr.mxu0 0.0
    %3639 = vmatpush1.msra.mxu0 %v2009
    %3640 = vmatprep.subr.mxu0 0.0
    %3641 = vmatpush2.msra.mxu0 0.0
    %3642 = vmatprep.subr.mxu0 0.0
    %3643 = vmatpush2.msra.mxu0 0.0
    %3644 = vmatprep.subr.mxu0 0.0
    %3645 = vmatpush2.msra.mxu0 0.0
    %3646 = vmatprep.subr.mxu0 0.0
    %3647 = vmatpush2.msra.mxu0 0.0
    %3648 = vmatprep.subr.mxu0 0.0
    %3649 = vmatpush2.msra.mxu0 0.0
    %3650 = vmatprep.subr.mxu0 0.0
    %3651 = vmatpush2.msra.mxu0 0.0
    %3652 = vmatprep.subr.mxu0 0.0
    %3653 = vmatpush2.msra.mxu0 0.0
    %3654 = vmatprep.subr.mxu0 0.0
    %3655 = vmatpush2.msra.mxu0 0.0
    %3656 = vmatprep.subr.mxu0 0.0
    %3657 = vmatpush2.msra.mxu0 0.0
    %3658 = vmatprep.subr.mxu0 0.0
    %3659 = vmatpush2.msra.mxu0 0.0
    %3660 = vmatprep.subr.mxu0 0.0
    %3661 = vmatpush2.msra.mxu0 0.0
    %3662 = vmatprep.subr.mxu0 0.0
    %3663 = vmatpush2.msra.mxu0 0.0
    %3664 = vmatprep.subr.mxu0 0.0
    %3665 = vmatpush2.msra.mxu0 0.0
    %3666 = vmatprep.subr.mxu0 0.0
    %3667 = vmatpush2.msra.mxu0 0.0
    %3668 = vmatprep.subr.mxu0 0.0
    %3669 = vmatpush2.msra.mxu0 0.0
    %3670 = vmatprep.subr.mxu0 0.0
    %3671 = vmatpush2.msra.mxu0 0.0
    %3672 = vmatprep.mubr.f32.mxu0 0.0
    %3673 = vmatmul.mubr.f32.gmra.mxu0 %v3603
    %v3674 = vpop.f32.mrf.mxu0
    %v3675 = vadd.f32 %v3601, %v3674
    %v3676 = vpop.f32.mrf.mxu0
    %3677 = vmatprep.mubr.f32.mxu0 0.0
    %3678 = vmatmul.mubr.f32.gmra.mxu0 %v3606
    %v3679 = vpop.f32.mrf.mxu0
    %v3680 = vadd.f32 %v3601, %v3679
    %v3681 = vpop.f32.mrf.mxu0
    %3682 = vdwg.mxu0
    %v3683 = vadd.f32 %v3675, %v3459
    %v3684 = vadd.f32 %v3680, %v3460
    %v3685 = vxor.u32 %v3683, 2147483648
    %v3686 = vxor.u32 %v3684, 2147483648
    %v3687 = vmul.f32 %v3685, 1.442695
    %v3688 = vpow.pop %v3687
    %v3689 = vmul.f32 %v3686, 1.442695
    %v3690 = vpow.pop %v3689
    %v3691 = vadd.f32 %v3688, 1.0
    %v3692 = vadd.f32 %v3690, 1.0
    %v3693 = vrcp.pop %v3691
    %v3694 = vmul.f32 1.0, %v3693
    %v3695 = vrcp.pop %v3692
    %v3696 = vmul.f32 1.0, %v3695
    %v3697 = vmul.f32 %v3683, %v3694
    %v3698 = vmul.f32 %v3684, %v3696
    %v3699 = vadd.f32 %v3697, %v1991
    %v3700 = vadd.f32 %v3698, %v1992
    %s3701 = scalar_lea.vmem [#allocation9], 256
    %v3702 = vld [vmem:[%s3701] sm:$0xff]
    %v3703 = vld [vmem:[%s3701 + $0x8] sm:$0xff]
    %v3704 = vld [vmem:[%s3701 + $0x10] sm:$0xff]
    %v3705 = vld [vmem:[%s3701 + $0x18] sm:$0xff]
    %s3706 = scalar_lea.vmem [#allocation9], 288
    %v3707 = vld [vmem:[%s3706] sm:$0xff]
    %v3708 = vld [vmem:[%s3706 + $0x8] sm:$0xff]
    %v3709 = vld [vmem:[%s3706 + $0x10] sm:$0xff]
    %v3710 = vld [vmem:[%s3706 + $0x18] sm:$0xff]
    %s3711 = scalar_lea.vmem [#allocation9], 320
    %v3712 = vld [vmem:[%s3711] sm:$0xff]
    %v3713 = vld [vmem:[%s3711 + $0x8] sm:$0xff]
    %v3714 = vld [vmem:[%s3711 + $0x10] sm:$0xff]
    %v3715 = vld [vmem:[%s3711 + $0x18] sm:$0xff]
    %s3716 = scalar_lea.vmem [#allocation9], 352
    %v3717 = vld [vmem:[%s3716] sm:$0xff]
    %v3718 = vld [vmem:[%s3716 + $0x8] sm:$0xff]
    %v3719 = vld [vmem:[%s3716 + $0x10] sm:$0xff]
    %v3720 = vld [vmem:[%s3716 + $0x18] sm:$0xff]
    %s3721 = scalar_lea.vmem %s8, 64
    %v3722 = vld [vmem:[%s3721] sm:$0xff]
    %v3723 = vld [vmem:[%s3721 + $0x8] sm:$0xff]
    %v3724 = vld [vmem:[%s3721 + $0x10] sm:$0xff]
    %v3725 = vld [vmem:[%s3721 + $0x18] sm:$0xff]
    %s3726 = scalar_lea.vmem %s9, 32
    %v3727 = vld [vmem:[%s3726] sm:$0xff]
    %v3728 = vld [vmem:[%s3726 + $0x8] sm:$0x1]
    %3729 = vmatprep.subr.mxu0 0.0
    %3730 = vmatpush1.msra.mxu0 0.0
    %3731 = vmatprep.subr.mxu0 0.0
    %3732 = vmatpush1.msra.mxu0 0.0
    %3733 = vmatprep.subr.mxu0 0.0
    %3734 = vmatpush1.msra.mxu0 0.0
    %3735 = vmatprep.subr.mxu0 0.0
    %3736 = vmatpush1.msra.mxu0 0.0
    %3737 = vmatprep.subr.mxu0 0.0
    %3738 = vmatpush1.msra.mxu0 0.0
    %3739 = vmatprep.subr.mxu0 0.0
    %3740 = vmatpush1.msra.mxu0 0.0
    %3741 = vmatprep.subr.mxu0 0.0
    %3742 = vmatpush1.msra.mxu0 0.0
    %3743 = vmatprep.subr.mxu0 0.0
    %3744 = vmatpush1.msra.mxu0 0.0
    %3745 = vmatprep.subr.mxu0 0.0
    %3746 = vmatpush1.msra.mxu0 0.0
    %3747 = vmatprep.subr.mxu0 0.0
    %3748 = vmatpush1.msra.mxu0 0.0
    %3749 = vmatprep.subr.mxu0 0.0
    %3750 = vmatpush1.msra.mxu0 0.0
    %3751 = vmatprep.subr.mxu0 0.0
    %3752 = vmatpush1.msra.mxu0 0.0
    %3753 = vmatprep.subr.mxu0 0.0
    %3754 = vmatpush1.msra.mxu0 0.0
    %3755 = vmatprep.subr.mxu0 0.0
    %3756 = vmatpush1.msra.mxu0 0.0
    %3757 = vmatprep.subr.mxu0 0.0
    %3758 = vmatpush1.msra.mxu0 %v3700
    %3759 = vmatprep.subr.mxu0 0.0
    %3760 = vmatpush1.msra.mxu0 %v3699
    %3761 = vmatprep.subr.mxu0 0.0
    %3762 = vmatpush2.msra.mxu0 0.0
    %3763 = vmatprep.subr.mxu0 0.0
    %3764 = vmatpush2.msra.mxu0 0.0
    %3765 = vmatprep.subr.mxu0 0.0
    %3766 = vmatpush2.msra.mxu0 0.0
    %3767 = vmatprep.subr.mxu0 0.0
    %3768 = vmatpush2.msra.mxu0 0.0
    %3769 = vmatprep.subr.mxu0 0.0
    %3770 = vmatpush2.msra.mxu0 0.0
    %3771 = vmatprep.subr.mxu0 0.0
    %3772 = vmatpush2.msra.mxu0 0.0
    %3773 = vmatprep.subr.mxu0 0.0
    %3774 = vmatpush2.msra.mxu0 0.0
    %3775 = vmatprep.subr.mxu0 0.0
    %3776 = vmatpush2.msra.mxu0 0.0
    %3777 = vmatprep.subr.mxu0 0.0
    %3778 = vmatpush2.msra.mxu0 0.0
    %3779 = vmatprep.subr.mxu0 0.0
    %3780 = vmatpush2.msra.mxu0 0.0
    %3781 = vmatprep.subr.mxu0 0.0
    %3782 = vmatpush2.msra.mxu0 0.0
    %3783 = vmatprep.subr.mxu0 0.0
    %3784 = vmatpush2.msra.mxu0 0.0
    %3785 = vmatprep.subr.mxu0 0.0
    %3786 = vmatpush2.msra.mxu0 0.0
    %3787 = vmatprep.subr.mxu0 0.0
    %3788 = vmatpush2.msra.mxu0 0.0
    %3789 = vmatprep.subr.mxu0 0.0
    %3790 = vmatpush2.msra.mxu0 0.0
    %3791 = vmatprep.subr.mxu0 0.0
    %3792 = vmatpush2.msra.mxu0 0.0
    %3793 = vmatprep.mubr.f32.mxu0 0.0
    %3794 = vmatmul.mubr.f32.gmra.mxu0 %v306
    %v3795 = vpop.f32.mrf.mxu0
    %v3796 = vadd.f32 0.0, %v3795
    %v3797 = vpop.f32.mrf.mxu0
    %3798 = vmatprep.mubr.f32.mxu0 0.0
    %3799 = vmatmul.mubr.f32.gmra.mxu0 %v309
    %v3800 = vpop.f32.mrf.mxu0
    %v3801 = vadd.f32 0.0, %v3800
    %v3802 = vpop.f32.mrf.mxu0
    %3803 = vdwg.mxu0
    %s3804 = sld [smem:[#allocation2 + $0x2]]
    %s3805 = sadd.f32 %s3804, 1.0
    %v3806 = vstv %s3805
    %v3807 = vmul.f32 %v3806, %v3699
    %v3808 = vmul.f32 %v3806, %v3700
    %v3809 = vadd.f32 %v3807, %v3796
    %v3810 = vadd.f32 %v3808, %v3801
    %v3811 = vlaneseq
    %v3812 = vshrl.u32 %v3811, 7
    %v3813 = vsub.s32 0, %v3812
    %v3814 = vrot.slane %v3727, %v3813
    %v3816 = vsel %vm197, %v3809, 0
    %v3819 = vsel %vm197, %v3810, 0
    %3821 = vmatprep.subr.mxu0 0.0
    %3822 = vmatpush1.msra.mxu0 0.0
    %3823 = vmatprep.subr.mxu0 0.0
    %3824 = vmatpush1.msra.mxu0 0.0
    %3825 = vmatprep.subr.mxu0 0.0
    %3826 = vmatpush1.msra.mxu0 0.0
    %3827 = vmatprep.subr.mxu0 0.0
    %3828 = vmatpush1.msra.mxu0 0.0
    %3829 = vmatprep.subr.mxu0 0.0
    %3830 = vmatpush1.msra.mxu0 0.0
    %3831 = vmatprep.subr.mxu0 0.0
    %3832 = vmatpush1.msra.mxu0 0.0
    %3833 = vmatprep.subr.mxu0 0.0
    %3834 = vmatpush1.msra.mxu0 0.0
    %3835 = vmatprep.subr.mxu0 0.0
    %3836 = vmatpush1.msra.mxu0 0.0
    %3837 = vmatprep.subr.mxu0 0.0
    %3838 = vmatpush1.msra.mxu0 0.0
    %3839 = vmatprep.subr.mxu0 0.0
    %3840 = vmatpush1.msra.mxu0 0.0
    %3841 = vmatprep.subr.mxu0 0.0
    %3842 = vmatpush1.msra.mxu0 0.0
    %3843 = vmatprep.subr.mxu0 0.0
    %3844 = vmatpush1.msra.mxu0 0.0
    %3845 = vmatprep.subr.mxu0 0.0
    %3846 = vmatpush1.msra.mxu0 %v3705
    %3847 = vmatprep.subr.mxu0 0.0
    %3848 = vmatpush1.msra.mxu0 %v3704
    %3849 = vmatprep.subr.mxu0 0.0
    %3850 = vmatpush1.msra.mxu0 %v3703
    %3851 = vmatprep.subr.mxu0 0.0
    %3852 = vmatpush1.msra.mxu0 %v3702
    %3853 = vmatprep.subr.mxu0 0.0
    %3854 = vmatpush2.msra.mxu0 0.0
    %3855 = vmatprep.subr.mxu0 0.0
    %3856 = vmatpush2.msra.mxu0 0.0
    %3857 = vmatprep.subr.mxu0 0.0
    %3858 = vmatpush2.msra.mxu0 0.0
    %3859 = vmatprep.subr.mxu0 0.0
    %3860 = vmatpush2.msra.mxu0 0.0
    %3861 = vmatprep.subr.mxu0 0.0
    %3862 = vmatpush2.msra.mxu0 0.0
    %3863 = vmatprep.subr.mxu0 0.0
    %3864 = vmatpush2.msra.mxu0 0.0
    %3865 = vmatprep.subr.mxu0 0.0
    %3866 = vmatpush2.msra.mxu0 0.0
    %3867 = vmatprep.subr.mxu0 0.0
    %3868 = vmatpush2.msra.mxu0 0.0
    %3869 = vmatprep.subr.mxu0 0.0
    %3870 = vmatpush2.msra.mxu0 0.0
    %3871 = vmatprep.subr.mxu0 0.0
    %3872 = vmatpush2.msra.mxu0 0.0
    %3873 = vmatprep.subr.mxu0 0.0
    %3874 = vmatpush2.msra.mxu0 0.0
    %3875 = vmatprep.subr.mxu0 0.0
    %3876 = vmatpush2.msra.mxu0 0.0
    %3877 = vmatprep.subr.mxu0 0.0
    %3878 = vmatpush2.msra.mxu0 0.0
    %3879 = vmatprep.subr.mxu0 0.0
    %3880 = vmatpush2.msra.mxu0 0.0
    %3881 = vmatprep.subr.mxu0 0.0
    %3882 = vmatpush2.msra.mxu0 0.0
    %3883 = vmatprep.subr.mxu0 0.0
    %3884 = vmatpush2.msra.mxu0 0.0
    %3885 = vmatprep.mubr.f32.mxu0 0.0
    %3886 = vmatmul.mubr.f32.gmra.mxu0 %v3816
    %v3887 = vpop.f32.mrf.mxu0
    %v3888 = vadd.f32 %v3814, %v3887
    %v3889 = vpop.f32.mrf.mxu0
    %3890 = vmatprep.mubr.f32.mxu0 0.0
    %3891 = vmatmul.mubr.f32.gmra.mxu0 %v3819
    %v3892 = vpop.f32.mrf.mxu0
    %v3893 = vadd.f32 %v3814, %v3892
    %v3894 = vpop.f32.mrf.mxu0
    %3895 = vdwg.mxu0
    %v3896 = vsel %vm197, %v3888, 0.0
    %3897 = vadd.xlane.f32.xlu0 %v3896
    %v3898 = vpop.xlane.xlu0 %3897
    %v3899 = vsel %vm197, %v3893, 0.0
    %3900 = vadd.xlane.f32.xlu0 %v3899
    %v3901 = vpop.xlane.xlu0 %3900
    %v3902 = vmul.f32 %v3898, %v484
    %v3903 = vmul.f32 %v3901, %v484
    %v3904 = vsub.f32 %v3888, %v3902
    %v3905 = vsub.f32 %v3893, %v3903
    %v3906 = vmul.f32 %v3904, %v3904
    %v3907 = vmul.f32 %v3905, %v3905
    %v3908 = vsel %vm197, %v3906, 0.0
    %3909 = vadd.xlane.f32.xlu0 %v3908
    %v3910 = vpop.xlane.xlu0 %3909
    %v3911 = vsel %vm197, %v3907, 0.0
    %3912 = vadd.xlane.f32.xlu0 %v3911
    %v3913 = vpop.xlane.xlu0 %3912
    %v3914 = vmul.f32 %v3910, %v484
    %v3915 = vmul.f32 %v3913, %v484
    %v3916 = vadd.f32 %v3914, 1e-05
    %v3917 = vadd.f32 %v3915, 1e-05
    %v3918 = vrsqrt.pop %v3916
    %v3919 = vrsqrt.pop %v3917
    %v3920 = vmul.f32 %v3904, %v3918
    %v3921 = vmul.f32 %v3905, %v3919
    %v3922 = vlaneseq
    %v3923 = vshrl.u32 %v3922, 7
    %v3924 = vsub.s32 1, %v3923
    %v3925 = vrot.slane %v3727, %v3924
    %v3926 = vmul.f32 %v3920, %v3925
    %v3927 = vmul.f32 %v3921, %v3925
    %v3928 = vlaneseq
    %v3929 = vshrl.u32 %v3928, 7
    %v3930 = vsub.s32 2, %v3929
    %v3931 = vrot.slane %v3727, %v3930
    %v3932 = vadd.f32 %v3926, %v3931
    %v3933 = vadd.f32 %v3927, %v3931
    %v3934 = vlaneseq
    %v3935 = vshrl.u32 %v3934, 7
    %v3936 = vsub.s32 3, %v3935
    %v3937 = vrot.slane %v3727, %v3936
    %v3939 = vsel %vm197, %v3932, 0
    %v3942 = vsel %vm197, %v3933, 0
    %3944 = vmatprep.subr.mxu0 0.0
    %3945 = vmatpush1.msra.mxu0 0.0
    %3946 = vmatprep.subr.mxu0 0.0
    %3947 = vmatpush1.msra.mxu0 0.0
    %3948 = vmatprep.subr.mxu0 0.0
    %3949 = vmatpush1.msra.mxu0 0.0
    %3950 = vmatprep.subr.mxu0 0.0
    %3951 = vmatpush1.msra.mxu0 0.0
    %3952 = vmatprep.subr.mxu0 0.0
    %3953 = vmatpush1.msra.mxu0 0.0
    %3954 = vmatprep.subr.mxu0 0.0
    %3955 = vmatpush1.msra.mxu0 0.0
    %3956 = vmatprep.subr.mxu0 0.0
    %3957 = vmatpush1.msra.mxu0 0.0
    %3958 = vmatprep.subr.mxu0 0.0
    %3959 = vmatpush1.msra.mxu0 0.0
    %3960 = vmatprep.subr.mxu0 0.0
    %3961 = vmatpush1.msra.mxu0 0.0
    %3962 = vmatprep.subr.mxu0 0.0
    %3963 = vmatpush1.msra.mxu0 0.0
    %3964 = vmatprep.subr.mxu0 0.0
    %3965 = vmatpush1.msra.mxu0 0.0
    %3966 = vmatprep.subr.mxu0 0.0
    %3967 = vmatpush1.msra.mxu0 0.0
    %3968 = vmatprep.subr.mxu0 0.0
    %3969 = vmatpush1.msra.mxu0 %v3725
    %3970 = vmatprep.subr.mxu0 0.0
    %3971 = vmatpush1.msra.mxu0 %v3724
    %3972 = vmatprep.subr.mxu0 0.0
    %3973 = vmatpush1.msra.mxu0 %v3723
    %3974 = vmatprep.subr.mxu0 0.0
    %3975 = vmatpush1.msra.mxu0 %v3722
    %3976 = vmatprep.subr.mxu0 0.0
    %3977 = vmatpush2.msra.mxu0 0.0
    %3978 = vmatprep.subr.mxu0 0.0
    %3979 = vmatpush2.msra.mxu0 0.0
    %3980 = vmatprep.subr.mxu0 0.0
    %3981 = vmatpush2.msra.mxu0 0.0
    %3982 = vmatprep.subr.mxu0 0.0
    %3983 = vmatpush2.msra.mxu0 0.0
    %3984 = vmatprep.subr.mxu0 0.0
    %3985 = vmatpush2.msra.mxu0 0.0
    %3986 = vmatprep.subr.mxu0 0.0
    %3987 = vmatpush2.msra.mxu0 0.0
    %3988 = vmatprep.subr.mxu0 0.0
    %3989 = vmatpush2.msra.mxu0 0.0
    %3990 = vmatprep.subr.mxu0 0.0
    %3991 = vmatpush2.msra.mxu0 0.0
    %3992 = vmatprep.subr.mxu0 0.0
    %3993 = vmatpush2.msra.mxu0 0.0
    %3994 = vmatprep.subr.mxu0 0.0
    %3995 = vmatpush2.msra.mxu0 0.0
    %3996 = vmatprep.subr.mxu0 0.0
    %3997 = vmatpush2.msra.mxu0 0.0
    %3998 = vmatprep.subr.mxu0 0.0
    %3999 = vmatpush2.msra.mxu0 0.0
    %4000 = vmatprep.subr.mxu0 0.0
    %4001 = vmatpush2.msra.mxu0 0.0
    %4002 = vmatprep.subr.mxu0 0.0
    %4003 = vmatpush2.msra.mxu0 0.0
    %4004 = vmatprep.subr.mxu0 0.0
    %4005 = vmatpush2.msra.mxu0 0.0
    %4006 = vmatprep.subr.mxu0 0.0
    %4007 = vmatpush2.msra.mxu0 0.0
    %4008 = vmatprep.mubr.f32.mxu0 0.0
    %4009 = vmatmul.mubr.f32.gmra.mxu0 %v3939
    %v4010 = vpop.f32.mrf.mxu0
    %v4011 = vadd.f32 %v3937, %v4010
    %v4012 = vpop.f32.mrf.mxu0
    %4013 = vmatprep.mubr.f32.mxu0 0.0
    %4014 = vmatmul.mubr.f32.gmra.mxu0 %v3942
    %v4015 = vpop.f32.mrf.mxu0
    %v4016 = vadd.f32 %v3937, %v4015
    %v4017 = vpop.f32.mrf.mxu0
    %4018 = vdwg.mxu0
    %4021 = vrot.lane.b32.xlu0 %v4011, 96
    %v4022 = vpop.permute.xlu0 %4021
    %4023 = vrot.lane.b32.xlu0 %v4016, 96
    %v4024 = vpop.permute.xlu0 %4023
    %v4025 = vsel %vm608, %v4011, 0
    %v4027 = vsel %vm608, %v4016, 0
    %v4029 = vsel %vm608, %v4022, 0
    %v4031 = vsel %vm608, %v4024, 0
    %4033 = vmatprep.subr.mxu0 0.0
    %4034 = vmatpush1.xpose.msra.mxu0 0.0
    %4035 = vmatprep.subr.mxu0 0.0
    %4036 = vmatpush1.xpose.msra.mxu0 0.0
    %4037 = vmatprep.subr.mxu0 0.0
    %4038 = vmatpush1.xpose.msra.mxu0 0.0
    %4039 = vmatprep.subr.mxu0 0.0
    %4040 = vmatpush1.xpose.msra.mxu0 0.0
    %4041 = vmatprep.subr.mxu0 0.0
    %4042 = vmatpush1.xpose.msra.mxu0 0.0
    %4043 = vmatprep.subr.mxu0 0.0
    %4044 = vmatpush1.xpose.msra.mxu0 0.0
    %4045 = vmatprep.subr.mxu0 0.0
    %4046 = vmatpush1.xpose.msra.mxu0 0.0
    %4047 = vmatprep.subr.mxu0 0.0
    %4048 = vmatpush1.xpose.msra.mxu0 0.0
    %4049 = vmatprep.subr.mxu0 0.0
    %4050 = vmatpush1.xpose.msra.mxu0 0.0
    %4051 = vmatprep.subr.mxu0 0.0
    %4052 = vmatpush1.xpose.msra.mxu0 0.0
    %4053 = vmatprep.subr.mxu0 0.0
    %4054 = vmatpush1.xpose.msra.mxu0 0.0
    %4055 = vmatprep.subr.mxu0 0.0
    %4056 = vmatpush1.xpose.msra.mxu0 0.0
    %4057 = vmatprep.subr.mxu0 0.0
    %4058 = vmatpush1.xpose.msra.mxu0 0.0
    %4059 = vmatprep.subr.mxu0 0.0
    %4060 = vmatpush1.xpose.msra.mxu0 0.0
    %4061 = vmatprep.subr.mxu0 0.0
    %4062 = vmatpush1.xpose.msra.mxu0 %v4031
    %4063 = vmatprep.subr.mxu0 0.0
    %4064 = vmatpush1.xpose.msra.mxu0 %v4029
    %4065 = vmatprep.subr.mxu0 0.0
    %4066 = vmatpush2.xpose.msra.mxu0 0.0
    %4067 = vmatprep.subr.mxu0 0.0
    %4068 = vmatpush2.xpose.msra.mxu0 0.0
    %4069 = vmatprep.subr.mxu0 0.0
    %4070 = vmatpush2.xpose.msra.mxu0 0.0
    %4071 = vmatprep.subr.mxu0 0.0
    %4072 = vmatpush2.xpose.msra.mxu0 0.0
    %4073 = vmatprep.subr.mxu0 0.0
    %4074 = vmatpush2.xpose.msra.mxu0 0.0
    %4075 = vmatprep.subr.mxu0 0.0
    %4076 = vmatpush2.xpose.msra.mxu0 0.0
    %4077 = vmatprep.subr.mxu0 0.0
    %4078 = vmatpush2.xpose.msra.mxu0 0.0
    %4079 = vmatprep.subr.mxu0 0.0
    %4080 = vmatpush2.xpose.msra.mxu0 0.0
    %4081 = vmatprep.subr.mxu0 0.0
    %4082 = vmatpush2.xpose.msra.mxu0 0.0
    %4083 = vmatprep.subr.mxu0 0.0
    %4084 = vmatpush2.xpose.msra.mxu0 0.0
    %4085 = vmatprep.subr.mxu0 0.0
    %4086 = vmatpush2.xpose.msra.mxu0 0.0
    %4087 = vmatprep.subr.mxu0 0.0
    %4088 = vmatpush2.xpose.msra.mxu0 0.0
    %4089 = vmatprep.subr.mxu0 0.0
    %4090 = vmatpush2.xpose.msra.mxu0 0.0
    %4091 = vmatprep.subr.mxu0 0.0
    %4092 = vmatpush2.xpose.msra.mxu0 0.0
    %4093 = vmatprep.subr.mxu0 0.0
    %4094 = vmatpush2.xpose.msra.mxu0 0.0
    %4095 = vmatprep.subr.mxu0 0.0
    %4096 = vmatpush2.xpose.msra.mxu0 0.0
    %4097 = vmatprep.mubr.f32.mxu0 0.0
    %4098 = vmatmul.mubr.f32.gmra.mxu0 %v4025
    %v4099 = vpop.f32.mrf.mxu0
    %v4100 = vadd.f32 0.0, %v4099
    %v4101 = vpop.f32.mrf.mxu0
    %4102 = vmatprep.mubr.f32.mxu0 0.0
    %4103 = vmatmul.mubr.f32.gmra.mxu0 %v4027
    %v4104 = vpop.f32.mrf.mxu0
    %v4105 = vadd.f32 0.0, %v4104
    %v4106 = vpop.f32.mrf.mxu0
    %4107 = vdwg.mxu0
    %v4108 = vmul.f32 %v4100, 0.35355338
    %v4109 = vmul.f32 %v4105, 0.35355338
    %v4110 = vadd.f32 %v4108, %v92
    %v4111 = vadd.f32 %v4109, %v93
    %v4112 = vsel %vm304, %v4110, -inf
    %4113 = vmax.xlane.f32.xlu0 %v4112
    %v4114 = vpop.xlane.xlu0 %4113
    %v4115 = vsel %vm304, %v4111, -inf
    %4116 = vmax.xlane.f32.xlu0 %v4115
    %v4117 = vpop.xlane.xlu0 %4116
    %v4118 = vsub.f32 %v4110, %v4114
    %v4119 = vsub.f32 %v4111, %v4117
    %v4120 = vmul.f32 %v4118, 1.442695
    %v4121 = vpow.pop %v4120
    %v4122 = vmul.f32 %v4119, 1.442695
    %v4123 = vpow.pop %v4122
    %v4124 = vsel %vm304, %v4121, 0.0
    %4125 = vadd.xlane.f32.xlu0 %v4124
    %v4126 = vpop.xlane.xlu0 %4125
    %v4127 = vsel %vm304, %v4123, 0.0
    %4128 = vadd.xlane.f32.xlu0 %v4127
    %v4129 = vpop.xlane.xlu0 %4128
    %v4130 = vrcp.pop %v4126
    %v4131 = vrcp.pop %v4129
    %v4132 = vmul.f32 %v4121, %v4130
    %v4133 = vmul.f32 %v4123, %v4131
    %4134 = vrot.lane.b32.xlu0 %v4011, 64
    %v4135 = vpop.permute.xlu0 %4134
    %4136 = vrot.lane.b32.xlu0 %v4016, 64
    %v4137 = vpop.permute.xlu0 %4136
    %v4141 = vsel %vm304, %v4132, 0
    %v4144 = vsel %vm304, %v4133, 0
    %4146 = vmatprep.subr.mxu0 0.0
    %4147 = vmatpush1.msra.mxu0 0.0
    %4148 = vmatprep.subr.mxu0 0.0
    %4149 = vmatpush1.msra.mxu0 0.0
    %4150 = vmatprep.subr.mxu0 0.0
    %4151 = vmatpush1.msra.mxu0 0.0
    %4152 = vmatprep.subr.mxu0 0.0
    %4153 = vmatpush1.msra.mxu0 0.0
    %4154 = vmatprep.subr.mxu0 0.0
    %4155 = vmatpush1.msra.mxu0 0.0
    %4156 = vmatprep.subr.mxu0 0.0
    %4157 = vmatpush1.msra.mxu0 0.0
    %4158 = vmatprep.subr.mxu0 0.0
    %4159 = vmatpush1.msra.mxu0 0.0
    %4160 = vmatprep.subr.mxu0 0.0
    %4161 = vmatpush1.msra.mxu0 0.0
    %4162 = vmatprep.subr.mxu0 0.0
    %4163 = vmatpush1.msra.mxu0 0.0
    %4164 = vmatprep.subr.mxu0 0.0
    %4165 = vmatpush1.msra.mxu0 0.0
    %4166 = vmatprep.subr.mxu0 0.0
    %4167 = vmatpush1.msra.mxu0 0.0
    %4168 = vmatprep.subr.mxu0 0.0
    %4169 = vmatpush1.msra.mxu0 0.0
    %4170 = vmatprep.subr.mxu0 0.0
    %4171 = vmatpush1.msra.mxu0 0.0
    %4172 = vmatprep.subr.mxu0 0.0
    %4173 = vmatpush1.msra.mxu0 0.0
    %4174 = vmatprep.subr.mxu0 0.0
    %4175 = vmatpush1.msra.mxu0 %v4137
    %4176 = vmatprep.subr.mxu0 0.0
    %4177 = vmatpush1.msra.mxu0 %v4135
    %4178 = vmatprep.subr.mxu0 0.0
    %4179 = vmatpush2.msra.mxu0 0.0
    %4180 = vmatprep.subr.mxu0 0.0
    %4181 = vmatpush2.msra.mxu0 0.0
    %4182 = vmatprep.subr.mxu0 0.0
    %4183 = vmatpush2.msra.mxu0 0.0
    %4184 = vmatprep.subr.mxu0 0.0
    %4185 = vmatpush2.msra.mxu0 0.0
    %4186 = vmatprep.subr.mxu0 0.0
    %4187 = vmatpush2.msra.mxu0 0.0
    %4188 = vmatprep.subr.mxu0 0.0
    %4189 = vmatpush2.msra.mxu0 0.0
    %4190 = vmatprep.subr.mxu0 0.0
    %4191 = vmatpush2.msra.mxu0 0.0
    %4192 = vmatprep.subr.mxu0 0.0
    %4193 = vmatpush2.msra.mxu0 0.0
    %4194 = vmatprep.subr.mxu0 0.0
    %4195 = vmatpush2.msra.mxu0 0.0
    %4196 = vmatprep.subr.mxu0 0.0
    %4197 = vmatpush2.msra.mxu0 0.0
    %4198 = vmatprep.subr.mxu0 0.0
    %4199 = vmatpush2.msra.mxu0 0.0
    %4200 = vmatprep.subr.mxu0 0.0
    %4201 = vmatpush2.msra.mxu0 0.0
    %4202 = vmatprep.subr.mxu0 0.0
    %4203 = vmatpush2.msra.mxu0 0.0
    %4204 = vmatprep.subr.mxu0 0.0
    %4205 = vmatpush2.msra.mxu0 0.0
    %4206 = vmatprep.subr.mxu0 0.0
    %4207 = vmatpush2.msra.mxu0 0.0
    %4208 = vmatprep.subr.mxu0 0.0
    %4209 = vmatpush2.msra.mxu0 0.0
    %4210 = vmatprep.mubr.f32.mxu0 0.0
    %4211 = vmatmul.mubr.f32.gmra.mxu0 %v4141
    %v4212 = vpop.f32.mrf.mxu0
    %v4213 = vadd.f32 0.0, %v4212
    %v4214 = vpop.f32.mrf.mxu0
    %4215 = vmatprep.mubr.f32.mxu0 0.0
    %4216 = vmatmul.mubr.f32.gmra.mxu0 %v4144
    %v4217 = vpop.f32.mrf.mxu0
    %v4218 = vadd.f32 0.0, %v4217
    %v4219 = vpop.f32.mrf.mxu0
    %4220 = vdwg.mxu0
    %4221 = vrot.lane.b32.xlu0 %v4011, 120
    %v4222 = vpop.permute.xlu0 %4221
    %4223 = vrot.lane.b32.xlu0 %v4016, 120
    %v4224 = vpop.permute.xlu0 %4223
    %4225 = vrot.lane.b32.xlu0 %v4011, 88
    %v4226 = vpop.permute.xlu0 %4225
    %4227 = vrot.lane.b32.xlu0 %v4016, 88
    %v4228 = vpop.permute.xlu0 %4227
    %v4229 = vsel %vm608, %v4222, 0
    %v4231 = vsel %vm608, %v4224, 0
    %v4233 = vsel %vm608, %v4226, 0
    %v4235 = vsel %vm608, %v4228, 0
    %4237 = vmatprep.subr.mxu0 0.0
    %4238 = vmatpush1.xpose.msra.mxu0 0.0
    %4239 = vmatprep.subr.mxu0 0.0
    %4240 = vmatpush1.xpose.msra.mxu0 0.0
    %4241 = vmatprep.subr.mxu0 0.0
    %4242 = vmatpush1.xpose.msra.mxu0 0.0
    %4243 = vmatprep.subr.mxu0 0.0
    %4244 = vmatpush1.xpose.msra.mxu0 0.0
    %4245 = vmatprep.subr.mxu0 0.0
    %4246 = vmatpush1.xpose.msra.mxu0 0.0
    %4247 = vmatprep.subr.mxu0 0.0
    %4248 = vmatpush1.xpose.msra.mxu0 0.0
    %4249 = vmatprep.subr.mxu0 0.0
    %4250 = vmatpush1.xpose.msra.mxu0 0.0
    %4251 = vmatprep.subr.mxu0 0.0
    %4252 = vmatpush1.xpose.msra.mxu0 0.0
    %4253 = vmatprep.subr.mxu0 0.0
    %4254 = vmatpush1.xpose.msra.mxu0 0.0
    %4255 = vmatprep.subr.mxu0 0.0
    %4256 = vmatpush1.xpose.msra.mxu0 0.0
    %4257 = vmatprep.subr.mxu0 0.0
    %4258 = vmatpush1.xpose.msra.mxu0 0.0
    %4259 = vmatprep.subr.mxu0 0.0
    %4260 = vmatpush1.xpose.msra.mxu0 0.0
    %4261 = vmatprep.subr.mxu0 0.0
    %4262 = vmatpush1.xpose.msra.mxu0 0.0
    %4263 = vmatprep.subr.mxu0 0.0
    %4264 = vmatpush1.xpose.msra.mxu0 0.0
    %4265 = vmatprep.subr.mxu0 0.0
    %4266 = vmatpush1.xpose.msra.mxu0 %v4235
    %4267 = vmatprep.subr.mxu0 0.0
    %4268 = vmatpush1.xpose.msra.mxu0 %v4233
    %4269 = vmatprep.subr.mxu0 0.0
    %4270 = vmatpush2.xpose.msra.mxu0 0.0
    %4271 = vmatprep.subr.mxu0 0.0
    %4272 = vmatpush2.xpose.msra.mxu0 0.0
    %4273 = vmatprep.subr.mxu0 0.0
    %4274 = vmatpush2.xpose.msra.mxu0 0.0
    %4275 = vmatprep.subr.mxu0 0.0
    %4276 = vmatpush2.xpose.msra.mxu0 0.0
    %4277 = vmatprep.subr.mxu0 0.0
    %4278 = vmatpush2.xpose.msra.mxu0 0.0
    %4279 = vmatprep.subr.mxu0 0.0
    %4280 = vmatpush2.xpose.msra.mxu0 0.0
    %4281 = vmatprep.subr.mxu0 0.0
    %4282 = vmatpush2.xpose.msra.mxu0 0.0
    %4283 = vmatprep.subr.mxu0 0.0
    %4284 = vmatpush2.xpose.msra.mxu0 0.0
    %4285 = vmatprep.subr.mxu0 0.0
    %4286 = vmatpush2.xpose.msra.mxu0 0.0
    %4287 = vmatprep.subr.mxu0 0.0
    %4288 = vmatpush2.xpose.msra.mxu0 0.0
    %4289 = vmatprep.subr.mxu0 0.0
    %4290 = vmatpush2.xpose.msra.mxu0 0.0
    %4291 = vmatprep.subr.mxu0 0.0
    %4292 = vmatpush2.xpose.msra.mxu0 0.0
    %4293 = vmatprep.subr.mxu0 0.0
    %4294 = vmatpush2.xpose.msra.mxu0 0.0
    %4295 = vmatprep.subr.mxu0 0.0
    %4296 = vmatpush2.xpose.msra.mxu0 0.0
    %4297 = vmatprep.subr.mxu0 0.0
    %4298 = vmatpush2.xpose.msra.mxu0 0.0
    %4299 = vmatprep.subr.mxu0 0.0
    %4300 = vmatpush2.xpose.msra.mxu0 0.0
    %4301 = vmatprep.mubr.f32.mxu0 0.0
    %4302 = vmatmul.mubr.f32.gmra.mxu0 %v4229
    %v4303 = vpop.f32.mrf.mxu0
    %v4304 = vadd.f32 0.0, %v4303
    %v4305 = vpop.f32.mrf.mxu0
    %4306 = vmatprep.mubr.f32.mxu0 0.0
    %4307 = vmatmul.mubr.f32.gmra.mxu0 %v4231
    %v4308 = vpop.f32.mrf.mxu0
    %v4309 = vadd.f32 0.0, %v4308
    %v4310 = vpop.f32.mrf.mxu0
    %4311 = vdwg.mxu0
    %v4312 = vmul.f32 %v4304, 0.35355338
    %v4313 = vmul.f32 %v4309, 0.35355338
    %v4314 = vadd.f32 %v4312, %v92
    %v4315 = vadd.f32 %v4313, %v93
    %v4316 = vsel %vm304, %v4314, -inf
    %4317 = vmax.xlane.f32.xlu0 %v4316
    %v4318 = vpop.xlane.xlu0 %4317
    %v4319 = vsel %vm304, %v4315, -inf
    %4320 = vmax.xlane.f32.xlu0 %v4319
    %v4321 = vpop.xlane.xlu0 %4320
    %v4322 = vsub.f32 %v4314, %v4318
    %v4323 = vsub.f32 %v4315, %v4321
    %v4324 = vmul.f32 %v4322, 1.442695
    %v4325 = vpow.pop %v4324
    %v4326 = vmul.f32 %v4323, 1.442695
    %v4327 = vpow.pop %v4326
    %v4328 = vsel %vm304, %v4325, 0.0
    %4329 = vadd.xlane.f32.xlu0 %v4328
    %v4330 = vpop.xlane.xlu0 %4329
    %v4331 = vsel %vm304, %v4327, 0.0
    %4332 = vadd.xlane.f32.xlu0 %v4331
    %v4333 = vpop.xlane.xlu0 %4332
    %v4334 = vrcp.pop %v4330
    %v4335 = vrcp.pop %v4333
    %v4336 = vmul.f32 %v4325, %v4334
    %v4337 = vmul.f32 %v4327, %v4335
    %4338 = vrot.lane.b32.xlu0 %v4011, 56
    %v4339 = vpop.permute.xlu0 %4338
    %4340 = vrot.lane.b32.xlu0 %v4016, 56
    %v4341 = vpop.permute.xlu0 %4340
    %v4345 = vsel %vm304, %v4336, 0
    %v4348 = vsel %vm304, %v4337, 0
    %4350 = vmatprep.subr.mxu0 0.0
    %4351 = vmatpush1.msra.mxu0 0.0
    %4352 = vmatprep.subr.mxu0 0.0
    %4353 = vmatpush1.msra.mxu0 0.0
    %4354 = vmatprep.subr.mxu0 0.0
    %4355 = vmatpush1.msra.mxu0 0.0
    %4356 = vmatprep.subr.mxu0 0.0
    %4357 = vmatpush1.msra.mxu0 0.0
    %4358 = vmatprep.subr.mxu0 0.0
    %4359 = vmatpush1.msra.mxu0 0.0
    %4360 = vmatprep.subr.mxu0 0.0
    %4361 = vmatpush1.msra.mxu0 0.0
    %4362 = vmatprep.subr.mxu0 0.0
    %4363 = vmatpush1.msra.mxu0 0.0
    %4364 = vmatprep.subr.mxu0 0.0
    %4365 = vmatpush1.msra.mxu0 0.0
    %4366 = vmatprep.subr.mxu0 0.0
    %4367 = vmatpush1.msra.mxu0 0.0
    %4368 = vmatprep.subr.mxu0 0.0
    %4369 = vmatpush1.msra.mxu0 0.0
    %4370 = vmatprep.subr.mxu0 0.0
    %4371 = vmatpush1.msra.mxu0 0.0
    %4372 = vmatprep.subr.mxu0 0.0
    %4373 = vmatpush1.msra.mxu0 0.0
    %4374 = vmatprep.subr.mxu0 0.0
    %4375 = vmatpush1.msra.mxu0 0.0
    %4376 = vmatprep.subr.mxu0 0.0
    %4377 = vmatpush1.msra.mxu0 0.0
    %4378 = vmatprep.subr.mxu0 0.0
    %4379 = vmatpush1.msra.mxu0 %v4341
    %4380 = vmatprep.subr.mxu0 0.0
    %4381 = vmatpush1.msra.mxu0 %v4339
    %4382 = vmatprep.subr.mxu0 0.0
    %4383 = vmatpush2.msra.mxu0 0.0
    %4384 = vmatprep.subr.mxu0 0.0
    %4385 = vmatpush2.msra.mxu0 0.0
    %4386 = vmatprep.subr.mxu0 0.0
    %4387 = vmatpush2.msra.mxu0 0.0
    %4388 = vmatprep.subr.mxu0 0.0
    %4389 = vmatpush2.msra.mxu0 0.0
    %4390 = vmatprep.subr.mxu0 0.0
    %4391 = vmatpush2.msra.mxu0 0.0
    %4392 = vmatprep.subr.mxu0 0.0
    %4393 = vmatpush2.msra.mxu0 0.0
    %4394 = vmatprep.subr.mxu0 0.0
    %4395 = vmatpush2.msra.mxu0 0.0
    %4396 = vmatprep.subr.mxu0 0.0
    %4397 = vmatpush2.msra.mxu0 0.0
    %4398 = vmatprep.subr.mxu0 0.0
    %4399 = vmatpush2.msra.mxu0 0.0
    %4400 = vmatprep.subr.mxu0 0.0
    %4401 = vmatpush2.msra.mxu0 0.0
    %4402 = vmatprep.subr.mxu0 0.0
    %4403 = vmatpush2.msra.mxu0 0.0
    %4404 = vmatprep.subr.mxu0 0.0
    %4405 = vmatpush2.msra.mxu0 0.0
    %4406 = vmatprep.subr.mxu0 0.0
    %4407 = vmatpush2.msra.mxu0 0.0
    %4408 = vmatprep.subr.mxu0 0.0
    %4409 = vmatpush2.msra.mxu0 0.0
    %4410 = vmatprep.subr.mxu0 0.0
    %4411 = vmatpush2.msra.mxu0 0.0
    %4412 = vmatprep.subr.mxu0 0.0
    %4413 = vmatpush2.msra.mxu0 0.0
    %4414 = vmatprep.mubr.f32.mxu0 0.0
    %4415 = vmatmul.mubr.f32.gmra.mxu0 %v4345
    %v4416 = vpop.f32.mrf.mxu0
    %v4417 = vadd.f32 0.0, %v4416
    %v4418 = vpop.f32.mrf.mxu0
    %4419 = vmatprep.mubr.f32.mxu0 0.0
    %4420 = vmatmul.mubr.f32.gmra.mxu0 %v4348
    %v4421 = vpop.f32.mrf.mxu0
    %v4422 = vadd.f32 0.0, %v4421
    %v4423 = vpop.f32.mrf.mxu0
    %4424 = vdwg.mxu0
    %v4426 = vsel %vm608, %v4417, 0
    %v4429 = vsel %vm608, %v4422, 0
    %4431 = vmatprep.subr.mxu0 0.0
    %4432 = vmatpush1.msra.mxu0 0.0
    %4433 = vmatprep.subr.mxu0 0.0
    %4434 = vmatpush1.msra.mxu0 0.0
    %4435 = vmatprep.subr.mxu0 0.0
    %4436 = vmatpush1.msra.mxu0 0.0
    %4437 = vmatprep.subr.mxu0 0.0
    %4438 = vmatpush1.msra.mxu0 0.0
    %4439 = vmatprep.subr.mxu0 0.0
    %4440 = vmatpush1.msra.mxu0 0.0
    %4441 = vmatprep.subr.mxu0 0.0
    %4442 = vmatpush1.msra.mxu0 0.0
    %4443 = vmatprep.subr.mxu0 0.0
    %4444 = vmatpush1.msra.mxu0 0.0
    %4445 = vmatprep.subr.mxu0 0.0
    %4446 = vmatpush1.msra.mxu0 0.0
    %4447 = vmatprep.subr.mxu0 0.0
    %4448 = vmatpush1.msra.mxu0 0.0
    %4449 = vmatprep.subr.mxu0 0.0
    %4450 = vmatpush1.msra.mxu0 0.0
    %4451 = vmatprep.subr.mxu0 0.0
    %4452 = vmatpush1.msra.mxu0 0.0
    %4453 = vmatprep.subr.mxu0 0.0
    %4454 = vmatpush1.msra.mxu0 0.0
    %4455 = vmatprep.subr.mxu0 0.0
    %4456 = vmatpush1.msra.mxu0 0.0
    %4457 = vmatprep.subr.mxu0 0.0
    %4458 = vmatpush1.msra.mxu0 0.0
    %4459 = vmatprep.subr.mxu0 0.0
    %4460 = vmatpush1.msra.mxu0 0.0
    %4461 = vmatprep.subr.mxu0 0.0
    %4462 = vmatpush1.msra.mxu0 %v3708
    %4463 = vmatprep.subr.mxu0 0.0
    %4464 = vmatpush2.msra.mxu0 0.0
    %4465 = vmatprep.subr.mxu0 0.0
    %4466 = vmatpush2.msra.mxu0 0.0
    %4467 = vmatprep.subr.mxu0 0.0
    %4468 = vmatpush2.msra.mxu0 0.0
    %4469 = vmatprep.subr.mxu0 0.0
    %4470 = vmatpush2.msra.mxu0 0.0
    %4471 = vmatprep.subr.mxu0 0.0
    %4472 = vmatpush2.msra.mxu0 0.0
    %4473 = vmatprep.subr.mxu0 0.0
    %4474 = vmatpush2.msra.mxu0 0.0
    %4475 = vmatprep.subr.mxu0 0.0
    %4476 = vmatpush2.msra.mxu0 0.0
    %4477 = vmatprep.subr.mxu0 0.0
    %4478 = vmatpush2.msra.mxu0 0.0
    %4479 = vmatprep.subr.mxu0 0.0
    %4480 = vmatpush2.msra.mxu0 0.0
    %4481 = vmatprep.subr.mxu0 0.0
    %4482 = vmatpush2.msra.mxu0 0.0
    %4483 = vmatprep.subr.mxu0 0.0
    %4484 = vmatpush2.msra.mxu0 0.0
    %4485 = vmatprep.subr.mxu0 0.0
    %4486 = vmatpush2.msra.mxu0 0.0
    %4487 = vmatprep.subr.mxu0 0.0
    %4488 = vmatpush2.msra.mxu0 0.0
    %4489 = vmatprep.subr.mxu0 0.0
    %4490 = vmatpush2.msra.mxu0 0.0
    %4491 = vmatprep.subr.mxu0 0.0
    %4492 = vmatpush2.msra.mxu0 0.0
    %4493 = vmatprep.subr.mxu0 0.0
    %4494 = vmatpush2.msra.mxu0 0.0
    %4495 = vmatprep.mubr.f32.mxu0 0.0
    %4496 = vmatmul.mubr.f32.gmra.mxu0 %v4426
    %v4497 = vpop.f32.mrf.mxu0
    %v4498 = vadd.f32 0.0, %v4497
    %v4499 = vpop.f32.mrf.mxu0
    %4500 = vmatprep.mubr.f32.mxu0 0.0
    %4501 = vmatmul.mubr.f32.gmra.mxu0 %v4429
    %v4502 = vpop.f32.mrf.mxu0
    %v4503 = vadd.f32 0.0, %v4502
    %v4504 = vpop.f32.mrf.mxu0
    %4505 = vdwg.mxu0
    %v4507 = vsel %vm608, %v4213, 0
    %v4510 = vsel %vm608, %v4218, 0
    %4512 = vmatprep.subr.mxu0 0.0
    %4513 = vmatpush1.msra.mxu0 0.0
    %4514 = vmatprep.subr.mxu0 0.0
    %4515 = vmatpush1.msra.mxu0 0.0
    %4516 = vmatprep.subr.mxu0 0.0
    %4517 = vmatpush1.msra.mxu0 0.0
    %4518 = vmatprep.subr.mxu0 0.0
    %4519 = vmatpush1.msra.mxu0 0.0
    %4520 = vmatprep.subr.mxu0 0.0
    %4521 = vmatpush1.msra.mxu0 0.0
    %4522 = vmatprep.subr.mxu0 0.0
    %4523 = vmatpush1.msra.mxu0 0.0
    %4524 = vmatprep.subr.mxu0 0.0
    %4525 = vmatpush1.msra.mxu0 0.0
    %4526 = vmatprep.subr.mxu0 0.0
    %4527 = vmatpush1.msra.mxu0 0.0
    %4528 = vmatprep.subr.mxu0 0.0
    %4529 = vmatpush1.msra.mxu0 0.0
    %4530 = vmatprep.subr.mxu0 0.0
    %4531 = vmatpush1.msra.mxu0 0.0
    %4532 = vmatprep.subr.mxu0 0.0
    %4533 = vmatpush1.msra.mxu0 0.0
    %4534 = vmatprep.subr.mxu0 0.0
    %4535 = vmatpush1.msra.mxu0 0.0
    %4536 = vmatprep.subr.mxu0 0.0
    %4537 = vmatpush1.msra.mxu0 0.0
    %4538 = vmatprep.subr.mxu0 0.0
    %4539 = vmatpush1.msra.mxu0 0.0
    %4540 = vmatprep.subr.mxu0 0.0
    %4541 = vmatpush1.msra.mxu0 0.0
    %4542 = vmatprep.subr.mxu0 0.0
    %4543 = vmatpush1.msra.mxu0 %v3707
    %4544 = vmatprep.subr.mxu0 0.0
    %4545 = vmatpush2.msra.mxu0 0.0
    %4546 = vmatprep.subr.mxu0 0.0
    %4547 = vmatpush2.msra.mxu0 0.0
    %4548 = vmatprep.subr.mxu0 0.0
    %4549 = vmatpush2.msra.mxu0 0.0
    %4550 = vmatprep.subr.mxu0 0.0
    %4551 = vmatpush2.msra.mxu0 0.0
    %4552 = vmatprep.subr.mxu0 0.0
    %4553 = vmatpush2.msra.mxu0 0.0
    %4554 = vmatprep.subr.mxu0 0.0
    %4555 = vmatpush2.msra.mxu0 0.0
    %4556 = vmatprep.subr.mxu0 0.0
    %4557 = vmatpush2.msra.mxu0 0.0
    %4558 = vmatprep.subr.mxu0 0.0
    %4559 = vmatpush2.msra.mxu0 0.0
    %4560 = vmatprep.subr.mxu0 0.0
    %4561 = vmatpush2.msra.mxu0 0.0
    %4562 = vmatprep.subr.mxu0 0.0
    %4563 = vmatpush2.msra.mxu0 0.0
    %4564 = vmatprep.subr.mxu0 0.0
    %4565 = vmatpush2.msra.mxu0 0.0
    %4566 = vmatprep.subr.mxu0 0.0
    %4567 = vmatpush2.msra.mxu0 0.0
    %4568 = vmatprep.subr.mxu0 0.0
    %4569 = vmatpush2.msra.mxu0 0.0
    %4570 = vmatprep.subr.mxu0 0.0
    %4571 = vmatpush2.msra.mxu0 0.0
    %4572 = vmatprep.subr.mxu0 0.0
    %4573 = vmatpush2.msra.mxu0 0.0
    %4574 = vmatprep.subr.mxu0 0.0
    %4575 = vmatpush2.msra.mxu0 0.0
    %4576 = vmatprep.mubr.f32.mxu0 0.0
    %4577 = vmatmul.mubr.f32.gmra.mxu0 %v4507
    %v4578 = vpop.f32.mrf.mxu0
    %v4579 = vadd.f32 %v4498, %v4578
    %v4580 = vpop.f32.mrf.mxu0
    %4581 = vmatprep.mubr.f32.mxu0 0.0
    %4582 = vmatmul.mubr.f32.gmra.mxu0 %v4510
    %v4583 = vpop.f32.mrf.mxu0
    %v4584 = vadd.f32 %v4503, %v4583
    %v4585 = vpop.f32.mrf.mxu0
    %4586 = vdwg.mxu0
    %4587 = vrot.lane.b32.xlu0 %v4011, 112
    %v4588 = vpop.permute.xlu0 %4587
    %4589 = vrot.lane.b32.xlu0 %v4016, 112
    %v4590 = vpop.permute.xlu0 %4589
    %4591 = vrot.lane.b32.xlu0 %v4011, 80
    %v4592 = vpop.permute.xlu0 %4591
    %4593 = vrot.lane.b32.xlu0 %v4016, 80
    %v4594 = vpop.permute.xlu0 %4593
    %v4595 = vsel %vm608, %v4588, 0
    %v4597 = vsel %vm608, %v4590, 0
    %v4599 = vsel %vm608, %v4592, 0
    %v4601 = vsel %vm608, %v4594, 0
    %4603 = vmatprep.subr.mxu0 0.0
    %4604 = vmatpush1.xpose.msra.mxu0 0.0
    %4605 = vmatprep.subr.mxu0 0.0
    %4606 = vmatpush1.xpose.msra.mxu0 0.0
    %4607 = vmatprep.subr.mxu0 0.0
    %4608 = vmatpush1.xpose.msra.mxu0 0.0
    %4609 = vmatprep.subr.mxu0 0.0
    %4610 = vmatpush1.xpose.msra.mxu0 0.0
    %4611 = vmatprep.subr.mxu0 0.0
    %4612 = vmatpush1.xpose.msra.mxu0 0.0
    %4613 = vmatprep.subr.mxu0 0.0
    %4614 = vmatpush1.xpose.msra.mxu0 0.0
    %4615 = vmatprep.subr.mxu0 0.0
    %4616 = vmatpush1.xpose.msra.mxu0 0.0
    %4617 = vmatprep.subr.mxu0 0.0
    %4618 = vmatpush1.xpose.msra.mxu0 0.0
    %4619 = vmatprep.subr.mxu0 0.0
    %4620 = vmatpush1.xpose.msra.mxu0 0.0
    %4621 = vmatprep.subr.mxu0 0.0
    %4622 = vmatpush1.xpose.msra.mxu0 0.0
    %4623 = vmatprep.subr.mxu0 0.0
    %4624 = vmatpush1.xpose.msra.mxu0 0.0
    %4625 = vmatprep.subr.mxu0 0.0
    %4626 = vmatpush1.xpose.msra.mxu0 0.0
    %4627 = vmatprep.subr.mxu0 0.0
    %4628 = vmatpush1.xpose.msra.mxu0 0.0
    %4629 = vmatprep.subr.mxu0 0.0
    %4630 = vmatpush1.xpose.msra.mxu0 0.0
    %4631 = vmatprep.subr.mxu0 0.0
    %4632 = vmatpush1.xpose.msra.mxu0 %v4601
    %4633 = vmatprep.subr.mxu0 0.0
    %4634 = vmatpush1.xpose.msra.mxu0 %v4599
    %4635 = vmatprep.subr.mxu0 0.0
    %4636 = vmatpush2.xpose.msra.mxu0 0.0
    %4637 = vmatprep.subr.mxu0 0.0
    %4638 = vmatpush2.xpose.msra.mxu0 0.0
    %4639 = vmatprep.subr.mxu0 0.0
    %4640 = vmatpush2.xpose.msra.mxu0 0.0
    %4641 = vmatprep.subr.mxu0 0.0
    %4642 = vmatpush2.xpose.msra.mxu0 0.0
    %4643 = vmatprep.subr.mxu0 0.0
    %4644 = vmatpush2.xpose.msra.mxu0 0.0
    %4645 = vmatprep.subr.mxu0 0.0
    %4646 = vmatpush2.xpose.msra.mxu0 0.0
    %4647 = vmatprep.subr.mxu0 0.0
    %4648 = vmatpush2.xpose.msra.mxu0 0.0
    %4649 = vmatprep.subr.mxu0 0.0
    %4650 = vmatpush2.xpose.msra.mxu0 0.0
    %4651 = vmatprep.subr.mxu0 0.0
    %4652 = vmatpush2.xpose.msra.mxu0 0.0
    %4653 = vmatprep.subr.mxu0 0.0
    %4654 = vmatpush2.xpose.msra.mxu0 0.0
    %4655 = vmatprep.subr.mxu0 0.0
    %4656 = vmatpush2.xpose.msra.mxu0 0.0
    %4657 = vmatprep.subr.mxu0 0.0
    %4658 = vmatpush2.xpose.msra.mxu0 0.0
    %4659 = vmatprep.subr.mxu0 0.0
    %4660 = vmatpush2.xpose.msra.mxu0 0.0
    %4661 = vmatprep.subr.mxu0 0.0
    %4662 = vmatpush2.xpose.msra.mxu0 0.0
    %4663 = vmatprep.subr.mxu0 0.0
    %4664 = vmatpush2.xpose.msra.mxu0 0.0
    %4665 = vmatprep.subr.mxu0 0.0
    %4666 = vmatpush2.xpose.msra.mxu0 0.0
    %4667 = vmatprep.mubr.f32.mxu0 0.0
    %4668 = vmatmul.mubr.f32.gmra.mxu0 %v4595
    %v4669 = vpop.f32.mrf.mxu0
    %v4670 = vadd.f32 0.0, %v4669
    %v4671 = vpop.f32.mrf.mxu0
    %4672 = vmatprep.mubr.f32.mxu0 0.0
    %4673 = vmatmul.mubr.f32.gmra.mxu0 %v4597
    %v4674 = vpop.f32.mrf.mxu0
    %v4675 = vadd.f32 0.0, %v4674
    %v4676 = vpop.f32.mrf.mxu0
    %4677 = vdwg.mxu0
    %v4678 = vmul.f32 %v4670, 0.35355338
    %v4679 = vmul.f32 %v4675, 0.35355338
    %v4680 = vadd.f32 %v4678, %v92
    %v4681 = vadd.f32 %v4679, %v93
    %v4682 = vsel %vm304, %v4680, -inf
    %4683 = vmax.xlane.f32.xlu0 %v4682
    %v4684 = vpop.xlane.xlu0 %4683
    %v4685 = vsel %vm304, %v4681, -inf
    %4686 = vmax.xlane.f32.xlu0 %v4685
    %v4687 = vpop.xlane.xlu0 %4686
    %v4688 = vsub.f32 %v4680, %v4684
    %v4689 = vsub.f32 %v4681, %v4687
    %v4690 = vmul.f32 %v4688, 1.442695
    %v4691 = vpow.pop %v4690
    %v4692 = vmul.f32 %v4689, 1.442695
    %v4693 = vpow.pop %v4692
    %v4694 = vsel %vm304, %v4691, 0.0
    %4695 = vadd.xlane.f32.xlu0 %v4694
    %v4696 = vpop.xlane.xlu0 %4695
    %v4697 = vsel %vm304, %v4693, 0.0
    %4698 = vadd.xlane.f32.xlu0 %v4697
    %v4699 = vpop.xlane.xlu0 %4698
    %v4700 = vrcp.pop %v4696
    %v4701 = vrcp.pop %v4699
    %v4702 = vmul.f32 %v4691, %v4700
    %v4703 = vmul.f32 %v4693, %v4701
    %4704 = vrot.lane.b32.xlu0 %v4011, 48
    %v4705 = vpop.permute.xlu0 %4704
    %4706 = vrot.lane.b32.xlu0 %v4016, 48
    %v4707 = vpop.permute.xlu0 %4706
    %v4711 = vsel %vm304, %v4702, 0
    %v4714 = vsel %vm304, %v4703, 0
    %4716 = vmatprep.subr.mxu0 0.0
    %4717 = vmatpush1.msra.mxu0 0.0
    %4718 = vmatprep.subr.mxu0 0.0
    %4719 = vmatpush1.msra.mxu0 0.0
    %4720 = vmatprep.subr.mxu0 0.0
    %4721 = vmatpush1.msra.mxu0 0.0
    %4722 = vmatprep.subr.mxu0 0.0
    %4723 = vmatpush1.msra.mxu0 0.0
    %4724 = vmatprep.subr.mxu0 0.0
    %4725 = vmatpush1.msra.mxu0 0.0
    %4726 = vmatprep.subr.mxu0 0.0
    %4727 = vmatpush1.msra.mxu0 0.0
    %4728 = vmatprep.subr.mxu0 0.0
    %4729 = vmatpush1.msra.mxu0 0.0
    %4730 = vmatprep.subr.mxu0 0.0
    %4731 = vmatpush1.msra.mxu0 0.0
    %4732 = vmatprep.subr.mxu0 0.0
    %4733 = vmatpush1.msra.mxu0 0.0
    %4734 = vmatprep.subr.mxu0 0.0
    %4735 = vmatpush1.msra.mxu0 0.0
    %4736 = vmatprep.subr.mxu0 0.0
    %4737 = vmatpush1.msra.mxu0 0.0
    %4738 = vmatprep.subr.mxu0 0.0
    %4739 = vmatpush1.msra.mxu0 0.0
    %4740 = vmatprep.subr.mxu0 0.0
    %4741 = vmatpush1.msra.mxu0 0.0
    %4742 = vmatprep.subr.mxu0 0.0
    %4743 = vmatpush1.msra.mxu0 0.0
    %4744 = vmatprep.subr.mxu0 0.0
    %4745 = vmatpush1.msra.mxu0 %v4707
    %4746 = vmatprep.subr.mxu0 0.0
    %4747 = vmatpush1.msra.mxu0 %v4705
    %4748 = vmatprep.subr.mxu0 0.0
    %4749 = vmatpush2.msra.mxu0 0.0
    %4750 = vmatprep.subr.mxu0 0.0
    %4751 = vmatpush2.msra.mxu0 0.0
    %4752 = vmatprep.subr.mxu0 0.0
    %4753 = vmatpush2.msra.mxu0 0.0
    %4754 = vmatprep.subr.mxu0 0.0
    %4755 = vmatpush2.msra.mxu0 0.0
    %4756 = vmatprep.subr.mxu0 0.0
    %4757 = vmatpush2.msra.mxu0 0.0
    %4758 = vmatprep.subr.mxu0 0.0
    %4759 = vmatpush2.msra.mxu0 0.0
    %4760 = vmatprep.subr.mxu0 0.0
    %4761 = vmatpush2.msra.mxu0 0.0
    %4762 = vmatprep.subr.mxu0 0.0
    %4763 = vmatpush2.msra.mxu0 0.0
    %4764 = vmatprep.subr.mxu0 0.0
    %4765 = vmatpush2.msra.mxu0 0.0
    %4766 = vmatprep.subr.mxu0 0.0
    %4767 = vmatpush2.msra.mxu0 0.0
    %4768 = vmatprep.subr.mxu0 0.0
    %4769 = vmatpush2.msra.mxu0 0.0
    %4770 = vmatprep.subr.mxu0 0.0
    %4771 = vmatpush2.msra.mxu0 0.0
    %4772 = vmatprep.subr.mxu0 0.0
    %4773 = vmatpush2.msra.mxu0 0.0
    %4774 = vmatprep.subr.mxu0 0.0
    %4775 = vmatpush2.msra.mxu0 0.0
    %4776 = vmatprep.subr.mxu0 0.0
    %4777 = vmatpush2.msra.mxu0 0.0
    %4778 = vmatprep.subr.mxu0 0.0
    %4779 = vmatpush2.msra.mxu0 0.0
    %4780 = vmatprep.mubr.f32.mxu0 0.0
    %4781 = vmatmul.mubr.f32.gmra.mxu0 %v4711
    %v4782 = vpop.f32.mrf.mxu0
    %v4783 = vadd.f32 0.0, %v4782
    %v4784 = vpop.f32.mrf.mxu0
    %4785 = vmatprep.mubr.f32.mxu0 0.0
    %4786 = vmatmul.mubr.f32.gmra.mxu0 %v4714
    %v4787 = vpop.f32.mrf.mxu0
    %v4788 = vadd.f32 0.0, %v4787
    %v4789 = vpop.f32.mrf.mxu0
    %4790 = vdwg.mxu0
    %v4792 = vsel %vm608, %v4783, 0
    %v4795 = vsel %vm608, %v4788, 0
    %4797 = vmatprep.subr.mxu0 0.0
    %4798 = vmatpush1.msra.mxu0 0.0
    %4799 = vmatprep.subr.mxu0 0.0
    %4800 = vmatpush1.msra.mxu0 0.0
    %4801 = vmatprep.subr.mxu0 0.0
    %4802 = vmatpush1.msra.mxu0 0.0
    %4803 = vmatprep.subr.mxu0 0.0
    %4804 = vmatpush1.msra.mxu0 0.0
    %4805 = vmatprep.subr.mxu0 0.0
    %4806 = vmatpush1.msra.mxu0 0.0
    %4807 = vmatprep.subr.mxu0 0.0
    %4808 = vmatpush1.msra.mxu0 0.0
    %4809 = vmatprep.subr.mxu0 0.0
    %4810 = vmatpush1.msra.mxu0 0.0
    %4811 = vmatprep.subr.mxu0 0.0
    %4812 = vmatpush1.msra.mxu0 0.0
    %4813 = vmatprep.subr.mxu0 0.0
    %4814 = vmatpush1.msra.mxu0 0.0
    %4815 = vmatprep.subr.mxu0 0.0
    %4816 = vmatpush1.msra.mxu0 0.0
    %4817 = vmatprep.subr.mxu0 0.0
    %4818 = vmatpush1.msra.mxu0 0.0
    %4819 = vmatprep.subr.mxu0 0.0
    %4820 = vmatpush1.msra.mxu0 0.0
    %4821 = vmatprep.subr.mxu0 0.0
    %4822 = vmatpush1.msra.mxu0 0.0
    %4823 = vmatprep.subr.mxu0 0.0
    %4824 = vmatpush1.msra.mxu0 0.0
    %4825 = vmatprep.subr.mxu0 0.0
    %4826 = vmatpush1.msra.mxu0 0.0
    %4827 = vmatprep.subr.mxu0 0.0
    %4828 = vmatpush1.msra.mxu0 %v3709
    %4829 = vmatprep.subr.mxu0 0.0
    %4830 = vmatpush2.msra.mxu0 0.0
    %4831 = vmatprep.subr.mxu0 0.0
    %4832 = vmatpush2.msra.mxu0 0.0
    %4833 = vmatprep.subr.mxu0 0.0
    %4834 = vmatpush2.msra.mxu0 0.0
    %4835 = vmatprep.subr.mxu0 0.0
    %4836 = vmatpush2.msra.mxu0 0.0
    %4837 = vmatprep.subr.mxu0 0.0
    %4838 = vmatpush2.msra.mxu0 0.0
    %4839 = vmatprep.subr.mxu0 0.0
    %4840 = vmatpush2.msra.mxu0 0.0
    %4841 = vmatprep.subr.mxu0 0.0
    %4842 = vmatpush2.msra.mxu0 0.0
    %4843 = vmatprep.subr.mxu0 0.0
    %4844 = vmatpush2.msra.mxu0 0.0
    %4845 = vmatprep.subr.mxu0 0.0
    %4846 = vmatpush2.msra.mxu0 0.0
    %4847 = vmatprep.subr.mxu0 0.0
    %4848 = vmatpush2.msra.mxu0 0.0
    %4849 = vmatprep.subr.mxu0 0.0
    %4850 = vmatpush2.msra.mxu0 0.0
    %4851 = vmatprep.subr.mxu0 0.0
    %4852 = vmatpush2.msra.mxu0 0.0
    %4853 = vmatprep.subr.mxu0 0.0
    %4854 = vmatpush2.msra.mxu0 0.0
    %4855 = vmatprep.subr.mxu0 0.0
    %4856 = vmatpush2.msra.mxu0 0.0
    %4857 = vmatprep.subr.mxu0 0.0
    %4858 = vmatpush2.msra.mxu0 0.0
    %4859 = vmatprep.subr.mxu0 0.0
    %4860 = vmatpush2.msra.mxu0 0.0
    %4861 = vmatprep.mubr.f32.mxu0 0.0
    %4862 = vmatmul.mubr.f32.gmra.mxu0 %v4792
    %v4863 = vpop.f32.mrf.mxu0
    %v4864 = vadd.f32 0.0, %v4863
    %v4865 = vpop.f32.mrf.mxu0
    %4866 = vmatprep.mubr.f32.mxu0 0.0
    %4867 = vmatmul.mubr.f32.gmra.mxu0 %v4795
    %v4868 = vpop.f32.mrf.mxu0
    %v4869 = vadd.f32 0.0, %v4868
    %v4870 = vpop.f32.mrf.mxu0
    %4871 = vdwg.mxu0
    %v4872 = vadd.f32 %v4579, %v4864
    %v4873 = vadd.f32 %v4584, %v4869
    %4874 = vrot.lane.b32.xlu0 %v4011, 104
    %v4875 = vpop.permute.xlu0 %4874
    %4876 = vrot.lane.b32.xlu0 %v4016, 104
    %v4877 = vpop.permute.xlu0 %4876
    %4878 = vrot.lane.b32.xlu0 %v4011, 72
    %v4879 = vpop.permute.xlu0 %4878
    %4880 = vrot.lane.b32.xlu0 %v4016, 72
    %v4881 = vpop.permute.xlu0 %4880
    %v4882 = vsel %vm608, %v4875, 0
    %v4884 = vsel %vm608, %v4877, 0
    %v4886 = vsel %vm608, %v4879, 0
    %v4888 = vsel %vm608, %v4881, 0
    %4890 = vmatprep.subr.mxu0 0.0
    %4891 = vmatpush1.xpose.msra.mxu0 0.0
    %4892 = vmatprep.subr.mxu0 0.0
    %4893 = vmatpush1.xpose.msra.mxu0 0.0
    %4894 = vmatprep.subr.mxu0 0.0
    %4895 = vmatpush1.xpose.msra.mxu0 0.0
    %4896 = vmatprep.subr.mxu0 0.0
    %4897 = vmatpush1.xpose.msra.mxu0 0.0
    %4898 = vmatprep.subr.mxu0 0.0
    %4899 = vmatpush1.xpose.msra.mxu0 0.0
    %4900 = vmatprep.subr.mxu0 0.0
    %4901 = vmatpush1.xpose.msra.mxu0 0.0
    %4902 = vmatprep.subr.mxu0 0.0
    %4903 = vmatpush1.xpose.msra.mxu0 0.0
    %4904 = vmatprep.subr.mxu0 0.0
    %4905 = vmatpush1.xpose.msra.mxu0 0.0
    %4906 = vmatprep.subr.mxu0 0.0
    %4907 = vmatpush1.xpose.msra.mxu0 0.0
    %4908 = vmatprep.subr.mxu0 0.0
    %4909 = vmatpush1.xpose.msra.mxu0 0.0
    %4910 = vmatprep.subr.mxu0 0.0
    %4911 = vmatpush1.xpose.msra.mxu0 0.0
    %4912 = vmatprep.subr.mxu0 0.0
    %4913 = vmatpush1.xpose.msra.mxu0 0.0
    %4914 = vmatprep.subr.mxu0 0.0
    %4915 = vmatpush1.xpose.msra.mxu0 0.0
    %4916 = vmatprep.subr.mxu0 0.0
    %4917 = vmatpush1.xpose.msra.mxu0 0.0
    %4918 = vmatprep.subr.mxu0 0.0
    %4919 = vmatpush1.xpose.msra.mxu0 %v4888
    %4920 = vmatprep.subr.mxu0 0.0
    %4921 = vmatpush1.xpose.msra.mxu0 %v4886
    %4922 = vmatprep.subr.mxu0 0.0
    %4923 = vmatpush2.xpose.msra.mxu0 0.0
    %4924 = vmatprep.subr.mxu0 0.0
    %4925 = vmatpush2.xpose.msra.mxu0 0.0
    %4926 = vmatprep.subr.mxu0 0.0
    %4927 = vmatpush2.xpose.msra.mxu0 0.0
    %4928 = vmatprep.subr.mxu0 0.0
    %4929 = vmatpush2.xpose.msra.mxu0 0.0
    %4930 = vmatprep.subr.mxu0 0.0
    %4931 = vmatpush2.xpose.msra.mxu0 0.0
    %4932 = vmatprep.subr.mxu0 0.0
    %4933 = vmatpush2.xpose.msra.mxu0 0.0
    %4934 = vmatprep.subr.mxu0 0.0
    %4935 = vmatpush2.xpose.msra.mxu0 0.0
    %4936 = vmatprep.subr.mxu0 0.0
    %4937 = vmatpush2.xpose.msra.mxu0 0.0
    %4938 = vmatprep.subr.mxu0 0.0
    %4939 = vmatpush2.xpose.msra.mxu0 0.0
    %4940 = vmatprep.subr.mxu0 0.0
    %4941 = vmatpush2.xpose.msra.mxu0 0.0
    %4942 = vmatprep.subr.mxu0 0.0
    %4943 = vmatpush2.xpose.msra.mxu0 0.0
    %4944 = vmatprep.subr.mxu0 0.0
    %4945 = vmatpush2.xpose.msra.mxu0 0.0
    %4946 = vmatprep.subr.mxu0 0.0
    %4947 = vmatpush2.xpose.msra.mxu0 0.0
    %4948 = vmatprep.subr.mxu0 0.0
    %4949 = vmatpush2.xpose.msra.mxu0 0.0
    %4950 = vmatprep.subr.mxu0 0.0
    %4951 = vmatpush2.xpose.msra.mxu0 0.0
    %4952 = vmatprep.subr.mxu0 0.0
    %4953 = vmatpush2.xpose.msra.mxu0 0.0
    %4954 = vmatprep.mubr.f32.mxu0 0.0
    %4955 = vmatmul.mubr.f32.gmra.mxu0 %v4882
    %v4956 = vpop.f32.mrf.mxu0
    %v4957 = vadd.f32 0.0, %v4956
    %v4958 = vpop.f32.mrf.mxu0
    %4959 = vmatprep.mubr.f32.mxu0 0.0
    %4960 = vmatmul.mubr.f32.gmra.mxu0 %v4884
    %v4961 = vpop.f32.mrf.mxu0
    %v4962 = vadd.f32 0.0, %v4961
    %v4963 = vpop.f32.mrf.mxu0
    %4964 = vdwg.mxu0
    %v4965 = vmul.f32 %v4957, 0.35355338
    %v4966 = vmul.f32 %v4962, 0.35355338
    %v4967 = vadd.f32 %v4965, %v92
    %v4968 = vadd.f32 %v4966, %v93
    %v4969 = vsel %vm304, %v4967, -inf
    %4970 = vmax.xlane.f32.xlu0 %v4969
    %v4971 = vpop.xlane.xlu0 %4970
    %v4972 = vsel %vm304, %v4968, -inf
    %4973 = vmax.xlane.f32.xlu0 %v4972
    %v4974 = vpop.xlane.xlu0 %4973
    %v4975 = vsub.f32 %v4967, %v4971
    %v4976 = vsub.f32 %v4968, %v4974
    %v4977 = vmul.f32 %v4975, 1.442695
    %v4978 = vpow.pop %v4977
    %v4979 = vmul.f32 %v4976, 1.442695
    %v4980 = vpow.pop %v4979
    %v4981 = vsel %vm304, %v4978, 0.0
    %4982 = vadd.xlane.f32.xlu0 %v4981
    %v4983 = vpop.xlane.xlu0 %4982
    %v4984 = vsel %vm304, %v4980, 0.0
    %4985 = vadd.xlane.f32.xlu0 %v4984
    %v4986 = vpop.xlane.xlu0 %4985
    %v4987 = vrcp.pop %v4983
    %v4988 = vrcp.pop %v4986
    %v4989 = vmul.f32 %v4978, %v4987
    %v4990 = vmul.f32 %v4980, %v4988
    %4991 = vrot.lane.b32.xlu0 %v4011, 40
    %v4992 = vpop.permute.xlu0 %4991
    %4993 = vrot.lane.b32.xlu0 %v4016, 40
    %v4994 = vpop.permute.xlu0 %4993
    %v4998 = vsel %vm304, %v4989, 0
    %v5001 = vsel %vm304, %v4990, 0
    %5003 = vmatprep.subr.mxu0 0.0
    %5004 = vmatpush1.msra.mxu0 0.0
    %5005 = vmatprep.subr.mxu0 0.0
    %5006 = vmatpush1.msra.mxu0 0.0
    %5007 = vmatprep.subr.mxu0 0.0
    %5008 = vmatpush1.msra.mxu0 0.0
    %5009 = vmatprep.subr.mxu0 0.0
    %5010 = vmatpush1.msra.mxu0 0.0
    %5011 = vmatprep.subr.mxu0 0.0
    %5012 = vmatpush1.msra.mxu0 0.0
    %5013 = vmatprep.subr.mxu0 0.0
    %5014 = vmatpush1.msra.mxu0 0.0
    %5015 = vmatprep.subr.mxu0 0.0
    %5016 = vmatpush1.msra.mxu0 0.0
    %5017 = vmatprep.subr.mxu0 0.0
    %5018 = vmatpush1.msra.mxu0 0.0
    %5019 = vmatprep.subr.mxu0 0.0
    %5020 = vmatpush1.msra.mxu0 0.0
    %5021 = vmatprep.subr.mxu0 0.0
    %5022 = vmatpush1.msra.mxu0 0.0
    %5023 = vmatprep.subr.mxu0 0.0
    %5024 = vmatpush1.msra.mxu0 0.0
    %5025 = vmatprep.subr.mxu0 0.0
    %5026 = vmatpush1.msra.mxu0 0.0
    %5027 = vmatprep.subr.mxu0 0.0
    %5028 = vmatpush1.msra.mxu0 0.0
    %5029 = vmatprep.subr.mxu0 0.0
    %5030 = vmatpush1.msra.mxu0 0.0
    %5031 = vmatprep.subr.mxu0 0.0
    %5032 = vmatpush1.msra.mxu0 %v4994
    %5033 = vmatprep.subr.mxu0 0.0
    %5034 = vmatpush1.msra.mxu0 %v4992
    %5035 = vmatprep.subr.mxu0 0.0
    %5036 = vmatpush2.msra.mxu0 0.0
    %5037 = vmatprep.subr.mxu0 0.0
    %5038 = vmatpush2.msra.mxu0 0.0
    %5039 = vmatprep.subr.mxu0 0.0
    %5040 = vmatpush2.msra.mxu0 0.0
    %5041 = vmatprep.subr.mxu0 0.0
    %5042 = vmatpush2.msra.mxu0 0.0
    %5043 = vmatprep.subr.mxu0 0.0
    %5044 = vmatpush2.msra.mxu0 0.0
    %5045 = vmatprep.subr.mxu0 0.0
    %5046 = vmatpush2.msra.mxu0 0.0
    %5047 = vmatprep.subr.mxu0 0.0
    %5048 = vmatpush2.msra.mxu0 0.0
    %5049 = vmatprep.subr.mxu0 0.0
    %5050 = vmatpush2.msra.mxu0 0.0
    %5051 = vmatprep.subr.mxu0 0.0
    %5052 = vmatpush2.msra.mxu0 0.0
    %5053 = vmatprep.subr.mxu0 0.0
    %5054 = vmatpush2.msra.mxu0 0.0
    %5055 = vmatprep.subr.mxu0 0.0
    %5056 = vmatpush2.msra.mxu0 0.0
    %5057 = vmatprep.subr.mxu0 0.0
    %5058 = vmatpush2.msra.mxu0 0.0
    %5059 = vmatprep.subr.mxu0 0.0
    %5060 = vmatpush2.msra.mxu0 0.0
    %5061 = vmatprep.subr.mxu0 0.0
    %5062 = vmatpush2.msra.mxu0 0.0
    %5063 = vmatprep.subr.mxu0 0.0
    %5064 = vmatpush2.msra.mxu0 0.0
    %5065 = vmatprep.subr.mxu0 0.0
    %5066 = vmatpush2.msra.mxu0 0.0
    %5067 = vmatprep.mubr.f32.mxu0 0.0
    %5068 = vmatmul.mubr.f32.gmra.mxu0 %v4998
    %v5069 = vpop.f32.mrf.mxu0
    %v5070 = vadd.f32 0.0, %v5069
    %v5071 = vpop.f32.mrf.mxu0
    %5072 = vmatprep.mubr.f32.mxu0 0.0
    %5073 = vmatmul.mubr.f32.gmra.mxu0 %v5001
    %v5074 = vpop.f32.mrf.mxu0
    %v5075 = vadd.f32 0.0, %v5074
    %v5076 = vpop.f32.mrf.mxu0
    %5077 = vdwg.mxu0
    %v5079 = vsel %vm608, %v5070, 0
    %v5082 = vsel %vm608, %v5075, 0
    %5084 = vmatprep.subr.mxu0 0.0
    %5085 = vmatpush1.msra.mxu0 0.0
    %5086 = vmatprep.subr.mxu0 0.0
    %5087 = vmatpush1.msra.mxu0 0.0
    %5088 = vmatprep.subr.mxu0 0.0
    %5089 = vmatpush1.msra.mxu0 0.0
    %5090 = vmatprep.subr.mxu0 0.0
    %5091 = vmatpush1.msra.mxu0 0.0
    %5092 = vmatprep.subr.mxu0 0.0
    %5093 = vmatpush1.msra.mxu0 0.0
    %5094 = vmatprep.subr.mxu0 0.0
    %5095 = vmatpush1.msra.mxu0 0.0
    %5096 = vmatprep.subr.mxu0 0.0
    %5097 = vmatpush1.msra.mxu0 0.0
    %5098 = vmatprep.subr.mxu0 0.0
    %5099 = vmatpush1.msra.mxu0 0.0
    %5100 = vmatprep.subr.mxu0 0.0
    %5101 = vmatpush1.msra.mxu0 0.0
    %5102 = vmatprep.subr.mxu0 0.0
    %5103 = vmatpush1.msra.mxu0 0.0
    %5104 = vmatprep.subr.mxu0 0.0
    %5105 = vmatpush1.msra.mxu0 0.0
    %5106 = vmatprep.subr.mxu0 0.0
    %5107 = vmatpush1.msra.mxu0 0.0
    %5108 = vmatprep.subr.mxu0 0.0
    %5109 = vmatpush1.msra.mxu0 0.0
    %5110 = vmatprep.subr.mxu0 0.0
    %5111 = vmatpush1.msra.mxu0 0.0
    %5112 = vmatprep.subr.mxu0 0.0
    %5113 = vmatpush1.msra.mxu0 0.0
    %5114 = vmatprep.subr.mxu0 0.0
    %5115 = vmatpush1.msra.mxu0 %v3710
    %5116 = vmatprep.subr.mxu0 0.0
    %5117 = vmatpush2.msra.mxu0 0.0
    %5118 = vmatprep.subr.mxu0 0.0
    %5119 = vmatpush2.msra.mxu0 0.0
    %5120 = vmatprep.subr.mxu0 0.0
    %5121 = vmatpush2.msra.mxu0 0.0
    %5122 = vmatprep.subr.mxu0 0.0
    %5123 = vmatpush2.msra.mxu0 0.0
    %5124 = vmatprep.subr.mxu0 0.0
    %5125 = vmatpush2.msra.mxu0 0.0
    %5126 = vmatprep.subr.mxu0 0.0
    %5127 = vmatpush2.msra.mxu0 0.0
    %5128 = vmatprep.subr.mxu0 0.0
    %5129 = vmatpush2.msra.mxu0 0.0
    %5130 = vmatprep.subr.mxu0 0.0
    %5131 = vmatpush2.msra.mxu0 0.0
    %5132 = vmatprep.subr.mxu0 0.0
    %5133 = vmatpush2.msra.mxu0 0.0
    %5134 = vmatprep.subr.mxu0 0.0
    %5135 = vmatpush2.msra.mxu0 0.0
    %5136 = vmatprep.subr.mxu0 0.0
    %5137 = vmatpush2.msra.mxu0 0.0
    %5138 = vmatprep.subr.mxu0 0.0
    %5139 = vmatpush2.msra.mxu0 0.0
    %5140 = vmatprep.subr.mxu0 0.0
    %5141 = vmatpush2.msra.mxu0 0.0
    %5142 = vmatprep.subr.mxu0 0.0
    %5143 = vmatpush2.msra.mxu0 0.0
    %5144 = vmatprep.subr.mxu0 0.0
    %5145 = vmatpush2.msra.mxu0 0.0
    %5146 = vmatprep.subr.mxu0 0.0
    %5147 = vmatpush2.msra.mxu0 0.0
    %5148 = vmatprep.mubr.f32.mxu0 0.0
    %5149 = vmatmul.mubr.f32.gmra.mxu0 %v5079
    %v5150 = vpop.f32.mrf.mxu0
    %v5151 = vadd.f32 0.0, %v5150
    %v5152 = vpop.f32.mrf.mxu0
    %5153 = vmatprep.mubr.f32.mxu0 0.0
    %5154 = vmatmul.mubr.f32.gmra.mxu0 %v5082
    %v5155 = vpop.f32.mrf.mxu0
    %v5156 = vadd.f32 0.0, %v5155
    %v5157 = vpop.f32.mrf.mxu0
    %5158 = vdwg.mxu0
    %v5159 = vadd.f32 %v4872, %v5151
    %v5160 = vadd.f32 %v4873, %v5156
    %v5161 = vlaneseq
    %v5162 = vshrl.u32 %v5161, 7
    %v5163 = vsub.s32 4, %v5162
    %v5164 = vrot.slane %v3727, %v5163
    %v5165 = vadd.f32 %v5159, %v5164
    %v5166 = vadd.f32 %v5160, %v5164
    %v5167 = vadd.f32 %v5165, %v3888
    %v5168 = vadd.f32 %v5166, %v3893
    %v5169 = vsel %vm197, %v5167, 0.0
    %5170 = vadd.xlane.f32.xlu0 %v5169
    %v5171 = vpop.xlane.xlu0 %5170
    %v5172 = vsel %vm197, %v5168, 0.0
    %5173 = vadd.xlane.f32.xlu0 %v5172
    %v5174 = vpop.xlane.xlu0 %5173
    %v5175 = vmul.f32 %v5171, %v484
    %v5176 = vmul.f32 %v5174, %v484
    %v5177 = vsub.f32 %v5167, %v5175
    %v5178 = vsub.f32 %v5168, %v5176
    %v5179 = vmul.f32 %v5177, %v5177
    %v5180 = vmul.f32 %v5178, %v5178
    %v5181 = vsel %vm197, %v5179, 0.0
    %5182 = vadd.xlane.f32.xlu0 %v5181
    %v5183 = vpop.xlane.xlu0 %5182
    %v5184 = vsel %vm197, %v5180, 0.0
    %5185 = vadd.xlane.f32.xlu0 %v5184
    %v5186 = vpop.xlane.xlu0 %5185
    %v5187 = vmul.f32 %v5183, %v484
    %v5188 = vmul.f32 %v5186, %v484
    %v5189 = vadd.f32 %v5187, 1e-05
    %v5190 = vadd.f32 %v5188, 1e-05
    %v5191 = vrsqrt.pop %v5189
    %v5192 = vrsqrt.pop %v5190
    %v5193 = vmul.f32 %v5177, %v5191
    %v5194 = vmul.f32 %v5178, %v5192
    %v5195 = vlaneseq
    %v5196 = vshrl.u32 %v5195, 7
    %v5197 = vsub.s32 5, %v5196
    %v5198 = vrot.slane %v3727, %v5197
    %v5199 = vmul.f32 %v5193, %v5198
    %v5200 = vmul.f32 %v5194, %v5198
    %v5201 = vlaneseq
    %v5202 = vshrl.u32 %v5201, 7
    %v5203 = vsub.s32 6, %v5202
    %v5204 = vrot.slane %v3727, %v5203
    %v5205 = vadd.f32 %v5199, %v5204
    %v5206 = vadd.f32 %v5200, %v5204
    %v5207 = vlaneseq
    %v5208 = vshrl.u32 %v5207, 7
    %v5209 = vsub.s32 7, %v5208
    %v5210 = vrot.slane %v3727, %v5209
    %v5212 = vsel %vm197, %v5205, 0
    %v5215 = vsel %vm197, %v5206, 0
    %5217 = vmatprep.subr.mxu0 0.0
    %5218 = vmatpush1.msra.mxu0 0.0
    %5219 = vmatprep.subr.mxu0 0.0
    %5220 = vmatpush1.msra.mxu0 0.0
    %5221 = vmatprep.subr.mxu0 0.0
    %5222 = vmatpush1.msra.mxu0 0.0
    %5223 = vmatprep.subr.mxu0 0.0
    %5224 = vmatpush1.msra.mxu0 0.0
    %5225 = vmatprep.subr.mxu0 0.0
    %5226 = vmatpush1.msra.mxu0 0.0
    %5227 = vmatprep.subr.mxu0 0.0
    %5228 = vmatpush1.msra.mxu0 0.0
    %5229 = vmatprep.subr.mxu0 0.0
    %5230 = vmatpush1.msra.mxu0 0.0
    %5231 = vmatprep.subr.mxu0 0.0
    %5232 = vmatpush1.msra.mxu0 0.0
    %5233 = vmatprep.subr.mxu0 0.0
    %5234 = vmatpush1.msra.mxu0 0.0
    %5235 = vmatprep.subr.mxu0 0.0
    %5236 = vmatpush1.msra.mxu0 0.0
    %5237 = vmatprep.subr.mxu0 0.0
    %5238 = vmatpush1.msra.mxu0 0.0
    %5239 = vmatprep.subr.mxu0 0.0
    %5240 = vmatpush1.msra.mxu0 0.0
    %5241 = vmatprep.subr.mxu0 0.0
    %5242 = vmatpush1.msra.mxu0 %v3715
    %5243 = vmatprep.subr.mxu0 0.0
    %5244 = vmatpush1.msra.mxu0 %v3714
    %5245 = vmatprep.subr.mxu0 0.0
    %5246 = vmatpush1.msra.mxu0 %v3713
    %5247 = vmatprep.subr.mxu0 0.0
    %5248 = vmatpush1.msra.mxu0 %v3712
    %5249 = vmatprep.subr.mxu0 0.0
    %5250 = vmatpush2.msra.mxu0 0.0
    %5251 = vmatprep.subr.mxu0 0.0
    %5252 = vmatpush2.msra.mxu0 0.0
    %5253 = vmatprep.subr.mxu0 0.0
    %5254 = vmatpush2.msra.mxu0 0.0
    %5255 = vmatprep.subr.mxu0 0.0
    %5256 = vmatpush2.msra.mxu0 0.0
    %5257 = vmatprep.subr.mxu0 0.0
    %5258 = vmatpush2.msra.mxu0 0.0
    %5259 = vmatprep.subr.mxu0 0.0
    %5260 = vmatpush2.msra.mxu0 0.0
    %5261 = vmatprep.subr.mxu0 0.0
    %5262 = vmatpush2.msra.mxu0 0.0
    %5263 = vmatprep.subr.mxu0 0.0
    %5264 = vmatpush2.msra.mxu0 0.0
    %5265 = vmatprep.subr.mxu0 0.0
    %5266 = vmatpush2.msra.mxu0 0.0
    %5267 = vmatprep.subr.mxu0 0.0
    %5268 = vmatpush2.msra.mxu0 0.0
    %5269 = vmatprep.subr.mxu0 0.0
    %5270 = vmatpush2.msra.mxu0 0.0
    %5271 = vmatprep.subr.mxu0 0.0
    %5272 = vmatpush2.msra.mxu0 0.0
    %5273 = vmatprep.subr.mxu0 0.0
    %5274 = vmatpush2.msra.mxu0 0.0
    %5275 = vmatprep.subr.mxu0 0.0
    %5276 = vmatpush2.msra.mxu0 0.0
    %5277 = vmatprep.subr.mxu0 0.0
    %5278 = vmatpush2.msra.mxu0 0.0
    %5279 = vmatprep.subr.mxu0 0.0
    %5280 = vmatpush2.msra.mxu0 0.0
    %5281 = vmatprep.mubr.f32.mxu0 0.0
    %5282 = vmatmul.mubr.f32.gmra.mxu0 %v5212
    %v5283 = vpop.f32.mrf.mxu0
    %v5284 = vadd.f32 %v5210, %v5283
    %v5285 = vpop.f32.mrf.mxu0
    %5286 = vmatprep.mubr.f32.mxu0 0.0
    %5287 = vmatmul.mubr.f32.gmra.mxu0 %v5215
    %v5288 = vpop.f32.mrf.mxu0
    %v5289 = vadd.f32 %v5210, %v5288
    %v5290 = vpop.f32.mrf.mxu0
    %5291 = vdwg.mxu0
    %v5292 = vxor.u32 %v5284, 2147483648
    %v5293 = vxor.u32 %v5289, 2147483648
    %v5294 = vmul.f32 %v5292, 1.442695
    %v5295 = vpow.pop %v5294
    %v5296 = vmul.f32 %v5293, 1.442695
    %v5297 = vpow.pop %v5296
    %v5298 = vadd.f32 %v5295, 1.0
    %v5299 = vadd.f32 %v5297, 1.0
    %v5300 = vrcp.pop %v5298
    %v5301 = vmul.f32 1.0, %v5300
    %v5302 = vrcp.pop %v5299
    %v5303 = vmul.f32 1.0, %v5302
    %v5304 = vmul.f32 %v5284, %v5301
    %v5305 = vmul.f32 %v5289, %v5303
    %v5306 = vlaneseq
    %v5307 = vshrl.u32 %v5306, 7
    %v5308 = vsub.s32 0, %v5307
    %v5309 = vrot.slane %v3728, %v5308
    %v5311 = vsel %vm197, %v5304, 0
    %v5314 = vsel %vm197, %v5305, 0
    %5316 = vmatprep.subr.mxu0 0.0
    %5317 = vmatpush1.msra.mxu0 0.0
    %5318 = vmatprep.subr.mxu0 0.0
    %5319 = vmatpush1.msra.mxu0 0.0
    %5320 = vmatprep.subr.mxu0 0.0
    %5321 = vmatpush1.msra.mxu0 0.0
    %5322 = vmatprep.subr.mxu0 0.0
    %5323 = vmatpush1.msra.mxu0 0.0
    %5324 = vmatprep.subr.mxu0 0.0
    %5325 = vmatpush1.msra.mxu0 0.0
    %5326 = vmatprep.subr.mxu0 0.0
    %5327 = vmatpush1.msra.mxu0 0.0
    %5328 = vmatprep.subr.mxu0 0.0
    %5329 = vmatpush1.msra.mxu0 0.0
    %5330 = vmatprep.subr.mxu0 0.0
    %5331 = vmatpush1.msra.mxu0 0.0
    %5332 = vmatprep.subr.mxu0 0.0
    %5333 = vmatpush1.msra.mxu0 0.0
    %5334 = vmatprep.subr.mxu0 0.0
    %5335 = vmatpush1.msra.mxu0 0.0
    %5336 = vmatprep.subr.mxu0 0.0
    %5337 = vmatpush1.msra.mxu0 0.0
    %5338 = vmatprep.subr.mxu0 0.0
    %5339 = vmatpush1.msra.mxu0 0.0
    %5340 = vmatprep.subr.mxu0 0.0
    %5341 = vmatpush1.msra.mxu0 %v3720
    %5342 = vmatprep.subr.mxu0 0.0
    %5343 = vmatpush1.msra.mxu0 %v3719
    %5344 = vmatprep.subr.mxu0 0.0
    %5345 = vmatpush1.msra.mxu0 %v3718
    %5346 = vmatprep.subr.mxu0 0.0
    %5347 = vmatpush1.msra.mxu0 %v3717
    %5348 = vmatprep.subr.mxu0 0.0
    %5349 = vmatpush2.msra.mxu0 0.0
    %5350 = vmatprep.subr.mxu0 0.0
    %5351 = vmatpush2.msra.mxu0 0.0
    %5352 = vmatprep.subr.mxu0 0.0
    %5353 = vmatpush2.msra.mxu0 0.0
    %5354 = vmatprep.subr.mxu0 0.0
    %5355 = vmatpush2.msra.mxu0 0.0
    %5356 = vmatprep.subr.mxu0 0.0
    %5357 = vmatpush2.msra.mxu0 0.0
    %5358 = vmatprep.subr.mxu0 0.0
    %5359 = vmatpush2.msra.mxu0 0.0
    %5360 = vmatprep.subr.mxu0 0.0
    %5361 = vmatpush2.msra.mxu0 0.0
    %5362 = vmatprep.subr.mxu0 0.0
    %5363 = vmatpush2.msra.mxu0 0.0
    %5364 = vmatprep.subr.mxu0 0.0
    %5365 = vmatpush2.msra.mxu0 0.0
    %5366 = vmatprep.subr.mxu0 0.0
    %5367 = vmatpush2.msra.mxu0 0.0
    %5368 = vmatprep.subr.mxu0 0.0
    %5369 = vmatpush2.msra.mxu0 0.0
    %5370 = vmatprep.subr.mxu0 0.0
    %5371 = vmatpush2.msra.mxu0 0.0
    %5372 = vmatprep.subr.mxu0 0.0
    %5373 = vmatpush2.msra.mxu0 0.0
    %5374 = vmatprep.subr.mxu0 0.0
    %5375 = vmatpush2.msra.mxu0 0.0
    %5376 = vmatprep.subr.mxu0 0.0
    %5377 = vmatpush2.msra.mxu0 0.0
    %5378 = vmatprep.subr.mxu0 0.0
    %5379 = vmatpush2.msra.mxu0 0.0
    %5380 = vmatprep.mubr.f32.mxu0 0.0
    %5381 = vmatmul.mubr.f32.gmra.mxu0 %v5311
    %v5382 = vpop.f32.mrf.mxu0
    %v5383 = vadd.f32 %v5309, %v5382
    %v5384 = vpop.f32.mrf.mxu0
    %5385 = vmatprep.mubr.f32.mxu0 0.0
    %5386 = vmatmul.mubr.f32.gmra.mxu0 %v5314
    %v5387 = vpop.f32.mrf.mxu0
    %v5388 = vadd.f32 %v5309, %v5387
    %v5389 = vpop.f32.mrf.mxu0
    %5390 = vdwg.mxu0
    %v5391 = vadd.f32 %v5383, %v5167
    %v5392 = vadd.f32 %v5388, %v5168
    %v5393 = vadd.f32 %v5391, %v3699
    %v5394 = vadd.f32 %v5392, %v3700
    %v5395 = vtanh.pop %v5393
    %v5396 = vtanh.pop %v5394
    %5397 = vst.msk [vmem:[#allocation10] sm:$0xff] %vm197, %v5395
    %5398 = vst.msk [vmem:[#allocation10 + $0x8] sm:$0xff] %vm197, %v5396
    // Predicated region
    $region58: #{tpu_custom_call.1} parent=1 // pred_check
      _
    $region59: #{tpu_custom_call.1} parent=1 // pred_check_branch
      %5400 = sbr.rel (0) target = $region61
    $region60: #{tpu_custom_call.1} parent=1 // pred_region
      %s5402 = ssub.s32 256, 256
      %5403 = vsyncadd [#allocation4], %s5402
      %s5404 = sshll.u32 [#allocation10], 4
      %s5405 = int_to_ptr.vmem [resolvable:$true] %s5404
      %5410 = dma.vmem_to_hbm [thread:$0]  %s5405, 256, %s10, [#allocation4], 128, 128, 8
    $region61: #{tpu_custom_call.1} parent=1 // pred_fallthru
      _
    // Predicated region
    $region62: #{tpu_custom_call.1} parent=1 // pred_check
      _
    $region63: #{tpu_custom_call.1} parent=1 // pred_check_branch
      %5412 = sbr.rel (0) target = $region65
    $region64: #{tpu_custom_call.1} parent=1 // pred_region
      %5413 = dma.done [#allocation4], 256
    $region65: #{tpu_custom_call.1} parent=1 // pred_fallthru
      _
    %5414 = vsyncpa [#allocation3], 1
    %5415 = vsyncpa [#allocation8], 1
    %5416 = vsyncpa [#allocation4], 1
    %5417 = vsyncpa [#allocation5], 1

</llo_original>
